<compile_context>
chip_gen: v7x
topology: tpu7x:2x2x1
jax: 0.10.0
libtpu: 0.0.40
codegen_flags: <defaults>
</compile_context>

<pallas_src>
import jax
import jax.numpy as jnp
from jax import lax
from jax.experimental import pallas as pl
from jax.experimental.pallas import tpu as pltpu


def _layernorm(x, gamma, beta, eps=1e-5):
    mean = jnp.mean(x, axis=-1, keepdims=True)
    var = jnp.mean((x - mean) ** 2, axis=-1, keepdims=True)
    inv = lax.rsqrt(var + eps)
    # Fold gamma into the inverse std -> drops one full-tile multiply per LN.
    return (x - mean) * (inv * gamma) + beta


def _make_kernel(nonlinear: bool, has_downsample: bool):
    def kernel(x_ref, w1_ref, w2_ref, w3_ref, ph_ref, po_ref, *rest):
        if has_downsample:
            wd_ref, o_ref = rest
        else:
            (o_ref,) = rest

        x_f32 = x_ref[...]                      # f32 activation tile [TB, D_in]
        x = x_f32.astype(jnp.bfloat16)          # in-kernel cast for the MXU

        # Packed per-feature params (f32 rows):
        #   ph = [b1; g1; be1; b2; g2; be2]  (width = hid)
        #   po = [b3; g3; be3 (; bd; gd; bed)] (width = output_dim)

        # lin1 + ln1 (+ relu)  -- bf16 x bf16 MXU, f32 accumulate
        h = jnp.dot(x, w1_ref[...], preferred_element_type=jnp.float32) + ph_ref[0:1, :]
        h = _layernorm(h, ph_ref[1:2, :], ph_ref[2:3, :])
        if nonlinear:
            h = jnp.maximum(h, 0.0)

        # lin2 + ln2 (+ relu)
        h = jnp.dot(h.astype(w2_ref.dtype), w2_ref[...],
                    preferred_element_type=jnp.float32) + ph_ref[3:4, :]
        h = _layernorm(h, ph_ref[4:5, :], ph_ref[5:6, :])
        if nonlinear:
            h = jnp.maximum(h, 0.0)

        # lin3 + ln3
        h = jnp.dot(h.astype(w3_ref.dtype), w3_ref[...],
                    preferred_element_type=jnp.float32) + po_ref[0:1, :]
        h = _layernorm(h, po_ref[1:2, :], po_ref[2:3, :])

        if has_downsample:
            # TODO(synk): the literal PyTorch forward applies `downsample` to the
            # post-ln3 activations, which is shape-inconsistent with the declared
            # nn.Linear(input_dim, output_dim) and would raise in PyTorch whenever
            # the downsample branch exists.  We implement the only shape-consistent
            # reading: project the block *input* (standard ResNet downsample).
            ident = jnp.dot(x, wd_ref[...],
                            preferred_element_type=jnp.float32) + po_ref[3:4, :]
            identity = _layernorm(ident, po_ref[4:5, :], po_ref[5:6, :])
        else:
            identity = x_f32  # exact f32 identity, matching PyTorch

        out = h + identity
        if nonlinear:
            out = jnp.maximum(out, 0.0)
        o_ref[...] = out.astype(o_ref.dtype)

    return kernel


def bottleneck_block(x, params, *, nonlinear: bool, output_dim: int,
                     block_b: int = 256, out_dtype=jnp.bfloat16):
    """Runs the BottleneckBlock forward pass as a single batch-tiled Pallas kernel."""
    B, d_in = x.shape
    has_downsample = "wd" in params

    tb = min(block_b, B)
    assert B % tb == 0, "demo assumes batch divisible by the batch tile"

    # Pack the tiny [1, N] bias / gamma / beta rows into two stacked arrays
    # (one per feature width) -> 2 resident param operands instead of ~10.
    ph = jnp.concatenate([params["b1"], params["g1"], params["be1"],
                          params["b2"], params["g2"], params["be2"]], axis=0)
    po_rows = [params["b3"], params["g3"], params["be3"]]
    if has_downsample:
        po_rows += [params["bd"], params["gd"], params["bed"]]
    po = jnp.concatenate(po_rows, axis=0)

    ordered = [x, params["w1"], params["w2"], params["w3"], ph, po]
    if has_downsample:
        ordered.append(params["wd"])

    # x / out tiled over the batch (default double-buffered); weights & packed
    # params use a constant block index and Buffered(1) -> VMEM-resident,
    # single-buffered (halves resident weight VMEM).
    resident = pl.Buffered(1)
    in_specs = [pl.BlockSpec((tb, d_in), lambda i: (i, 0))]
    in_specs += [pl.BlockSpec(a.shape, lambda i: (0, 0), pipeline_mode=resident)
                 for a in ordered[1:]]

    # Explicit scoped-VMEM budget: resident params + double-buffered x/out tiles,
    # with headroom; capped at 56 MiB so it also fits v7x's 64 MiB VMEM.
    resident_bytes = sum(int(a.size) * a.dtype.itemsize for a in ordered[1:])
    out_itemsize = jnp.dtype(out_dtype).itemsize
    tile_bytes = 2 * (tb * d_in * x.dtype.itemsize + tb * output_dim * out_itemsize)
    vmem_limit = int(1.5 * (resident_bytes + tile_bytes)) + (4 << 20)
    vmem_limit = min(max(vmem_limit, 32 << 20), 56 << 20)

    kernel = _make_kernel(nonlinear, has_downsample)
    return pl.pallas_call(
        kernel,
        out_shape=jax.ShapeDtypeStruct((B, output_dim), out_dtype),
        grid=(B // tb,),
        in_specs=in_specs,
        out_specs=pl.BlockSpec((tb, output_dim), lambda i: (i, 0)),
        compiler_params=pltpu.CompilerParams(
            dimension_semantics=("parallel",),
            vmem_limit_bytes=vmem_limit),
    )(*ordered)


def init_params(key, input_dim, output_dim):
    """Deterministic init matching the module's shapes (PyTorch-style uniform).

    Weights are stored in bf16 once here (no per-call casts); biases and
    LayerNorm affine params stay f32 as [1, N] rows.
    """
    hid = input_dim // 4
    ks = jax.random.split(key, 4)

    def lin(k, fan_in, fan_out):
        kw, kb = jax.random.split(k)
        bound = 1.0 / (fan_in ** 0.5)
        w = jax.random.uniform(kw, (fan_in, fan_out), jnp.float32, -bound, bound)
        b = jax.random.uniform(kb, (1, fan_out), jnp.float32, -bound, bound)
        return w.astype(jnp.bfloat16), b

    p = {}
    p["w1"], p["b1"] = lin(ks[0], input_dim, hid)
    p["g1"], p["be1"] = jnp.ones((1, hid), jnp.float32), jnp.zeros((1, hid), jnp.float32)
    p["w2"], p["b2"] = lin(ks[1], hid, hid)
    p["g2"], p["be2"] = jnp.ones((1, hid), jnp.float32), jnp.zeros((1, hid), jnp.float32)
    p["w3"], p["b3"] = lin(ks[2], hid, output_dim)
    p["g3"], p["be3"] = (jnp.ones((1, output_dim), jnp.float32),
                         jnp.zeros((1, output_dim), jnp.float32))
    if input_dim != output_dim:
        p["wd"], p["bd"] = lin(ks[3], input_dim, output_dim)
        p["gd"], p["bed"] = (jnp.ones((1, output_dim), jnp.float32),
                             jnp.zeros((1, output_dim), jnp.float32))
    return p


def _reference(x, params, *, nonlinear):
    """Plain-JAX reference mirroring the kernel math (bf16 MXU inputs, f32 accum)."""
    bf16 = jnp.bfloat16
    xb = x.astype(bf16)

    def mm(a, w):
        return jnp.dot(a.astype(bf16), w, preferred_element_type=jnp.float32)

    h = mm(xb, params["w1"]) + params["b1"]
    h = _layernorm(h, params["g1"], params["be1"])
    if nonlinear:
        h = jnp.maximum(h, 0.0)
    h = mm(h, params["w2"]) + params["b2"]
    h = _layernorm(h, params["g2"], params["be2"])
    if nonlinear:
        h = jnp.maximum(h, 0.0)
    h = mm(h, params["w3"]) + params["b3"]
    h = _layernorm(h, params["g3"], params["be3"])
    if "wd" in params:
        ident = mm(xb, params["wd"]) + params["bd"]
        identity = _layernorm(ident, params["gd"], params["bed"])
    else:
        identity = x  # exact f32 identity
    out = h + identity
    if nonlinear:
        out = jnp.maximum(out, 0.0)
    return out


if __name__ == "__main__":
    key = jax.random.PRNGKey(0)

    # MXU-friendly shapes: hid = input_dim//4 = 256 and output widths are
    # multiples of 256; batch tile = 256 rows -> 4 grid steps (>=2 per core
    # on v7x megacore), all lane-dense stores.
    configs = [
        # (B, input_dim, output_dim, nonlinear)
        (1024, 1024, 512, True),    # downsample (projection) path, ReLU on
        (1024, 1024, 1024, False),  # pure-identity residual path, linear
    ]

    for (B, d_in, d_out, nonlinear) in configs:
        kx, kp, key = jax.random.split(key, 3)
        x = jax.random.normal(kx, (B, d_in), dtype=jnp.float32)
        params = init_params(kp, d_in, d_out)

        out = bottleneck_block(x, params, nonlinear=nonlinear, output_dim=d_out)
        out = jax.block_until_ready(out)

        ref = _reference(x, params, nonlinear=nonlinear)
        assert out.shape == (B, d_out)
        err = jnp.max(jnp.abs(out.astype(jnp.float32) - ref))
        assert jnp.allclose(out.astype(jnp.float32), ref, atol=3e-2, rtol=2e-2), (
            "max abs err = %f" % float(err))

    print("KERNEL_OK")
</pallas_src>

<mosaic_0001>
module attributes {stable_mosaic.version = 11 : i64} {
  func.func @kernel(%arg0: i32, %arg1: memref<256x1024xf32, #tpu.memory_space<vmem>>, %arg2: memref<1024x256xbf16, #tpu.memory_space<vmem>>, %arg3: memref<256x256xbf16, #tpu.memory_space<vmem>>, %arg4: memref<256x512xbf16, #tpu.memory_space<vmem>>, %arg5: memref<6x256xf32, #tpu.memory_space<vmem>>, %arg6: memref<6x512xf32, #tpu.memory_space<vmem>>, %arg7: memref<1024x512xbf16, #tpu.memory_space<vmem>>, %arg8: memref<256x512xbf16, #tpu.memory_space<vmem>>) attributes {dimension_semantics = [#tpu.dimension_semantics<parallel>], iteration_bounds = array<i64: 4>, scalar_prefetch = 0 : i64, scratch_operands = 0 : i64, tpu.core_type = #tpu.core_type<tc>, window_params = [{transform_indices = @transform_0, window_bounds = array<i64: 256, 1024>}, {pipeline_mode = #tpu.pipeline_mode<synchronous>, transform_indices = @transform_1, window_bounds = array<i64: 1024, 256>}, {pipeline_mode = #tpu.pipeline_mode<synchronous>, transform_indices = @transform_2, window_bounds = array<i64: 256, 256>}, {pipeline_mode = #tpu.pipeline_mode<synchronous>, transform_indices = @transform_3, window_bounds = array<i64: 256, 512>}, {pipeline_mode = #tpu.pipeline_mode<synchronous>, transform_indices = @transform_4, window_bounds = array<i64: 6, 256>}, {pipeline_mode = #tpu.pipeline_mode<synchronous>, transform_indices = @transform_5, window_bounds = array<i64: 6, 512>}, {pipeline_mode = #tpu.pipeline_mode<synchronous>, transform_indices = @transform_6, window_bounds = array<i64: 1024, 512>}, {transform_indices = @transform_7, window_bounds = array<i64: 256, 512>}]} {
    %c0 = arith.constant 0 : index
    %c0_0 = arith.constant 0 : index
    %0 = vector.load %arg1[%c0, %c0_0] : memref<256x1024xf32, #tpu.memory_space<vmem>>, vector<256x1024xf32>
    %1 = arith.truncf %0 : vector<256x1024xf32> to vector<256x1024xbf16>
    %c0_1 = arith.constant 0 : index
    %c0_2 = arith.constant 0 : index
    %2 = vector.load %arg2[%c0_1, %c0_2] : memref<1024x256xbf16, #tpu.memory_space<vmem>>, vector<1024x256xbf16>
    %cst = arith.constant dense<0.000000e+00> : vector<256x256xf32>
    %3 = tpu.matmul %1, %2, %cst {dimension_numbers = #tpu.dot_dimension_numbers<[1], [0], [0], [1], [0, 0, 1, 1], [], []>} : vector<256x1024xbf16>, vector<1024x256xbf16>, vector<256x256xf32> -> vector<256x256xf32>
    %c0_3 = arith.constant 0 : index
    %c0_4 = arith.constant 0 : index
    %4 = vector.load %arg5[%c0_3, %c0_4] : memref<6x256xf32, #tpu.memory_space<vmem>>, vector<1x256xf32>
    %5 = vector.broadcast %4 : vector<1x256xf32> to vector<256x256xf32>
    %6 = arith.addf %3, %5 : vector<256x256xf32>
    %c1 = arith.constant 1 : index
    %c0_5 = arith.constant 0 : index
    %7 = vector.load %arg5[%c1, %c0_5] : memref<6x256xf32, #tpu.memory_space<vmem>>, vector<1x256xf32>
    %c2 = arith.constant 2 : index
    %c0_6 = arith.constant 0 : index
    %8 = vector.load %arg5[%c2, %c0_6] : memref<6x256xf32, #tpu.memory_space<vmem>>, vector<1x256xf32>
    %cst_7 = arith.constant dense<0.000000e+00> : vector<256xf32>
    %9 = vector.multi_reduction <add>, %6, %cst_7 [1] : vector<256x256xf32> to vector<256xf32>
    %10 = vector.shape_cast %9 : vector<256xf32> to vector<256x1xf32>
    %cst_8 = arith.constant 2.560000e+02 : f32
    %11 = vector.broadcast %cst_8 : f32 to vector<256x1xf32>
    %12 = arith.divf %10, %11 : vector<256x1xf32>
    %13 = vector.broadcast %12 : vector<256x1xf32> to vector<256x256xf32>
    %14 = arith.subf %6, %13 : vector<256x256xf32>
    %15 = arith.mulf %14, %14 : vector<256x256xf32>
    %cst_9 = arith.constant dense<0.000000e+00> : vector<256xf32>
    %16 = vector.multi_reduction <add>, %15, %cst_9 [1] : vector<256x256xf32> to vector<256xf32>
    %17 = vector.shape_cast %16 : vector<256xf32> to vector<256x1xf32>
    %cst_10 = arith.constant 2.560000e+02 : f32
    %18 = vector.broadcast %cst_10 : f32 to vector<256x1xf32>
    %19 = arith.divf %17, %18 : vector<256x1xf32>
    %cst_11 = arith.constant 9.99999974E-6 : f32
    %20 = vector.broadcast %cst_11 : f32 to vector<256x1xf32>
    %21 = arith.addf %19, %20 : vector<256x1xf32>
    %22 = math.rsqrt %21 : vector<256x1xf32>
    %23 = vector.broadcast %12 : vector<256x1xf32> to vector<256x256xf32>
    %24 = arith.subf %6, %23 : vector<256x256xf32>
    %25 = vector.broadcast %22 : vector<256x1xf32> to vector<256x256xf32>
    %26 = vector.broadcast %7 : vector<1x256xf32> to vector<256x256xf32>
    %27 = arith.mulf %25, %26 : vector<256x256xf32>
    %28 = arith.mulf %24, %27 : vector<256x256xf32>
    %29 = vector.broadcast %8 : vector<1x256xf32> to vector<256x256xf32>
    %30 = arith.addf %28, %29 : vector<256x256xf32>
    %cst_12 = arith.constant 0.000000e+00 : f32
    %31 = vector.broadcast %cst_12 : f32 to vector<256x256xf32>
    %32 = arith.maximumf %30, %31 : vector<256x256xf32>
    %33 = arith.truncf %32 : vector<256x256xf32> to vector<256x256xbf16>
    %c0_13 = arith.constant 0 : index
    %c0_14 = arith.constant 0 : index
    %34 = vector.load %arg3[%c0_13, %c0_14] : memref<256x256xbf16, #tpu.memory_space<vmem>>, vector<256x256xbf16>
    %cst_15 = arith.constant dense<0.000000e+00> : vector<256x256xf32>
    %35 = tpu.matmul %33, %34, %cst_15 {dimension_numbers = #tpu.dot_dimension_numbers<[1], [0], [0], [1], [0, 0, 1, 1], [], []>} : vector<256x256xbf16>, vector<256x256xbf16>, vector<256x256xf32> -> vector<256x256xf32>
    %c3 = arith.constant 3 : index
    %c0_16 = arith.constant 0 : index
    %36 = vector.load %arg5[%c3, %c0_16] : memref<6x256xf32, #tpu.memory_space<vmem>>, vector<1x256xf32>
    %37 = vector.broadcast %36 : vector<1x256xf32> to vector<256x256xf32>
    %38 = arith.addf %35, %37 : vector<256x256xf32>
    %c4 = arith.constant 4 : index
    %c0_17 = arith.constant 0 : index
    %39 = vector.load %arg5[%c4, %c0_17] : memref<6x256xf32, #tpu.memory_space<vmem>>, vector<1x256xf32>
    %c5 = arith.constant 5 : index
    %c0_18 = arith.constant 0 : index
    %40 = vector.load %arg5[%c5, %c0_18] : memref<6x256xf32, #tpu.memory_space<vmem>>, vector<1x256xf32>
    %cst_19 = arith.constant dense<0.000000e+00> : vector<256xf32>
    %41 = vector.multi_reduction <add>, %38, %cst_19 [1] : vector<256x256xf32> to vector<256xf32>
    %42 = vector.shape_cast %41 : vector<256xf32> to vector<256x1xf32>
    %cst_20 = arith.constant 2.560000e+02 : f32
    %43 = vector.broadcast %cst_20 : f32 to vector<256x1xf32>
    %44 = arith.divf %42, %43 : vector<256x1xf32>
    %45 = vector.broadcast %44 : vector<256x1xf32> to vector<256x256xf32>
    %46 = arith.subf %38, %45 : vector<256x256xf32>
    %47 = arith.mulf %46, %46 : vector<256x256xf32>
    %cst_21 = arith.constant dense<0.000000e+00> : vector<256xf32>
    %48 = vector.multi_reduction <add>, %47, %cst_21 [1] : vector<256x256xf32> to vector<256xf32>
    %49 = vector.shape_cast %48 : vector<256xf32> to vector<256x1xf32>
    %cst_22 = arith.constant 2.560000e+02 : f32
    %50 = vector.broadcast %cst_22 : f32 to vector<256x1xf32>
    %51 = arith.divf %49, %50 : vector<256x1xf32>
    %cst_23 = arith.constant 9.99999974E-6 : f32
    %52 = vector.broadcast %cst_23 : f32 to vector<256x1xf32>
    %53 = arith.addf %51, %52 : vector<256x1xf32>
    %54 = math.rsqrt %53 : vector<256x1xf32>
    %55 = vector.broadcast %44 : vector<256x1xf32> to vector<256x256xf32>
    %56 = arith.subf %38, %55 : vector<256x256xf32>
    %57 = vector.broadcast %54 : vector<256x1xf32> to vector<256x256xf32>
    %58 = vector.broadcast %39 : vector<1x256xf32> to vector<256x256xf32>
    %59 = arith.mulf %57, %58 : vector<256x256xf32>
    %60 = arith.mulf %56, %59 : vector<256x256xf32>
    %61 = vector.broadcast %40 : vector<1x256xf32> to vector<256x256xf32>
    %62 = arith.addf %60, %61 : vector<256x256xf32>
    %cst_24 = arith.constant 0.000000e+00 : f32
    %63 = vector.broadcast %cst_24 : f32 to vector<256x256xf32>
    %64 = arith.maximumf %62, %63 : vector<256x256xf32>
    %65 = arith.truncf %64 : vector<256x256xf32> to vector<256x256xbf16>
    %c0_25 = arith.constant 0 : index
    %c0_26 = arith.constant 0 : index
    %66 = vector.load %arg4[%c0_25, %c0_26] : memref<256x512xbf16, #tpu.memory_space<vmem>>, vector<256x512xbf16>
    %cst_27 = arith.constant dense<0.000000e+00> : vector<256x512xf32>
    %67 = tpu.matmul %65, %66, %cst_27 {dimension_numbers = #tpu.dot_dimension_numbers<[1], [0], [0], [1], [0, 0, 1, 1], [], []>} : vector<256x256xbf16>, vector<256x512xbf16>, vector<256x512xf32> -> vector<256x512xf32>
    %c0_28 = arith.constant 0 : index
    %c0_29 = arith.constant 0 : index
    %68 = vector.load %arg6[%c0_28, %c0_29] : memref<6x512xf32, #tpu.memory_space<vmem>>, vector<1x512xf32>
    %69 = vector.broadcast %68 : vector<1x512xf32> to vector<256x512xf32>
    %70 = arith.addf %67, %69 : vector<256x512xf32>
    %c1_30 = arith.constant 1 : index
    %c0_31 = arith.constant 0 : index
    %71 = vector.load %arg6[%c1_30, %c0_31] : memref<6x512xf32, #tpu.memory_space<vmem>>, vector<1x512xf32>
    %c2_32 = arith.constant 2 : index
    %c0_33 = arith.constant 0 : index
    %72 = vector.load %arg6[%c2_32, %c0_33] : memref<6x512xf32, #tpu.memory_space<vmem>>, vector<1x512xf32>
    %cst_34 = arith.constant dense<0.000000e+00> : vector<256xf32>
    %73 = vector.multi_reduction <add>, %70, %cst_34 [1] : vector<256x512xf32> to vector<256xf32>
    %74 = vector.shape_cast %73 : vector<256xf32> to vector<256x1xf32>
    %cst_35 = arith.constant 5.120000e+02 : f32
    %75 = vector.broadcast %cst_35 : f32 to vector<256x1xf32>
    %76 = arith.divf %74, %75 : vector<256x1xf32>
    %77 = vector.broadcast %76 : vector<256x1xf32> to vector<256x512xf32>
    %78 = arith.subf %70, %77 : vector<256x512xf32>
    %79 = arith.mulf %78, %78 : vector<256x512xf32>
    %cst_36 = arith.constant dense<0.000000e+00> : vector<256xf32>
    %80 = vector.multi_reduction <add>, %79, %cst_36 [1] : vector<256x512xf32> to vector<256xf32>
    %81 = vector.shape_cast %80 : vector<256xf32> to vector<256x1xf32>
    %cst_37 = arith.constant 5.120000e+02 : f32
    %82 = vector.broadcast %cst_37 : f32 to vector<256x1xf32>
    %83 = arith.divf %81, %82 : vector<256x1xf32>
    %cst_38 = arith.constant 9.99999974E-6 : f32
    %84 = vector.broadcast %cst_38 : f32 to vector<256x1xf32>
    %85 = arith.addf %83, %84 : vector<256x1xf32>
    %86 = math.rsqrt %85 : vector<256x1xf32>
    %87 = vector.broadcast %76 : vector<256x1xf32> to vector<256x512xf32>
    %88 = arith.subf %70, %87 : vector<256x512xf32>
    %89 = vector.broadcast %86 : vector<256x1xf32> to vector<256x512xf32>
    %90 = vector.broadcast %71 : vector<1x512xf32> to vector<256x512xf32>
    %91 = arith.mulf %89, %90 : vector<256x512xf32>
    %92 = arith.mulf %88, %91 : vector<256x512xf32>
    %93 = vector.broadcast %72 : vector<1x512xf32> to vector<256x512xf32>
    %94 = arith.addf %92, %93 : vector<256x512xf32>
    %c0_39 = arith.constant 0 : index
    %c0_40 = arith.constant 0 : index
    %95 = vector.load %arg7[%c0_39, %c0_40] : memref<1024x512xbf16, #tpu.memory_space<vmem>>, vector<1024x512xbf16>
    %cst_41 = arith.constant dense<0.000000e+00> : vector<256x512xf32>
    %96 = tpu.matmul %1, %95, %cst_41 {dimension_numbers = #tpu.dot_dimension_numbers<[1], [0], [0], [1], [0, 0, 1, 1], [], []>} : vector<256x1024xbf16>, vector<1024x512xbf16>, vector<256x512xf32> -> vector<256x512xf32>
    %c3_42 = arith.constant 3 : index
    %c0_43 = arith.constant 0 : index
    %97 = vector.load %arg6[%c3_42, %c0_43] : memref<6x512xf32, #tpu.memory_space<vmem>>, vector<1x512xf32>
    %98 = vector.broadcast %97 : vector<1x512xf32> to vector<256x512xf32>
    %99 = arith.addf %96, %98 : vector<256x512xf32>
    %c4_44 = arith.constant 4 : index
    %c0_45 = arith.constant 0 : index
    %100 = vector.load %arg6[%c4_44, %c0_45] : memref<6x512xf32, #tpu.memory_space<vmem>>, vector<1x512xf32>
    %c5_46 = arith.constant 5 : index
    %c0_47 = arith.constant 0 : index
    %101 = vector.load %arg6[%c5_46, %c0_47] : memref<6x512xf32, #tpu.memory_space<vmem>>, vector<1x512xf32>
    %cst_48 = arith.constant dense<0.000000e+00> : vector<256xf32>
    %102 = vector.multi_reduction <add>, %99, %cst_48 [1] : vector<256x512xf32> to vector<256xf32>
    %103 = vector.shape_cast %102 : vector<256xf32> to vector<256x1xf32>
    %cst_49 = arith.constant 5.120000e+02 : f32
    %104 = vector.broadcast %cst_49 : f32 to vector<256x1xf32>
    %105 = arith.divf %103, %104 : vector<256x1xf32>
    %106 = vector.broadcast %105 : vector<256x1xf32> to vector<256x512xf32>
    %107 = arith.subf %99, %106 : vector<256x512xf32>
    %108 = arith.mulf %107, %107 : vector<256x512xf32>
    %cst_50 = arith.constant dense<0.000000e+00> : vector<256xf32>
    %109 = vector.multi_reduction <add>, %108, %cst_50 [1] : vector<256x512xf32> to vector<256xf32>
    %110 = vector.shape_cast %109 : vector<256xf32> to vector<256x1xf32>
    %cst_51 = arith.constant 5.120000e+02 : f32
    %111 = vector.broadcast %cst_51 : f32 to vector<256x1xf32>
    %112 = arith.divf %110, %111 : vector<256x1xf32>
    %cst_52 = arith.constant 9.99999974E-6 : f32
    %113 = vector.broadcast %cst_52 : f32 to vector<256x1xf32>
    %114 = arith.addf %112, %113 : vector<256x1xf32>
    %115 = math.rsqrt %114 : vector<256x1xf32>
    %116 = vector.broadcast %105 : vector<256x1xf32> to vector<256x512xf32>
    %117 = arith.subf %99, %116 : vector<256x512xf32>
    %118 = vector.broadcast %115 : vector<256x1xf32> to vector<256x512xf32>
    %119 = vector.broadcast %100 : vector<1x512xf32> to vector<256x512xf32>
    %120 = arith.mulf %118, %119 : vector<256x512xf32>
    %121 = arith.mulf %117, %120 : vector<256x512xf32>
    %122 = vector.broadcast %101 : vector<1x512xf32> to vector<256x512xf32>
    %123 = arith.addf %121, %122 : vector<256x512xf32>
    %124 = arith.addf %94, %123 : vector<256x512xf32>
    %cst_53 = arith.constant 0.000000e+00 : f32
    %125 = vector.broadcast %cst_53 : f32 to vector<256x512xf32>
    %126 = arith.maximumf %124, %125 : vector<256x512xf32>
    %127 = arith.truncf %126 : vector<256x512xf32> to vector<256x512xbf16>
    %c0_54 = arith.constant 0 : index
    %c0_55 = arith.constant 0 : index
    %128 = vector.load %arg8[%c0_54, %c0_55] : memref<256x512xbf16, #tpu.memory_space<vmem>>, vector<256x512xbf16>
    tpu.vector_store %arg8[%c0_54, %c0_55], %127 {strides = array<i32>} : memref<256x512xbf16, #tpu.memory_space<vmem>>, vector<256x512xbf16>,
    return
  }
  func.func @transform_0(%arg0: i32) -> (i32, i32) {
    %c0_i32 = arith.constant 0 : i32
    %c0_i32_0 = arith.constant 0 : i32
    return %arg0, %c0_i32 : i32, i32
  }
  func.func @transform_1(%arg0: i32) -> (i32, i32) {
    %c0_i32 = arith.constant 0 : i32
    %c0_i32_0 = arith.constant 0 : i32
    %c0_i32_1 = arith.constant 0 : i32
    return %c0_i32, %c0_i32_0 : i32, i32
  }
  func.func @transform_2(%arg0: i32) -> (i32, i32) {
    %c0_i32 = arith.constant 0 : i32
    %c0_i32_0 = arith.constant 0 : i32
    %c0_i32_1 = arith.constant 0 : i32
    return %c0_i32, %c0_i32_0 : i32, i32
  }
  func.func @transform_3(%arg0: i32) -> (i32, i32) {
    %c0_i32 = arith.constant 0 : i32
    %c0_i32_0 = arith.constant 0 : i32
    %c0_i32_1 = arith.constant 0 : i32
    return %c0_i32, %c0_i32_0 : i32, i32
  }
  func.func @transform_4(%arg0: i32) -> (i32, i32) {
    %c0_i32 = arith.constant 0 : i32
    %c0_i32_0 = arith.constant 0 : i32
    %c0_i32_1 = arith.constant 0 : i32
    return %c0_i32, %c0_i32_0 : i32, i32
  }
  func.func @transform_5(%arg0: i32) -> (i32, i32) {
    %c0_i32 = arith.constant 0 : i32
    %c0_i32_0 = arith.constant 0 : i32
    %c0_i32_1 = arith.constant 0 : i32
    return %c0_i32, %c0_i32_0 : i32, i32
  }
  func.func @transform_6(%arg0: i32) -> (i32, i32) {
    %c0_i32 = arith.constant 0 : i32
    %c0_i32_0 = arith.constant 0 : i32
    %c0_i32_1 = arith.constant 0 : i32
    return %c0_i32, %c0_i32_0 : i32, i32
  }
  func.func @transform_7(%arg0: i32) -> (i32, i32) {
    %c0_i32 = arith.constant 0 : i32
    %c0_i32_0 = arith.constant 0 : i32
    return %arg0, %c0_i32 : i32, i32
  }
}

</mosaic_0001>

<llo_original>
// kernel: tpu_custom_call.1
$region0: #{tpu_custom_call.1}
  #allocation0 [shape = 'u32[]', space=smem, size = 0x4, offset = 0x4, fixed_abs, tag = 'smem constant byte address 0x4 - core index']
  #allocation1 [shape = 'u32[144,128]{1,0:T(1,128)}', space=vmem, size = 0x12000, scoped, tag = 'internal scratch']
  %s0 = inlined_call_operand.hbm [shape: f32[1024,1024], index: 0, kind: input, shape index: {}]
  %s1 = inlined_call_operand.hbm [shape: bf16[1024,256], index: 1, kind: input, shape index: {}]
  %s2 = inlined_call_operand.hbm [shape: bf16[256,256], index: 2, kind: input, shape index: {}]
  %s3 = inlined_call_operand.hbm [shape: bf16[256,512], index: 3, kind: input, shape index: {}]
  %s4 = inlined_call_operand.hbm [shape: f32[6,256], index: 4, kind: input, shape index: {}]
  %s5 = inlined_call_operand.hbm [shape: f32[6,512], index: 5, kind: input, shape index: {}]
  %s6 = inlined_call_operand.hbm [shape: bf16[1024,512], index: 6, kind: input, shape index: {}]
  %s7 = inlined_call_operand.hbm [shape: bf16[1024,512], index: 7, kind: output, shape index: {}]
  %s8 = sld [smem:[#allocation0]]
  $region89: #{tpu_custom_call.1} parent=0
    _
  %s10 = ssub.s32 1, %s8
  %s11 = scalar_select 0, %s10, %s8
  $region1: #{tpu_custom_call.1} parent=0
    #allocation2 [shape = 'u8[2097152]{0}', space=vmem, size = 0x200000, scoped, tag = 'input window, operand 0']
    #allocation3 [shape = 's32[2]{0}', space=sflag, size = 0x8, scoped, tag = 'scoped memory for tpu_custom_call.1']
    #allocation4 [shape = 's32[2]{0}', space=sflag, size = 0x8, scoped, tag = 'scoped memory for tpu_custom_call.1']
    #allocation5 [shape = 'u8[524288]{0}', space=vmem, size = 0x80000, scoped, tag = 'input window, operand 1, single buffered']
    #allocation6 [shape = 's32[1]{0}', space=sflag, size = 0x4, scoped, tag = 'scoped memory for tpu_custom_call.1']
    #allocation7 [shape = 'u8[131072]{0}', space=vmem, size = 0x20000, scoped, tag = 'input window, operand 2, single buffered']
    #allocation8 [shape = 'u8[262144]{0}', space=vmem, size = 0x40000, scoped, tag = 'input window, operand 3, single buffered']
    #allocation9 [shape = 's32[1]{0}', space=sflag, size = 0x4, scoped, tag = 'scoped memory for tpu_custom_call.1']
    #allocation10 [shape = 'u8[8192]{0}', space=vmem, size = 0x2000, scoped, tag = 'input window, operand 4, single buffered']
    #allocation11 [shape = 'u8[16384]{0}', space=vmem, size = 0x4000, scoped, tag = 'input window, operand 5, single buffered']
    #allocation12 [shape = 's32[1]{0}', space=sflag, size = 0x4, scoped, tag = 'scoped memory for tpu_custom_call.1']
    #allocation13 [shape = 'u8[1048576]{0}', space=vmem, size = 0x100000, scoped, tag = 'input window, operand 6, single buffered']
    #allocation14 [shape = 'u8[524288]{0}', space=vmem, size = 0x80000, scoped, tag = 'output window, operand 0']
    %12 = vsyncpa [#allocation3], 0
    %s13 = scalar_lea.sflag [#allocation3], 1
    %14 = vsyncpa %s13, 0
    %15 = vsyncpa [#allocation6], 0
    %16 = vsyncpa [#allocation9], 0
    %17 = vsyncpa [#allocation12], 0
    %18 = vsyncpa [#allocation4], 0
    %s19 = scalar_lea.sflag [#allocation4], 1
    %20 = vsyncpa %s19, 0
    loop: start=0, step=1, limit=6
    $region2: #{tpu_custom_call.1} parent=1 // loop_pre_header
      _
    $region3: #{tpu_custom_call.1} parent=1 // loop_header
      %s22 = sphi 0, %s26
      %p23 = scmp.ge.s32.totalorder %s22, 6
      %s32 = sphi 0, %s34
      %s35 = sphi 0, %s32
      %s36 = sphi 0, %s35
      %s52 = sphi 0, %s36
      %s56 = sphi 0, %s56
      %s58 = sphi 0, %s56
      %s59 = sphi 0, %s58
      %s73 = sphi 0, %s59
      %s77 = sphi 0, %s77
      %s79 = sphi 0, %s77
      %s80 = sphi 0, %s79
      %s94 = sphi 0, %s80
      %s98 = sphi 0, %s98
      %s100 = sphi 0, %s98
      %s101 = sphi 0, %s100
      %s115 = sphi 0, %s101
      %s119 = sphi 0, %s119
      %s121 = sphi 0, %s119
      %s122 = sphi 0, %s121
      %s136 = sphi 0, %s122
      %s140 = sphi 0, %s140
      %s142 = sphi 0, %s140
      %s143 = sphi 0, %s142
      %s157 = sphi 0, %s143
      %s161 = sphi 0, %s161
      %s163 = sphi 0, %s161
      %s164 = sphi 0, %s163
      %s178 = sphi 0, %s164
      %s184 = sphi 0, %s186
      %s187 = sphi 0, %s184
      %s188 = sphi 0, %s187
      %s204 = sphi 0, %s188
    $region4: #{tpu_custom_call.1} parent=1 // loop_header_branch
      %25 = sbr.rel (%p23) target = $region8
    $region5: #{tpu_custom_call.1} parent=1 // loop_body
      %s27 = ssub.s32 %s22, 1
      %s28 = ssub.s32 %s22, 2
      %s29 = sadd.s32 %s22, 1
      %s30 = ssub.s32 %s22, %s29
      %p31 = scmp.eq.s32.totalorder %s30, 0
      %s33 = sadd.s32 %s32, 1
      %s34 = scalar_select %p31, %s32, %s33
      %p37 = pneg %p31
      %p38 = scmp.eq.s32.totalorder %s22, 3
      %p39 = por %p37, %p38
      %p40 = scmp.ne.s32.totalorder %s32, %s35
      %p41 = scmp.eq.s32.totalorder %s22, 0
      %p42 = por %p40, %p41
      %p43 = scmp.ne.s32.totalorder %s32, %s35
      %p44 = scmp.eq.s32.totalorder %s27, 3
      %p45 = por %p43, %p44
      %p46 = scmp.ne.s32.totalorder %s35, %s36
      %p47 = scmp.eq.s32.totalorder %s27, 0
      %p48 = por %p46, %p47
      %p49 = scmp.ne.s32.totalorder %s35, %s36
      %p50 = scmp.eq.s32.totalorder %s28, 3
      %p51 = por %p49, %p50
      %p53 = scmp.ne.s32.totalorder %s36, %s52
      %p54 = scmp.eq.s32.totalorder %s28, 0
      %p55 = por %p53, %p54
      %s57 = sadd.s32 %s56, 1
      %p60 = scmp.eq.s32.totalorder %s22, 3
      %p61 = scmp.ne.s32.totalorder %s56, %s58
      %p62 = scmp.eq.s32.totalorder %s22, 0
      %p63 = por %p61, %p62
      %p64 = scmp.ne.s32.totalorder %s56, %s58
      %p65 = scmp.eq.s32.totalorder %s27, 3
      %p66 = por %p64, %p65
      %p67 = scmp.ne.s32.totalorder %s58, %s59
      %p68 = scmp.eq.s32.totalorder %s27, 0
      %p69 = por %p67, %p68
      %p70 = scmp.ne.s32.totalorder %s58, %s59
      %p71 = scmp.eq.s32.totalorder %s28, 3
      %p72 = por %p70, %p71
      %p74 = scmp.ne.s32.totalorder %s59, %s73
      %p75 = scmp.eq.s32.totalorder %s28, 0
      %p76 = por %p74, %p75
      %s78 = sadd.s32 %s77, 1
      %p81 = scmp.eq.s32.totalorder %s22, 3
      %p82 = scmp.ne.s32.totalorder %s77, %s79
      %p83 = scmp.eq.s32.totalorder %s22, 0
      %p84 = por %p82, %p83
      %p85 = scmp.ne.s32.totalorder %s77, %s79
      %p86 = scmp.eq.s32.totalorder %s27, 3
      %p87 = por %p85, %p86
      %p88 = scmp.ne.s32.totalorder %s79, %s80
      %p89 = scmp.eq.s32.totalorder %s27, 0
      %p90 = por %p88, %p89
      %p91 = scmp.ne.s32.totalorder %s79, %s80
      %p92 = scmp.eq.s32.totalorder %s28, 3
      %p93 = por %p91, %p92
      %p95 = scmp.ne.s32.totalorder %s80, %s94
      %p96 = scmp.eq.s32.totalorder %s28, 0
      %p97 = por %p95, %p96
      %s99 = sadd.s32 %s98, 1
      %p102 = scmp.eq.s32.totalorder %s22, 3
      %p103 = scmp.ne.s32.totalorder %s98, %s100
      %p104 = scmp.eq.s32.totalorder %s22, 0
      %p105 = por %p103, %p104
      %p106 = scmp.ne.s32.totalorder %s98, %s100
      %p107 = scmp.eq.s32.totalorder %s27, 3
      %p108 = por %p106, %p107
      %p109 = scmp.ne.s32.totalorder %s100, %s101
      %p110 = scmp.eq.s32.totalorder %s27, 0
      %p111 = por %p109, %p110
      %p112 = scmp.ne.s32.totalorder %s100, %s101
      %p113 = scmp.eq.s32.totalorder %s28, 3
      %p114 = por %p112, %p113
      %p116 = scmp.ne.s32.totalorder %s101, %s115
      %p117 = scmp.eq.s32.totalorder %s28, 0
      %p118 = por %p116, %p117
      %s120 = sadd.s32 %s119, 1
      %p123 = scmp.eq.s32.totalorder %s22, 3
      %p124 = scmp.ne.s32.totalorder %s119, %s121
      %p125 = scmp.eq.s32.totalorder %s22, 0
      %p126 = por %p124, %p125
      %p127 = scmp.ne.s32.totalorder %s119, %s121
      %p128 = scmp.eq.s32.totalorder %s27, 3
      %p129 = por %p127, %p128
      %p130 = scmp.ne.s32.totalorder %s121, %s122
      %p131 = scmp.eq.s32.totalorder %s27, 0
      %p132 = por %p130, %p131
      %p133 = scmp.ne.s32.totalorder %s121, %s122
      %p134 = scmp.eq.s32.totalorder %s28, 3
      %p135 = por %p133, %p134
      %p137 = scmp.ne.s32.totalorder %s122, %s136
      %p138 = scmp.eq.s32.totalorder %s28, 0
      %p139 = por %p137, %p138
      %s141 = sadd.s32 %s140, 1
      %p144 = scmp.eq.s32.totalorder %s22, 3
      %p145 = scmp.ne.s32.totalorder %s140, %s142
      %p146 = scmp.eq.s32.totalorder %s22, 0
      %p147 = por %p145, %p146
      %p148 = scmp.ne.s32.totalorder %s140, %s142
      %p149 = scmp.eq.s32.totalorder %s27, 3
      %p150 = por %p148, %p149
      %p151 = scmp.ne.s32.totalorder %s142, %s143
      %p152 = scmp.eq.s32.totalorder %s27, 0
      %p153 = por %p151, %p152
      %p154 = scmp.ne.s32.totalorder %s142, %s143
      %p155 = scmp.eq.s32.totalorder %s28, 3
      %p156 = por %p154, %p155
      %p158 = scmp.ne.s32.totalorder %s143, %s157
      %p159 = scmp.eq.s32.totalorder %s28, 0
      %p160 = por %p158, %p159
      %s162 = sadd.s32 %s161, 1
      %p165 = scmp.eq.s32.totalorder %s22, 3
      %p166 = scmp.ne.s32.totalorder %s161, %s163
      %p167 = scmp.eq.s32.totalorder %s22, 0
      %p168 = por %p166, %p167
      %p169 = scmp.ne.s32.totalorder %s161, %s163
      %p170 = scmp.eq.s32.totalorder %s27, 3
      %p171 = por %p169, %p170
      %p172 = scmp.ne.s32.totalorder %s163, %s164
      %p173 = scmp.eq.s32.totalorder %s27, 0
      %p174 = por %p172, %p173
      %p175 = scmp.ne.s32.totalorder %s163, %s164
      %p176 = scmp.eq.s32.totalorder %s28, 3
      %p177 = por %p175, %p176
      %p179 = scmp.ne.s32.totalorder %s164, %s178
      %p180 = scmp.eq.s32.totalorder %s28, 0
      %p181 = por %p179, %p180
      %s182 = ssub.s32 %s22, %s29
      %p183 = scmp.eq.s32.totalorder %s182, 0
      %s185 = sadd.s32 %s184, 1
      %s186 = scalar_select %p183, %s184, %s185
      %p189 = pneg %p183
      %p190 = scmp.eq.s32.totalorder %s22, 3
      %p191 = por %p189, %p190
      %p192 = scmp.ne.s32.totalorder %s184, %s187
      %p193 = scmp.eq.s32.totalorder %s22, 0
      %p194 = por %p192, %p193
      %p195 = scmp.ne.s32.totalorder %s184, %s187
      %p196 = scmp.eq.s32.totalorder %s27, 3
      %p197 = por %p195, %p196
      %p198 = scmp.ne.s32.totalorder %s187, %s188
      %p199 = scmp.eq.s32.totalorder %s27, 0
      %p200 = por %p198, %p199
      %p201 = scmp.ne.s32.totalorder %s187, %s188
      %p202 = scmp.eq.s32.totalorder %s28, 3
      %p203 = por %p201, %p202
      %p205 = scmp.ne.s32.totalorder %s188, %s204
      %p206 = scmp.eq.s32.totalorder %s28, 0
      %p207 = por %p205, %p206
      %p208 = scmp.le.s32.totalorder 1, %s22
      %p209 = scmp.lt.s32.totalorder %s22, 5
      %p210 = pnand %p208, %p209
      %p211 = pneg %p210
      // Predicated region
      $region9: #{tpu_custom_call.1} parent=5 // pred_check
        _
      $region10: #{tpu_custom_call.1} parent=5 // pred_check_branch
        %213 = sbr.rel (%p210) target = $region12
      $region11: #{tpu_custom_call.1} parent=5 // pred_region
        %s214 = ssub.s32 %s22, 1
        // Predicated region
        $region13: #{tpu_custom_call.1} parent=11 // pred_check
          %p215 = pneg %p69
        $region14: #{tpu_custom_call.1} parent=11 // pred_check_branch
          %217 = sbr.rel (%p215) target = $region16
        $region15: #{tpu_custom_call.1} parent=11 // pred_region
          %s219 = ssub.s32 16384, 16384
          %220 = vsyncadd [#allocation6], %s219
          %s221 = sshll.u32 [#allocation5], 4
          %s222 = int_to_ptr.vmem [resolvable:$true] %s221
          %227 = dma.hbm_to_vmem [thread:$0]  %s1, 16384, %s222, [#allocation6], 128, 128, 8
        $region16: #{tpu_custom_call.1} parent=11 // pred_fallthru
          _
        // Predicated region
        $region17: #{tpu_custom_call.1} parent=11 // pred_check
          %p228 = pneg %p90
        $region18: #{tpu_custom_call.1} parent=11 // pred_check_branch
          %230 = sbr.rel (%p228) target = $region20
        $region19: #{tpu_custom_call.1} parent=11 // pred_region
          %s232 = ssub.s32 4096, 4096
          %233 = vsyncadd [#allocation6], %s232
          %s234 = sshll.u32 [#allocation7], 4
          %s235 = int_to_ptr.vmem [resolvable:$true] %s234
          %240 = dma.hbm_to_vmem [thread:$0]  %s2, 4096, %s235, [#allocation6], 128, 128, 8
        $region20: #{tpu_custom_call.1} parent=11 // pred_fallthru
          _
        // Predicated region
        $region21: #{tpu_custom_call.1} parent=11 // pred_check
          %p241 = pneg %p111
        $region22: #{tpu_custom_call.1} parent=11 // pred_check_branch
          %243 = sbr.rel (%p241) target = $region24
        $region23: #{tpu_custom_call.1} parent=11 // pred_region
          %s245 = ssub.s32 8192, 8192
          %246 = vsyncadd [#allocation9], %s245
          %s247 = sshll.u32 [#allocation8], 4
          %s248 = int_to_ptr.vmem [resolvable:$true] %s247
          %253 = dma.hbm_to_vmem [thread:$0]  %s3, 8192, %s248, [#allocation9], 256, 256, 16
        $region24: #{tpu_custom_call.1} parent=11 // pred_fallthru
          _
        // Predicated region
        $region25: #{tpu_custom_call.1} parent=11 // pred_check
          %p254 = pneg %p132
        $region26: #{tpu_custom_call.1} parent=11 // pred_check_branch
          %256 = sbr.rel (%p254) target = $region28
        $region27: #{tpu_custom_call.1} parent=11 // pred_region
          %s258 = ssub.s32 256, 256
          %259 = vsyncadd [#allocation9], %s258
          %s261 = sshll.u32 [#allocation10], 4
          %s262 = int_to_ptr.vmem [resolvable:$true] %s261
          %264 = dma.hbm_to_vmem [thread:$0]  %s4, 256, %s262, [#allocation9]
        $region28: #{tpu_custom_call.1} parent=11 // pred_fallthru
          _
        // Predicated region
        $region29: #{tpu_custom_call.1} parent=11 // pred_check
          %p265 = pneg %p153
        $region30: #{tpu_custom_call.1} parent=11 // pred_check_branch
          %267 = sbr.rel (%p265) target = $region32
        $region31: #{tpu_custom_call.1} parent=11 // pred_region
          %s269 = ssub.s32 512, 512
          %270 = vsyncadd [#allocation12], %s269
          %s272 = sshll.u32 [#allocation11], 4
          %s273 = int_to_ptr.vmem [resolvable:$true] %s272
          %275 = dma.hbm_to_vmem [thread:$0]  %s5, 512, %s273, [#allocation12]
        $region32: #{tpu_custom_call.1} parent=11 // pred_fallthru
          _
        // Predicated region
        $region33: #{tpu_custom_call.1} parent=11 // pred_check
          %p276 = pneg %p174
        $region34: #{tpu_custom_call.1} parent=11 // pred_check_branch
          %278 = sbr.rel (%p276) target = $region36
        $region35: #{tpu_custom_call.1} parent=11 // pred_region
          %s280 = ssub.s32 32768, 32768
          %281 = vsyncadd [#allocation12], %s280
          %s282 = sshll.u32 [#allocation13], 4
          %s283 = int_to_ptr.vmem [resolvable:$true] %s282
          %288 = dma.hbm_to_vmem [thread:$0]  %s6, 32768, %s283, [#allocation12], 256, 256, 16
        $region36: #{tpu_custom_call.1} parent=11 // pred_fallthru
          _
      $region12: #{tpu_custom_call.1} parent=5 // pred_fallthru
        _
      %p289 = scmp.lt.s32.totalorder %s22, 4
      // Predicated region
      $region37: #{tpu_custom_call.1} parent=5 // pred_check
        %p290 = pneg %p289
      $region38: #{tpu_custom_call.1} parent=5 // pred_check_branch
        %292 = sbr.rel (%p290) target = $region40
      $region39: #{tpu_custom_call.1} parent=5 // pred_region
        // Predicated region
        $region41: #{tpu_custom_call.1} parent=39 // pred_check
          %p293 = pneg %p42
        $region42: #{tpu_custom_call.1} parent=39 // pred_check_branch
          %295 = sbr.rel (%p293) target = $region44
        $region43: #{tpu_custom_call.1} parent=39 // pred_region
          %s296 = sand.u32 %s32, 1
          %s297 = scalar_lea.sflag [#allocation3], %s296
          %s298 = sand.u32 %s32, 1
          %s299 = smul.addr %s298, 2048
          %s300 = scalar_lea.vmem [#allocation2], %s299
          %s301 = smul.u32 32, %s22
          %s303 = ssub.s32 32768, 32768
          %304 = vsyncadd %s297, %s303
          %s305 = smul.addr %s301, 8
          %s306 = smul.addr %s305, 128
          %s307 = scalar_lea.hbm %s0, %s306
          %s308 = sshll.u32 %s300, 4
          %s309 = int_to_ptr.vmem [resolvable:$true] %s308
          %314 = dma.hbm_to_vmem [thread:$0]  %s307, 32768, %s309, %s297, 1024, 1024, 64
        $region44: #{tpu_custom_call.1} parent=39 // pred_fallthru
          _
      $region40: #{tpu_custom_call.1} parent=5 // pred_fallthru
        _
      %p315 = scmp.le.s32.totalorder 1, %s22
      %p316 = scmp.lt.s32.totalorder %s22, 5
      %p317 = pnand %p315, %p316
      %p318 = pneg %p317
      // Predicated region
      $region45: #{tpu_custom_call.1} parent=5 // pred_check
        _
      $region46: #{tpu_custom_call.1} parent=5 // pred_check_branch
        %320 = sbr.rel (%p317) target = $region48
      $region47: #{tpu_custom_call.1} parent=5 // pred_region
        %s321 = ssub.s32 %s22, 1
        %s322 = sand.u32 %s35, 1
        %s323 = scalar_lea.sflag [#allocation3], %s322
        %s324 = sand.u32 %s35, 1
        %s325 = smul.addr %s324, 2048
        %s326 = scalar_lea.vmem [#allocation2], %s325
        // Predicated region
        $region49: #{tpu_custom_call.1} parent=47 // pred_check
          %p327 = pneg %p48
        $region50: #{tpu_custom_call.1} parent=47 // pred_check_branch
          %329 = sbr.rel (%p327) target = $region52
        $region51: #{tpu_custom_call.1} parent=47 // pred_region
          %330 = dma.done %s323, 32768
        $region52: #{tpu_custom_call.1} parent=47 // pred_fallthru
          _
        // Predicated region
        $region53: #{tpu_custom_call.1} parent=47 // pred_check
          %p331 = pneg %p69
        $region54: #{tpu_custom_call.1} parent=47 // pred_check_branch
          %333 = sbr.rel (%p331) target = $region56
        $region55: #{tpu_custom_call.1} parent=47 // pred_region
          %334 = dma.done [#allocation6], 16384
        $region56: #{tpu_custom_call.1} parent=47 // pred_fallthru
          _
        // Predicated region
        $region57: #{tpu_custom_call.1} parent=47 // pred_check
          %p335 = pneg %p90
        $region58: #{tpu_custom_call.1} parent=47 // pred_check_branch
          %337 = sbr.rel (%p335) target = $region60
        $region59: #{tpu_custom_call.1} parent=47 // pred_region
          %338 = dma.done [#allocation6], 4096
        $region60: #{tpu_custom_call.1} parent=47 // pred_fallthru
          _
        // Predicated region
        $region61: #{tpu_custom_call.1} parent=47 // pred_check
          %p339 = pneg %p111
        $region62: #{tpu_custom_call.1} parent=47 // pred_check_branch
          %341 = sbr.rel (%p339) target = $region64
        $region63: #{tpu_custom_call.1} parent=47 // pred_region
          %342 = dma.done [#allocation9], 8192
        $region64: #{tpu_custom_call.1} parent=47 // pred_fallthru
          _
        // Predicated region
        $region65: #{tpu_custom_call.1} parent=47 // pred_check
          %p343 = pneg %p132
        $region66: #{tpu_custom_call.1} parent=47 // pred_check_branch
          %345 = sbr.rel (%p343) target = $region68
        $region67: #{tpu_custom_call.1} parent=47 // pred_region
          %346 = dma.done [#allocation9], 256
        $region68: #{tpu_custom_call.1} parent=47 // pred_fallthru
          _
        // Predicated region
        $region69: #{tpu_custom_call.1} parent=47 // pred_check
          %p347 = pneg %p153
        $region70: #{tpu_custom_call.1} parent=47 // pred_check_branch
          %349 = sbr.rel (%p347) target = $region72
        $region71: #{tpu_custom_call.1} parent=47 // pred_region
          %350 = dma.done [#allocation12], 512
        $region72: #{tpu_custom_call.1} parent=47 // pred_fallthru
          _
        // Predicated region
        $region73: #{tpu_custom_call.1} parent=47 // pred_check
          %p351 = pneg %p174
        $region74: #{tpu_custom_call.1} parent=47 // pred_check_branch
          %353 = sbr.rel (%p351) target = $region76
        $region75: #{tpu_custom_call.1} parent=47 // pred_region
          %354 = dma.done [#allocation12], 32768
        $region76: #{tpu_custom_call.1} parent=47 // pred_fallthru
          _
        %s355 = sand.u32 %s35, 1
        %s356 = scalar_lea.sflag [#allocation3], %s355
        %s357 = sand.u32 %s35, 1
        %s358 = smul.addr %s357, 2048
        %s359 = scalar_lea.vmem [#allocation2], %s358
        %p360 = pneg %p48
        %p361 = pneg %p45
        %p362 = pneg %p69
        %p363 = pneg %p66
        %p364 = pneg %p90
        %p365 = pneg %p87
        %p366 = pneg %p111
        %p367 = pneg %p108
        %p368 = pneg %p132
        %p369 = pneg %p129
        %p370 = pneg %p153
        %p371 = pneg %p150
        %p372 = pneg %p174
        %p373 = pneg %p171
        %p374 = pneg %p200
        %p375 = pneg %p197
        %s376 = sand.u32 %s187, 1
        %s377 = scalar_lea.sflag [#allocation4], %s376
        %s378 = sand.u32 %s187, 1
        %s379 = smul.addr %s378, 512
        %s380 = scalar_lea.vmem [#allocation14], %s379
        %s381 = smul.u32 32, %s27
        %s382 = smul.u32 32, %s27
        %v383 = vld [vmem:[%s326] sm:$0xff]
        %v384 = vld [vmem:[%s326 + $0x8] sm:$0xff]
        %v385 = vld [vmem:[%s326 + $0x10] sm:$0xff]
        %v386 = vld [vmem:[%s326 + $0x18] sm:$0xff]
        %v387 = vld [vmem:[%s326 + $0x20] sm:$0xff]
        %v388 = vld [vmem:[%s326 + $0x28] sm:$0xff]
        %v389 = vld [vmem:[%s326 + $0x30] sm:$0xff]
        %v390 = vld [vmem:[%s326 + $0x38] sm:$0xff]
        %v391 = vld [vmem:[%s326 + $0x40] sm:$0xff]
        %v392 = vld [vmem:[%s326 + $0x48] sm:$0xff]
        %v393 = vld [vmem:[%s326 + $0x50] sm:$0xff]
        %v394 = vld [vmem:[%s326 + $0x58] sm:$0xff]
        %v395 = vld [vmem:[%s326 + $0x60] sm:$0xff]
        %v396 = vld [vmem:[%s326 + $0x68] sm:$0xff]
        %v397 = vld [vmem:[%s326 + $0x70] sm:$0xff]
        %v398 = vld [vmem:[%s326 + $0x78] sm:$0xff]
        %v399 = vld [vmem:[%s326 + $0x80] sm:$0xff]
        %v400 = vld [vmem:[%s326 + $0x88] sm:$0xff]
        %v401 = vld [vmem:[%s326 + $0x90] sm:$0xff]
        %v402 = vld [vmem:[%s326 + $0x98] sm:$0xff]
        %v403 = vld [vmem:[%s326 + $0xa0] sm:$0xff]
        %v404 = vld [vmem:[%s326 + $0xa8] sm:$0xff]
        %v405 = vld [vmem:[%s326 + $0xb0] sm:$0xff]
        %v406 = vld [vmem:[%s326 + $0xb8] sm:$0xff]
        %v407 = vld [vmem:[%s326 + $0xc0] sm:$0xff]
        %v408 = vld [vmem:[%s326 + $0xc8] sm:$0xff]
        %v409 = vld [vmem:[%s326 + $0xd0] sm:$0xff]
        %v410 = vld [vmem:[%s326 + $0xd8] sm:$0xff]
        %v411 = vld [vmem:[%s326 + $0xe0] sm:$0xff]
        %v412 = vld [vmem:[%s326 + $0xe8] sm:$0xff]
        %v413 = vld [vmem:[%s326 + $0xf0] sm:$0xff]
        %v414 = vld [vmem:[%s326 + $0xf8] sm:$0xff]
        %v415 = vld [vmem:[%s326 + $0x100] sm:$0xff]
        %v416 = vld [vmem:[%s326 + $0x108] sm:$0xff]
        %v417 = vld [vmem:[%s326 + $0x110] sm:$0xff]
        %v418 = vld [vmem:[%s326 + $0x118] sm:$0xff]
        %v419 = vld [vmem:[%s326 + $0x120] sm:$0xff]
        %v420 = vld [vmem:[%s326 + $0x128] sm:$0xff]
        %v421 = vld [vmem:[%s326 + $0x130] sm:$0xff]
        %v422 = vld [vmem:[%s326 + $0x138] sm:$0xff]
        %v423 = vld [vmem:[%s326 + $0x140] sm:$0xff]
        %v424 = vld [vmem:[%s326 + $0x148] sm:$0xff]
        %v425 = vld [vmem:[%s326 + $0x150] sm:$0xff]
        %v426 = vld [vmem:[%s326 + $0x158] sm:$0xff]
        %v427 = vld [vmem:[%s326 + $0x160] sm:$0xff]
        %v428 = vld [vmem:[%s326 + $0x168] sm:$0xff]
        %v429 = vld [vmem:[%s326 + $0x170] sm:$0xff]
        %v430 = vld [vmem:[%s326 + $0x178] sm:$0xff]
        %v431 = vld [vmem:[%s326 + $0x180] sm:$0xff]
        %v432 = vld [vmem:[%s326 + $0x188] sm:$0xff]
        %v433 = vld [vmem:[%s326 + $0x190] sm:$0xff]
        %v434 = vld [vmem:[%s326 + $0x198] sm:$0xff]
        %v435 = vld [vmem:[%s326 + $0x1a0] sm:$0xff]
        %v436 = vld [vmem:[%s326 + $0x1a8] sm:$0xff]
        %v437 = vld [vmem:[%s326 + $0x1b0] sm:$0xff]
        %v438 = vld [vmem:[%s326 + $0x1b8] sm:$0xff]
        %v439 = vld [vmem:[%s326 + $0x1c0] sm:$0xff]
        %v440 = vld [vmem:[%s326 + $0x1c8] sm:$0xff]
        %v441 = vld [vmem:[%s326 + $0x1d0] sm:$0xff]
        %v442 = vld [vmem:[%s326 + $0x1d8] sm:$0xff]
        %v443 = vld [vmem:[%s326 + $0x1e0] sm:$0xff]
        %v444 = vld [vmem:[%s326 + $0x1e8] sm:$0xff]
        %v445 = vld [vmem:[%s326 + $0x1f0] sm:$0xff]
        %v446 = vld [vmem:[%s326 + $0x1f8] sm:$0xff]
        %v447 = vld [vmem:[%s326 + $0x200] sm:$0xff]
        %v448 = vld [vmem:[%s326 + $0x208] sm:$0xff]
        %v449 = vld [vmem:[%s326 + $0x210] sm:$0xff]
        %v450 = vld [vmem:[%s326 + $0x218] sm:$0xff]
        %v451 = vld [vmem:[%s326 + $0x220] sm:$0xff]
        %v452 = vld [vmem:[%s326 + $0x228] sm:$0xff]
        %v453 = vld [vmem:[%s326 + $0x230] sm:$0xff]
        %v454 = vld [vmem:[%s326 + $0x238] sm:$0xff]
        %v455 = vld [vmem:[%s326 + $0x240] sm:$0xff]
        %v456 = vld [vmem:[%s326 + $0x248] sm:$0xff]
        %v457 = vld [vmem:[%s326 + $0x250] sm:$0xff]
        %v458 = vld [vmem:[%s326 + $0x258] sm:$0xff]
        %v459 = vld [vmem:[%s326 + $0x260] sm:$0xff]
        %v460 = vld [vmem:[%s326 + $0x268] sm:$0xff]
        %v461 = vld [vmem:[%s326 + $0x270] sm:$0xff]
        %v462 = vld [vmem:[%s326 + $0x278] sm:$0xff]
        %v463 = vld [vmem:[%s326 + $0x280] sm:$0xff]
        %v464 = vld [vmem:[%s326 + $0x288] sm:$0xff]
        %v465 = vld [vmem:[%s326 + $0x290] sm:$0xff]
        %v466 = vld [vmem:[%s326 + $0x298] sm:$0xff]
        %v467 = vld [vmem:[%s326 + $0x2a0] sm:$0xff]
        %v468 = vld [vmem:[%s326 + $0x2a8] sm:$0xff]
        %v469 = vld [vmem:[%s326 + $0x2b0] sm:$0xff]
        %v470 = vld [vmem:[%s326 + $0x2b8] sm:$0xff]
        %v471 = vld [vmem:[%s326 + $0x2c0] sm:$0xff]
        %v472 = vld [vmem:[%s326 + $0x2c8] sm:$0xff]
        %v473 = vld [vmem:[%s326 + $0x2d0] sm:$0xff]
        %v474 = vld [vmem:[%s326 + $0x2d8] sm:$0xff]
        %v475 = vld [vmem:[%s326 + $0x2e0] sm:$0xff]
        %v476 = vld [vmem:[%s326 + $0x2e8] sm:$0xff]
        %v477 = vld [vmem:[%s326 + $0x2f0] sm:$0xff]
        %v478 = vld [vmem:[%s326 + $0x2f8] sm:$0xff]
        %v479 = vld [vmem:[%s326 + $0x300] sm:$0xff]
        %v480 = vld [vmem:[%s326 + $0x308] sm:$0xff]
        %v481 = vld [vmem:[%s326 + $0x310] sm:$0xff]
        %v482 = vld [vmem:[%s326 + $0x318] sm:$0xff]
        %v483 = vld [vmem:[%s326 + $0x320] sm:$0xff]
        %v484 = vld [vmem:[%s326 + $0x328] sm:$0xff]
        %v485 = vld [vmem:[%s326 + $0x330] sm:$0xff]
        %v486 = vld [vmem:[%s326 + $0x338] sm:$0xff]
        %v487 = vld [vmem:[%s326 + $0x340] sm:$0xff]
        %v488 = vld [vmem:[%s326 + $0x348] sm:$0xff]
        %v489 = vld [vmem:[%s326 + $0x350] sm:$0xff]
        %v490 = vld [vmem:[%s326 + $0x358] sm:$0xff]
        %v491 = vld [vmem:[%s326 + $0x360] sm:$0xff]
        %v492 = vld [vmem:[%s326 + $0x368] sm:$0xff]
        %v493 = vld [vmem:[%s326 + $0x370] sm:$0xff]
        %v494 = vld [vmem:[%s326 + $0x378] sm:$0xff]
        %v495 = vld [vmem:[%s326 + $0x380] sm:$0xff]
        %v496 = vld [vmem:[%s326 + $0x388] sm:$0xff]
        %v497 = vld [vmem:[%s326 + $0x390] sm:$0xff]
        %v498 = vld [vmem:[%s326 + $0x398] sm:$0xff]
        %v499 = vld [vmem:[%s326 + $0x3a0] sm:$0xff]
        %v500 = vld [vmem:[%s326 + $0x3a8] sm:$0xff]
        %v501 = vld [vmem:[%s326 + $0x3b0] sm:$0xff]
        %v502 = vld [vmem:[%s326 + $0x3b8] sm:$0xff]
        %v503 = vld [vmem:[%s326 + $0x3c0] sm:$0xff]
        %v504 = vld [vmem:[%s326 + $0x3c8] sm:$0xff]
        %v505 = vld [vmem:[%s326 + $0x3d0] sm:$0xff]
        %v506 = vld [vmem:[%s326 + $0x3d8] sm:$0xff]
        %v507 = vld [vmem:[%s326 + $0x3e0] sm:$0xff]
        %v508 = vld [vmem:[%s326 + $0x3e8] sm:$0xff]
        %v509 = vld [vmem:[%s326 + $0x3f0] sm:$0xff]
        %v510 = vld [vmem:[%s326 + $0x3f8] sm:$0xff]
        %v511 = vld [vmem:[%s326 + $0x400] sm:$0xff]
        %v512 = vld [vmem:[%s326 + $0x408] sm:$0xff]
        %v513 = vld [vmem:[%s326 + $0x410] sm:$0xff]
        %v514 = vld [vmem:[%s326 + $0x418] sm:$0xff]
        %v515 = vld [vmem:[%s326 + $0x420] sm:$0xff]
        %v516 = vld [vmem:[%s326 + $0x428] sm:$0xff]
        %v517 = vld [vmem:[%s326 + $0x430] sm:$0xff]
        %v518 = vld [vmem:[%s326 + $0x438] sm:$0xff]
        %v519 = vld [vmem:[%s326 + $0x440] sm:$0xff]
        %v520 = vld [vmem:[%s326 + $0x448] sm:$0xff]
        %v521 = vld [vmem:[%s326 + $0x450] sm:$0xff]
        %v522 = vld [vmem:[%s326 + $0x458] sm:$0xff]
        %v523 = vld [vmem:[%s326 + $0x460] sm:$0xff]
        %v524 = vld [vmem:[%s326 + $0x468] sm:$0xff]
        %v525 = vld [vmem:[%s326 + $0x470] sm:$0xff]
        %v526 = vld [vmem:[%s326 + $0x478] sm:$0xff]
        %v527 = vld [vmem:[%s326 + $0x480] sm:$0xff]
        %v528 = vld [vmem:[%s326 + $0x488] sm:$0xff]
        %v529 = vld [vmem:[%s326 + $0x490] sm:$0xff]
        %v530 = vld [vmem:[%s326 + $0x498] sm:$0xff]
        %v531 = vld [vmem:[%s326 + $0x4a0] sm:$0xff]
        %v532 = vld [vmem:[%s326 + $0x4a8] sm:$0xff]
        %v533 = vld [vmem:[%s326 + $0x4b0] sm:$0xff]
        %v534 = vld [vmem:[%s326 + $0x4b8] sm:$0xff]
        %v535 = vld [vmem:[%s326 + $0x4c0] sm:$0xff]
        %v536 = vld [vmem:[%s326 + $0x4c8] sm:$0xff]
        %v537 = vld [vmem:[%s326 + $0x4d0] sm:$0xff]
        %v538 = vld [vmem:[%s326 + $0x4d8] sm:$0xff]
        %v539 = vld [vmem:[%s326 + $0x4e0] sm:$0xff]
        %v540 = vld [vmem:[%s326 + $0x4e8] sm:$0xff]
        %v541 = vld [vmem:[%s326 + $0x4f0] sm:$0xff]
        %v542 = vld [vmem:[%s326 + $0x4f8] sm:$0xff]
        %v543 = vld [vmem:[%s326 + $0x500] sm:$0xff]
        %v544 = vld [vmem:[%s326 + $0x508] sm:$0xff]
        %v545 = vld [vmem:[%s326 + $0x510] sm:$0xff]
        %v546 = vld [vmem:[%s326 + $0x518] sm:$0xff]
        %v547 = vld [vmem:[%s326 + $0x520] sm:$0xff]
        %v548 = vld [vmem:[%s326 + $0x528] sm:$0xff]
        %v549 = vld [vmem:[%s326 + $0x530] sm:$0xff]
        %v550 = vld [vmem:[%s326 + $0x538] sm:$0xff]
        %v551 = vld [vmem:[%s326 + $0x540] sm:$0xff]
        %v552 = vld [vmem:[%s326 + $0x548] sm:$0xff]
        %v553 = vld [vmem:[%s326 + $0x550] sm:$0xff]
        %v554 = vld [vmem:[%s326 + $0x558] sm:$0xff]
        %v555 = vld [vmem:[%s326 + $0x560] sm:$0xff]
        %v556 = vld [vmem:[%s326 + $0x568] sm:$0xff]
        %v557 = vld [vmem:[%s326 + $0x570] sm:$0xff]
        %v558 = vld [vmem:[%s326 + $0x578] sm:$0xff]
        %v559 = vld [vmem:[%s326 + $0x580] sm:$0xff]
        %v560 = vld [vmem:[%s326 + $0x588] sm:$0xff]
        %v561 = vld [vmem:[%s326 + $0x590] sm:$0xff]
        %v562 = vld [vmem:[%s326 + $0x598] sm:$0xff]
        %v563 = vld [vmem:[%s326 + $0x5a0] sm:$0xff]
        %v564 = vld [vmem:[%s326 + $0x5a8] sm:$0xff]
        %v565 = vld [vmem:[%s326 + $0x5b0] sm:$0xff]
        %v566 = vld [vmem:[%s326 + $0x5b8] sm:$0xff]
        %v567 = vld [vmem:[%s326 + $0x5c0] sm:$0xff]
        %v568 = vld [vmem:[%s326 + $0x5c8] sm:$0xff]
        %v569 = vld [vmem:[%s326 + $0x5d0] sm:$0xff]
        %v570 = vld [vmem:[%s326 + $0x5d8] sm:$0xff]
        %v571 = vld [vmem:[%s326 + $0x5e0] sm:$0xff]
        %v572 = vld [vmem:[%s326 + $0x5e8] sm:$0xff]
        %v573 = vld [vmem:[%s326 + $0x5f0] sm:$0xff]
        %v574 = vld [vmem:[%s326 + $0x5f8] sm:$0xff]
        %v575 = vld [vmem:[%s326 + $0x600] sm:$0xff]
        %v576 = vld [vmem:[%s326 + $0x608] sm:$0xff]
        %v577 = vld [vmem:[%s326 + $0x610] sm:$0xff]
        %v578 = vld [vmem:[%s326 + $0x618] sm:$0xff]
        %v579 = vld [vmem:[%s326 + $0x620] sm:$0xff]
        %v580 = vld [vmem:[%s326 + $0x628] sm:$0xff]
        %v581 = vld [vmem:[%s326 + $0x630] sm:$0xff]
        %v582 = vld [vmem:[%s326 + $0x638] sm:$0xff]
        %v583 = vld [vmem:[%s326 + $0x640] sm:$0xff]
        %v584 = vld [vmem:[%s326 + $0x648] sm:$0xff]
        %v585 = vld [vmem:[%s326 + $0x650] sm:$0xff]
        %v586 = vld [vmem:[%s326 + $0x658] sm:$0xff]
        %v587 = vld [vmem:[%s326 + $0x660] sm:$0xff]
        %v588 = vld [vmem:[%s326 + $0x668] sm:$0xff]
        %v589 = vld [vmem:[%s326 + $0x670] sm:$0xff]
        %v590 = vld [vmem:[%s326 + $0x678] sm:$0xff]
        %v591 = vld [vmem:[%s326 + $0x680] sm:$0xff]
        %v592 = vld [vmem:[%s326 + $0x688] sm:$0xff]
        %v593 = vld [vmem:[%s326 + $0x690] sm:$0xff]
        %v594 = vld [vmem:[%s326 + $0x698] sm:$0xff]
        %v595 = vld [vmem:[%s326 + $0x6a0] sm:$0xff]
        %v596 = vld [vmem:[%s326 + $0x6a8] sm:$0xff]
        %v597 = vld [vmem:[%s326 + $0x6b0] sm:$0xff]
        %v598 = vld [vmem:[%s326 + $0x6b8] sm:$0xff]
        %v599 = vld [vmem:[%s326 + $0x6c0] sm:$0xff]
        %v600 = vld [vmem:[%s326 + $0x6c8] sm:$0xff]
        %v601 = vld [vmem:[%s326 + $0x6d0] sm:$0xff]
        %v602 = vld [vmem:[%s326 + $0x6d8] sm:$0xff]
        %v603 = vld [vmem:[%s326 + $0x6e0] sm:$0xff]
        %v604 = vld [vmem:[%s326 + $0x6e8] sm:$0xff]
        %v605 = vld [vmem:[%s326 + $0x6f0] sm:$0xff]
        %v606 = vld [vmem:[%s326 + $0x6f8] sm:$0xff]
        %v607 = vld [vmem:[%s326 + $0x700] sm:$0xff]
        %v608 = vld [vmem:[%s326 + $0x708] sm:$0xff]
        %v609 = vld [vmem:[%s326 + $0x710] sm:$0xff]
        %v610 = vld [vmem:[%s326 + $0x718] sm:$0xff]
        %v611 = vld [vmem:[%s326 + $0x720] sm:$0xff]
        %v612 = vld [vmem:[%s326 + $0x728] sm:$0xff]
        %v613 = vld [vmem:[%s326 + $0x730] sm:$0xff]
        %v614 = vld [vmem:[%s326 + $0x738] sm:$0xff]
        %v615 = vld [vmem:[%s326 + $0x740] sm:$0xff]
        %v616 = vld [vmem:[%s326 + $0x748] sm:$0xff]
        %v617 = vld [vmem:[%s326 + $0x750] sm:$0xff]
        %v618 = vld [vmem:[%s326 + $0x758] sm:$0xff]
        %v619 = vld [vmem:[%s326 + $0x760] sm:$0xff]
        %v620 = vld [vmem:[%s326 + $0x768] sm:$0xff]
        %v621 = vld [vmem:[%s326 + $0x770] sm:$0xff]
        %v622 = vld [vmem:[%s326 + $0x778] sm:$0xff]
        %v623 = vld [vmem:[%s326 + $0x780] sm:$0xff]
        %v624 = vld [vmem:[%s326 + $0x788] sm:$0xff]
        %v625 = vld [vmem:[%s326 + $0x790] sm:$0xff]
        %v626 = vld [vmem:[%s326 + $0x798] sm:$0xff]
        %v627 = vld [vmem:[%s326 + $0x7a0] sm:$0xff]
        %v628 = vld [vmem:[%s326 + $0x7a8] sm:$0xff]
        %v629 = vld [vmem:[%s326 + $0x7b0] sm:$0xff]
        %v630 = vld [vmem:[%s326 + $0x7b8] sm:$0xff]
        %v631 = vld [vmem:[%s326 + $0x7c0] sm:$0xff]
        %v632 = vld [vmem:[%s326 + $0x7c8] sm:$0xff]
        %v633 = vld [vmem:[%s326 + $0x7d0] sm:$0xff]
        %v634 = vld [vmem:[%s326 + $0x7d8] sm:$0xff]
        %v635 = vld [vmem:[%s326 + $0x7e0] sm:$0xff]
        %v636 = vld [vmem:[%s326 + $0x7e8] sm:$0xff]
        %v637 = vld [vmem:[%s326 + $0x7f0] sm:$0xff]
        %v638 = vld [vmem:[%s326 + $0x7f8] sm:$0xff]
        %v639 = vpack.c.bf16 %v391, %v383
        %v640 = vpack.c.bf16 %v392, %v384
        %v641 = vpack.c.bf16 %v393, %v385
        %v642 = vpack.c.bf16 %v394, %v386
        %v643 = vpack.c.bf16 %v395, %v387
        %v644 = vpack.c.bf16 %v396, %v388
        %v645 = vpack.c.bf16 %v397, %v389
        %v646 = vpack.c.bf16 %v398, %v390
        %v647 = vpack.c.bf16 %v407, %v399
        %v648 = vpack.c.bf16 %v408, %v400
        %v649 = vpack.c.bf16 %v409, %v401
        %v650 = vpack.c.bf16 %v410, %v402
        %v651 = vpack.c.bf16 %v411, %v403
        %v652 = vpack.c.bf16 %v412, %v404
        %v653 = vpack.c.bf16 %v413, %v405
        %v654 = vpack.c.bf16 %v414, %v406
        %v655 = vpack.c.bf16 %v423, %v415
        %v656 = vpack.c.bf16 %v424, %v416
        %v657 = vpack.c.bf16 %v425, %v417
        %v658 = vpack.c.bf16 %v426, %v418
        %v659 = vpack.c.bf16 %v427, %v419
        %v660 = vpack.c.bf16 %v428, %v420
        %v661 = vpack.c.bf16 %v429, %v421
        %v662 = vpack.c.bf16 %v430, %v422
        %v663 = vpack.c.bf16 %v439, %v431
        %v664 = vpack.c.bf16 %v440, %v432
        %v665 = vpack.c.bf16 %v441, %v433
        %v666 = vpack.c.bf16 %v442, %v434
        %v667 = vpack.c.bf16 %v443, %v435
        %v668 = vpack.c.bf16 %v444, %v436
        %v669 = vpack.c.bf16 %v445, %v437
        %v670 = vpack.c.bf16 %v446, %v438
        %v671 = vpack.c.bf16 %v455, %v447
        %v672 = vpack.c.bf16 %v456, %v448
        %v673 = vpack.c.bf16 %v457, %v449
        %v674 = vpack.c.bf16 %v458, %v450
        %v675 = vpack.c.bf16 %v459, %v451
        %v676 = vpack.c.bf16 %v460, %v452
        %v677 = vpack.c.bf16 %v461, %v453
        %v678 = vpack.c.bf16 %v462, %v454
        %v679 = vpack.c.bf16 %v471, %v463
        %v680 = vpack.c.bf16 %v472, %v464
        %v681 = vpack.c.bf16 %v473, %v465
        %v682 = vpack.c.bf16 %v474, %v466
        %v683 = vpack.c.bf16 %v475, %v467
        %v684 = vpack.c.bf16 %v476, %v468
        %v685 = vpack.c.bf16 %v477, %v469
        %v686 = vpack.c.bf16 %v478, %v470
        %v687 = vpack.c.bf16 %v487, %v479
        %v688 = vpack.c.bf16 %v488, %v480
        %v689 = vpack.c.bf16 %v489, %v481
        %v690 = vpack.c.bf16 %v490, %v482
        %v691 = vpack.c.bf16 %v491, %v483
        %v692 = vpack.c.bf16 %v492, %v484
        %v693 = vpack.c.bf16 %v493, %v485
        %v694 = vpack.c.bf16 %v494, %v486
        %v695 = vpack.c.bf16 %v503, %v495
        %v696 = vpack.c.bf16 %v504, %v496
        %v697 = vpack.c.bf16 %v505, %v497
        %v698 = vpack.c.bf16 %v506, %v498
        %v699 = vpack.c.bf16 %v507, %v499
        %v700 = vpack.c.bf16 %v508, %v500
        %v701 = vpack.c.bf16 %v509, %v501
        %v702 = vpack.c.bf16 %v510, %v502
        %v703 = vpack.c.bf16 %v519, %v511
        %v704 = vpack.c.bf16 %v520, %v512
        %v705 = vpack.c.bf16 %v521, %v513
        %v706 = vpack.c.bf16 %v522, %v514
        %v707 = vpack.c.bf16 %v523, %v515
        %v708 = vpack.c.bf16 %v524, %v516
        %v709 = vpack.c.bf16 %v525, %v517
        %v710 = vpack.c.bf16 %v526, %v518
        %v711 = vpack.c.bf16 %v535, %v527
        %v712 = vpack.c.bf16 %v536, %v528
        %v713 = vpack.c.bf16 %v537, %v529
        %v714 = vpack.c.bf16 %v538, %v530
        %v715 = vpack.c.bf16 %v539, %v531
        %v716 = vpack.c.bf16 %v540, %v532
        %v717 = vpack.c.bf16 %v541, %v533
        %v718 = vpack.c.bf16 %v542, %v534
        %v719 = vpack.c.bf16 %v551, %v543
        %v720 = vpack.c.bf16 %v552, %v544
        %v721 = vpack.c.bf16 %v553, %v545
        %v722 = vpack.c.bf16 %v554, %v546
        %v723 = vpack.c.bf16 %v555, %v547
        %v724 = vpack.c.bf16 %v556, %v548
        %v725 = vpack.c.bf16 %v557, %v549
        %v726 = vpack.c.bf16 %v558, %v550
        %v727 = vpack.c.bf16 %v567, %v559
        %v728 = vpack.c.bf16 %v568, %v560
        %v729 = vpack.c.bf16 %v569, %v561
        %v730 = vpack.c.bf16 %v570, %v562
        %v731 = vpack.c.bf16 %v571, %v563
        %v732 = vpack.c.bf16 %v572, %v564
        %v733 = vpack.c.bf16 %v573, %v565
        %v734 = vpack.c.bf16 %v574, %v566
        %v735 = vpack.c.bf16 %v583, %v575
        %v736 = vpack.c.bf16 %v584, %v576
        %v737 = vpack.c.bf16 %v585, %v577
        %v738 = vpack.c.bf16 %v586, %v578
        %v739 = vpack.c.bf16 %v587, %v579
        %v740 = vpack.c.bf16 %v588, %v580
        %v741 = vpack.c.bf16 %v589, %v581
        %v742 = vpack.c.bf16 %v590, %v582
        %v743 = vpack.c.bf16 %v599, %v591
        %v744 = vpack.c.bf16 %v600, %v592
        %v745 = vpack.c.bf16 %v601, %v593
        %v746 = vpack.c.bf16 %v602, %v594
        %v747 = vpack.c.bf16 %v603, %v595
        %v748 = vpack.c.bf16 %v604, %v596
        %v749 = vpack.c.bf16 %v605, %v597
        %v750 = vpack.c.bf16 %v606, %v598
        %v751 = vpack.c.bf16 %v615, %v607
        %v752 = vpack.c.bf16 %v616, %v608
        %v753 = vpack.c.bf16 %v617, %v609
        %v754 = vpack.c.bf16 %v618, %v610
        %v755 = vpack.c.bf16 %v619, %v611
        %v756 = vpack.c.bf16 %v620, %v612
        %v757 = vpack.c.bf16 %v621, %v613
        %v758 = vpack.c.bf16 %v622, %v614
        %v759 = vpack.c.bf16 %v631, %v623
        %v760 = vpack.c.bf16 %v632, %v624
        %v761 = vpack.c.bf16 %v633, %v625
        %v762 = vpack.c.bf16 %v634, %v626
        %v763 = vpack.c.bf16 %v635, %v627
        %v764 = vpack.c.bf16 %v636, %v628
        %v765 = vpack.c.bf16 %v637, %v629
        %v766 = vpack.c.bf16 %v638, %v630
        %v767 = vld [vmem:[#allocation5] sm:$0xff]
        %v768 = vld [vmem:[#allocation5 + $0x8] sm:$0xff]
        %v769 = vld [vmem:[#allocation5 + $0x10] sm:$0xff]
        %v770 = vld [vmem:[#allocation5 + $0x18] sm:$0xff]
        %v771 = vld [vmem:[#allocation5 + $0x20] sm:$0xff]
        %v772 = vld [vmem:[#allocation5 + $0x28] sm:$0xff]
        %v773 = vld [vmem:[#allocation5 + $0x30] sm:$0xff]
        %v774 = vld [vmem:[#allocation5 + $0x38] sm:$0xff]
        %v775 = vld [vmem:[#allocation5 + $0x40] sm:$0xff]
        %v776 = vld [vmem:[#allocation5 + $0x48] sm:$0xff]
        %v777 = vld [vmem:[#allocation5 + $0x50] sm:$0xff]
        %v778 = vld [vmem:[#allocation5 + $0x58] sm:$0xff]
        %v779 = vld [vmem:[#allocation5 + $0x60] sm:$0xff]
        %v780 = vld [vmem:[#allocation5 + $0x68] sm:$0xff]
        %v781 = vld [vmem:[#allocation5 + $0x70] sm:$0xff]
        %v782 = vld [vmem:[#allocation5 + $0x78] sm:$0xff]
        %v783 = vld [vmem:[#allocation5 + $0x80] sm:$0xff]
        %v784 = vld [vmem:[#allocation5 + $0x88] sm:$0xff]
        %v785 = vld [vmem:[#allocation5 + $0x90] sm:$0xff]
        %v786 = vld [vmem:[#allocation5 + $0x98] sm:$0xff]
        %v787 = vld [vmem:[#allocation5 + $0xa0] sm:$0xff]
        %v788 = vld [vmem:[#allocation5 + $0xa8] sm:$0xff]
        %v789 = vld [vmem:[#allocation5 + $0xb0] sm:$0xff]
        %v790 = vld [vmem:[#allocation5 + $0xb8] sm:$0xff]
        %v791 = vld [vmem:[#allocation5 + $0xc0] sm:$0xff]
        %v792 = vld [vmem:[#allocation5 + $0xc8] sm:$0xff]
        %v793 = vld [vmem:[#allocation5 + $0xd0] sm:$0xff]
        %v794 = vld [vmem:[#allocation5 + $0xd8] sm:$0xff]
        %v795 = vld [vmem:[#allocation5 + $0xe0] sm:$0xff]
        %v796 = vld [vmem:[#allocation5 + $0xe8] sm:$0xff]
        %v797 = vld [vmem:[#allocation5 + $0xf0] sm:$0xff]
        %v798 = vld [vmem:[#allocation5 + $0xf8] sm:$0xff]
        %v799 = vld [vmem:[#allocation5 + $0x100] sm:$0xff]
        %v800 = vld [vmem:[#allocation5 + $0x108] sm:$0xff]
        %v801 = vld [vmem:[#allocation5 + $0x110] sm:$0xff]
        %v802 = vld [vmem:[#allocation5 + $0x118] sm:$0xff]
        %v803 = vld [vmem:[#allocation5 + $0x120] sm:$0xff]
        %v804 = vld [vmem:[#allocation5 + $0x128] sm:$0xff]
        %v805 = vld [vmem:[#allocation5 + $0x130] sm:$0xff]
        %v806 = vld [vmem:[#allocation5 + $0x138] sm:$0xff]
        %v807 = vld [vmem:[#allocation5 + $0x140] sm:$0xff]
        %v808 = vld [vmem:[#allocation5 + $0x148] sm:$0xff]
        %v809 = vld [vmem:[#allocation5 + $0x150] sm:$0xff]
        %v810 = vld [vmem:[#allocation5 + $0x158] sm:$0xff]
        %v811 = vld [vmem:[#allocation5 + $0x160] sm:$0xff]
        %v812 = vld [vmem:[#allocation5 + $0x168] sm:$0xff]
        %v813 = vld [vmem:[#allocation5 + $0x170] sm:$0xff]
        %v814 = vld [vmem:[#allocation5 + $0x178] sm:$0xff]
        %v815 = vld [vmem:[#allocation5 + $0x180] sm:$0xff]
        %v816 = vld [vmem:[#allocation5 + $0x188] sm:$0xff]
        %v817 = vld [vmem:[#allocation5 + $0x190] sm:$0xff]
        %v818 = vld [vmem:[#allocation5 + $0x198] sm:$0xff]
        %v819 = vld [vmem:[#allocation5 + $0x1a0] sm:$0xff]
        %v820 = vld [vmem:[#allocation5 + $0x1a8] sm:$0xff]
        %v821 = vld [vmem:[#allocation5 + $0x1b0] sm:$0xff]
        %v822 = vld [vmem:[#allocation5 + $0x1b8] sm:$0xff]
        %v823 = vld [vmem:[#allocation5 + $0x1c0] sm:$0xff]
        %v824 = vld [vmem:[#allocation5 + $0x1c8] sm:$0xff]
        %v825 = vld [vmem:[#allocation5 + $0x1d0] sm:$0xff]
        %v826 = vld [vmem:[#allocation5 + $0x1d8] sm:$0xff]
        %v827 = vld [vmem:[#allocation5 + $0x1e0] sm:$0xff]
        %v828 = vld [vmem:[#allocation5 + $0x1e8] sm:$0xff]
        %v829 = vld [vmem:[#allocation5 + $0x1f0] sm:$0xff]
        %v830 = vld [vmem:[#allocation5 + $0x1f8] sm:$0xff]
        %v831 = vld [vmem:[#allocation5 + $0x200] sm:$0xff]
        %v832 = vld [vmem:[#allocation5 + $0x208] sm:$0xff]
        %v833 = vld [vmem:[#allocation5 + $0x210] sm:$0xff]
        %v834 = vld [vmem:[#allocation5 + $0x218] sm:$0xff]
        %v835 = vld [vmem:[#allocation5 + $0x220] sm:$0xff]
        %v836 = vld [vmem:[#allocation5 + $0x228] sm:$0xff]
        %v837 = vld [vmem:[#allocation5 + $0x230] sm:$0xff]
        %v838 = vld [vmem:[#allocation5 + $0x238] sm:$0xff]
        %v839 = vld [vmem:[#allocation5 + $0x240] sm:$0xff]
        %v840 = vld [vmem:[#allocation5 + $0x248] sm:$0xff]
        %v841 = vld [vmem:[#allocation5 + $0x250] sm:$0xff]
        %v842 = vld [vmem:[#allocation5 + $0x258] sm:$0xff]
        %v843 = vld [vmem:[#allocation5 + $0x260] sm:$0xff]
        %v844 = vld [vmem:[#allocation5 + $0x268] sm:$0xff]
        %v845 = vld [vmem:[#allocation5 + $0x270] sm:$0xff]
        %v846 = vld [vmem:[#allocation5 + $0x278] sm:$0xff]
        %v847 = vld [vmem:[#allocation5 + $0x280] sm:$0xff]
        %v848 = vld [vmem:[#allocation5 + $0x288] sm:$0xff]
        %v849 = vld [vmem:[#allocation5 + $0x290] sm:$0xff]
        %v850 = vld [vmem:[#allocation5 + $0x298] sm:$0xff]
        %v851 = vld [vmem:[#allocation5 + $0x2a0] sm:$0xff]
        %v852 = vld [vmem:[#allocation5 + $0x2a8] sm:$0xff]
        %v853 = vld [vmem:[#allocation5 + $0x2b0] sm:$0xff]
        %v854 = vld [vmem:[#allocation5 + $0x2b8] sm:$0xff]
        %v855 = vld [vmem:[#allocation5 + $0x2c0] sm:$0xff]
        %v856 = vld [vmem:[#allocation5 + $0x2c8] sm:$0xff]
        %v857 = vld [vmem:[#allocation5 + $0x2d0] sm:$0xff]
        %v858 = vld [vmem:[#allocation5 + $0x2d8] sm:$0xff]
        %v859 = vld [vmem:[#allocation5 + $0x2e0] sm:$0xff]
        %v860 = vld [vmem:[#allocation5 + $0x2e8] sm:$0xff]
        %v861 = vld [vmem:[#allocation5 + $0x2f0] sm:$0xff]
        %v862 = vld [vmem:[#allocation5 + $0x2f8] sm:$0xff]
        %v863 = vld [vmem:[#allocation5 + $0x300] sm:$0xff]
        %v864 = vld [vmem:[#allocation5 + $0x308] sm:$0xff]
        %v865 = vld [vmem:[#allocation5 + $0x310] sm:$0xff]
        %v866 = vld [vmem:[#allocation5 + $0x318] sm:$0xff]
        %v867 = vld [vmem:[#allocation5 + $0x320] sm:$0xff]
        %v868 = vld [vmem:[#allocation5 + $0x328] sm:$0xff]
        %v869 = vld [vmem:[#allocation5 + $0x330] sm:$0xff]
        %v870 = vld [vmem:[#allocation5 + $0x338] sm:$0xff]
        %v871 = vld [vmem:[#allocation5 + $0x340] sm:$0xff]
        %v872 = vld [vmem:[#allocation5 + $0x348] sm:$0xff]
        %v873 = vld [vmem:[#allocation5 + $0x350] sm:$0xff]
        %v874 = vld [vmem:[#allocation5 + $0x358] sm:$0xff]
        %v875 = vld [vmem:[#allocation5 + $0x360] sm:$0xff]
        %v876 = vld [vmem:[#allocation5 + $0x368] sm:$0xff]
        %v877 = vld [vmem:[#allocation5 + $0x370] sm:$0xff]
        %v878 = vld [vmem:[#allocation5 + $0x378] sm:$0xff]
        %v879 = vld [vmem:[#allocation5 + $0x380] sm:$0xff]
        %v880 = vld [vmem:[#allocation5 + $0x388] sm:$0xff]
        %v881 = vld [vmem:[#allocation5 + $0x390] sm:$0xff]
        %v882 = vld [vmem:[#allocation5 + $0x398] sm:$0xff]
        %v883 = vld [vmem:[#allocation5 + $0x3a0] sm:$0xff]
        %v884 = vld [vmem:[#allocation5 + $0x3a8] sm:$0xff]
        %v885 = vld [vmem:[#allocation5 + $0x3b0] sm:$0xff]
        %v886 = vld [vmem:[#allocation5 + $0x3b8] sm:$0xff]
        %v887 = vld [vmem:[#allocation5 + $0x3c0] sm:$0xff]
        %v888 = vld [vmem:[#allocation5 + $0x3c8] sm:$0xff]
        %v889 = vld [vmem:[#allocation5 + $0x3d0] sm:$0xff]
        %v890 = vld [vmem:[#allocation5 + $0x3d8] sm:$0xff]
        %v891 = vld [vmem:[#allocation5 + $0x3e0] sm:$0xff]
        %v892 = vld [vmem:[#allocation5 + $0x3e8] sm:$0xff]
        %v893 = vld [vmem:[#allocation5 + $0x3f0] sm:$0xff]
        %v894 = vld [vmem:[#allocation5 + $0x3f8] sm:$0xff]
        %v895 = vld [vmem:[#allocation10] ss:$8 sm:$0x3]
        %v897 = vlaneseq
        %v898 = vshrl.u32 %v897, 7
        %v899 = vsub.s32 0, %v898
        %v900 = vrot.slane %v895, %v899
        %v901 = vlaneseq
        %v902 = vshrl.u32 %v901, 7
        %v903 = vsub.s32 1, %v902
        %v904 = vrot.slane %v895, %v903
        %v1035 = vunpack.c.l.b16 %v767
        %v1036 = vunpack.c.h.b16 %v767
        %v1037 = vunpack.c.l.b16 %v768
        %v1038 = vunpack.c.h.b16 %v768
        %v1039 = vunpack.c.l.b16 %v769
        %v1040 = vunpack.c.h.b16 %v769
        %v1041 = vunpack.c.l.b16 %v770
        %v1042 = vunpack.c.h.b16 %v770
        %v1043 = vunpack.c.l.b16 %v771
        %v1044 = vunpack.c.h.b16 %v771
        %v1045 = vunpack.c.l.b16 %v772
        %v1046 = vunpack.c.h.b16 %v772
        %v1047 = vunpack.c.l.b16 %v773
        %v1048 = vunpack.c.h.b16 %v773
        %v1049 = vunpack.c.l.b16 %v774
        %v1050 = vunpack.c.h.b16 %v774
        %v1051 = vunpack.c.l.b16 %v775
        %v1052 = vunpack.c.h.b16 %v775
        %v1053 = vunpack.c.l.b16 %v776
        %v1054 = vunpack.c.h.b16 %v776
        %v1055 = vunpack.c.l.b16 %v777
        %v1056 = vunpack.c.h.b16 %v777
        %v1057 = vunpack.c.l.b16 %v778
        %v1058 = vunpack.c.h.b16 %v778
        %v1059 = vunpack.c.l.b16 %v779
        %v1060 = vunpack.c.h.b16 %v779
        %v1061 = vunpack.c.l.b16 %v780
        %v1062 = vunpack.c.h.b16 %v780
        %v1063 = vunpack.c.l.b16 %v781
        %v1064 = vunpack.c.h.b16 %v781
        %v1065 = vunpack.c.l.b16 %v782
        %v1066 = vunpack.c.h.b16 %v782
        %v1067 = vunpack.c.l.b16 %v783
        %v1068 = vunpack.c.h.b16 %v783
        %v1069 = vunpack.c.l.b16 %v784
        %v1070 = vunpack.c.h.b16 %v784
        %v1071 = vunpack.c.l.b16 %v785
        %v1072 = vunpack.c.h.b16 %v785
        %v1073 = vunpack.c.l.b16 %v786
        %v1074 = vunpack.c.h.b16 %v786
        %v1075 = vunpack.c.l.b16 %v787
        %v1076 = vunpack.c.h.b16 %v787
        %v1077 = vunpack.c.l.b16 %v788
        %v1078 = vunpack.c.h.b16 %v788
        %v1079 = vunpack.c.l.b16 %v789
        %v1080 = vunpack.c.h.b16 %v789
        %v1081 = vunpack.c.l.b16 %v790
        %v1082 = vunpack.c.h.b16 %v790
        %v1083 = vunpack.c.l.b16 %v791
        %v1084 = vunpack.c.h.b16 %v791
        %v1085 = vunpack.c.l.b16 %v792
        %v1086 = vunpack.c.h.b16 %v792
        %v1087 = vunpack.c.l.b16 %v793
        %v1088 = vunpack.c.h.b16 %v793
        %v1089 = vunpack.c.l.b16 %v794
        %v1090 = vunpack.c.h.b16 %v794
        %v1091 = vunpack.c.l.b16 %v795
        %v1092 = vunpack.c.h.b16 %v795
        %v1093 = vunpack.c.l.b16 %v796
        %v1094 = vunpack.c.h.b16 %v796
        %v1095 = vunpack.c.l.b16 %v797
        %v1096 = vunpack.c.h.b16 %v797
        %v1097 = vunpack.c.l.b16 %v798
        %v1098 = vunpack.c.h.b16 %v798
        %v1099 = vunpack.c.l.b16 %v799
        %v1100 = vunpack.c.h.b16 %v799
        %v1101 = vunpack.c.l.b16 %v800
        %v1102 = vunpack.c.h.b16 %v800
        %v1103 = vunpack.c.l.b16 %v801
        %v1104 = vunpack.c.h.b16 %v801
        %v1105 = vunpack.c.l.b16 %v802
        %v1106 = vunpack.c.h.b16 %v802
        %v1107 = vunpack.c.l.b16 %v803
        %v1108 = vunpack.c.h.b16 %v803
        %v1109 = vunpack.c.l.b16 %v804
        %v1110 = vunpack.c.h.b16 %v804
        %v1111 = vunpack.c.l.b16 %v805
        %v1112 = vunpack.c.h.b16 %v805
        %v1113 = vunpack.c.l.b16 %v806
        %v1114 = vunpack.c.h.b16 %v806
        %v1115 = vunpack.c.l.b16 %v807
        %v1116 = vunpack.c.h.b16 %v807
        %v1117 = vunpack.c.l.b16 %v808
        %v1118 = vunpack.c.h.b16 %v808
        %v1119 = vunpack.c.l.b16 %v809
        %v1120 = vunpack.c.h.b16 %v809
        %v1121 = vunpack.c.l.b16 %v810
        %v1122 = vunpack.c.h.b16 %v810
        %v1123 = vunpack.c.l.b16 %v811
        %v1124 = vunpack.c.h.b16 %v811
        %v1125 = vunpack.c.l.b16 %v812
        %v1126 = vunpack.c.h.b16 %v812
        %v1127 = vunpack.c.l.b16 %v813
        %v1128 = vunpack.c.h.b16 %v813
        %v1129 = vunpack.c.l.b16 %v814
        %v1130 = vunpack.c.h.b16 %v814
        %v1131 = vunpack.c.l.b16 %v815
        %v1132 = vunpack.c.h.b16 %v815
        %v1133 = vunpack.c.l.b16 %v816
        %v1134 = vunpack.c.h.b16 %v816
        %v1135 = vunpack.c.l.b16 %v817
        %v1136 = vunpack.c.h.b16 %v817
        %v1137 = vunpack.c.l.b16 %v818
        %v1138 = vunpack.c.h.b16 %v818
        %v1139 = vunpack.c.l.b16 %v819
        %v1140 = vunpack.c.h.b16 %v819
        %v1141 = vunpack.c.l.b16 %v820
        %v1142 = vunpack.c.h.b16 %v820
        %v1143 = vunpack.c.l.b16 %v821
        %v1144 = vunpack.c.h.b16 %v821
        %v1145 = vunpack.c.l.b16 %v822
        %v1146 = vunpack.c.h.b16 %v822
        %v1147 = vunpack.c.l.b16 %v823
        %v1148 = vunpack.c.h.b16 %v823
        %v1149 = vunpack.c.l.b16 %v824
        %v1150 = vunpack.c.h.b16 %v824
        %v1151 = vunpack.c.l.b16 %v825
        %v1152 = vunpack.c.h.b16 %v825
        %v1153 = vunpack.c.l.b16 %v826
        %v1154 = vunpack.c.h.b16 %v826
        %v1155 = vunpack.c.l.b16 %v827
        %v1156 = vunpack.c.h.b16 %v827
        %v1157 = vunpack.c.l.b16 %v828
        %v1158 = vunpack.c.h.b16 %v828
        %v1159 = vunpack.c.l.b16 %v829
        %v1160 = vunpack.c.h.b16 %v829
        %v1161 = vunpack.c.l.b16 %v830
        %v1162 = vunpack.c.h.b16 %v830
        %v1163 = vunpack.c.l.b16 %v831
        %v1164 = vunpack.c.h.b16 %v831
        %v1165 = vunpack.c.l.b16 %v832
        %v1166 = vunpack.c.h.b16 %v832
        %v1167 = vunpack.c.l.b16 %v833
        %v1168 = vunpack.c.h.b16 %v833
        %v1169 = vunpack.c.l.b16 %v834
        %v1170 = vunpack.c.h.b16 %v834
        %v1171 = vunpack.c.l.b16 %v835
        %v1172 = vunpack.c.h.b16 %v835
        %v1173 = vunpack.c.l.b16 %v836
        %v1174 = vunpack.c.h.b16 %v836
        %v1175 = vunpack.c.l.b16 %v837
        %v1176 = vunpack.c.h.b16 %v837
        %v1177 = vunpack.c.l.b16 %v838
        %v1178 = vunpack.c.h.b16 %v838
        %v1179 = vunpack.c.l.b16 %v839
        %v1180 = vunpack.c.h.b16 %v839
        %v1181 = vunpack.c.l.b16 %v840
        %v1182 = vunpack.c.h.b16 %v840
        %v1183 = vunpack.c.l.b16 %v841
        %v1184 = vunpack.c.h.b16 %v841
        %v1185 = vunpack.c.l.b16 %v842
        %v1186 = vunpack.c.h.b16 %v842
        %v1187 = vunpack.c.l.b16 %v843
        %v1188 = vunpack.c.h.b16 %v843
        %v1189 = vunpack.c.l.b16 %v844
        %v1190 = vunpack.c.h.b16 %v844
        %v1191 = vunpack.c.l.b16 %v845
        %v1192 = vunpack.c.h.b16 %v845
        %v1193 = vunpack.c.l.b16 %v846
        %v1194 = vunpack.c.h.b16 %v846
        %v1195 = vunpack.c.l.b16 %v847
        %v1196 = vunpack.c.h.b16 %v847
        %v1197 = vunpack.c.l.b16 %v848
        %v1198 = vunpack.c.h.b16 %v848
        %v1199 = vunpack.c.l.b16 %v849
        %v1200 = vunpack.c.h.b16 %v849
        %v1201 = vunpack.c.l.b16 %v850
        %v1202 = vunpack.c.h.b16 %v850
        %v1203 = vunpack.c.l.b16 %v851
        %v1204 = vunpack.c.h.b16 %v851
        %v1205 = vunpack.c.l.b16 %v852
        %v1206 = vunpack.c.h.b16 %v852
        %v1207 = vunpack.c.l.b16 %v853
        %v1208 = vunpack.c.h.b16 %v853
        %v1209 = vunpack.c.l.b16 %v854
        %v1210 = vunpack.c.h.b16 %v854
        %v1211 = vunpack.c.l.b16 %v855
        %v1212 = vunpack.c.h.b16 %v855
        %v1213 = vunpack.c.l.b16 %v856
        %v1214 = vunpack.c.h.b16 %v856
        %v1215 = vunpack.c.l.b16 %v857
        %v1216 = vunpack.c.h.b16 %v857
        %v1217 = vunpack.c.l.b16 %v858
        %v1218 = vunpack.c.h.b16 %v858
        %v1219 = vunpack.c.l.b16 %v859
        %v1220 = vunpack.c.h.b16 %v859
        %v1221 = vunpack.c.l.b16 %v860
        %v1222 = vunpack.c.h.b16 %v860
        %v1223 = vunpack.c.l.b16 %v861
        %v1224 = vunpack.c.h.b16 %v861
        %v1225 = vunpack.c.l.b16 %v862
        %v1226 = vunpack.c.h.b16 %v862
        %v1227 = vunpack.c.l.b16 %v863
        %v1228 = vunpack.c.h.b16 %v863
        %v1229 = vunpack.c.l.b16 %v864
        %v1230 = vunpack.c.h.b16 %v864
        %v1231 = vunpack.c.l.b16 %v865
        %v1232 = vunpack.c.h.b16 %v865
        %v1233 = vunpack.c.l.b16 %v866
        %v1234 = vunpack.c.h.b16 %v866
        %v1235 = vunpack.c.l.b16 %v867
        %v1236 = vunpack.c.h.b16 %v867
        %v1237 = vunpack.c.l.b16 %v868
        %v1238 = vunpack.c.h.b16 %v868
        %v1239 = vunpack.c.l.b16 %v869
        %v1240 = vunpack.c.h.b16 %v869
        %v1241 = vunpack.c.l.b16 %v870
        %v1242 = vunpack.c.h.b16 %v870
        %v1243 = vunpack.c.l.b16 %v871
        %v1244 = vunpack.c.h.b16 %v871
        %v1245 = vunpack.c.l.b16 %v872
        %v1246 = vunpack.c.h.b16 %v872
        %v1247 = vunpack.c.l.b16 %v873
        %v1248 = vunpack.c.h.b16 %v873
        %v1249 = vunpack.c.l.b16 %v874
        %v1250 = vunpack.c.h.b16 %v874
        %v1251 = vunpack.c.l.b16 %v875
        %v1252 = vunpack.c.h.b16 %v875
        %v1253 = vunpack.c.l.b16 %v876
        %v1254 = vunpack.c.h.b16 %v876
        %v1255 = vunpack.c.l.b16 %v877
        %v1256 = vunpack.c.h.b16 %v877
        %v1257 = vunpack.c.l.b16 %v878
        %v1258 = vunpack.c.h.b16 %v878
        %v1259 = vunpack.c.l.b16 %v879
        %v1260 = vunpack.c.h.b16 %v879
        %v1261 = vunpack.c.l.b16 %v880
        %v1262 = vunpack.c.h.b16 %v880
        %v1263 = vunpack.c.l.b16 %v881
        %v1264 = vunpack.c.h.b16 %v881
        %v1265 = vunpack.c.l.b16 %v882
        %v1266 = vunpack.c.h.b16 %v882
        %v1267 = vunpack.c.l.b16 %v883
        %v1268 = vunpack.c.h.b16 %v883
        %v1269 = vunpack.c.l.b16 %v884
        %v1270 = vunpack.c.h.b16 %v884
        %v1271 = vunpack.c.l.b16 %v885
        %v1272 = vunpack.c.h.b16 %v885
        %v1273 = vunpack.c.l.b16 %v886
        %v1274 = vunpack.c.h.b16 %v886
        %v1275 = vunpack.c.l.b16 %v887
        %v1276 = vunpack.c.h.b16 %v887
        %v1277 = vunpack.c.l.b16 %v888
        %v1278 = vunpack.c.h.b16 %v888
        %v1279 = vunpack.c.l.b16 %v889
        %v1280 = vunpack.c.h.b16 %v889
        %v1281 = vunpack.c.l.b16 %v890
        %v1282 = vunpack.c.h.b16 %v890
        %v1283 = vunpack.c.l.b16 %v891
        %v1284 = vunpack.c.h.b16 %v891
        %v1285 = vunpack.c.l.b16 %v892
        %v1286 = vunpack.c.h.b16 %v892
        %v1287 = vunpack.c.l.b16 %v893
        %v1288 = vunpack.c.h.b16 %v893
        %v1289 = vunpack.c.l.b16 %v894
        %v1290 = vunpack.c.h.b16 %v894
        %v1291 = vpack.c.b16 %v1037, %v1035
        %v1292 = vpack.c.b16 %v1038, %v1036
        %v1293 = vpack.c.b16 %v1041, %v1039
        %v1294 = vpack.c.b16 %v1042, %v1040
        %v1295 = vpack.c.b16 %v1045, %v1043
        %v1296 = vpack.c.b16 %v1046, %v1044
        %v1297 = vpack.c.b16 %v1049, %v1047
        %v1298 = vpack.c.b16 %v1050, %v1048
        %v1299 = vpack.c.b16 %v1053, %v1051
        %v1300 = vpack.c.b16 %v1054, %v1052
        %v1301 = vpack.c.b16 %v1057, %v1055
        %v1302 = vpack.c.b16 %v1058, %v1056
        %v1303 = vpack.c.b16 %v1061, %v1059
        %v1304 = vpack.c.b16 %v1062, %v1060
        %v1305 = vpack.c.b16 %v1065, %v1063
        %v1306 = vpack.c.b16 %v1066, %v1064
        %v1307 = vpack.c.b16 %v1069, %v1067
        %v1308 = vpack.c.b16 %v1070, %v1068
        %v1309 = vpack.c.b16 %v1073, %v1071
        %v1310 = vpack.c.b16 %v1074, %v1072
        %v1311 = vpack.c.b16 %v1077, %v1075
        %v1312 = vpack.c.b16 %v1078, %v1076
        %v1313 = vpack.c.b16 %v1081, %v1079
        %v1314 = vpack.c.b16 %v1082, %v1080
        %v1315 = vpack.c.b16 %v1085, %v1083
        %v1316 = vpack.c.b16 %v1086, %v1084
        %v1317 = vpack.c.b16 %v1089, %v1087
        %v1318 = vpack.c.b16 %v1090, %v1088
        %v1319 = vpack.c.b16 %v1093, %v1091
        %v1320 = vpack.c.b16 %v1094, %v1092
        %v1321 = vpack.c.b16 %v1097, %v1095
        %v1322 = vpack.c.b16 %v1098, %v1096
        %v1323 = vpack.c.b16 %v1101, %v1099
        %v1324 = vpack.c.b16 %v1102, %v1100
        %v1325 = vpack.c.b16 %v1105, %v1103
        %v1326 = vpack.c.b16 %v1106, %v1104
        %v1327 = vpack.c.b16 %v1109, %v1107
        %v1328 = vpack.c.b16 %v1110, %v1108
        %v1329 = vpack.c.b16 %v1113, %v1111
        %v1330 = vpack.c.b16 %v1114, %v1112
        %v1331 = vpack.c.b16 %v1117, %v1115
        %v1332 = vpack.c.b16 %v1118, %v1116
        %v1333 = vpack.c.b16 %v1121, %v1119
        %v1334 = vpack.c.b16 %v1122, %v1120
        %v1335 = vpack.c.b16 %v1125, %v1123
        %v1336 = vpack.c.b16 %v1126, %v1124
        %v1337 = vpack.c.b16 %v1129, %v1127
        %v1338 = vpack.c.b16 %v1130, %v1128
        %v1339 = vpack.c.b16 %v1133, %v1131
        %v1340 = vpack.c.b16 %v1134, %v1132
        %v1341 = vpack.c.b16 %v1137, %v1135
        %v1342 = vpack.c.b16 %v1138, %v1136
        %v1343 = vpack.c.b16 %v1141, %v1139
        %v1344 = vpack.c.b16 %v1142, %v1140
        %v1345 = vpack.c.b16 %v1145, %v1143
        %v1346 = vpack.c.b16 %v1146, %v1144
        %v1347 = vpack.c.b16 %v1149, %v1147
        %v1348 = vpack.c.b16 %v1150, %v1148
        %v1349 = vpack.c.b16 %v1153, %v1151
        %v1350 = vpack.c.b16 %v1154, %v1152
        %v1351 = vpack.c.b16 %v1157, %v1155
        %v1352 = vpack.c.b16 %v1158, %v1156
        %v1353 = vpack.c.b16 %v1161, %v1159
        %v1354 = vpack.c.b16 %v1162, %v1160
        %v1355 = vpack.c.b16 %v1165, %v1163
        %v1356 = vpack.c.b16 %v1166, %v1164
        %v1357 = vpack.c.b16 %v1169, %v1167
        %v1358 = vpack.c.b16 %v1170, %v1168
        %v1359 = vpack.c.b16 %v1173, %v1171
        %v1360 = vpack.c.b16 %v1174, %v1172
        %v1361 = vpack.c.b16 %v1177, %v1175
        %v1362 = vpack.c.b16 %v1178, %v1176
        %v1363 = vpack.c.b16 %v1181, %v1179
        %v1364 = vpack.c.b16 %v1182, %v1180
        %v1365 = vpack.c.b16 %v1185, %v1183
        %v1366 = vpack.c.b16 %v1186, %v1184
        %v1367 = vpack.c.b16 %v1189, %v1187
        %v1368 = vpack.c.b16 %v1190, %v1188
        %v1369 = vpack.c.b16 %v1193, %v1191
        %v1370 = vpack.c.b16 %v1194, %v1192
        %v1371 = vpack.c.b16 %v1197, %v1195
        %v1372 = vpack.c.b16 %v1198, %v1196
        %v1373 = vpack.c.b16 %v1201, %v1199
        %v1374 = vpack.c.b16 %v1202, %v1200
        %v1375 = vpack.c.b16 %v1205, %v1203
        %v1376 = vpack.c.b16 %v1206, %v1204
        %v1377 = vpack.c.b16 %v1209, %v1207
        %v1378 = vpack.c.b16 %v1210, %v1208
        %v1379 = vpack.c.b16 %v1213, %v1211
        %v1380 = vpack.c.b16 %v1214, %v1212
        %v1381 = vpack.c.b16 %v1217, %v1215
        %v1382 = vpack.c.b16 %v1218, %v1216
        %v1383 = vpack.c.b16 %v1221, %v1219
        %v1384 = vpack.c.b16 %v1222, %v1220
        %v1385 = vpack.c.b16 %v1225, %v1223
        %v1386 = vpack.c.b16 %v1226, %v1224
        %v1387 = vpack.c.b16 %v1229, %v1227
        %v1388 = vpack.c.b16 %v1230, %v1228
        %v1389 = vpack.c.b16 %v1233, %v1231
        %v1390 = vpack.c.b16 %v1234, %v1232
        %v1391 = vpack.c.b16 %v1237, %v1235
        %v1392 = vpack.c.b16 %v1238, %v1236
        %v1393 = vpack.c.b16 %v1241, %v1239
        %v1394 = vpack.c.b16 %v1242, %v1240
        %v1395 = vpack.c.b16 %v1245, %v1243
        %v1396 = vpack.c.b16 %v1246, %v1244
        %v1397 = vpack.c.b16 %v1249, %v1247
        %v1398 = vpack.c.b16 %v1250, %v1248
        %v1399 = vpack.c.b16 %v1253, %v1251
        %v1400 = vpack.c.b16 %v1254, %v1252
        %v1401 = vpack.c.b16 %v1257, %v1255
        %v1402 = vpack.c.b16 %v1258, %v1256
        %v1403 = vpack.c.b16 %v1261, %v1259
        %v1404 = vpack.c.b16 %v1262, %v1260
        %v1405 = vpack.c.b16 %v1265, %v1263
        %v1406 = vpack.c.b16 %v1266, %v1264
        %v1407 = vpack.c.b16 %v1269, %v1267
        %v1408 = vpack.c.b16 %v1270, %v1268
        %v1409 = vpack.c.b16 %v1273, %v1271
        %v1410 = vpack.c.b16 %v1274, %v1272
        %v1411 = vpack.c.b16 %v1277, %v1275
        %v1412 = vpack.c.b16 %v1278, %v1276
        %v1413 = vpack.c.b16 %v1281, %v1279
        %v1414 = vpack.c.b16 %v1282, %v1280
        %v1415 = vpack.c.b16 %v1285, %v1283
        %v1416 = vpack.c.b16 %v1286, %v1284
        %v1417 = vpack.c.b16 %v1289, %v1287
        %v1418 = vpack.c.b16 %v1290, %v1288
        %1547 = vmatprep.subr.bf16.mxu0 %v1292
        %1548 = vmatpush1.bf16.msra.mxu0 %v1291
        %1549 = vmatprep.subr.bf16.mxu0 %v1294
        %1550 = vmatpush1.bf16.msra.mxu0 %v1293
        %1551 = vmatprep.subr.bf16.mxu0 %v1296
        %1552 = vmatpush1.bf16.msra.mxu0 %v1295
        %1553 = vmatprep.subr.bf16.mxu0 %v1298
        %1554 = vmatpush1.bf16.msra.mxu0 %v1297
        %1555 = vmatprep.subr.bf16.mxu0 %v1300
        %1556 = vmatpush1.bf16.msra.mxu0 %v1299
        %1557 = vmatprep.subr.bf16.mxu0 %v1302
        %1558 = vmatpush1.bf16.msra.mxu0 %v1301
        %1559 = vmatprep.subr.bf16.mxu0 %v1304
        %1560 = vmatpush1.bf16.msra.mxu0 %v1303
        %1561 = vmatprep.subr.bf16.mxu0 %v1306
        %1562 = vmatpush1.bf16.msra.mxu0 %v1305
        %1563 = vmatprep.subr.bf16.mxu0 %v1308
        %1564 = vmatpush1.bf16.msra.mxu0 %v1307
        %1565 = vmatprep.subr.bf16.mxu0 %v1310
        %1566 = vmatpush1.bf16.msra.mxu0 %v1309
        %1567 = vmatprep.subr.bf16.mxu0 %v1312
        %1568 = vmatpush1.bf16.msra.mxu0 %v1311
        %1569 = vmatprep.subr.bf16.mxu0 %v1314
        %1570 = vmatpush1.bf16.msra.mxu0 %v1313
        %1571 = vmatprep.subr.bf16.mxu0 %v1316
        %1572 = vmatpush1.bf16.msra.mxu0 %v1315
        %1573 = vmatprep.subr.bf16.mxu0 %v1318
        %1574 = vmatpush1.bf16.msra.mxu0 %v1317
        %1575 = vmatprep.subr.bf16.mxu0 %v1320
        %1576 = vmatpush1.bf16.msra.mxu0 %v1319
        %1577 = vmatprep.subr.bf16.mxu0 %v1322
        %1578 = vmatpush1.bf16.msra.mxu0 %v1321
        %1579 = vmatprep.mubr.bf16.mxu0 %v640
        %1580 = vmatmul.mubr.bf16.gmra.mrb[0].mxu0 %v639
        %v1581 = vpop.f32.mrb[0].mxu0
        %v1582 = vadd.f32 %v900, %v1581
        %v1583 = vpop.f32.mrb[0].mxu0
        %v1584 = vadd.f32 %v904, %v1583
        %v1585 = vpop.f32.mrb[0].mxu0
        %v1586 = vadd.f32 %v900, %v1585
        %v1587 = vpop.f32.mrb[0].mxu0
        %v1588 = vadd.f32 %v904, %v1587
        %1589 = vmatprep.mubr.bf16.mxu0 %v648
        %1590 = vmatmul.mubr.bf16.gmra.mrb[0].mxu0 %v647
        %v1591 = vpop.f32.mrb[0].mxu0
        %v1592 = vadd.f32 %v900, %v1591
        %v1593 = vpop.f32.mrb[0].mxu0
        %v1594 = vadd.f32 %v904, %v1593
        %v1595 = vpop.f32.mrb[0].mxu0
        %v1596 = vadd.f32 %v900, %v1595
        %v1597 = vpop.f32.mrb[0].mxu0
        %v1598 = vadd.f32 %v904, %v1597
        %1599 = vmatprep.mubr.bf16.mxu0 %v656
        %1600 = vmatmul.mubr.bf16.gmra.mrb[0].mxu0 %v655
        %v1601 = vpop.f32.mrb[0].mxu0
        %v1602 = vadd.f32 %v900, %v1601
        %v1603 = vpop.f32.mrb[0].mxu0
        %v1604 = vadd.f32 %v904, %v1603
        %v1605 = vpop.f32.mrb[0].mxu0
        %v1606 = vadd.f32 %v900, %v1605
        %v1607 = vpop.f32.mrb[0].mxu0
        %v1608 = vadd.f32 %v904, %v1607
        %1609 = vmatprep.mubr.bf16.mxu0 %v664
        %1610 = vmatmul.mubr.bf16.gmra.mrb[0].mxu0 %v663
        %v1611 = vpop.f32.mrb[0].mxu0
        %v1612 = vadd.f32 %v900, %v1611
        %v1613 = vpop.f32.mrb[0].mxu0
        %v1614 = vadd.f32 %v904, %v1613
        %v1615 = vpop.f32.mrb[0].mxu0
        %v1616 = vadd.f32 %v900, %v1615
        %v1617 = vpop.f32.mrb[0].mxu0
        %v1618 = vadd.f32 %v904, %v1617
        %1619 = vmatprep.mubr.bf16.mxu0 %v672
        %1620 = vmatmul.mubr.bf16.gmra.mrb[0].mxu0 %v671
        %v1621 = vpop.f32.mrb[0].mxu0
        %v1622 = vadd.f32 %v900, %v1621
        %v1623 = vpop.f32.mrb[0].mxu0
        %v1624 = vadd.f32 %v904, %v1623
        %v1625 = vpop.f32.mrb[0].mxu0
        %v1626 = vadd.f32 %v900, %v1625
        %v1627 = vpop.f32.mrb[0].mxu0
        %v1628 = vadd.f32 %v904, %v1627
        %1629 = vmatprep.mubr.bf16.mxu0 %v680
        %1630 = vmatmul.mubr.bf16.gmra.mrb[0].mxu0 %v679
        %v1631 = vpop.f32.mrb[0].mxu0
        %v1632 = vadd.f32 %v900, %v1631
        %v1633 = vpop.f32.mrb[0].mxu0
        %v1634 = vadd.f32 %v904, %v1633
        %v1635 = vpop.f32.mrb[0].mxu0
        %v1636 = vadd.f32 %v900, %v1635
        %v1637 = vpop.f32.mrb[0].mxu0
        %v1638 = vadd.f32 %v904, %v1637
        %1639 = vmatprep.mubr.bf16.mxu0 %v688
        %1640 = vmatmul.mubr.bf16.gmra.mrb[0].mxu0 %v687
        %v1641 = vpop.f32.mrb[0].mxu0
        %v1642 = vadd.f32 %v900, %v1641
        %v1643 = vpop.f32.mrb[0].mxu0
        %v1644 = vadd.f32 %v904, %v1643
        %v1645 = vpop.f32.mrb[0].mxu0
        %v1646 = vadd.f32 %v900, %v1645
        %v1647 = vpop.f32.mrb[0].mxu0
        %v1648 = vadd.f32 %v904, %v1647
        %1649 = vmatprep.mubr.bf16.mxu0 %v696
        %1650 = vmatmul.mubr.bf16.gmra.mrb[0].mxu0 %v695
        %v1651 = vpop.f32.mrb[0].mxu0
        %v1652 = vadd.f32 %v900, %v1651
        %v1653 = vpop.f32.mrb[0].mxu0
        %v1654 = vadd.f32 %v904, %v1653
        %v1655 = vpop.f32.mrb[0].mxu0
        %v1656 = vadd.f32 %v900, %v1655
        %v1657 = vpop.f32.mrb[0].mxu0
        %v1658 = vadd.f32 %v904, %v1657
        %1659 = vmatprep.mubr.bf16.mxu0 %v704
        %1660 = vmatmul.mubr.bf16.gmra.mrb[0].mxu0 %v703
        %v1661 = vpop.f32.mrb[0].mxu0
        %v1662 = vadd.f32 %v900, %v1661
        %v1663 = vpop.f32.mrb[0].mxu0
        %v1664 = vadd.f32 %v904, %v1663
        %v1665 = vpop.f32.mrb[0].mxu0
        %v1666 = vadd.f32 %v900, %v1665
        %v1667 = vpop.f32.mrb[0].mxu0
        %v1668 = vadd.f32 %v904, %v1667
        %1669 = vmatprep.mubr.bf16.mxu0 %v712
        %1670 = vmatmul.mubr.bf16.gmra.mrb[0].mxu0 %v711
        %v1671 = vpop.f32.mrb[0].mxu0
        %v1672 = vadd.f32 %v900, %v1671
        %v1673 = vpop.f32.mrb[0].mxu0
        %v1674 = vadd.f32 %v904, %v1673
        %v1675 = vpop.f32.mrb[0].mxu0
        %v1676 = vadd.f32 %v900, %v1675
        %v1677 = vpop.f32.mrb[0].mxu0
        %v1678 = vadd.f32 %v904, %v1677
        %1679 = vmatprep.mubr.bf16.mxu0 %v720
        %1680 = vmatmul.mubr.bf16.gmra.mrb[0].mxu0 %v719
        %v1681 = vpop.f32.mrb[0].mxu0
        %v1682 = vadd.f32 %v900, %v1681
        %v1683 = vpop.f32.mrb[0].mxu0
        %v1684 = vadd.f32 %v904, %v1683
        %v1685 = vpop.f32.mrb[0].mxu0
        %v1686 = vadd.f32 %v900, %v1685
        %v1687 = vpop.f32.mrb[0].mxu0
        %v1688 = vadd.f32 %v904, %v1687
        %1689 = vmatprep.mubr.bf16.mxu0 %v728
        %1690 = vmatmul.mubr.bf16.gmra.mrb[0].mxu0 %v727
        %v1691 = vpop.f32.mrb[0].mxu0
        %v1692 = vadd.f32 %v900, %v1691
        %v1693 = vpop.f32.mrb[0].mxu0
        %v1694 = vadd.f32 %v904, %v1693
        %v1695 = vpop.f32.mrb[0].mxu0
        %v1696 = vadd.f32 %v900, %v1695
        %v1697 = vpop.f32.mrb[0].mxu0
        %v1698 = vadd.f32 %v904, %v1697
        %1699 = vmatprep.mubr.bf16.mxu0 %v736
        %1700 = vmatmul.mubr.bf16.gmra.mrb[0].mxu0 %v735
        %v1701 = vpop.f32.mrb[0].mxu0
        %v1702 = vadd.f32 %v900, %v1701
        %v1703 = vpop.f32.mrb[0].mxu0
        %v1704 = vadd.f32 %v904, %v1703
        %v1705 = vpop.f32.mrb[0].mxu0
        %v1706 = vadd.f32 %v900, %v1705
        %v1707 = vpop.f32.mrb[0].mxu0
        %v1708 = vadd.f32 %v904, %v1707
        %1709 = vmatprep.mubr.bf16.mxu0 %v744
        %1710 = vmatmul.mubr.bf16.gmra.mrb[0].mxu0 %v743
        %v1711 = vpop.f32.mrb[0].mxu0
        %v1712 = vadd.f32 %v900, %v1711
        %v1713 = vpop.f32.mrb[0].mxu0
        %v1714 = vadd.f32 %v904, %v1713
        %v1715 = vpop.f32.mrb[0].mxu0
        %v1716 = vadd.f32 %v900, %v1715
        %v1717 = vpop.f32.mrb[0].mxu0
        %v1718 = vadd.f32 %v904, %v1717
        %1719 = vmatprep.mubr.bf16.mxu0 %v752
        %1720 = vmatmul.mubr.bf16.gmra.mrb[0].mxu0 %v751
        %v1721 = vpop.f32.mrb[0].mxu0
        %v1722 = vadd.f32 %v900, %v1721
        %v1723 = vpop.f32.mrb[0].mxu0
        %v1724 = vadd.f32 %v904, %v1723
        %v1725 = vpop.f32.mrb[0].mxu0
        %v1726 = vadd.f32 %v900, %v1725
        %v1727 = vpop.f32.mrb[0].mxu0
        %v1728 = vadd.f32 %v904, %v1727
        %1729 = vmatprep.mubr.bf16.mxu0 %v760
        %1730 = vmatmul.mubr.bf16.gmra.mrb[0].mxu0 %v759
        %v1731 = vpop.f32.mrb[0].mxu0
        %v1732 = vadd.f32 %v900, %v1731
        %v1733 = vpop.f32.mrb[0].mxu0
        %v1734 = vadd.f32 %v904, %v1733
        %v1735 = vpop.f32.mrb[0].mxu0
        %v1736 = vadd.f32 %v900, %v1735
        %v1737 = vpop.f32.mrb[0].mxu0
        %v1738 = vadd.f32 %v904, %v1737
        %1739 = vdwg.mxu0
        %1740 = vmatprep.subr.bf16.mxu0 %v1324
        %1741 = vmatpush1.bf16.msra.mxu0 %v1323
        %1742 = vmatprep.subr.bf16.mxu0 %v1326
        %1743 = vmatpush1.bf16.msra.mxu0 %v1325
        %1744 = vmatprep.subr.bf16.mxu0 %v1328
        %1745 = vmatpush1.bf16.msra.mxu0 %v1327
        %1746 = vmatprep.subr.bf16.mxu0 %v1330
        %1747 = vmatpush1.bf16.msra.mxu0 %v1329
        %1748 = vmatprep.subr.bf16.mxu0 %v1332
        %1749 = vmatpush1.bf16.msra.mxu0 %v1331
        %1750 = vmatprep.subr.bf16.mxu0 %v1334
        %1751 = vmatpush1.bf16.msra.mxu0 %v1333
        %1752 = vmatprep.subr.bf16.mxu0 %v1336
        %1753 = vmatpush1.bf16.msra.mxu0 %v1335
        %1754 = vmatprep.subr.bf16.mxu0 %v1338
        %1755 = vmatpush1.bf16.msra.mxu0 %v1337
        %1756 = vmatprep.subr.bf16.mxu0 %v1340
        %1757 = vmatpush1.bf16.msra.mxu0 %v1339
        %1758 = vmatprep.subr.bf16.mxu0 %v1342
        %1759 = vmatpush1.bf16.msra.mxu0 %v1341
        %1760 = vmatprep.subr.bf16.mxu0 %v1344
        %1761 = vmatpush1.bf16.msra.mxu0 %v1343
        %1762 = vmatprep.subr.bf16.mxu0 %v1346
        %1763 = vmatpush1.bf16.msra.mxu0 %v1345
        %1764 = vmatprep.subr.bf16.mxu0 %v1348
        %1765 = vmatpush1.bf16.msra.mxu0 %v1347
        %1766 = vmatprep.subr.bf16.mxu0 %v1350
        %1767 = vmatpush1.bf16.msra.mxu0 %v1349
        %1768 = vmatprep.subr.bf16.mxu0 %v1352
        %1769 = vmatpush1.bf16.msra.mxu0 %v1351
        %1770 = vmatprep.subr.bf16.mxu0 %v1354
        %1771 = vmatpush1.bf16.msra.mxu0 %v1353
        %1772 = vmatprep.mubr.bf16.mxu0 %v642
        %1773 = vmatmul.mubr.bf16.gmra.mrb[0].mxu0 %v641
        %v1774 = vpop.f32.mrb[0].mxu0
        %v1775 = vadd.f32 %v1582, %v1774
        %v1776 = vpop.f32.mrb[0].mxu0
        %v1777 = vadd.f32 %v1584, %v1776
        %v1778 = vpop.f32.mrb[0].mxu0
        %v1779 = vadd.f32 %v1586, %v1778
        %v1780 = vpop.f32.mrb[0].mxu0
        %v1781 = vadd.f32 %v1588, %v1780
        %1782 = vmatprep.mubr.bf16.mxu0 %v650
        %1783 = vmatmul.mubr.bf16.gmra.mrb[0].mxu0 %v649
        %v1784 = vpop.f32.mrb[0].mxu0
        %v1785 = vadd.f32 %v1592, %v1784
        %v1786 = vpop.f32.mrb[0].mxu0
        %v1787 = vadd.f32 %v1594, %v1786
        %v1788 = vpop.f32.mrb[0].mxu0
        %v1789 = vadd.f32 %v1596, %v1788
        %v1790 = vpop.f32.mrb[0].mxu0
        %v1791 = vadd.f32 %v1598, %v1790
        %1792 = vmatprep.mubr.bf16.mxu0 %v658
        %1793 = vmatmul.mubr.bf16.gmra.mrb[0].mxu0 %v657
        %v1794 = vpop.f32.mrb[0].mxu0
        %v1795 = vadd.f32 %v1602, %v1794
        %v1796 = vpop.f32.mrb[0].mxu0
        %v1797 = vadd.f32 %v1604, %v1796
        %v1798 = vpop.f32.mrb[0].mxu0
        %v1799 = vadd.f32 %v1606, %v1798
        %v1800 = vpop.f32.mrb[0].mxu0
        %v1801 = vadd.f32 %v1608, %v1800
        %1802 = vmatprep.mubr.bf16.mxu0 %v666
        %1803 = vmatmul.mubr.bf16.gmra.mrb[0].mxu0 %v665
        %v1804 = vpop.f32.mrb[0].mxu0
        %v1805 = vadd.f32 %v1612, %v1804
        %v1806 = vpop.f32.mrb[0].mxu0
        %v1807 = vadd.f32 %v1614, %v1806
        %v1808 = vpop.f32.mrb[0].mxu0
        %v1809 = vadd.f32 %v1616, %v1808
        %v1810 = vpop.f32.mrb[0].mxu0
        %v1811 = vadd.f32 %v1618, %v1810
        %1812 = vmatprep.mubr.bf16.mxu0 %v674
        %1813 = vmatmul.mubr.bf16.gmra.mrb[0].mxu0 %v673
        %v1814 = vpop.f32.mrb[0].mxu0
        %v1815 = vadd.f32 %v1622, %v1814
        %v1816 = vpop.f32.mrb[0].mxu0
        %v1817 = vadd.f32 %v1624, %v1816
        %v1818 = vpop.f32.mrb[0].mxu0
        %v1819 = vadd.f32 %v1626, %v1818
        %v1820 = vpop.f32.mrb[0].mxu0
        %v1821 = vadd.f32 %v1628, %v1820
        %1822 = vmatprep.mubr.bf16.mxu0 %v682
        %1823 = vmatmul.mubr.bf16.gmra.mrb[0].mxu0 %v681
        %v1824 = vpop.f32.mrb[0].mxu0
        %v1825 = vadd.f32 %v1632, %v1824
        %v1826 = vpop.f32.mrb[0].mxu0
        %v1827 = vadd.f32 %v1634, %v1826
        %v1828 = vpop.f32.mrb[0].mxu0
        %v1829 = vadd.f32 %v1636, %v1828
        %v1830 = vpop.f32.mrb[0].mxu0
        %v1831 = vadd.f32 %v1638, %v1830
        %1832 = vmatprep.mubr.bf16.mxu0 %v690
        %1833 = vmatmul.mubr.bf16.gmra.mrb[0].mxu0 %v689
        %v1834 = vpop.f32.mrb[0].mxu0
        %v1835 = vadd.f32 %v1642, %v1834
        %v1836 = vpop.f32.mrb[0].mxu0
        %v1837 = vadd.f32 %v1644, %v1836
        %v1838 = vpop.f32.mrb[0].mxu0
        %v1839 = vadd.f32 %v1646, %v1838
        %v1840 = vpop.f32.mrb[0].mxu0
        %v1841 = vadd.f32 %v1648, %v1840
        %1842 = vmatprep.mubr.bf16.mxu0 %v698
        %1843 = vmatmul.mubr.bf16.gmra.mrb[0].mxu0 %v697
        %v1844 = vpop.f32.mrb[0].mxu0
        %v1845 = vadd.f32 %v1652, %v1844
        %v1846 = vpop.f32.mrb[0].mxu0
        %v1847 = vadd.f32 %v1654, %v1846
        %v1848 = vpop.f32.mrb[0].mxu0
        %v1849 = vadd.f32 %v1656, %v1848
        %v1850 = vpop.f32.mrb[0].mxu0
        %v1851 = vadd.f32 %v1658, %v1850
        %1852 = vmatprep.mubr.bf16.mxu0 %v706
        %1853 = vmatmul.mubr.bf16.gmra.mrb[0].mxu0 %v705
        %v1854 = vpop.f32.mrb[0].mxu0
        %v1855 = vadd.f32 %v1662, %v1854
        %v1856 = vpop.f32.mrb[0].mxu0
        %v1857 = vadd.f32 %v1664, %v1856
        %v1858 = vpop.f32.mrb[0].mxu0
        %v1859 = vadd.f32 %v1666, %v1858
        %v1860 = vpop.f32.mrb[0].mxu0
        %v1861 = vadd.f32 %v1668, %v1860
        %1862 = vmatprep.mubr.bf16.mxu0 %v714
        %1863 = vmatmul.mubr.bf16.gmra.mrb[0].mxu0 %v713
        %v1864 = vpop.f32.mrb[0].mxu0
        %v1865 = vadd.f32 %v1672, %v1864
        %v1866 = vpop.f32.mrb[0].mxu0
        %v1867 = vadd.f32 %v1674, %v1866
        %v1868 = vpop.f32.mrb[0].mxu0
        %v1869 = vadd.f32 %v1676, %v1868
        %v1870 = vpop.f32.mrb[0].mxu0
        %v1871 = vadd.f32 %v1678, %v1870
        %1872 = vmatprep.mubr.bf16.mxu0 %v722
        %1873 = vmatmul.mubr.bf16.gmra.mrb[0].mxu0 %v721
        %v1874 = vpop.f32.mrb[0].mxu0
        %v1875 = vadd.f32 %v1682, %v1874
        %v1876 = vpop.f32.mrb[0].mxu0
        %v1877 = vadd.f32 %v1684, %v1876
        %v1878 = vpop.f32.mrb[0].mxu0
        %v1879 = vadd.f32 %v1686, %v1878
        %v1880 = vpop.f32.mrb[0].mxu0
        %v1881 = vadd.f32 %v1688, %v1880
        %1882 = vmatprep.mubr.bf16.mxu0 %v730
        %1883 = vmatmul.mubr.bf16.gmra.mrb[0].mxu0 %v729
        %v1884 = vpop.f32.mrb[0].mxu0
        %v1885 = vadd.f32 %v1692, %v1884
        %v1886 = vpop.f32.mrb[0].mxu0
        %v1887 = vadd.f32 %v1694, %v1886
        %v1888 = vpop.f32.mrb[0].mxu0
        %v1889 = vadd.f32 %v1696, %v1888
        %v1890 = vpop.f32.mrb[0].mxu0
        %v1891 = vadd.f32 %v1698, %v1890
        %1892 = vmatprep.mubr.bf16.mxu0 %v738
        %1893 = vmatmul.mubr.bf16.gmra.mrb[0].mxu0 %v737
        %v1894 = vpop.f32.mrb[0].mxu0
        %v1895 = vadd.f32 %v1702, %v1894
        %v1896 = vpop.f32.mrb[0].mxu0
        %v1897 = vadd.f32 %v1704, %v1896
        %v1898 = vpop.f32.mrb[0].mxu0
        %v1899 = vadd.f32 %v1706, %v1898
        %v1900 = vpop.f32.mrb[0].mxu0
        %v1901 = vadd.f32 %v1708, %v1900
        %1902 = vmatprep.mubr.bf16.mxu0 %v746
        %1903 = vmatmul.mubr.bf16.gmra.mrb[0].mxu0 %v745
        %v1904 = vpop.f32.mrb[0].mxu0
        %v1905 = vadd.f32 %v1712, %v1904
        %v1906 = vpop.f32.mrb[0].mxu0
        %v1907 = vadd.f32 %v1714, %v1906
        %v1908 = vpop.f32.mrb[0].mxu0
        %v1909 = vadd.f32 %v1716, %v1908
        %v1910 = vpop.f32.mrb[0].mxu0
        %v1911 = vadd.f32 %v1718, %v1910
        %1912 = vmatprep.mubr.bf16.mxu0 %v754
        %1913 = vmatmul.mubr.bf16.gmra.mrb[0].mxu0 %v753
        %v1914 = vpop.f32.mrb[0].mxu0
        %v1915 = vadd.f32 %v1722, %v1914
        %v1916 = vpop.f32.mrb[0].mxu0
        %v1917 = vadd.f32 %v1724, %v1916
        %v1918 = vpop.f32.mrb[0].mxu0
        %v1919 = vadd.f32 %v1726, %v1918
        %v1920 = vpop.f32.mrb[0].mxu0
        %v1921 = vadd.f32 %v1728, %v1920
        %1922 = vmatprep.mubr.bf16.mxu0 %v762
        %1923 = vmatmul.mubr.bf16.gmra.mrb[0].mxu0 %v761
        %v1924 = vpop.f32.mrb[0].mxu0
        %v1925 = vadd.f32 %v1732, %v1924
        %v1926 = vpop.f32.mrb[0].mxu0
        %v1927 = vadd.f32 %v1734, %v1926
        %v1928 = vpop.f32.mrb[0].mxu0
        %v1929 = vadd.f32 %v1736, %v1928
        %v1930 = vpop.f32.mrb[0].mxu0
        %v1931 = vadd.f32 %v1738, %v1930
        %1932 = vdwg.mxu0
        %1933 = vmatprep.subr.bf16.mxu0 %v1356
        %1934 = vmatpush1.bf16.msra.mxu0 %v1355
        %1935 = vmatprep.subr.bf16.mxu0 %v1358
        %1936 = vmatpush1.bf16.msra.mxu0 %v1357
        %1937 = vmatprep.subr.bf16.mxu0 %v1360
        %1938 = vmatpush1.bf16.msra.mxu0 %v1359
        %1939 = vmatprep.subr.bf16.mxu0 %v1362
        %1940 = vmatpush1.bf16.msra.mxu0 %v1361
        %1941 = vmatprep.subr.bf16.mxu0 %v1364
        %1942 = vmatpush1.bf16.msra.mxu0 %v1363
        %1943 = vmatprep.subr.bf16.mxu0 %v1366
        %1944 = vmatpush1.bf16.msra.mxu0 %v1365
        %1945 = vmatprep.subr.bf16.mxu0 %v1368
        %1946 = vmatpush1.bf16.msra.mxu0 %v1367
        %1947 = vmatprep.subr.bf16.mxu0 %v1370
        %1948 = vmatpush1.bf16.msra.mxu0 %v1369
        %1949 = vmatprep.subr.bf16.mxu0 %v1372
        %1950 = vmatpush1.bf16.msra.mxu0 %v1371
        %1951 = vmatprep.subr.bf16.mxu0 %v1374
        %1952 = vmatpush1.bf16.msra.mxu0 %v1373
        %1953 = vmatprep.subr.bf16.mxu0 %v1376
        %1954 = vmatpush1.bf16.msra.mxu0 %v1375
        %1955 = vmatprep.subr.bf16.mxu0 %v1378
        %1956 = vmatpush1.bf16.msra.mxu0 %v1377
        %1957 = vmatprep.subr.bf16.mxu0 %v1380
        %1958 = vmatpush1.bf16.msra.mxu0 %v1379
        %1959 = vmatprep.subr.bf16.mxu0 %v1382
        %1960 = vmatpush1.bf16.msra.mxu0 %v1381
        %1961 = vmatprep.subr.bf16.mxu0 %v1384
        %1962 = vmatpush1.bf16.msra.mxu0 %v1383
        %1963 = vmatprep.subr.bf16.mxu0 %v1386
        %1964 = vmatpush1.bf16.msra.mxu0 %v1385
        %1965 = vmatprep.mubr.bf16.mxu0 %v644
        %1966 = vmatmul.mubr.bf16.gmra.mrb[0].mxu0 %v643
        %v1967 = vpop.f32.mrb[0].mxu0
        %v1968 = vadd.f32 %v1775, %v1967
        %v1969 = vpop.f32.mrb[0].mxu0
        %v1970 = vadd.f32 %v1777, %v1969
        %v1971 = vpop.f32.mrb[0].mxu0
        %v1972 = vadd.f32 %v1779, %v1971
        %v1973 = vpop.f32.mrb[0].mxu0
        %v1974 = vadd.f32 %v1781, %v1973
        %1975 = vmatprep.mubr.bf16.mxu0 %v652
        %1976 = vmatmul.mubr.bf16.gmra.mrb[0].mxu0 %v651
        %v1977 = vpop.f32.mrb[0].mxu0
        %v1978 = vadd.f32 %v1785, %v1977
        %v1979 = vpop.f32.mrb[0].mxu0
        %v1980 = vadd.f32 %v1787, %v1979
        %v1981 = vpop.f32.mrb[0].mxu0
        %v1982 = vadd.f32 %v1789, %v1981
        %v1983 = vpop.f32.mrb[0].mxu0
        %v1984 = vadd.f32 %v1791, %v1983
        %1985 = vmatprep.mubr.bf16.mxu0 %v660
        %1986 = vmatmul.mubr.bf16.gmra.mrb[0].mxu0 %v659
        %v1987 = vpop.f32.mrb[0].mxu0
        %v1988 = vadd.f32 %v1795, %v1987
        %v1989 = vpop.f32.mrb[0].mxu0
        %v1990 = vadd.f32 %v1797, %v1989
        %v1991 = vpop.f32.mrb[0].mxu0
        %v1992 = vadd.f32 %v1799, %v1991
        %v1993 = vpop.f32.mrb[0].mxu0
        %v1994 = vadd.f32 %v1801, %v1993
        %1995 = vmatprep.mubr.bf16.mxu0 %v668
        %1996 = vmatmul.mubr.bf16.gmra.mrb[0].mxu0 %v667
        %v1997 = vpop.f32.mrb[0].mxu0
        %v1998 = vadd.f32 %v1805, %v1997
        %v1999 = vpop.f32.mrb[0].mxu0
        %v2000 = vadd.f32 %v1807, %v1999
        %v2001 = vpop.f32.mrb[0].mxu0
        %v2002 = vadd.f32 %v1809, %v2001
        %v2003 = vpop.f32.mrb[0].mxu0
        %v2004 = vadd.f32 %v1811, %v2003
        %2005 = vmatprep.mubr.bf16.mxu0 %v676
        %2006 = vmatmul.mubr.bf16.gmra.mrb[0].mxu0 %v675
        %v2007 = vpop.f32.mrb[0].mxu0
        %v2008 = vadd.f32 %v1815, %v2007
        %v2009 = vpop.f32.mrb[0].mxu0
        %v2010 = vadd.f32 %v1817, %v2009
        %v2011 = vpop.f32.mrb[0].mxu0
        %v2012 = vadd.f32 %v1819, %v2011
        %v2013 = vpop.f32.mrb[0].mxu0
        %v2014 = vadd.f32 %v1821, %v2013
        %2015 = vmatprep.mubr.bf16.mxu0 %v684
        %2016 = vmatmul.mubr.bf16.gmra.mrb[0].mxu0 %v683
        %v2017 = vpop.f32.mrb[0].mxu0
        %v2018 = vadd.f32 %v1825, %v2017
        %v2019 = vpop.f32.mrb[0].mxu0
        %v2020 = vadd.f32 %v1827, %v2019
        %v2021 = vpop.f32.mrb[0].mxu0
        %v2022 = vadd.f32 %v1829, %v2021
        %v2023 = vpop.f32.mrb[0].mxu0
        %v2024 = vadd.f32 %v1831, %v2023
        %2025 = vmatprep.mubr.bf16.mxu0 %v692
        %2026 = vmatmul.mubr.bf16.gmra.mrb[0].mxu0 %v691
        %v2027 = vpop.f32.mrb[0].mxu0
        %v2028 = vadd.f32 %v1835, %v2027
        %v2029 = vpop.f32.mrb[0].mxu0
        %v2030 = vadd.f32 %v1837, %v2029
        %v2031 = vpop.f32.mrb[0].mxu0
        %v2032 = vadd.f32 %v1839, %v2031
        %v2033 = vpop.f32.mrb[0].mxu0
        %v2034 = vadd.f32 %v1841, %v2033
        %2035 = vmatprep.mubr.bf16.mxu0 %v700
        %2036 = vmatmul.mubr.bf16.gmra.mrb[0].mxu0 %v699
        %v2037 = vpop.f32.mrb[0].mxu0
        %v2038 = vadd.f32 %v1845, %v2037
        %v2039 = vpop.f32.mrb[0].mxu0
        %v2040 = vadd.f32 %v1847, %v2039
        %v2041 = vpop.f32.mrb[0].mxu0
        %v2042 = vadd.f32 %v1849, %v2041
        %v2043 = vpop.f32.mrb[0].mxu0
        %v2044 = vadd.f32 %v1851, %v2043
        %2045 = vmatprep.mubr.bf16.mxu0 %v708
        %2046 = vmatmul.mubr.bf16.gmra.mrb[0].mxu0 %v707
        %v2047 = vpop.f32.mrb[0].mxu0
        %v2048 = vadd.f32 %v1855, %v2047
        %v2049 = vpop.f32.mrb[0].mxu0
        %v2050 = vadd.f32 %v1857, %v2049
        %v2051 = vpop.f32.mrb[0].mxu0
        %v2052 = vadd.f32 %v1859, %v2051
        %v2053 = vpop.f32.mrb[0].mxu0
        %v2054 = vadd.f32 %v1861, %v2053
        %2055 = vmatprep.mubr.bf16.mxu0 %v716
        %2056 = vmatmul.mubr.bf16.gmra.mrb[0].mxu0 %v715
        %v2057 = vpop.f32.mrb[0].mxu0
        %v2058 = vadd.f32 %v1865, %v2057
        %v2059 = vpop.f32.mrb[0].mxu0
        %v2060 = vadd.f32 %v1867, %v2059
        %v2061 = vpop.f32.mrb[0].mxu0
        %v2062 = vadd.f32 %v1869, %v2061
        %v2063 = vpop.f32.mrb[0].mxu0
        %v2064 = vadd.f32 %v1871, %v2063
        %2065 = vmatprep.mubr.bf16.mxu0 %v724
        %2066 = vmatmul.mubr.bf16.gmra.mrb[0].mxu0 %v723
        %v2067 = vpop.f32.mrb[0].mxu0
        %v2068 = vadd.f32 %v1875, %v2067
        %v2069 = vpop.f32.mrb[0].mxu0
        %v2070 = vadd.f32 %v1877, %v2069
        %v2071 = vpop.f32.mrb[0].mxu0
        %v2072 = vadd.f32 %v1879, %v2071
        %v2073 = vpop.f32.mrb[0].mxu0
        %v2074 = vadd.f32 %v1881, %v2073
        %2075 = vmatprep.mubr.bf16.mxu0 %v732
        %2076 = vmatmul.mubr.bf16.gmra.mrb[0].mxu0 %v731
        %v2077 = vpop.f32.mrb[0].mxu0
        %v2078 = vadd.f32 %v1885, %v2077
        %v2079 = vpop.f32.mrb[0].mxu0
        %v2080 = vadd.f32 %v1887, %v2079
        %v2081 = vpop.f32.mrb[0].mxu0
        %v2082 = vadd.f32 %v1889, %v2081
        %v2083 = vpop.f32.mrb[0].mxu0
        %v2084 = vadd.f32 %v1891, %v2083
        %2085 = vmatprep.mubr.bf16.mxu0 %v740
        %2086 = vmatmul.mubr.bf16.gmra.mrb[0].mxu0 %v739
        %v2087 = vpop.f32.mrb[0].mxu0
        %v2088 = vadd.f32 %v1895, %v2087
        %v2089 = vpop.f32.mrb[0].mxu0
        %v2090 = vadd.f32 %v1897, %v2089
        %v2091 = vpop.f32.mrb[0].mxu0
        %v2092 = vadd.f32 %v1899, %v2091
        %v2093 = vpop.f32.mrb[0].mxu0
        %v2094 = vadd.f32 %v1901, %v2093
        %2095 = vmatprep.mubr.bf16.mxu0 %v748
        %2096 = vmatmul.mubr.bf16.gmra.mrb[0].mxu0 %v747
        %v2097 = vpop.f32.mrb[0].mxu0
        %v2098 = vadd.f32 %v1905, %v2097
        %v2099 = vpop.f32.mrb[0].mxu0
        %v2100 = vadd.f32 %v1907, %v2099
        %v2101 = vpop.f32.mrb[0].mxu0
        %v2102 = vadd.f32 %v1909, %v2101
        %v2103 = vpop.f32.mrb[0].mxu0
        %v2104 = vadd.f32 %v1911, %v2103
        %2105 = vmatprep.mubr.bf16.mxu0 %v756
        %2106 = vmatmul.mubr.bf16.gmra.mrb[0].mxu0 %v755
        %v2107 = vpop.f32.mrb[0].mxu0
        %v2108 = vadd.f32 %v1915, %v2107
        %v2109 = vpop.f32.mrb[0].mxu0
        %v2110 = vadd.f32 %v1917, %v2109
        %v2111 = vpop.f32.mrb[0].mxu0
        %v2112 = vadd.f32 %v1919, %v2111
        %v2113 = vpop.f32.mrb[0].mxu0
        %v2114 = vadd.f32 %v1921, %v2113
        %2115 = vmatprep.mubr.bf16.mxu0 %v764
        %2116 = vmatmul.mubr.bf16.gmra.mrb[0].mxu0 %v763
        %v2117 = vpop.f32.mrb[0].mxu0
        %v2118 = vadd.f32 %v1925, %v2117
        %v2119 = vpop.f32.mrb[0].mxu0
        %v2120 = vadd.f32 %v1927, %v2119
        %v2121 = vpop.f32.mrb[0].mxu0
        %v2122 = vadd.f32 %v1929, %v2121
        %v2123 = vpop.f32.mrb[0].mxu0
        %v2124 = vadd.f32 %v1931, %v2123
        %2125 = vdwg.mxu0
        %2126 = vmatprep.subr.bf16.mxu0 %v1388
        %2127 = vmatpush1.bf16.msra.mxu0 %v1387
        %2128 = vmatprep.subr.bf16.mxu0 %v1390
        %2129 = vmatpush1.bf16.msra.mxu0 %v1389
        %2130 = vmatprep.subr.bf16.mxu0 %v1392
        %2131 = vmatpush1.bf16.msra.mxu0 %v1391
        %2132 = vmatprep.subr.bf16.mxu0 %v1394
        %2133 = vmatpush1.bf16.msra.mxu0 %v1393
        %2134 = vmatprep.subr.bf16.mxu0 %v1396
        %2135 = vmatpush1.bf16.msra.mxu0 %v1395
        %2136 = vmatprep.subr.bf16.mxu0 %v1398
        %2137 = vmatpush1.bf16.msra.mxu0 %v1397
        %2138 = vmatprep.subr.bf16.mxu0 %v1400
        %2139 = vmatpush1.bf16.msra.mxu0 %v1399
        %2140 = vmatprep.subr.bf16.mxu0 %v1402
        %2141 = vmatpush1.bf16.msra.mxu0 %v1401
        %2142 = vmatprep.subr.bf16.mxu0 %v1404
        %2143 = vmatpush1.bf16.msra.mxu0 %v1403
        %2144 = vmatprep.subr.bf16.mxu0 %v1406
        %2145 = vmatpush1.bf16.msra.mxu0 %v1405
        %2146 = vmatprep.subr.bf16.mxu0 %v1408
        %2147 = vmatpush1.bf16.msra.mxu0 %v1407
        %2148 = vmatprep.subr.bf16.mxu0 %v1410
        %2149 = vmatpush1.bf16.msra.mxu0 %v1409
        %2150 = vmatprep.subr.bf16.mxu0 %v1412
        %2151 = vmatpush1.bf16.msra.mxu0 %v1411
        %2152 = vmatprep.subr.bf16.mxu0 %v1414
        %2153 = vmatpush1.bf16.msra.mxu0 %v1413
        %2154 = vmatprep.subr.bf16.mxu0 %v1416
        %2155 = vmatpush1.bf16.msra.mxu0 %v1415
        %2156 = vmatprep.subr.bf16.mxu0 %v1418
        %2157 = vmatpush1.bf16.msra.mxu0 %v1417
        %2158 = vmatprep.mubr.bf16.mxu0 %v646
        %2159 = vmatmul.mubr.bf16.gmra.mrb[0].mxu0 %v645
        %v2160 = vpop.f32.mrb[0].mxu0
        %v2161 = vadd.f32 %v1968, %v2160
        %v2162 = vpop.f32.mrb[0].mxu0
        %v2163 = vadd.f32 %v1970, %v2162
        %v2164 = vpop.f32.mrb[0].mxu0
        %v2165 = vadd.f32 %v1972, %v2164
        %v2166 = vpop.f32.mrb[0].mxu0
        %v2167 = vadd.f32 %v1974, %v2166
        %2168 = vmatprep.mubr.bf16.mxu0 %v654
        %2169 = vmatmul.mubr.bf16.gmra.mrb[0].mxu0 %v653
        %v2170 = vpop.f32.mrb[0].mxu0
        %v2171 = vadd.f32 %v1978, %v2170
        %v2172 = vpop.f32.mrb[0].mxu0
        %v2173 = vadd.f32 %v1980, %v2172
        %v2174 = vpop.f32.mrb[0].mxu0
        %v2175 = vadd.f32 %v1982, %v2174
        %v2176 = vpop.f32.mrb[0].mxu0
        %v2177 = vadd.f32 %v1984, %v2176
        %2178 = vmatprep.mubr.bf16.mxu0 %v662
        %2179 = vmatmul.mubr.bf16.gmra.mrb[0].mxu0 %v661
        %v2180 = vpop.f32.mrb[0].mxu0
        %v2181 = vadd.f32 %v1988, %v2180
        %v2182 = vpop.f32.mrb[0].mxu0
        %v2183 = vadd.f32 %v1990, %v2182
        %v2184 = vpop.f32.mrb[0].mxu0
        %v2185 = vadd.f32 %v1992, %v2184
        %v2186 = vpop.f32.mrb[0].mxu0
        %v2187 = vadd.f32 %v1994, %v2186
        %2188 = vmatprep.mubr.bf16.mxu0 %v670
        %2189 = vmatmul.mubr.bf16.gmra.mrb[0].mxu0 %v669
        %v2190 = vpop.f32.mrb[0].mxu0
        %v2191 = vadd.f32 %v1998, %v2190
        %v2192 = vpop.f32.mrb[0].mxu0
        %v2193 = vadd.f32 %v2000, %v2192
        %v2194 = vpop.f32.mrb[0].mxu0
        %v2195 = vadd.f32 %v2002, %v2194
        %v2196 = vpop.f32.mrb[0].mxu0
        %v2197 = vadd.f32 %v2004, %v2196
        %2198 = vmatprep.mubr.bf16.mxu0 %v678
        %2199 = vmatmul.mubr.bf16.gmra.mrb[0].mxu0 %v677
        %v2200 = vpop.f32.mrb[0].mxu0
        %v2201 = vadd.f32 %v2008, %v2200
        %v2202 = vpop.f32.mrb[0].mxu0
        %v2203 = vadd.f32 %v2010, %v2202
        %v2204 = vpop.f32.mrb[0].mxu0
        %v2205 = vadd.f32 %v2012, %v2204
        %v2206 = vpop.f32.mrb[0].mxu0
        %v2207 = vadd.f32 %v2014, %v2206
        %2208 = vmatprep.mubr.bf16.mxu0 %v686
        %2209 = vmatmul.mubr.bf16.gmra.mrb[0].mxu0 %v685
        %v2210 = vpop.f32.mrb[0].mxu0
        %v2211 = vadd.f32 %v2018, %v2210
        %v2212 = vpop.f32.mrb[0].mxu0
        %v2213 = vadd.f32 %v2020, %v2212
        %v2214 = vpop.f32.mrb[0].mxu0
        %v2215 = vadd.f32 %v2022, %v2214
        %v2216 = vpop.f32.mrb[0].mxu0
        %v2217 = vadd.f32 %v2024, %v2216
        %2218 = vmatprep.mubr.bf16.mxu0 %v694
        %2219 = vmatmul.mubr.bf16.gmra.mrb[0].mxu0 %v693
        %v2220 = vpop.f32.mrb[0].mxu0
        %v2221 = vadd.f32 %v2028, %v2220
        %v2222 = vpop.f32.mrb[0].mxu0
        %v2223 = vadd.f32 %v2030, %v2222
        %v2224 = vpop.f32.mrb[0].mxu0
        %v2225 = vadd.f32 %v2032, %v2224
        %v2226 = vpop.f32.mrb[0].mxu0
        %v2227 = vadd.f32 %v2034, %v2226
        %2228 = vmatprep.mubr.bf16.mxu0 %v702
        %2229 = vmatmul.mubr.bf16.gmra.mrb[0].mxu0 %v701
        %v2230 = vpop.f32.mrb[0].mxu0
        %v2231 = vadd.f32 %v2038, %v2230
        %v2232 = vpop.f32.mrb[0].mxu0
        %v2233 = vadd.f32 %v2040, %v2232
        %v2234 = vpop.f32.mrb[0].mxu0
        %v2235 = vadd.f32 %v2042, %v2234
        %v2236 = vpop.f32.mrb[0].mxu0
        %v2237 = vadd.f32 %v2044, %v2236
        %2238 = vmatprep.mubr.bf16.mxu0 %v710
        %2239 = vmatmul.mubr.bf16.gmra.mrb[0].mxu0 %v709
        %v2240 = vpop.f32.mrb[0].mxu0
        %v2241 = vadd.f32 %v2048, %v2240
        %v2242 = vpop.f32.mrb[0].mxu0
        %v2243 = vadd.f32 %v2050, %v2242
        %v2244 = vpop.f32.mrb[0].mxu0
        %v2245 = vadd.f32 %v2052, %v2244
        %v2246 = vpop.f32.mrb[0].mxu0
        %v2247 = vadd.f32 %v2054, %v2246
        %2248 = vmatprep.mubr.bf16.mxu0 %v718
        %2249 = vmatmul.mubr.bf16.gmra.mrb[0].mxu0 %v717
        %v2250 = vpop.f32.mrb[0].mxu0
        %v2251 = vadd.f32 %v2058, %v2250
        %v2252 = vpop.f32.mrb[0].mxu0
        %v2253 = vadd.f32 %v2060, %v2252
        %v2254 = vpop.f32.mrb[0].mxu0
        %v2255 = vadd.f32 %v2062, %v2254
        %v2256 = vpop.f32.mrb[0].mxu0
        %v2257 = vadd.f32 %v2064, %v2256
        %2258 = vmatprep.mubr.bf16.mxu0 %v726
        %2259 = vmatmul.mubr.bf16.gmra.mrb[0].mxu0 %v725
        %v2260 = vpop.f32.mrb[0].mxu0
        %v2261 = vadd.f32 %v2068, %v2260
        %v2262 = vpop.f32.mrb[0].mxu0
        %v2263 = vadd.f32 %v2070, %v2262
        %v2264 = vpop.f32.mrb[0].mxu0
        %v2265 = vadd.f32 %v2072, %v2264
        %v2266 = vpop.f32.mrb[0].mxu0
        %v2267 = vadd.f32 %v2074, %v2266
        %2268 = vmatprep.mubr.bf16.mxu0 %v734
        %2269 = vmatmul.mubr.bf16.gmra.mrb[0].mxu0 %v733
        %v2270 = vpop.f32.mrb[0].mxu0
        %v2271 = vadd.f32 %v2078, %v2270
        %v2272 = vpop.f32.mrb[0].mxu0
        %v2273 = vadd.f32 %v2080, %v2272
        %v2274 = vpop.f32.mrb[0].mxu0
        %v2275 = vadd.f32 %v2082, %v2274
        %v2276 = vpop.f32.mrb[0].mxu0
        %v2277 = vadd.f32 %v2084, %v2276
        %2278 = vmatprep.mubr.bf16.mxu0 %v742
        %2279 = vmatmul.mubr.bf16.gmra.mrb[0].mxu0 %v741
        %v2280 = vpop.f32.mrb[0].mxu0
        %v2281 = vadd.f32 %v2088, %v2280
        %v2282 = vpop.f32.mrb[0].mxu0
        %v2283 = vadd.f32 %v2090, %v2282
        %v2284 = vpop.f32.mrb[0].mxu0
        %v2285 = vadd.f32 %v2092, %v2284
        %v2286 = vpop.f32.mrb[0].mxu0
        %v2287 = vadd.f32 %v2094, %v2286
        %2288 = vmatprep.mubr.bf16.mxu0 %v750
        %2289 = vmatmul.mubr.bf16.gmra.mrb[0].mxu0 %v749
        %v2290 = vpop.f32.mrb[0].mxu0
        %v2291 = vadd.f32 %v2098, %v2290
        %v2292 = vpop.f32.mrb[0].mxu0
        %v2293 = vadd.f32 %v2100, %v2292
        %v2294 = vpop.f32.mrb[0].mxu0
        %v2295 = vadd.f32 %v2102, %v2294
        %v2296 = vpop.f32.mrb[0].mxu0
        %v2297 = vadd.f32 %v2104, %v2296
        %2298 = vmatprep.mubr.bf16.mxu0 %v758
        %2299 = vmatmul.mubr.bf16.gmra.mrb[0].mxu0 %v757
        %v2300 = vpop.f32.mrb[0].mxu0
        %v2301 = vadd.f32 %v2108, %v2300
        %v2302 = vpop.f32.mrb[0].mxu0
        %v2303 = vadd.f32 %v2110, %v2302
        %v2304 = vpop.f32.mrb[0].mxu0
        %v2305 = vadd.f32 %v2112, %v2304
        %v2306 = vpop.f32.mrb[0].mxu0
        %v2307 = vadd.f32 %v2114, %v2306
        %2308 = vmatprep.mubr.bf16.mxu0 %v766
        %2309 = vmatmul.mubr.bf16.gmra.mrb[0].mxu0 %v765
        %v2310 = vpop.f32.mrb[0].mxu0
        %v2311 = vadd.f32 %v2118, %v2310
        %v2312 = vpop.f32.mrb[0].mxu0
        %v2313 = vadd.f32 %v2120, %v2312
        %v2314 = vpop.f32.mrb[0].mxu0
        %v2315 = vadd.f32 %v2122, %v2314
        %v2316 = vpop.f32.mrb[0].mxu0
        %v2317 = vadd.f32 %v2124, %v2316
        %2318 = vdwg.mxu0
        %s2319 = scalar_lea.vmem [#allocation10], 1
        %v2320 = vld [vmem:[%s2319] ss:$8 sm:$0x3]
        %s2321 = scalar_lea.vmem [#allocation10], 2
        %v2322 = vld [vmem:[%s2321] ss:$8 sm:$0x3]
        %v2323 = vadd.f32 %v2161, %v2163
        %2324 = vadd.xlane.f32.xlu0 %v2323
        %v2325 = vpop.xlane.xlu0 %2324
        %v2326 = vadd.f32 %v2165, %v2167
        %2327 = vadd.xlane.f32.xlu0 %v2326
        %v2328 = vpop.xlane.xlu0 %2327
        %v2329 = vadd.f32 %v2171, %v2173
        %2330 = vadd.xlane.f32.xlu0 %v2329
        %v2331 = vpop.xlane.xlu0 %2330
        %v2332 = vadd.f32 %v2175, %v2177
        %2333 = vadd.xlane.f32.xlu0 %v2332
        %v2334 = vpop.xlane.xlu0 %2333
        %v2335 = vadd.f32 %v2181, %v2183
        %2336 = vadd.xlane.f32.xlu0 %v2335
        %v2337 = vpop.xlane.xlu0 %2336
        %v2338 = vadd.f32 %v2185, %v2187
        %2339 = vadd.xlane.f32.xlu0 %v2338
        %v2340 = vpop.xlane.xlu0 %2339
        %v2341 = vadd.f32 %v2191, %v2193
        %2342 = vadd.xlane.f32.xlu0 %v2341
        %v2343 = vpop.xlane.xlu0 %2342
        %v2344 = vadd.f32 %v2195, %v2197
        %2345 = vadd.xlane.f32.xlu0 %v2344
        %v2346 = vpop.xlane.xlu0 %2345
        %v2347 = vadd.f32 %v2201, %v2203
        %2348 = vadd.xlane.f32.xlu0 %v2347
        %v2349 = vpop.xlane.xlu0 %2348
        %v2350 = vadd.f32 %v2205, %v2207
        %2351 = vadd.xlane.f32.xlu0 %v2350
        %v2352 = vpop.xlane.xlu0 %2351
        %v2353 = vadd.f32 %v2211, %v2213
        %2354 = vadd.xlane.f32.xlu0 %v2353
        %v2355 = vpop.xlane.xlu0 %2354
        %v2356 = vadd.f32 %v2215, %v2217
        %2357 = vadd.xlane.f32.xlu0 %v2356
        %v2358 = vpop.xlane.xlu0 %2357
        %v2359 = vadd.f32 %v2221, %v2223
        %2360 = vadd.xlane.f32.xlu0 %v2359
        %v2361 = vpop.xlane.xlu0 %2360
        %v2362 = vadd.f32 %v2225, %v2227
        %2363 = vadd.xlane.f32.xlu0 %v2362
        %v2364 = vpop.xlane.xlu0 %2363
        %v2365 = vadd.f32 %v2231, %v2233
        %2366 = vadd.xlane.f32.xlu0 %v2365
        %v2367 = vpop.xlane.xlu0 %2366
        %v2368 = vadd.f32 %v2235, %v2237
        %2369 = vadd.xlane.f32.xlu0 %v2368
        %v2370 = vpop.xlane.xlu0 %2369
        %v2371 = vadd.f32 %v2241, %v2243
        %2372 = vadd.xlane.f32.xlu0 %v2371
        %v2373 = vpop.xlane.xlu0 %2372
        %v2374 = vadd.f32 %v2245, %v2247
        %2375 = vadd.xlane.f32.xlu0 %v2374
        %v2376 = vpop.xlane.xlu0 %2375
        %v2377 = vadd.f32 %v2251, %v2253
        %2378 = vadd.xlane.f32.xlu0 %v2377
        %v2379 = vpop.xlane.xlu0 %2378
        %v2380 = vadd.f32 %v2255, %v2257
        %2381 = vadd.xlane.f32.xlu0 %v2380
        %v2382 = vpop.xlane.xlu0 %2381
        %v2383 = vadd.f32 %v2261, %v2263
        %2384 = vadd.xlane.f32.xlu0 %v2383
        %v2385 = vpop.xlane.xlu0 %2384
        %v2386 = vadd.f32 %v2265, %v2267
        %2387 = vadd.xlane.f32.xlu0 %v2386
        %v2388 = vpop.xlane.xlu0 %2387
        %v2389 = vadd.f32 %v2271, %v2273
        %2390 = vadd.xlane.f32.xlu0 %v2389
        %v2391 = vpop.xlane.xlu0 %2390
        %v2392 = vadd.f32 %v2275, %v2277
        %2393 = vadd.xlane.f32.xlu0 %v2392
        %v2394 = vpop.xlane.xlu0 %2393
        %v2395 = vadd.f32 %v2281, %v2283
        %2396 = vadd.xlane.f32.xlu0 %v2395
        %v2397 = vpop.xlane.xlu0 %2396
        %v2398 = vadd.f32 %v2285, %v2287
        %2399 = vadd.xlane.f32.xlu0 %v2398
        %v2400 = vpop.xlane.xlu0 %2399
        %v2401 = vadd.f32 %v2291, %v2293
        %2402 = vadd.xlane.f32.xlu0 %v2401
        %v2403 = vpop.xlane.xlu0 %2402
        %v2404 = vadd.f32 %v2295, %v2297
        %2405 = vadd.xlane.f32.xlu0 %v2404
        %v2406 = vpop.xlane.xlu0 %2405
        %v2407 = vadd.f32 %v2301, %v2303
        %2408 = vadd.xlane.f32.xlu0 %v2407
        %v2409 = vpop.xlane.xlu0 %2408
        %v2410 = vadd.f32 %v2305, %v2307
        %2411 = vadd.xlane.f32.xlu0 %v2410
        %v2412 = vpop.xlane.xlu0 %2411
        %v2413 = vadd.f32 %v2311, %v2313
        %2414 = vadd.xlane.f32.xlu0 %v2413
        %v2415 = vpop.xlane.xlu0 %2414
        %v2416 = vadd.f32 %v2315, %v2317
        %2417 = vadd.xlane.f32.xlu0 %v2416
        %v2418 = vpop.xlane.xlu0 %2417
        %v2419 = vrcp.pop 256.0
        %v2420 = vmul.f32 %v2325, %v2419
        %v2421 = vmul.f32 %v2328, %v2419
        %v2422 = vmul.f32 %v2331, %v2419
        %v2423 = vmul.f32 %v2334, %v2419
        %v2424 = vmul.f32 %v2337, %v2419
        %v2425 = vmul.f32 %v2340, %v2419
        %v2426 = vmul.f32 %v2343, %v2419
        %v2427 = vmul.f32 %v2346, %v2419
        %v2428 = vmul.f32 %v2349, %v2419
        %v2429 = vmul.f32 %v2352, %v2419
        %v2430 = vmul.f32 %v2355, %v2419
        %v2431 = vmul.f32 %v2358, %v2419
        %v2432 = vmul.f32 %v2361, %v2419
        %v2433 = vmul.f32 %v2364, %v2419
        %v2434 = vmul.f32 %v2367, %v2419
        %v2435 = vmul.f32 %v2370, %v2419
        %v2436 = vmul.f32 %v2373, %v2419
        %v2437 = vmul.f32 %v2376, %v2419
        %v2438 = vmul.f32 %v2379, %v2419
        %v2439 = vmul.f32 %v2382, %v2419
        %v2440 = vmul.f32 %v2385, %v2419
        %v2441 = vmul.f32 %v2388, %v2419
        %v2442 = vmul.f32 %v2391, %v2419
        %v2443 = vmul.f32 %v2394, %v2419
        %v2444 = vmul.f32 %v2397, %v2419
        %v2445 = vmul.f32 %v2400, %v2419
        %v2446 = vmul.f32 %v2403, %v2419
        %v2447 = vmul.f32 %v2406, %v2419
        %v2448 = vmul.f32 %v2409, %v2419
        %v2449 = vmul.f32 %v2412, %v2419
        %v2450 = vmul.f32 %v2415, %v2419
        %v2451 = vmul.f32 %v2418, %v2419
        %v2452 = vsub.f32 %v2161, %v2420
        %v2453 = vsub.f32 %v2163, %v2420
        %v2454 = vsub.f32 %v2165, %v2421
        %v2455 = vsub.f32 %v2167, %v2421
        %v2456 = vsub.f32 %v2171, %v2422
        %v2457 = vsub.f32 %v2173, %v2422
        %v2458 = vsub.f32 %v2175, %v2423
        %v2459 = vsub.f32 %v2177, %v2423
        %v2460 = vsub.f32 %v2181, %v2424
        %v2461 = vsub.f32 %v2183, %v2424
        %v2462 = vsub.f32 %v2185, %v2425
        %v2463 = vsub.f32 %v2187, %v2425
        %v2464 = vsub.f32 %v2191, %v2426
        %v2465 = vsub.f32 %v2193, %v2426
        %v2466 = vsub.f32 %v2195, %v2427
        %v2467 = vsub.f32 %v2197, %v2427
        %v2468 = vsub.f32 %v2201, %v2428
        %v2469 = vsub.f32 %v2203, %v2428
        %v2470 = vsub.f32 %v2205, %v2429
        %v2471 = vsub.f32 %v2207, %v2429
        %v2472 = vsub.f32 %v2211, %v2430
        %v2473 = vsub.f32 %v2213, %v2430
        %v2474 = vsub.f32 %v2215, %v2431
        %v2475 = vsub.f32 %v2217, %v2431
        %v2476 = vsub.f32 %v2221, %v2432
        %v2477 = vsub.f32 %v2223, %v2432
        %v2478 = vsub.f32 %v2225, %v2433
        %v2479 = vsub.f32 %v2227, %v2433
        %v2480 = vsub.f32 %v2231, %v2434
        %v2481 = vsub.f32 %v2233, %v2434
        %v2482 = vsub.f32 %v2235, %v2435
        %v2483 = vsub.f32 %v2237, %v2435
        %v2484 = vsub.f32 %v2241, %v2436
        %v2485 = vsub.f32 %v2243, %v2436
        %v2486 = vsub.f32 %v2245, %v2437
        %v2487 = vsub.f32 %v2247, %v2437
        %v2488 = vsub.f32 %v2251, %v2438
        %v2489 = vsub.f32 %v2253, %v2438
        %v2490 = vsub.f32 %v2255, %v2439
        %v2491 = vsub.f32 %v2257, %v2439
        %v2492 = vsub.f32 %v2261, %v2440
        %v2493 = vsub.f32 %v2263, %v2440
        %v2494 = vsub.f32 %v2265, %v2441
        %v2495 = vsub.f32 %v2267, %v2441
        %v2496 = vsub.f32 %v2271, %v2442
        %v2497 = vsub.f32 %v2273, %v2442
        %v2498 = vsub.f32 %v2275, %v2443
        %v2499 = vsub.f32 %v2277, %v2443
        %v2500 = vsub.f32 %v2281, %v2444
        %v2501 = vsub.f32 %v2283, %v2444
        %v2502 = vsub.f32 %v2285, %v2445
        %v2503 = vsub.f32 %v2287, %v2445
        %v2504 = vsub.f32 %v2291, %v2446
        %v2505 = vsub.f32 %v2293, %v2446
        %v2506 = vsub.f32 %v2295, %v2447
        %v2507 = vsub.f32 %v2297, %v2447
        %v2508 = vsub.f32 %v2301, %v2448
        %v2509 = vsub.f32 %v2303, %v2448
        %v2510 = vsub.f32 %v2305, %v2449
        %v2511 = vsub.f32 %v2307, %v2449
        %v2512 = vsub.f32 %v2311, %v2450
        %v2513 = vsub.f32 %v2313, %v2450
        %v2514 = vsub.f32 %v2315, %v2451
        %v2515 = vsub.f32 %v2317, %v2451
        %v2516 = vmul.f32 %v2452, %v2452
        %v2517 = vmul.f32 %v2453, %v2453
        %v2518 = vmul.f32 %v2454, %v2454
        %v2519 = vmul.f32 %v2455, %v2455
        %v2520 = vmul.f32 %v2456, %v2456
        %v2521 = vmul.f32 %v2457, %v2457
        %v2522 = vmul.f32 %v2458, %v2458
        %v2523 = vmul.f32 %v2459, %v2459
        %v2524 = vmul.f32 %v2460, %v2460
        %v2525 = vmul.f32 %v2461, %v2461
        %v2526 = vmul.f32 %v2462, %v2462
        %v2527 = vmul.f32 %v2463, %v2463
        %v2528 = vmul.f32 %v2464, %v2464
        %v2529 = vmul.f32 %v2465, %v2465
        %v2530 = vmul.f32 %v2466, %v2466
        %v2531 = vmul.f32 %v2467, %v2467
        %v2532 = vmul.f32 %v2468, %v2468
        %v2533 = vmul.f32 %v2469, %v2469
        %v2534 = vmul.f32 %v2470, %v2470
        %v2535 = vmul.f32 %v2471, %v2471
        %v2536 = vmul.f32 %v2472, %v2472
        %v2537 = vmul.f32 %v2473, %v2473
        %v2538 = vmul.f32 %v2474, %v2474
        %v2539 = vmul.f32 %v2475, %v2475
        %v2540 = vmul.f32 %v2476, %v2476
        %v2541 = vmul.f32 %v2477, %v2477
        %v2542 = vmul.f32 %v2478, %v2478
        %v2543 = vmul.f32 %v2479, %v2479
        %v2544 = vmul.f32 %v2480, %v2480
        %v2545 = vmul.f32 %v2481, %v2481
        %v2546 = vmul.f32 %v2482, %v2482
        %v2547 = vmul.f32 %v2483, %v2483
        %v2548 = vmul.f32 %v2484, %v2484
        %v2549 = vmul.f32 %v2485, %v2485
        %v2550 = vmul.f32 %v2486, %v2486
        %v2551 = vmul.f32 %v2487, %v2487
        %v2552 = vmul.f32 %v2488, %v2488
        %v2553 = vmul.f32 %v2489, %v2489
        %v2554 = vmul.f32 %v2490, %v2490
        %v2555 = vmul.f32 %v2491, %v2491
        %v2556 = vmul.f32 %v2492, %v2492
        %v2557 = vmul.f32 %v2493, %v2493
        %v2558 = vmul.f32 %v2494, %v2494
        %v2559 = vmul.f32 %v2495, %v2495
        %v2560 = vmul.f32 %v2496, %v2496
        %v2561 = vmul.f32 %v2497, %v2497
        %v2562 = vmul.f32 %v2498, %v2498
        %v2563 = vmul.f32 %v2499, %v2499
        %v2564 = vmul.f32 %v2500, %v2500
        %v2565 = vmul.f32 %v2501, %v2501
        %v2566 = vmul.f32 %v2502, %v2502
        %v2567 = vmul.f32 %v2503, %v2503
        %v2568 = vmul.f32 %v2504, %v2504
        %v2569 = vmul.f32 %v2505, %v2505
        %v2570 = vmul.f32 %v2506, %v2506
        %v2571 = vmul.f32 %v2507, %v2507
        %v2572 = vmul.f32 %v2508, %v2508
        %v2573 = vmul.f32 %v2509, %v2509
        %v2574 = vmul.f32 %v2510, %v2510
        %v2575 = vmul.f32 %v2511, %v2511
        %v2576 = vmul.f32 %v2512, %v2512
        %v2577 = vmul.f32 %v2513, %v2513
        %v2578 = vmul.f32 %v2514, %v2514
        %v2579 = vmul.f32 %v2515, %v2515
        %v2580 = vadd.f32 %v2516, %v2517
        %2581 = vadd.xlane.f32.xlu0 %v2580
        %v2582 = vpop.xlane.xlu0 %2581
        %v2583 = vadd.f32 %v2518, %v2519
        %2584 = vadd.xlane.f32.xlu0 %v2583
        %v2585 = vpop.xlane.xlu0 %2584
        %v2586 = vadd.f32 %v2520, %v2521
        %2587 = vadd.xlane.f32.xlu0 %v2586
        %v2588 = vpop.xlane.xlu0 %2587
        %v2589 = vadd.f32 %v2522, %v2523
        %2590 = vadd.xlane.f32.xlu0 %v2589
        %v2591 = vpop.xlane.xlu0 %2590
        %v2592 = vadd.f32 %v2524, %v2525
        %2593 = vadd.xlane.f32.xlu0 %v2592
        %v2594 = vpop.xlane.xlu0 %2593
        %v2595 = vadd.f32 %v2526, %v2527
        %2596 = vadd.xlane.f32.xlu0 %v2595
        %v2597 = vpop.xlane.xlu0 %2596
        %v2598 = vadd.f32 %v2528, %v2529
        %2599 = vadd.xlane.f32.xlu0 %v2598
        %v2600 = vpop.xlane.xlu0 %2599
        %v2601 = vadd.f32 %v2530, %v2531
        %2602 = vadd.xlane.f32.xlu0 %v2601
        %v2603 = vpop.xlane.xlu0 %2602
        %v2604 = vadd.f32 %v2532, %v2533
        %2605 = vadd.xlane.f32.xlu0 %v2604
        %v2606 = vpop.xlane.xlu0 %2605
        %v2607 = vadd.f32 %v2534, %v2535
        %2608 = vadd.xlane.f32.xlu0 %v2607
        %v2609 = vpop.xlane.xlu0 %2608
        %v2610 = vadd.f32 %v2536, %v2537
        %2611 = vadd.xlane.f32.xlu0 %v2610
        %v2612 = vpop.xlane.xlu0 %2611
        %v2613 = vadd.f32 %v2538, %v2539
        %2614 = vadd.xlane.f32.xlu0 %v2613
        %v2615 = vpop.xlane.xlu0 %2614
        %v2616 = vadd.f32 %v2540, %v2541
        %2617 = vadd.xlane.f32.xlu0 %v2616
        %v2618 = vpop.xlane.xlu0 %2617
        %v2619 = vadd.f32 %v2542, %v2543
        %2620 = vadd.xlane.f32.xlu0 %v2619
        %v2621 = vpop.xlane.xlu0 %2620
        %v2622 = vadd.f32 %v2544, %v2545
        %2623 = vadd.xlane.f32.xlu0 %v2622
        %v2624 = vpop.xlane.xlu0 %2623
        %v2625 = vadd.f32 %v2546, %v2547
        %2626 = vadd.xlane.f32.xlu0 %v2625
        %v2627 = vpop.xlane.xlu0 %2626
        %v2628 = vadd.f32 %v2548, %v2549
        %2629 = vadd.xlane.f32.xlu0 %v2628
        %v2630 = vpop.xlane.xlu0 %2629
        %v2631 = vadd.f32 %v2550, %v2551
        %2632 = vadd.xlane.f32.xlu0 %v2631
        %v2633 = vpop.xlane.xlu0 %2632
        %v2634 = vadd.f32 %v2552, %v2553
        %2635 = vadd.xlane.f32.xlu0 %v2634
        %v2636 = vpop.xlane.xlu0 %2635
        %v2637 = vadd.f32 %v2554, %v2555
        %2638 = vadd.xlane.f32.xlu0 %v2637
        %v2639 = vpop.xlane.xlu0 %2638
        %v2640 = vadd.f32 %v2556, %v2557
        %2641 = vadd.xlane.f32.xlu0 %v2640
        %v2642 = vpop.xlane.xlu0 %2641
        %v2643 = vadd.f32 %v2558, %v2559
        %2644 = vadd.xlane.f32.xlu0 %v2643
        %v2645 = vpop.xlane.xlu0 %2644
        %v2646 = vadd.f32 %v2560, %v2561
        %2647 = vadd.xlane.f32.xlu0 %v2646
        %v2648 = vpop.xlane.xlu0 %2647
        %v2649 = vadd.f32 %v2562, %v2563
        %2650 = vadd.xlane.f32.xlu0 %v2649
        %v2651 = vpop.xlane.xlu0 %2650
        %v2652 = vadd.f32 %v2564, %v2565
        %2653 = vadd.xlane.f32.xlu0 %v2652
        %v2654 = vpop.xlane.xlu0 %2653
        %v2655 = vadd.f32 %v2566, %v2567
        %2656 = vadd.xlane.f32.xlu0 %v2655
        %v2657 = vpop.xlane.xlu0 %2656
        %v2658 = vadd.f32 %v2568, %v2569
        %2659 = vadd.xlane.f32.xlu0 %v2658
        %v2660 = vpop.xlane.xlu0 %2659
        %v2661 = vadd.f32 %v2570, %v2571
        %2662 = vadd.xlane.f32.xlu0 %v2661
        %v2663 = vpop.xlane.xlu0 %2662
        %v2664 = vadd.f32 %v2572, %v2573
        %2665 = vadd.xlane.f32.xlu0 %v2664
        %v2666 = vpop.xlane.xlu0 %2665
        %v2667 = vadd.f32 %v2574, %v2575
        %2668 = vadd.xlane.f32.xlu0 %v2667
        %v2669 = vpop.xlane.xlu0 %2668
        %v2670 = vadd.f32 %v2576, %v2577
        %2671 = vadd.xlane.f32.xlu0 %v2670
        %v2672 = vpop.xlane.xlu0 %2671
        %v2673 = vadd.f32 %v2578, %v2579
        %2674 = vadd.xlane.f32.xlu0 %v2673
        %v2675 = vpop.xlane.xlu0 %2674
        %v2676 = vmul.f32 %v2582, %v2419
        %v2677 = vmul.f32 %v2585, %v2419
        %v2678 = vmul.f32 %v2588, %v2419
        %v2679 = vmul.f32 %v2591, %v2419
        %v2680 = vmul.f32 %v2594, %v2419
        %v2681 = vmul.f32 %v2597, %v2419
        %v2682 = vmul.f32 %v2600, %v2419
        %v2683 = vmul.f32 %v2603, %v2419
        %v2684 = vmul.f32 %v2606, %v2419
        %v2685 = vmul.f32 %v2609, %v2419
        %v2686 = vmul.f32 %v2612, %v2419
        %v2687 = vmul.f32 %v2615, %v2419
        %v2688 = vmul.f32 %v2618, %v2419
        %v2689 = vmul.f32 %v2621, %v2419
        %v2690 = vmul.f32 %v2624, %v2419
        %v2691 = vmul.f32 %v2627, %v2419
        %v2692 = vmul.f32 %v2630, %v2419
        %v2693 = vmul.f32 %v2633, %v2419
        %v2694 = vmul.f32 %v2636, %v2419
        %v2695 = vmul.f32 %v2639, %v2419
        %v2696 = vmul.f32 %v2642, %v2419
        %v2697 = vmul.f32 %v2645, %v2419
        %v2698 = vmul.f32 %v2648, %v2419
        %v2699 = vmul.f32 %v2651, %v2419
        %v2700 = vmul.f32 %v2654, %v2419
        %v2701 = vmul.f32 %v2657, %v2419
        %v2702 = vmul.f32 %v2660, %v2419
        %v2703 = vmul.f32 %v2663, %v2419
        %v2704 = vmul.f32 %v2666, %v2419
        %v2705 = vmul.f32 %v2669, %v2419
        %v2706 = vmul.f32 %v2672, %v2419
        %v2707 = vmul.f32 %v2675, %v2419
        %v2708 = vadd.f32 %v2676, 1e-05
        %v2709 = vadd.f32 %v2677, 1e-05
        %v2710 = vadd.f32 %v2678, 1e-05
        %v2711 = vadd.f32 %v2679, 1e-05
        %v2712 = vadd.f32 %v2680, 1e-05
        %v2713 = vadd.f32 %v2681, 1e-05
        %v2714 = vadd.f32 %v2682, 1e-05
        %v2715 = vadd.f32 %v2683, 1e-05
        %v2716 = vadd.f32 %v2684, 1e-05
        %v2717 = vadd.f32 %v2685, 1e-05
        %v2718 = vadd.f32 %v2686, 1e-05
        %v2719 = vadd.f32 %v2687, 1e-05
        %v2720 = vadd.f32 %v2688, 1e-05
        %v2721 = vadd.f32 %v2689, 1e-05
        %v2722 = vadd.f32 %v2690, 1e-05
        %v2723 = vadd.f32 %v2691, 1e-05
        %v2724 = vadd.f32 %v2692, 1e-05
        %v2725 = vadd.f32 %v2693, 1e-05
        %v2726 = vadd.f32 %v2694, 1e-05
        %v2727 = vadd.f32 %v2695, 1e-05
        %v2728 = vadd.f32 %v2696, 1e-05
        %v2729 = vadd.f32 %v2697, 1e-05
        %v2730 = vadd.f32 %v2698, 1e-05
        %v2731 = vadd.f32 %v2699, 1e-05
        %v2732 = vadd.f32 %v2700, 1e-05
        %v2733 = vadd.f32 %v2701, 1e-05
        %v2734 = vadd.f32 %v2702, 1e-05
        %v2735 = vadd.f32 %v2703, 1e-05
        %v2736 = vadd.f32 %v2704, 1e-05
        %v2737 = vadd.f32 %v2705, 1e-05
        %v2738 = vadd.f32 %v2706, 1e-05
        %v2739 = vadd.f32 %v2707, 1e-05
        %v2740 = vrsqrt.pop %v2708
        %v2741 = vrsqrt.pop %v2709
        %v2742 = vrsqrt.pop %v2710
        %v2743 = vrsqrt.pop %v2711
        %v2744 = vrsqrt.pop %v2712
        %v2745 = vrsqrt.pop %v2713
        %v2746 = vrsqrt.pop %v2714
        %v2747 = vrsqrt.pop %v2715
        %v2748 = vrsqrt.pop %v2716
        %v2749 = vrsqrt.pop %v2717
        %v2750 = vrsqrt.pop %v2718
        %v2751 = vrsqrt.pop %v2719
        %v2752 = vrsqrt.pop %v2720
        %v2753 = vrsqrt.pop %v2721
        %v2754 = vrsqrt.pop %v2722
        %v2755 = vrsqrt.pop %v2723
        %v2756 = vrsqrt.pop %v2724
        %v2757 = vrsqrt.pop %v2725
        %v2758 = vrsqrt.pop %v2726
        %v2759 = vrsqrt.pop %v2727
        %v2760 = vrsqrt.pop %v2728
        %v2761 = vrsqrt.pop %v2729
        %v2762 = vrsqrt.pop %v2730
        %v2763 = vrsqrt.pop %v2731
        %v2764 = vrsqrt.pop %v2732
        %v2765 = vrsqrt.pop %v2733
        %v2766 = vrsqrt.pop %v2734
        %v2767 = vrsqrt.pop %v2735
        %v2768 = vrsqrt.pop %v2736
        %v2769 = vrsqrt.pop %v2737
        %v2770 = vrsqrt.pop %v2738
        %v2771 = vrsqrt.pop %v2739
        %v2773 = vlaneseq
        %v2774 = vshrl.u32 %v2773, 7
        %v2775 = vsub.s32 0, %v2774
        %v2776 = vrot.slane %v2320, %v2775
        %v2777 = vlaneseq
        %v2778 = vshrl.u32 %v2777, 7
        %v2779 = vsub.s32 1, %v2778
        %v2780 = vrot.slane %v2320, %v2779
        %v2783 = vmul.f32 %v2740, %v2776
        %v2784 = vmul.f32 %v2740, %v2780
        %v2785 = vmul.f32 %v2741, %v2776
        %v2786 = vmul.f32 %v2741, %v2780
        %v2787 = vmul.f32 %v2742, %v2776
        %v2788 = vmul.f32 %v2742, %v2780
        %v2789 = vmul.f32 %v2743, %v2776
        %v2790 = vmul.f32 %v2743, %v2780
        %v2791 = vmul.f32 %v2744, %v2776
        %v2792 = vmul.f32 %v2744, %v2780
        %v2793 = vmul.f32 %v2745, %v2776
        %v2794 = vmul.f32 %v2745, %v2780
        %v2795 = vmul.f32 %v2746, %v2776
        %v2796 = vmul.f32 %v2746, %v2780
        %v2797 = vmul.f32 %v2747, %v2776
        %v2798 = vmul.f32 %v2747, %v2780
        %v2799 = vmul.f32 %v2748, %v2776
        %v2800 = vmul.f32 %v2748, %v2780
        %v2801 = vmul.f32 %v2749, %v2776
        %v2802 = vmul.f32 %v2749, %v2780
        %v2803 = vmul.f32 %v2750, %v2776
        %v2804 = vmul.f32 %v2750, %v2780
        %v2805 = vmul.f32 %v2751, %v2776
        %v2806 = vmul.f32 %v2751, %v2780
        %v2807 = vmul.f32 %v2752, %v2776
        %v2808 = vmul.f32 %v2752, %v2780
        %v2809 = vmul.f32 %v2753, %v2776
        %v2810 = vmul.f32 %v2753, %v2780
        %v2811 = vmul.f32 %v2754, %v2776
        %v2812 = vmul.f32 %v2754, %v2780
        %v2813 = vmul.f32 %v2755, %v2776
        %v2814 = vmul.f32 %v2755, %v2780
        %v2815 = vmul.f32 %v2756, %v2776
        %v2816 = vmul.f32 %v2756, %v2780
        %v2817 = vmul.f32 %v2757, %v2776
        %v2818 = vmul.f32 %v2757, %v2780
        %v2819 = vmul.f32 %v2758, %v2776
        %v2820 = vmul.f32 %v2758, %v2780
        %v2821 = vmul.f32 %v2759, %v2776
        %v2822 = vmul.f32 %v2759, %v2780
        %v2823 = vmul.f32 %v2760, %v2776
        %v2824 = vmul.f32 %v2760, %v2780
        %v2825 = vmul.f32 %v2761, %v2776
        %v2826 = vmul.f32 %v2761, %v2780
        %v2827 = vmul.f32 %v2762, %v2776
        %v2828 = vmul.f32 %v2762, %v2780
        %v2829 = vmul.f32 %v2763, %v2776
        %v2830 = vmul.f32 %v2763, %v2780
        %v2831 = vmul.f32 %v2764, %v2776
        %v2832 = vmul.f32 %v2764, %v2780
        %v2833 = vmul.f32 %v2765, %v2776
        %v2834 = vmul.f32 %v2765, %v2780
        %v2835 = vmul.f32 %v2766, %v2776
        %v2836 = vmul.f32 %v2766, %v2780
        %v2837 = vmul.f32 %v2767, %v2776
        %v2838 = vmul.f32 %v2767, %v2780
        %v2839 = vmul.f32 %v2768, %v2776
        %v2840 = vmul.f32 %v2768, %v2780
        %v2841 = vmul.f32 %v2769, %v2776
        %v2842 = vmul.f32 %v2769, %v2780
        %v2843 = vmul.f32 %v2770, %v2776
        %v2844 = vmul.f32 %v2770, %v2780
        %v2845 = vmul.f32 %v2771, %v2776
        %v2846 = vmul.f32 %v2771, %v2780
        %v2847 = vmul.f32 %v2452, %v2783
        %v2848 = vmul.f32 %v2453, %v2784
        %v2849 = vmul.f32 %v2454, %v2785
        %v2850 = vmul.f32 %v2455, %v2786
        %v2851 = vmul.f32 %v2456, %v2787
        %v2852 = vmul.f32 %v2457, %v2788
        %v2853 = vmul.f32 %v2458, %v2789
        %v2854 = vmul.f32 %v2459, %v2790
        %v2855 = vmul.f32 %v2460, %v2791
        %v2856 = vmul.f32 %v2461, %v2792
        %v2857 = vmul.f32 %v2462, %v2793
        %v2858 = vmul.f32 %v2463, %v2794
        %v2859 = vmul.f32 %v2464, %v2795
        %v2860 = vmul.f32 %v2465, %v2796
        %v2861 = vmul.f32 %v2466, %v2797
        %v2862 = vmul.f32 %v2467, %v2798
        %v2863 = vmul.f32 %v2468, %v2799
        %v2864 = vmul.f32 %v2469, %v2800
        %v2865 = vmul.f32 %v2470, %v2801
        %v2866 = vmul.f32 %v2471, %v2802
        %v2867 = vmul.f32 %v2472, %v2803
        %v2868 = vmul.f32 %v2473, %v2804
        %v2869 = vmul.f32 %v2474, %v2805
        %v2870 = vmul.f32 %v2475, %v2806
        %v2871 = vmul.f32 %v2476, %v2807
        %v2872 = vmul.f32 %v2477, %v2808
        %v2873 = vmul.f32 %v2478, %v2809
        %v2874 = vmul.f32 %v2479, %v2810
        %v2875 = vmul.f32 %v2480, %v2811
        %v2876 = vmul.f32 %v2481, %v2812
        %v2877 = vmul.f32 %v2482, %v2813
        %v2878 = vmul.f32 %v2483, %v2814
        %v2879 = vmul.f32 %v2484, %v2815
        %v2880 = vmul.f32 %v2485, %v2816
        %v2881 = vmul.f32 %v2486, %v2817
        %v2882 = vmul.f32 %v2487, %v2818
        %v2883 = vmul.f32 %v2488, %v2819
        %v2884 = vmul.f32 %v2489, %v2820
        %v2885 = vmul.f32 %v2490, %v2821
        %v2886 = vmul.f32 %v2491, %v2822
        %v2887 = vmul.f32 %v2492, %v2823
        %v2888 = vmul.f32 %v2493, %v2824
        %v2889 = vmul.f32 %v2494, %v2825
        %v2890 = vmul.f32 %v2495, %v2826
        %v2891 = vmul.f32 %v2496, %v2827
        %v2892 = vmul.f32 %v2497, %v2828
        %v2893 = vmul.f32 %v2498, %v2829
        %v2894 = vmul.f32 %v2499, %v2830
        %v2895 = vmul.f32 %v2500, %v2831
        %v2896 = vmul.f32 %v2501, %v2832
        %v2897 = vmul.f32 %v2502, %v2833
        %v2898 = vmul.f32 %v2503, %v2834
        %v2899 = vmul.f32 %v2504, %v2835
        %v2900 = vmul.f32 %v2505, %v2836
        %v2901 = vmul.f32 %v2506, %v2837
        %v2902 = vmul.f32 %v2507, %v2838
        %v2903 = vmul.f32 %v2508, %v2839
        %v2904 = vmul.f32 %v2509, %v2840
        %v2905 = vmul.f32 %v2510, %v2841
        %v2906 = vmul.f32 %v2511, %v2842
        %v2907 = vmul.f32 %v2512, %v2843
        %v2908 = vmul.f32 %v2513, %v2844
        %v2909 = vmul.f32 %v2514, %v2845
        %v2910 = vmul.f32 %v2515, %v2846
        %v2912 = vlaneseq
        %v2913 = vshrl.u32 %v2912, 7
        %v2914 = vsub.s32 0, %v2913
        %v2915 = vrot.slane %v2322, %v2914
        %v2916 = vlaneseq
        %v2917 = vshrl.u32 %v2916, 7
        %v2918 = vsub.s32 1, %v2917
        %v2919 = vrot.slane %v2322, %v2918
        %v2922 = vadd.f32 %v2847, %v2915
        %v2923 = vadd.f32 %v2848, %v2919
        %v2924 = vadd.f32 %v2849, %v2915
        %v2925 = vadd.f32 %v2850, %v2919
        %v2926 = vadd.f32 %v2851, %v2915
        %v2927 = vadd.f32 %v2852, %v2919
        %v2928 = vadd.f32 %v2853, %v2915
        %v2929 = vadd.f32 %v2854, %v2919
        %v2930 = vadd.f32 %v2855, %v2915
        %v2931 = vadd.f32 %v2856, %v2919
        %v2932 = vadd.f32 %v2857, %v2915
        %v2933 = vadd.f32 %v2858, %v2919
        %v2934 = vadd.f32 %v2859, %v2915
        %v2935 = vadd.f32 %v2860, %v2919
        %v2936 = vadd.f32 %v2861, %v2915
        %v2937 = vadd.f32 %v2862, %v2919
        %v2938 = vadd.f32 %v2863, %v2915
        %v2939 = vadd.f32 %v2864, %v2919
        %v2940 = vadd.f32 %v2865, %v2915
        %v2941 = vadd.f32 %v2866, %v2919
        %v2942 = vadd.f32 %v2867, %v2915
        %v2943 = vadd.f32 %v2868, %v2919
        %v2944 = vadd.f32 %v2869, %v2915
        %v2945 = vadd.f32 %v2870, %v2919
        %v2946 = vadd.f32 %v2871, %v2915
        %v2947 = vadd.f32 %v2872, %v2919
        %v2948 = vadd.f32 %v2873, %v2915
        %v2949 = vadd.f32 %v2874, %v2919
        %v2950 = vadd.f32 %v2875, %v2915
        %v2951 = vadd.f32 %v2876, %v2919
        %v2952 = vadd.f32 %v2877, %v2915
        %v2953 = vadd.f32 %v2878, %v2919
        %v2954 = vadd.f32 %v2879, %v2915
        %v2955 = vadd.f32 %v2880, %v2919
        %v2956 = vadd.f32 %v2881, %v2915
        %v2957 = vadd.f32 %v2882, %v2919
        %v2958 = vadd.f32 %v2883, %v2915
        %v2959 = vadd.f32 %v2884, %v2919
        %v2960 = vadd.f32 %v2885, %v2915
        %v2961 = vadd.f32 %v2886, %v2919
        %v2962 = vadd.f32 %v2887, %v2915
        %v2963 = vadd.f32 %v2888, %v2919
        %v2964 = vadd.f32 %v2889, %v2915
        %v2965 = vadd.f32 %v2890, %v2919
        %v2966 = vadd.f32 %v2891, %v2915
        %v2967 = vadd.f32 %v2892, %v2919
        %v2968 = vadd.f32 %v2893, %v2915
        %v2969 = vadd.f32 %v2894, %v2919
        %v2970 = vadd.f32 %v2895, %v2915
        %v2971 = vadd.f32 %v2896, %v2919
        %v2972 = vadd.f32 %v2897, %v2915
        %v2973 = vadd.f32 %v2898, %v2919
        %v2974 = vadd.f32 %v2899, %v2915
        %v2975 = vadd.f32 %v2900, %v2919
        %v2976 = vadd.f32 %v2901, %v2915
        %v2977 = vadd.f32 %v2902, %v2919
        %v2978 = vadd.f32 %v2903, %v2915
        %v2979 = vadd.f32 %v2904, %v2919
        %v2980 = vadd.f32 %v2905, %v2915
        %v2981 = vadd.f32 %v2906, %v2919
        %v2982 = vadd.f32 %v2907, %v2915
        %v2983 = vadd.f32 %v2908, %v2919
        %v2984 = vadd.f32 %v2909, %v2915
        %v2985 = vadd.f32 %v2910, %v2919
        %v2986 = vmax.f32 %v2922, 0.0
        %v2987 = vmax.f32 %v2923, 0.0
        %v2988 = vmax.f32 %v2924, 0.0
        %v2989 = vmax.f32 %v2925, 0.0
        %v2990 = vmax.f32 %v2926, 0.0
        %v2991 = vmax.f32 %v2927, 0.0
        %v2992 = vmax.f32 %v2928, 0.0
        %v2993 = vmax.f32 %v2929, 0.0
        %v2994 = vmax.f32 %v2930, 0.0
        %v2995 = vmax.f32 %v2931, 0.0
        %v2996 = vmax.f32 %v2932, 0.0
        %v2997 = vmax.f32 %v2933, 0.0
        %v2998 = vmax.f32 %v2934, 0.0
        %v2999 = vmax.f32 %v2935, 0.0
        %v3000 = vmax.f32 %v2936, 0.0
        %v3001 = vmax.f32 %v2937, 0.0
        %v3002 = vmax.f32 %v2938, 0.0
        %v3003 = vmax.f32 %v2939, 0.0
        %v3004 = vmax.f32 %v2940, 0.0
        %v3005 = vmax.f32 %v2941, 0.0
        %v3006 = vmax.f32 %v2942, 0.0
        %v3007 = vmax.f32 %v2943, 0.0
        %v3008 = vmax.f32 %v2944, 0.0
        %v3009 = vmax.f32 %v2945, 0.0
        %v3010 = vmax.f32 %v2946, 0.0
        %v3011 = vmax.f32 %v2947, 0.0
        %v3012 = vmax.f32 %v2948, 0.0
        %v3013 = vmax.f32 %v2949, 0.0
        %v3014 = vmax.f32 %v2950, 0.0
        %v3015 = vmax.f32 %v2951, 0.0
        %v3016 = vmax.f32 %v2952, 0.0
        %v3017 = vmax.f32 %v2953, 0.0
        %v3018 = vmax.f32 %v2954, 0.0
        %v3019 = vmax.f32 %v2955, 0.0
        %v3020 = vmax.f32 %v2956, 0.0
        %v3021 = vmax.f32 %v2957, 0.0
        %v3022 = vmax.f32 %v2958, 0.0
        %v3023 = vmax.f32 %v2959, 0.0
        %v3024 = vmax.f32 %v2960, 0.0
        %v3025 = vmax.f32 %v2961, 0.0
        %v3026 = vmax.f32 %v2962, 0.0
        %v3027 = vmax.f32 %v2963, 0.0
        %v3028 = vmax.f32 %v2964, 0.0
        %v3029 = vmax.f32 %v2965, 0.0
        %v3030 = vmax.f32 %v2966, 0.0
        %v3031 = vmax.f32 %v2967, 0.0
        %v3032 = vmax.f32 %v2968, 0.0
        %v3033 = vmax.f32 %v2969, 0.0
        %v3034 = vmax.f32 %v2970, 0.0
        %v3035 = vmax.f32 %v2971, 0.0
        %v3036 = vmax.f32 %v2972, 0.0
        %v3037 = vmax.f32 %v2973, 0.0
        %v3038 = vmax.f32 %v2974, 0.0
        %v3039 = vmax.f32 %v2975, 0.0
        %v3040 = vmax.f32 %v2976, 0.0
        %v3041 = vmax.f32 %v2977, 0.0
        %v3042 = vmax.f32 %v2978, 0.0
        %v3043 = vmax.f32 %v2979, 0.0
        %v3044 = vmax.f32 %v2980, 0.0
        %v3045 = vmax.f32 %v2981, 0.0
        %v3046 = vmax.f32 %v2982, 0.0
        %v3047 = vmax.f32 %v2983, 0.0
        %v3048 = vmax.f32 %v2984, 0.0
        %v3049 = vmax.f32 %v2985, 0.0
        %v3050 = vpack.c.bf16 %v2988, %v2986
        %v3051 = vpack.c.bf16 %v2989, %v2987
        %v3052 = vpack.c.bf16 %v2992, %v2990
        %v3053 = vpack.c.bf16 %v2993, %v2991
        %v3054 = vpack.c.bf16 %v2996, %v2994
        %v3055 = vpack.c.bf16 %v2997, %v2995
        %v3056 = vpack.c.bf16 %v3000, %v2998
        %v3057 = vpack.c.bf16 %v3001, %v2999
        %v3058 = vpack.c.bf16 %v3004, %v3002
        %v3059 = vpack.c.bf16 %v3005, %v3003
        %v3060 = vpack.c.bf16 %v3008, %v3006
        %v3061 = vpack.c.bf16 %v3009, %v3007
        %v3062 = vpack.c.bf16 %v3012, %v3010
        %v3063 = vpack.c.bf16 %v3013, %v3011
        %v3064 = vpack.c.bf16 %v3016, %v3014
        %v3065 = vpack.c.bf16 %v3017, %v3015
        %v3066 = vpack.c.bf16 %v3020, %v3018
        %v3067 = vpack.c.bf16 %v3021, %v3019
        %v3068 = vpack.c.bf16 %v3024, %v3022
        %v3069 = vpack.c.bf16 %v3025, %v3023
        %v3070 = vpack.c.bf16 %v3028, %v3026
        %v3071 = vpack.c.bf16 %v3029, %v3027
        %v3072 = vpack.c.bf16 %v3032, %v3030
        %v3073 = vpack.c.bf16 %v3033, %v3031
        %v3074 = vpack.c.bf16 %v3036, %v3034
        %v3075 = vpack.c.bf16 %v3037, %v3035
        %v3076 = vpack.c.bf16 %v3040, %v3038
        %v3077 = vpack.c.bf16 %v3041, %v3039
        %v3078 = vpack.c.bf16 %v3044, %v3042
        %v3079 = vpack.c.bf16 %v3045, %v3043
        %v3080 = vpack.c.bf16 %v3048, %v3046
        %v3081 = vpack.c.bf16 %v3049, %v3047
        %v3082 = vld [vmem:[#allocation7] sm:$0xff]
        %v3083 = vld [vmem:[#allocation7 + $0x8] sm:$0xff]
        %v3084 = vld [vmem:[#allocation7 + $0x10] sm:$0xff]
        %v3085 = vld [vmem:[#allocation7 + $0x18] sm:$0xff]
        %v3086 = vld [vmem:[#allocation7 + $0x20] sm:$0xff]
        %v3087 = vld [vmem:[#allocation7 + $0x28] sm:$0xff]
        %v3088 = vld [vmem:[#allocation7 + $0x30] sm:$0xff]
        %v3089 = vld [vmem:[#allocation7 + $0x38] sm:$0xff]
        %v3090 = vld [vmem:[#allocation7 + $0x40] sm:$0xff]
        %v3091 = vld [vmem:[#allocation7 + $0x48] sm:$0xff]
        %v3092 = vld [vmem:[#allocation7 + $0x50] sm:$0xff]
        %v3093 = vld [vmem:[#allocation7 + $0x58] sm:$0xff]
        %v3094 = vld [vmem:[#allocation7 + $0x60] sm:$0xff]
        %v3095 = vld [vmem:[#allocation7 + $0x68] sm:$0xff]
        %v3096 = vld [vmem:[#allocation7 + $0x70] sm:$0xff]
        %v3097 = vld [vmem:[#allocation7 + $0x78] sm:$0xff]
        %v3098 = vld [vmem:[#allocation7 + $0x80] sm:$0xff]
        %v3099 = vld [vmem:[#allocation7 + $0x88] sm:$0xff]
        %v3100 = vld [vmem:[#allocation7 + $0x90] sm:$0xff]
        %v3101 = vld [vmem:[#allocation7 + $0x98] sm:$0xff]
        %v3102 = vld [vmem:[#allocation7 + $0xa0] sm:$0xff]
        %v3103 = vld [vmem:[#allocation7 + $0xa8] sm:$0xff]
        %v3104 = vld [vmem:[#allocation7 + $0xb0] sm:$0xff]
        %v3105 = vld [vmem:[#allocation7 + $0xb8] sm:$0xff]
        %v3106 = vld [vmem:[#allocation7 + $0xc0] sm:$0xff]
        %v3107 = vld [vmem:[#allocation7 + $0xc8] sm:$0xff]
        %v3108 = vld [vmem:[#allocation7 + $0xd0] sm:$0xff]
        %v3109 = vld [vmem:[#allocation7 + $0xd8] sm:$0xff]
        %v3110 = vld [vmem:[#allocation7 + $0xe0] sm:$0xff]
        %v3111 = vld [vmem:[#allocation7 + $0xe8] sm:$0xff]
        %v3112 = vld [vmem:[#allocation7 + $0xf0] sm:$0xff]
        %v3113 = vld [vmem:[#allocation7 + $0xf8] sm:$0xff]
        %s3114 = scalar_lea.vmem [#allocation10], 3
        %v3115 = vld [vmem:[%s3114] ss:$8 sm:$0x3]
        %v3117 = vlaneseq
        %v3118 = vshrl.u32 %v3117, 7
        %v3119 = vsub.s32 0, %v3118
        %v3120 = vrot.slane %v3115, %v3119
        %v3121 = vlaneseq
        %v3122 = vshrl.u32 %v3121, 7
        %v3123 = vsub.s32 1, %v3122
        %v3124 = vrot.slane %v3115, %v3123
        %v3159 = vunpack.c.l.b16 %v3082
        %v3160 = vunpack.c.h.b16 %v3082
        %v3161 = vunpack.c.l.b16 %v3083
        %v3162 = vunpack.c.h.b16 %v3083
        %v3163 = vunpack.c.l.b16 %v3084
        %v3164 = vunpack.c.h.b16 %v3084
        %v3165 = vunpack.c.l.b16 %v3085
        %v3166 = vunpack.c.h.b16 %v3085
        %v3167 = vunpack.c.l.b16 %v3086
        %v3168 = vunpack.c.h.b16 %v3086
        %v3169 = vunpack.c.l.b16 %v3087
        %v3170 = vunpack.c.h.b16 %v3087
        %v3171 = vunpack.c.l.b16 %v3088
        %v3172 = vunpack.c.h.b16 %v3088
        %v3173 = vunpack.c.l.b16 %v3089
        %v3174 = vunpack.c.h.b16 %v3089
        %v3175 = vunpack.c.l.b16 %v3090
        %v3176 = vunpack.c.h.b16 %v3090
        %v3177 = vunpack.c.l.b16 %v3091
        %v3178 = vunpack.c.h.b16 %v3091
        %v3179 = vunpack.c.l.b16 %v3092
        %v3180 = vunpack.c.h.b16 %v3092
        %v3181 = vunpack.c.l.b16 %v3093
        %v3182 = vunpack.c.h.b16 %v3093
        %v3183 = vunpack.c.l.b16 %v3094
        %v3184 = vunpack.c.h.b16 %v3094
        %v3185 = vunpack.c.l.b16 %v3095
        %v3186 = vunpack.c.h.b16 %v3095
        %v3187 = vunpack.c.l.b16 %v3096
        %v3188 = vunpack.c.h.b16 %v3096
        %v3189 = vunpack.c.l.b16 %v3097
        %v3190 = vunpack.c.h.b16 %v3097
        %v3191 = vunpack.c.l.b16 %v3098
        %v3192 = vunpack.c.h.b16 %v3098
        %v3193 = vunpack.c.l.b16 %v3099
        %v3194 = vunpack.c.h.b16 %v3099
        %v3195 = vunpack.c.l.b16 %v3100
        %v3196 = vunpack.c.h.b16 %v3100
        %v3197 = vunpack.c.l.b16 %v3101
        %v3198 = vunpack.c.h.b16 %v3101
        %v3199 = vunpack.c.l.b16 %v3102
        %v3200 = vunpack.c.h.b16 %v3102
        %v3201 = vunpack.c.l.b16 %v3103
        %v3202 = vunpack.c.h.b16 %v3103
        %v3203 = vunpack.c.l.b16 %v3104
        %v3204 = vunpack.c.h.b16 %v3104
        %v3205 = vunpack.c.l.b16 %v3105
        %v3206 = vunpack.c.h.b16 %v3105
        %v3207 = vunpack.c.l.b16 %v3106
        %v3208 = vunpack.c.h.b16 %v3106
        %v3209 = vunpack.c.l.b16 %v3107
        %v3210 = vunpack.c.h.b16 %v3107
        %v3211 = vunpack.c.l.b16 %v3108
        %v3212 = vunpack.c.h.b16 %v3108
        %v3213 = vunpack.c.l.b16 %v3109
        %v3214 = vunpack.c.h.b16 %v3109
        %v3215 = vunpack.c.l.b16 %v3110
        %v3216 = vunpack.c.h.b16 %v3110
        %v3217 = vunpack.c.l.b16 %v3111
        %v3218 = vunpack.c.h.b16 %v3111
        %v3219 = vunpack.c.l.b16 %v3112
        %v3220 = vunpack.c.h.b16 %v3112
        %v3221 = vunpack.c.l.b16 %v3113
        %v3222 = vunpack.c.h.b16 %v3113
        %v3223 = vpack.c.b16 %v3161, %v3159
        %v3224 = vpack.c.b16 %v3162, %v3160
        %v3225 = vpack.c.b16 %v3165, %v3163
        %v3226 = vpack.c.b16 %v3166, %v3164
        %v3227 = vpack.c.b16 %v3169, %v3167
        %v3228 = vpack.c.b16 %v3170, %v3168
        %v3229 = vpack.c.b16 %v3173, %v3171
        %v3230 = vpack.c.b16 %v3174, %v3172
        %v3231 = vpack.c.b16 %v3177, %v3175
        %v3232 = vpack.c.b16 %v3178, %v3176
        %v3233 = vpack.c.b16 %v3181, %v3179
        %v3234 = vpack.c.b16 %v3182, %v3180
        %v3235 = vpack.c.b16 %v3185, %v3183
        %v3236 = vpack.c.b16 %v3186, %v3184
        %v3237 = vpack.c.b16 %v3189, %v3187
        %v3238 = vpack.c.b16 %v3190, %v3188
        %v3239 = vpack.c.b16 %v3193, %v3191
        %v3240 = vpack.c.b16 %v3194, %v3192
        %v3241 = vpack.c.b16 %v3197, %v3195
        %v3242 = vpack.c.b16 %v3198, %v3196
        %v3243 = vpack.c.b16 %v3201, %v3199
        %v3244 = vpack.c.b16 %v3202, %v3200
        %v3245 = vpack.c.b16 %v3205, %v3203
        %v3246 = vpack.c.b16 %v3206, %v3204
        %v3247 = vpack.c.b16 %v3209, %v3207
        %v3248 = vpack.c.b16 %v3210, %v3208
        %v3249 = vpack.c.b16 %v3213, %v3211
        %v3250 = vpack.c.b16 %v3214, %v3212
        %v3251 = vpack.c.b16 %v3217, %v3215
        %v3252 = vpack.c.b16 %v3218, %v3216
        %v3253 = vpack.c.b16 %v3221, %v3219
        %v3254 = vpack.c.b16 %v3222, %v3220
        %3287 = vmatprep.subr.bf16.mxu0 %v3224
        %3288 = vmatpush1.bf16.msra.mxu0 %v3223
        %3289 = vmatprep.subr.bf16.mxu0 %v3226
        %3290 = vmatpush1.bf16.msra.mxu0 %v3225
        %3291 = vmatprep.subr.bf16.mxu0 %v3228
        %3292 = vmatpush1.bf16.msra.mxu0 %v3227
        %3293 = vmatprep.subr.bf16.mxu0 %v3230
        %3294 = vmatpush1.bf16.msra.mxu0 %v3229
        %3295 = vmatprep.subr.bf16.mxu0 %v3232
        %3296 = vmatpush1.bf16.msra.mxu0 %v3231
        %3297 = vmatprep.subr.bf16.mxu0 %v3234
        %3298 = vmatpush1.bf16.msra.mxu0 %v3233
        %3299 = vmatprep.subr.bf16.mxu0 %v3236
        %3300 = vmatpush1.bf16.msra.mxu0 %v3235
        %3301 = vmatprep.subr.bf16.mxu0 %v3238
        %3302 = vmatpush1.bf16.msra.mxu0 %v3237
        %3303 = vmatprep.subr.bf16.mxu0 %v3240
        %3304 = vmatpush1.bf16.msra.mxu0 %v3239
        %3305 = vmatprep.subr.bf16.mxu0 %v3242
        %3306 = vmatpush1.bf16.msra.mxu0 %v3241
        %3307 = vmatprep.subr.bf16.mxu0 %v3244
        %3308 = vmatpush1.bf16.msra.mxu0 %v3243
        %3309 = vmatprep.subr.bf16.mxu0 %v3246
        %3310 = vmatpush1.bf16.msra.mxu0 %v3245
        %3311 = vmatprep.subr.bf16.mxu0 %v3248
        %3312 = vmatpush1.bf16.msra.mxu0 %v3247
        %3313 = vmatprep.subr.bf16.mxu0 %v3250
        %3314 = vmatpush1.bf16.msra.mxu0 %v3249
        %3315 = vmatprep.subr.bf16.mxu0 %v3252
        %3316 = vmatpush1.bf16.msra.mxu0 %v3251
        %3317 = vmatprep.subr.bf16.mxu0 %v3254
        %3318 = vmatpush1.bf16.msra.mxu0 %v3253
        %3319 = vmatprep.mubr.bf16.mxu0 %v3051
        %3320 = vmatmul.mubr.bf16.gmra.mrb[0].mxu0 %v3050
        %v3321 = vpop.f32.mrb[0].mxu0
        %v3322 = vadd.f32 %v3120, %v3321
        %v3323 = vpop.f32.mrb[0].mxu0
        %v3324 = vadd.f32 %v3124, %v3323
        %v3325 = vpop.f32.mrb[0].mxu0
        %v3326 = vadd.f32 %v3120, %v3325
        %v3327 = vpop.f32.mrb[0].mxu0
        %v3328 = vadd.f32 %v3124, %v3327
        %3329 = vmatprep.mubr.bf16.mxu0 %v3053
        %3330 = vmatmul.mubr.bf16.gmra.mrb[0].mxu0 %v3052
        %v3331 = vpop.f32.mrb[0].mxu0
        %v3332 = vadd.f32 %v3120, %v3331
        %v3333 = vpop.f32.mrb[0].mxu0
        %v3334 = vadd.f32 %v3124, %v3333
        %v3335 = vpop.f32.mrb[0].mxu0
        %v3336 = vadd.f32 %v3120, %v3335
        %v3337 = vpop.f32.mrb[0].mxu0
        %v3338 = vadd.f32 %v3124, %v3337
        %3339 = vmatprep.mubr.bf16.mxu0 %v3055
        %3340 = vmatmul.mubr.bf16.gmra.mrb[0].mxu0 %v3054
        %v3341 = vpop.f32.mrb[0].mxu0
        %v3342 = vadd.f32 %v3120, %v3341
        %v3343 = vpop.f32.mrb[0].mxu0
        %v3344 = vadd.f32 %v3124, %v3343
        %v3345 = vpop.f32.mrb[0].mxu0
        %v3346 = vadd.f32 %v3120, %v3345
        %v3347 = vpop.f32.mrb[0].mxu0
        %v3348 = vadd.f32 %v3124, %v3347
        %3349 = vmatprep.mubr.bf16.mxu0 %v3057
        %3350 = vmatmul.mubr.bf16.gmra.mrb[0].mxu0 %v3056
        %v3351 = vpop.f32.mrb[0].mxu0
        %v3352 = vadd.f32 %v3120, %v3351
        %v3353 = vpop.f32.mrb[0].mxu0
        %v3354 = vadd.f32 %v3124, %v3353
        %v3355 = vpop.f32.mrb[0].mxu0
        %v3356 = vadd.f32 %v3120, %v3355
        %v3357 = vpop.f32.mrb[0].mxu0
        %v3358 = vadd.f32 %v3124, %v3357
        %3359 = vmatprep.mubr.bf16.mxu0 %v3059
        %3360 = vmatmul.mubr.bf16.gmra.mrb[0].mxu0 %v3058
        %v3361 = vpop.f32.mrb[0].mxu0
        %v3362 = vadd.f32 %v3120, %v3361
        %v3363 = vpop.f32.mrb[0].mxu0
        %v3364 = vadd.f32 %v3124, %v3363
        %v3365 = vpop.f32.mrb[0].mxu0
        %v3366 = vadd.f32 %v3120, %v3365
        %v3367 = vpop.f32.mrb[0].mxu0
        %v3368 = vadd.f32 %v3124, %v3367
        %3369 = vmatprep.mubr.bf16.mxu0 %v3061
        %3370 = vmatmul.mubr.bf16.gmra.mrb[0].mxu0 %v3060
        %v3371 = vpop.f32.mrb[0].mxu0
        %v3372 = vadd.f32 %v3120, %v3371
        %v3373 = vpop.f32.mrb[0].mxu0
        %v3374 = vadd.f32 %v3124, %v3373
        %v3375 = vpop.f32.mrb[0].mxu0
        %v3376 = vadd.f32 %v3120, %v3375
        %v3377 = vpop.f32.mrb[0].mxu0
        %v3378 = vadd.f32 %v3124, %v3377
        %3379 = vmatprep.mubr.bf16.mxu0 %v3063
        %3380 = vmatmul.mubr.bf16.gmra.mrb[0].mxu0 %v3062
        %v3381 = vpop.f32.mrb[0].mxu0
        %v3382 = vadd.f32 %v3120, %v3381
        %v3383 = vpop.f32.mrb[0].mxu0
        %v3384 = vadd.f32 %v3124, %v3383
        %v3385 = vpop.f32.mrb[0].mxu0
        %v3386 = vadd.f32 %v3120, %v3385
        %v3387 = vpop.f32.mrb[0].mxu0
        %v3388 = vadd.f32 %v3124, %v3387
        %3389 = vmatprep.mubr.bf16.mxu0 %v3065
        %3390 = vmatmul.mubr.bf16.gmra.mrb[0].mxu0 %v3064
        %v3391 = vpop.f32.mrb[0].mxu0
        %v3392 = vadd.f32 %v3120, %v3391
        %v3393 = vpop.f32.mrb[0].mxu0
        %v3394 = vadd.f32 %v3124, %v3393
        %v3395 = vpop.f32.mrb[0].mxu0
        %v3396 = vadd.f32 %v3120, %v3395
        %v3397 = vpop.f32.mrb[0].mxu0
        %v3398 = vadd.f32 %v3124, %v3397
        %3399 = vmatprep.mubr.bf16.mxu0 %v3067
        %3400 = vmatmul.mubr.bf16.gmra.mrb[0].mxu0 %v3066
        %v3401 = vpop.f32.mrb[0].mxu0
        %v3402 = vadd.f32 %v3120, %v3401
        %v3403 = vpop.f32.mrb[0].mxu0
        %v3404 = vadd.f32 %v3124, %v3403
        %v3405 = vpop.f32.mrb[0].mxu0
        %v3406 = vadd.f32 %v3120, %v3405
        %v3407 = vpop.f32.mrb[0].mxu0
        %v3408 = vadd.f32 %v3124, %v3407
        %3409 = vmatprep.mubr.bf16.mxu0 %v3069
        %3410 = vmatmul.mubr.bf16.gmra.mrb[0].mxu0 %v3068
        %v3411 = vpop.f32.mrb[0].mxu0
        %v3412 = vadd.f32 %v3120, %v3411
        %v3413 = vpop.f32.mrb[0].mxu0
        %v3414 = vadd.f32 %v3124, %v3413
        %v3415 = vpop.f32.mrb[0].mxu0
        %v3416 = vadd.f32 %v3120, %v3415
        %v3417 = vpop.f32.mrb[0].mxu0
        %v3418 = vadd.f32 %v3124, %v3417
        %3419 = vmatprep.mubr.bf16.mxu0 %v3071
        %3420 = vmatmul.mubr.bf16.gmra.mrb[0].mxu0 %v3070
        %v3421 = vpop.f32.mrb[0].mxu0
        %v3422 = vadd.f32 %v3120, %v3421
        %v3423 = vpop.f32.mrb[0].mxu0
        %v3424 = vadd.f32 %v3124, %v3423
        %v3425 = vpop.f32.mrb[0].mxu0
        %v3426 = vadd.f32 %v3120, %v3425
        %v3427 = vpop.f32.mrb[0].mxu0
        %v3428 = vadd.f32 %v3124, %v3427
        %3429 = vmatprep.mubr.bf16.mxu0 %v3073
        %3430 = vmatmul.mubr.bf16.gmra.mrb[0].mxu0 %v3072
        %v3431 = vpop.f32.mrb[0].mxu0
        %v3432 = vadd.f32 %v3120, %v3431
        %v3433 = vpop.f32.mrb[0].mxu0
        %v3434 = vadd.f32 %v3124, %v3433
        %v3435 = vpop.f32.mrb[0].mxu0
        %v3436 = vadd.f32 %v3120, %v3435
        %v3437 = vpop.f32.mrb[0].mxu0
        %v3438 = vadd.f32 %v3124, %v3437
        %3439 = vmatprep.mubr.bf16.mxu0 %v3075
        %3440 = vmatmul.mubr.bf16.gmra.mrb[0].mxu0 %v3074
        %v3441 = vpop.f32.mrb[0].mxu0
        %v3442 = vadd.f32 %v3120, %v3441
        %v3443 = vpop.f32.mrb[0].mxu0
        %v3444 = vadd.f32 %v3124, %v3443
        %v3445 = vpop.f32.mrb[0].mxu0
        %v3446 = vadd.f32 %v3120, %v3445
        %v3447 = vpop.f32.mrb[0].mxu0
        %v3448 = vadd.f32 %v3124, %v3447
        %3449 = vmatprep.mubr.bf16.mxu0 %v3077
        %3450 = vmatmul.mubr.bf16.gmra.mrb[0].mxu0 %v3076
        %v3451 = vpop.f32.mrb[0].mxu0
        %v3452 = vadd.f32 %v3120, %v3451
        %v3453 = vpop.f32.mrb[0].mxu0
        %v3454 = vadd.f32 %v3124, %v3453
        %v3455 = vpop.f32.mrb[0].mxu0
        %v3456 = vadd.f32 %v3120, %v3455
        %v3457 = vpop.f32.mrb[0].mxu0
        %v3458 = vadd.f32 %v3124, %v3457
        %3459 = vmatprep.mubr.bf16.mxu0 %v3079
        %3460 = vmatmul.mubr.bf16.gmra.mrb[0].mxu0 %v3078
        %v3461 = vpop.f32.mrb[0].mxu0
        %v3462 = vadd.f32 %v3120, %v3461
        %v3463 = vpop.f32.mrb[0].mxu0
        %v3464 = vadd.f32 %v3124, %v3463
        %v3465 = vpop.f32.mrb[0].mxu0
        %v3466 = vadd.f32 %v3120, %v3465
        %v3467 = vpop.f32.mrb[0].mxu0
        %v3468 = vadd.f32 %v3124, %v3467
        %3469 = vmatprep.mubr.bf16.mxu0 %v3081
        %3470 = vmatmul.mubr.bf16.gmra.mrb[0].mxu0 %v3080
        %v3471 = vpop.f32.mrb[0].mxu0
        %v3472 = vadd.f32 %v3120, %v3471
        %v3473 = vpop.f32.mrb[0].mxu0
        %v3474 = vadd.f32 %v3124, %v3473
        %v3475 = vpop.f32.mrb[0].mxu0
        %v3476 = vadd.f32 %v3120, %v3475
        %v3477 = vpop.f32.mrb[0].mxu0
        %v3478 = vadd.f32 %v3124, %v3477
        %3479 = vdwg.mxu0
        %s3480 = scalar_lea.vmem [#allocation10], 4
        %v3481 = vld [vmem:[%s3480] ss:$8 sm:$0x3]
        %s3482 = scalar_lea.vmem [#allocation10], 5
        %v3483 = vld [vmem:[%s3482] ss:$8 sm:$0x3]
        %v3484 = vadd.f32 %v3322, %v3324
        %3485 = vadd.xlane.f32.xlu0 %v3484
        %v3486 = vpop.xlane.xlu0 %3485
        %v3487 = vadd.f32 %v3326, %v3328
        %3488 = vadd.xlane.f32.xlu0 %v3487
        %v3489 = vpop.xlane.xlu0 %3488
        %v3490 = vadd.f32 %v3332, %v3334
        %3491 = vadd.xlane.f32.xlu0 %v3490
        %v3492 = vpop.xlane.xlu0 %3491
        %v3493 = vadd.f32 %v3336, %v3338
        %3494 = vadd.xlane.f32.xlu0 %v3493
        %v3495 = vpop.xlane.xlu0 %3494
        %v3496 = vadd.f32 %v3342, %v3344
        %3497 = vadd.xlane.f32.xlu0 %v3496
        %v3498 = vpop.xlane.xlu0 %3497
        %v3499 = vadd.f32 %v3346, %v3348
        %3500 = vadd.xlane.f32.xlu0 %v3499
        %v3501 = vpop.xlane.xlu0 %3500
        %v3502 = vadd.f32 %v3352, %v3354
        %3503 = vadd.xlane.f32.xlu0 %v3502
        %v3504 = vpop.xlane.xlu0 %3503
        %v3505 = vadd.f32 %v3356, %v3358
        %3506 = vadd.xlane.f32.xlu0 %v3505
        %v3507 = vpop.xlane.xlu0 %3506
        %v3508 = vadd.f32 %v3362, %v3364
        %3509 = vadd.xlane.f32.xlu0 %v3508
        %v3510 = vpop.xlane.xlu0 %3509
        %v3511 = vadd.f32 %v3366, %v3368
        %3512 = vadd.xlane.f32.xlu0 %v3511
        %v3513 = vpop.xlane.xlu0 %3512
        %v3514 = vadd.f32 %v3372, %v3374
        %3515 = vadd.xlane.f32.xlu0 %v3514
        %v3516 = vpop.xlane.xlu0 %3515
        %v3517 = vadd.f32 %v3376, %v3378
        %3518 = vadd.xlane.f32.xlu0 %v3517
        %v3519 = vpop.xlane.xlu0 %3518
        %v3520 = vadd.f32 %v3382, %v3384
        %3521 = vadd.xlane.f32.xlu0 %v3520
        %v3522 = vpop.xlane.xlu0 %3521
        %v3523 = vadd.f32 %v3386, %v3388
        %3524 = vadd.xlane.f32.xlu0 %v3523
        %v3525 = vpop.xlane.xlu0 %3524
        %v3526 = vadd.f32 %v3392, %v3394
        %3527 = vadd.xlane.f32.xlu0 %v3526
        %v3528 = vpop.xlane.xlu0 %3527
        %v3529 = vadd.f32 %v3396, %v3398
        %3530 = vadd.xlane.f32.xlu0 %v3529
        %v3531 = vpop.xlane.xlu0 %3530
        %v3532 = vadd.f32 %v3402, %v3404
        %3533 = vadd.xlane.f32.xlu0 %v3532
        %v3534 = vpop.xlane.xlu0 %3533
        %v3535 = vadd.f32 %v3406, %v3408
        %3536 = vadd.xlane.f32.xlu0 %v3535
        %v3537 = vpop.xlane.xlu0 %3536
        %v3538 = vadd.f32 %v3412, %v3414
        %3539 = vadd.xlane.f32.xlu0 %v3538
        %v3540 = vpop.xlane.xlu0 %3539
        %v3541 = vadd.f32 %v3416, %v3418
        %3542 = vadd.xlane.f32.xlu0 %v3541
        %v3543 = vpop.xlane.xlu0 %3542
        %v3544 = vadd.f32 %v3422, %v3424
        %3545 = vadd.xlane.f32.xlu0 %v3544
        %v3546 = vpop.xlane.xlu0 %3545
        %v3547 = vadd.f32 %v3426, %v3428
        %3548 = vadd.xlane.f32.xlu0 %v3547
        %v3549 = vpop.xlane.xlu0 %3548
        %v3550 = vadd.f32 %v3432, %v3434
        %3551 = vadd.xlane.f32.xlu0 %v3550
        %v3552 = vpop.xlane.xlu0 %3551
        %v3553 = vadd.f32 %v3436, %v3438
        %3554 = vadd.xlane.f32.xlu0 %v3553
        %v3555 = vpop.xlane.xlu0 %3554
        %v3556 = vadd.f32 %v3442, %v3444
        %3557 = vadd.xlane.f32.xlu0 %v3556
        %v3558 = vpop.xlane.xlu0 %3557
        %v3559 = vadd.f32 %v3446, %v3448
        %3560 = vadd.xlane.f32.xlu0 %v3559
        %v3561 = vpop.xlane.xlu0 %3560
        %v3562 = vadd.f32 %v3452, %v3454
        %3563 = vadd.xlane.f32.xlu0 %v3562
        %v3564 = vpop.xlane.xlu0 %3563
        %v3565 = vadd.f32 %v3456, %v3458
        %3566 = vadd.xlane.f32.xlu0 %v3565
        %v3567 = vpop.xlane.xlu0 %3566
        %v3568 = vadd.f32 %v3462, %v3464
        %3569 = vadd.xlane.f32.xlu0 %v3568
        %v3570 = vpop.xlane.xlu0 %3569
        %v3571 = vadd.f32 %v3466, %v3468
        %3572 = vadd.xlane.f32.xlu0 %v3571
        %v3573 = vpop.xlane.xlu0 %3572
        %v3574 = vadd.f32 %v3472, %v3474
        %3575 = vadd.xlane.f32.xlu0 %v3574
        %v3576 = vpop.xlane.xlu0 %3575
        %v3577 = vadd.f32 %v3476, %v3478
        %3578 = vadd.xlane.f32.xlu0 %v3577
        %v3579 = vpop.xlane.xlu0 %3578
        %v3580 = vmul.f32 %v3486, %v2419
        %v3581 = vmul.f32 %v3489, %v2419
        %v3582 = vmul.f32 %v3492, %v2419
        %v3583 = vmul.f32 %v3495, %v2419
        %v3584 = vmul.f32 %v3498, %v2419
        %v3585 = vmul.f32 %v3501, %v2419
        %v3586 = vmul.f32 %v3504, %v2419
        %v3587 = vmul.f32 %v3507, %v2419
        %v3588 = vmul.f32 %v3510, %v2419
        %v3589 = vmul.f32 %v3513, %v2419
        %v3590 = vmul.f32 %v3516, %v2419
        %v3591 = vmul.f32 %v3519, %v2419
        %v3592 = vmul.f32 %v3522, %v2419
        %v3593 = vmul.f32 %v3525, %v2419
        %v3594 = vmul.f32 %v3528, %v2419
        %v3595 = vmul.f32 %v3531, %v2419
        %v3596 = vmul.f32 %v3534, %v2419
        %v3597 = vmul.f32 %v3537, %v2419
        %v3598 = vmul.f32 %v3540, %v2419
        %v3599 = vmul.f32 %v3543, %v2419
        %v3600 = vmul.f32 %v3546, %v2419
        %v3601 = vmul.f32 %v3549, %v2419
        %v3602 = vmul.f32 %v3552, %v2419
        %v3603 = vmul.f32 %v3555, %v2419
        %v3604 = vmul.f32 %v3558, %v2419
        %v3605 = vmul.f32 %v3561, %v2419
        %v3606 = vmul.f32 %v3564, %v2419
        %v3607 = vmul.f32 %v3567, %v2419
        %v3608 = vmul.f32 %v3570, %v2419
        %v3609 = vmul.f32 %v3573, %v2419
        %v3610 = vmul.f32 %v3576, %v2419
        %v3611 = vmul.f32 %v3579, %v2419
        %v3612 = vsub.f32 %v3322, %v3580
        %v3613 = vsub.f32 %v3324, %v3580
        %v3614 = vsub.f32 %v3326, %v3581
        %v3615 = vsub.f32 %v3328, %v3581
        %v3616 = vsub.f32 %v3332, %v3582
        %v3617 = vsub.f32 %v3334, %v3582
        %v3618 = vsub.f32 %v3336, %v3583
        %v3619 = vsub.f32 %v3338, %v3583
        %v3620 = vsub.f32 %v3342, %v3584
        %v3621 = vsub.f32 %v3344, %v3584
        %v3622 = vsub.f32 %v3346, %v3585
        %v3623 = vsub.f32 %v3348, %v3585
        %v3624 = vsub.f32 %v3352, %v3586
        %v3625 = vsub.f32 %v3354, %v3586
        %v3626 = vsub.f32 %v3356, %v3587
        %v3627 = vsub.f32 %v3358, %v3587
        %v3628 = vsub.f32 %v3362, %v3588
        %v3629 = vsub.f32 %v3364, %v3588
        %v3630 = vsub.f32 %v3366, %v3589
        %v3631 = vsub.f32 %v3368, %v3589
        %v3632 = vsub.f32 %v3372, %v3590
        %v3633 = vsub.f32 %v3374, %v3590
        %v3634 = vsub.f32 %v3376, %v3591
        %v3635 = vsub.f32 %v3378, %v3591
        %v3636 = vsub.f32 %v3382, %v3592
        %v3637 = vsub.f32 %v3384, %v3592
        %v3638 = vsub.f32 %v3386, %v3593
        %v3639 = vsub.f32 %v3388, %v3593
        %v3640 = vsub.f32 %v3392, %v3594
        %v3641 = vsub.f32 %v3394, %v3594
        %v3642 = vsub.f32 %v3396, %v3595
        %v3643 = vsub.f32 %v3398, %v3595
        %v3644 = vsub.f32 %v3402, %v3596
        %v3645 = vsub.f32 %v3404, %v3596
        %v3646 = vsub.f32 %v3406, %v3597
        %v3647 = vsub.f32 %v3408, %v3597
        %v3648 = vsub.f32 %v3412, %v3598
        %v3649 = vsub.f32 %v3414, %v3598
        %v3650 = vsub.f32 %v3416, %v3599
        %v3651 = vsub.f32 %v3418, %v3599
        %v3652 = vsub.f32 %v3422, %v3600
        %v3653 = vsub.f32 %v3424, %v3600
        %v3654 = vsub.f32 %v3426, %v3601
        %v3655 = vsub.f32 %v3428, %v3601
        %v3656 = vsub.f32 %v3432, %v3602
        %v3657 = vsub.f32 %v3434, %v3602
        %v3658 = vsub.f32 %v3436, %v3603
        %v3659 = vsub.f32 %v3438, %v3603
        %v3660 = vsub.f32 %v3442, %v3604
        %v3661 = vsub.f32 %v3444, %v3604
        %v3662 = vsub.f32 %v3446, %v3605
        %v3663 = vsub.f32 %v3448, %v3605
        %v3664 = vsub.f32 %v3452, %v3606
        %v3665 = vsub.f32 %v3454, %v3606
        %v3666 = vsub.f32 %v3456, %v3607
        %v3667 = vsub.f32 %v3458, %v3607
        %v3668 = vsub.f32 %v3462, %v3608
        %v3669 = vsub.f32 %v3464, %v3608
        %v3670 = vsub.f32 %v3466, %v3609
        %v3671 = vsub.f32 %v3468, %v3609
        %v3672 = vsub.f32 %v3472, %v3610
        %v3673 = vsub.f32 %v3474, %v3610
        %v3674 = vsub.f32 %v3476, %v3611
        %v3675 = vsub.f32 %v3478, %v3611
        %v3676 = vmul.f32 %v3612, %v3612
        %v3677 = vmul.f32 %v3613, %v3613
        %v3678 = vmul.f32 %v3614, %v3614
        %v3679 = vmul.f32 %v3615, %v3615
        %v3680 = vmul.f32 %v3616, %v3616
        %v3681 = vmul.f32 %v3617, %v3617
        %v3682 = vmul.f32 %v3618, %v3618
        %v3683 = vmul.f32 %v3619, %v3619
        %v3684 = vmul.f32 %v3620, %v3620
        %v3685 = vmul.f32 %v3621, %v3621
        %v3686 = vmul.f32 %v3622, %v3622
        %v3687 = vmul.f32 %v3623, %v3623
        %v3688 = vmul.f32 %v3624, %v3624
        %v3689 = vmul.f32 %v3625, %v3625
        %v3690 = vmul.f32 %v3626, %v3626
        %v3691 = vmul.f32 %v3627, %v3627
        %v3692 = vmul.f32 %v3628, %v3628
        %v3693 = vmul.f32 %v3629, %v3629
        %v3694 = vmul.f32 %v3630, %v3630
        %v3695 = vmul.f32 %v3631, %v3631
        %v3696 = vmul.f32 %v3632, %v3632
        %v3697 = vmul.f32 %v3633, %v3633
        %v3698 = vmul.f32 %v3634, %v3634
        %v3699 = vmul.f32 %v3635, %v3635
        %v3700 = vmul.f32 %v3636, %v3636
        %v3701 = vmul.f32 %v3637, %v3637
        %v3702 = vmul.f32 %v3638, %v3638
        %v3703 = vmul.f32 %v3639, %v3639
        %v3704 = vmul.f32 %v3640, %v3640
        %v3705 = vmul.f32 %v3641, %v3641
        %v3706 = vmul.f32 %v3642, %v3642
        %v3707 = vmul.f32 %v3643, %v3643
        %v3708 = vmul.f32 %v3644, %v3644
        %v3709 = vmul.f32 %v3645, %v3645
        %v3710 = vmul.f32 %v3646, %v3646
        %v3711 = vmul.f32 %v3647, %v3647
        %v3712 = vmul.f32 %v3648, %v3648
        %v3713 = vmul.f32 %v3649, %v3649
        %v3714 = vmul.f32 %v3650, %v3650
        %v3715 = vmul.f32 %v3651, %v3651
        %v3716 = vmul.f32 %v3652, %v3652
        %v3717 = vmul.f32 %v3653, %v3653
        %v3718 = vmul.f32 %v3654, %v3654
        %v3719 = vmul.f32 %v3655, %v3655
        %v3720 = vmul.f32 %v3656, %v3656
        %v3721 = vmul.f32 %v3657, %v3657
        %v3722 = vmul.f32 %v3658, %v3658
        %v3723 = vmul.f32 %v3659, %v3659
        %v3724 = vmul.f32 %v3660, %v3660
        %v3725 = vmul.f32 %v3661, %v3661
        %v3726 = vmul.f32 %v3662, %v3662
        %v3727 = vmul.f32 %v3663, %v3663
        %v3728 = vmul.f32 %v3664, %v3664
        %v3729 = vmul.f32 %v3665, %v3665
        %v3730 = vmul.f32 %v3666, %v3666
        %v3731 = vmul.f32 %v3667, %v3667
        %v3732 = vmul.f32 %v3668, %v3668
        %v3733 = vmul.f32 %v3669, %v3669
        %v3734 = vmul.f32 %v3670, %v3670
        %v3735 = vmul.f32 %v3671, %v3671
        %v3736 = vmul.f32 %v3672, %v3672
        %v3737 = vmul.f32 %v3673, %v3673
        %v3738 = vmul.f32 %v3674, %v3674
        %v3739 = vmul.f32 %v3675, %v3675
        %v3740 = vadd.f32 %v3676, %v3677
        %3741 = vadd.xlane.f32.xlu0 %v3740
        %v3742 = vpop.xlane.xlu0 %3741
        %v3743 = vadd.f32 %v3678, %v3679
        %3744 = vadd.xlane.f32.xlu0 %v3743
        %v3745 = vpop.xlane.xlu0 %3744
        %v3746 = vadd.f32 %v3680, %v3681
        %3747 = vadd.xlane.f32.xlu0 %v3746
        %v3748 = vpop.xlane.xlu0 %3747
        %v3749 = vadd.f32 %v3682, %v3683
        %3750 = vadd.xlane.f32.xlu0 %v3749
        %v3751 = vpop.xlane.xlu0 %3750
        %v3752 = vadd.f32 %v3684, %v3685
        %3753 = vadd.xlane.f32.xlu0 %v3752
        %v3754 = vpop.xlane.xlu0 %3753
        %v3755 = vadd.f32 %v3686, %v3687
        %3756 = vadd.xlane.f32.xlu0 %v3755
        %v3757 = vpop.xlane.xlu0 %3756
        %v3758 = vadd.f32 %v3688, %v3689
        %3759 = vadd.xlane.f32.xlu0 %v3758
        %v3760 = vpop.xlane.xlu0 %3759
        %v3761 = vadd.f32 %v3690, %v3691
        %3762 = vadd.xlane.f32.xlu0 %v3761
        %v3763 = vpop.xlane.xlu0 %3762
        %v3764 = vadd.f32 %v3692, %v3693
        %3765 = vadd.xlane.f32.xlu0 %v3764
        %v3766 = vpop.xlane.xlu0 %3765
        %v3767 = vadd.f32 %v3694, %v3695
        %3768 = vadd.xlane.f32.xlu0 %v3767
        %v3769 = vpop.xlane.xlu0 %3768
        %v3770 = vadd.f32 %v3696, %v3697
        %3771 = vadd.xlane.f32.xlu0 %v3770
        %v3772 = vpop.xlane.xlu0 %3771
        %v3773 = vadd.f32 %v3698, %v3699
        %3774 = vadd.xlane.f32.xlu0 %v3773
        %v3775 = vpop.xlane.xlu0 %3774
        %v3776 = vadd.f32 %v3700, %v3701
        %3777 = vadd.xlane.f32.xlu0 %v3776
        %v3778 = vpop.xlane.xlu0 %3777
        %v3779 = vadd.f32 %v3702, %v3703
        %3780 = vadd.xlane.f32.xlu0 %v3779
        %v3781 = vpop.xlane.xlu0 %3780
        %v3782 = vadd.f32 %v3704, %v3705
        %3783 = vadd.xlane.f32.xlu0 %v3782
        %v3784 = vpop.xlane.xlu0 %3783
        %v3785 = vadd.f32 %v3706, %v3707
        %3786 = vadd.xlane.f32.xlu0 %v3785
        %v3787 = vpop.xlane.xlu0 %3786
        %v3788 = vadd.f32 %v3708, %v3709
        %3789 = vadd.xlane.f32.xlu0 %v3788
        %v3790 = vpop.xlane.xlu0 %3789
        %v3791 = vadd.f32 %v3710, %v3711
        %3792 = vadd.xlane.f32.xlu0 %v3791
        %v3793 = vpop.xlane.xlu0 %3792
        %v3794 = vadd.f32 %v3712, %v3713
        %3795 = vadd.xlane.f32.xlu0 %v3794
        %v3796 = vpop.xlane.xlu0 %3795
        %v3797 = vadd.f32 %v3714, %v3715
        %3798 = vadd.xlane.f32.xlu0 %v3797
        %v3799 = vpop.xlane.xlu0 %3798
        %v3800 = vadd.f32 %v3716, %v3717
        %3801 = vadd.xlane.f32.xlu0 %v3800
        %v3802 = vpop.xlane.xlu0 %3801
        %v3803 = vadd.f32 %v3718, %v3719
        %3804 = vadd.xlane.f32.xlu0 %v3803
        %v3805 = vpop.xlane.xlu0 %3804
        %v3806 = vadd.f32 %v3720, %v3721
        %3807 = vadd.xlane.f32.xlu0 %v3806
        %v3808 = vpop.xlane.xlu0 %3807
        %v3809 = vadd.f32 %v3722, %v3723
        %3810 = vadd.xlane.f32.xlu0 %v3809
        %v3811 = vpop.xlane.xlu0 %3810
        %v3812 = vadd.f32 %v3724, %v3725
        %3813 = vadd.xlane.f32.xlu0 %v3812
        %v3814 = vpop.xlane.xlu0 %3813
        %v3815 = vadd.f32 %v3726, %v3727
        %3816 = vadd.xlane.f32.xlu0 %v3815
        %v3817 = vpop.xlane.xlu0 %3816
        %v3818 = vadd.f32 %v3728, %v3729
        %3819 = vadd.xlane.f32.xlu0 %v3818
        %v3820 = vpop.xlane.xlu0 %3819
        %v3821 = vadd.f32 %v3730, %v3731
        %3822 = vadd.xlane.f32.xlu0 %v3821
        %v3823 = vpop.xlane.xlu0 %3822
        %v3824 = vadd.f32 %v3732, %v3733
        %3825 = vadd.xlane.f32.xlu0 %v3824
        %v3826 = vpop.xlane.xlu0 %3825
        %v3827 = vadd.f32 %v3734, %v3735
        %3828 = vadd.xlane.f32.xlu0 %v3827
        %v3829 = vpop.xlane.xlu0 %3828
        %v3830 = vadd.f32 %v3736, %v3737
        %3831 = vadd.xlane.f32.xlu0 %v3830
        %v3832 = vpop.xlane.xlu0 %3831
        %v3833 = vadd.f32 %v3738, %v3739
        %3834 = vadd.xlane.f32.xlu0 %v3833
        %v3835 = vpop.xlane.xlu0 %3834
        %v3836 = vmul.f32 %v3742, %v2419
        %v3837 = vmul.f32 %v3745, %v2419
        %v3838 = vmul.f32 %v3748, %v2419
        %v3839 = vmul.f32 %v3751, %v2419
        %v3840 = vmul.f32 %v3754, %v2419
        %v3841 = vmul.f32 %v3757, %v2419
        %v3842 = vmul.f32 %v3760, %v2419
        %v3843 = vmul.f32 %v3763, %v2419
        %v3844 = vmul.f32 %v3766, %v2419
        %v3845 = vmul.f32 %v3769, %v2419
        %v3846 = vmul.f32 %v3772, %v2419
        %v3847 = vmul.f32 %v3775, %v2419
        %v3848 = vmul.f32 %v3778, %v2419
        %v3849 = vmul.f32 %v3781, %v2419
        %v3850 = vmul.f32 %v3784, %v2419
        %v3851 = vmul.f32 %v3787, %v2419
        %v3852 = vmul.f32 %v3790, %v2419
        %v3853 = vmul.f32 %v3793, %v2419
        %v3854 = vmul.f32 %v3796, %v2419
        %v3855 = vmul.f32 %v3799, %v2419
        %v3856 = vmul.f32 %v3802, %v2419
        %v3857 = vmul.f32 %v3805, %v2419
        %v3858 = vmul.f32 %v3808, %v2419
        %v3859 = vmul.f32 %v3811, %v2419
        %v3860 = vmul.f32 %v3814, %v2419
        %v3861 = vmul.f32 %v3817, %v2419
        %v3862 = vmul.f32 %v3820, %v2419
        %v3863 = vmul.f32 %v3823, %v2419
        %v3864 = vmul.f32 %v3826, %v2419
        %v3865 = vmul.f32 %v3829, %v2419
        %v3866 = vmul.f32 %v3832, %v2419
        %v3867 = vmul.f32 %v3835, %v2419
        %v3868 = vadd.f32 %v3836, 1e-05
        %v3869 = vadd.f32 %v3837, 1e-05
        %v3870 = vadd.f32 %v3838, 1e-05
        %v3871 = vadd.f32 %v3839, 1e-05
        %v3872 = vadd.f32 %v3840, 1e-05
        %v3873 = vadd.f32 %v3841, 1e-05
        %v3874 = vadd.f32 %v3842, 1e-05
        %v3875 = vadd.f32 %v3843, 1e-05
        %v3876 = vadd.f32 %v3844, 1e-05
        %v3877 = vadd.f32 %v3845, 1e-05
        %v3878 = vadd.f32 %v3846, 1e-05
        %v3879 = vadd.f32 %v3847, 1e-05
        %v3880 = vadd.f32 %v3848, 1e-05
        %v3881 = vadd.f32 %v3849, 1e-05
        %v3882 = vadd.f32 %v3850, 1e-05
        %v3883 = vadd.f32 %v3851, 1e-05
        %v3884 = vadd.f32 %v3852, 1e-05
        %v3885 = vadd.f32 %v3853, 1e-05
        %v3886 = vadd.f32 %v3854, 1e-05
        %v3887 = vadd.f32 %v3855, 1e-05
        %v3888 = vadd.f32 %v3856, 1e-05
        %v3889 = vadd.f32 %v3857, 1e-05
        %v3890 = vadd.f32 %v3858, 1e-05
        %v3891 = vadd.f32 %v3859, 1e-05
        %v3892 = vadd.f32 %v3860, 1e-05
        %v3893 = vadd.f32 %v3861, 1e-05
        %v3894 = vadd.f32 %v3862, 1e-05
        %v3895 = vadd.f32 %v3863, 1e-05
        %v3896 = vadd.f32 %v3864, 1e-05
        %v3897 = vadd.f32 %v3865, 1e-05
        %v3898 = vadd.f32 %v3866, 1e-05
        %v3899 = vadd.f32 %v3867, 1e-05
        %v3900 = vrsqrt.pop %v3868
        %v3901 = vrsqrt.pop %v3869
        %v3902 = vrsqrt.pop %v3870
        %v3903 = vrsqrt.pop %v3871
        %v3904 = vrsqrt.pop %v3872
        %v3905 = vrsqrt.pop %v3873
        %v3906 = vrsqrt.pop %v3874
        %v3907 = vrsqrt.pop %v3875
        %v3908 = vrsqrt.pop %v3876
        %v3909 = vrsqrt.pop %v3877
        %v3910 = vrsqrt.pop %v3878
        %v3911 = vrsqrt.pop %v3879
        %v3912 = vrsqrt.pop %v3880
        %v3913 = vrsqrt.pop %v3881
        %v3914 = vrsqrt.pop %v3882
        %v3915 = vrsqrt.pop %v3883
        %v3916 = vrsqrt.pop %v3884
        %v3917 = vrsqrt.pop %v3885
        %v3918 = vrsqrt.pop %v3886
        %v3919 = vrsqrt.pop %v3887
        %v3920 = vrsqrt.pop %v3888
        %v3921 = vrsqrt.pop %v3889
        %v3922 = vrsqrt.pop %v3890
        %v3923 = vrsqrt.pop %v3891
        %v3924 = vrsqrt.pop %v3892
        %v3925 = vrsqrt.pop %v3893
        %v3926 = vrsqrt.pop %v3894
        %v3927 = vrsqrt.pop %v3895
        %v3928 = vrsqrt.pop %v3896
        %v3929 = vrsqrt.pop %v3897
        %v3930 = vrsqrt.pop %v3898
        %v3931 = vrsqrt.pop %v3899
        %v3933 = vlaneseq
        %v3934 = vshrl.u32 %v3933, 7
        %v3935 = vsub.s32 0, %v3934
        %v3936 = vrot.slane %v3481, %v3935
        %v3937 = vlaneseq
        %v3938 = vshrl.u32 %v3937, 7
        %v3939 = vsub.s32 1, %v3938
        %v3940 = vrot.slane %v3481, %v3939
        %v3943 = vmul.f32 %v3900, %v3936
        %v3944 = vmul.f32 %v3900, %v3940
        %v3945 = vmul.f32 %v3901, %v3936
        %v3946 = vmul.f32 %v3901, %v3940
        %v3947 = vmul.f32 %v3902, %v3936
        %v3948 = vmul.f32 %v3902, %v3940
        %v3949 = vmul.f32 %v3903, %v3936
        %v3950 = vmul.f32 %v3903, %v3940
        %v3951 = vmul.f32 %v3904, %v3936
        %v3952 = vmul.f32 %v3904, %v3940
        %v3953 = vmul.f32 %v3905, %v3936
        %v3954 = vmul.f32 %v3905, %v3940
        %v3955 = vmul.f32 %v3906, %v3936
        %v3956 = vmul.f32 %v3906, %v3940
        %v3957 = vmul.f32 %v3907, %v3936
        %v3958 = vmul.f32 %v3907, %v3940
        %v3959 = vmul.f32 %v3908, %v3936
        %v3960 = vmul.f32 %v3908, %v3940
        %v3961 = vmul.f32 %v3909, %v3936
        %v3962 = vmul.f32 %v3909, %v3940
        %v3963 = vmul.f32 %v3910, %v3936
        %v3964 = vmul.f32 %v3910, %v3940
        %v3965 = vmul.f32 %v3911, %v3936
        %v3966 = vmul.f32 %v3911, %v3940
        %v3967 = vmul.f32 %v3912, %v3936
        %v3968 = vmul.f32 %v3912, %v3940
        %v3969 = vmul.f32 %v3913, %v3936
        %v3970 = vmul.f32 %v3913, %v3940
        %v3971 = vmul.f32 %v3914, %v3936
        %v3972 = vmul.f32 %v3914, %v3940
        %v3973 = vmul.f32 %v3915, %v3936
        %v3974 = vmul.f32 %v3915, %v3940
        %v3975 = vmul.f32 %v3916, %v3936
        %v3976 = vmul.f32 %v3916, %v3940
        %v3977 = vmul.f32 %v3917, %v3936
        %v3978 = vmul.f32 %v3917, %v3940
        %v3979 = vmul.f32 %v3918, %v3936
        %v3980 = vmul.f32 %v3918, %v3940
        %v3981 = vmul.f32 %v3919, %v3936
        %v3982 = vmul.f32 %v3919, %v3940
        %v3983 = vmul.f32 %v3920, %v3936
        %v3984 = vmul.f32 %v3920, %v3940
        %v3985 = vmul.f32 %v3921, %v3936
        %v3986 = vmul.f32 %v3921, %v3940
        %v3987 = vmul.f32 %v3922, %v3936
        %v3988 = vmul.f32 %v3922, %v3940
        %v3989 = vmul.f32 %v3923, %v3936
        %v3990 = vmul.f32 %v3923, %v3940
        %v3991 = vmul.f32 %v3924, %v3936
        %v3992 = vmul.f32 %v3924, %v3940
        %v3993 = vmul.f32 %v3925, %v3936
        %v3994 = vmul.f32 %v3925, %v3940
        %v3995 = vmul.f32 %v3926, %v3936
        %v3996 = vmul.f32 %v3926, %v3940
        %v3997 = vmul.f32 %v3927, %v3936
        %v3998 = vmul.f32 %v3927, %v3940
        %v3999 = vmul.f32 %v3928, %v3936
        %v4000 = vmul.f32 %v3928, %v3940
        %v4001 = vmul.f32 %v3929, %v3936
        %v4002 = vmul.f32 %v3929, %v3940
        %v4003 = vmul.f32 %v3930, %v3936
        %v4004 = vmul.f32 %v3930, %v3940
        %v4005 = vmul.f32 %v3931, %v3936
        %v4006 = vmul.f32 %v3931, %v3940
        %v4007 = vmul.f32 %v3612, %v3943
        %v4008 = vmul.f32 %v3613, %v3944
        %v4009 = vmul.f32 %v3614, %v3945
        %v4010 = vmul.f32 %v3615, %v3946
        %v4011 = vmul.f32 %v3616, %v3947
        %v4012 = vmul.f32 %v3617, %v3948
        %v4013 = vmul.f32 %v3618, %v3949
        %v4014 = vmul.f32 %v3619, %v3950
        %v4015 = vmul.f32 %v3620, %v3951
        %v4016 = vmul.f32 %v3621, %v3952
        %v4017 = vmul.f32 %v3622, %v3953
        %v4018 = vmul.f32 %v3623, %v3954
        %v4019 = vmul.f32 %v3624, %v3955
        %v4020 = vmul.f32 %v3625, %v3956
        %v4021 = vmul.f32 %v3626, %v3957
        %v4022 = vmul.f32 %v3627, %v3958
        %v4023 = vmul.f32 %v3628, %v3959
        %v4024 = vmul.f32 %v3629, %v3960
        %v4025 = vmul.f32 %v3630, %v3961
        %v4026 = vmul.f32 %v3631, %v3962
        %v4027 = vmul.f32 %v3632, %v3963
        %v4028 = vmul.f32 %v3633, %v3964
        %v4029 = vmul.f32 %v3634, %v3965
        %v4030 = vmul.f32 %v3635, %v3966
        %v4031 = vmul.f32 %v3636, %v3967
        %v4032 = vmul.f32 %v3637, %v3968
        %v4033 = vmul.f32 %v3638, %v3969
        %v4034 = vmul.f32 %v3639, %v3970
        %v4035 = vmul.f32 %v3640, %v3971
        %v4036 = vmul.f32 %v3641, %v3972
        %v4037 = vmul.f32 %v3642, %v3973
        %v4038 = vmul.f32 %v3643, %v3974
        %v4039 = vmul.f32 %v3644, %v3975
        %v4040 = vmul.f32 %v3645, %v3976
        %v4041 = vmul.f32 %v3646, %v3977
        %v4042 = vmul.f32 %v3647, %v3978
        %v4043 = vmul.f32 %v3648, %v3979
        %v4044 = vmul.f32 %v3649, %v3980
        %v4045 = vmul.f32 %v3650, %v3981
        %v4046 = vmul.f32 %v3651, %v3982
        %v4047 = vmul.f32 %v3652, %v3983
        %v4048 = vmul.f32 %v3653, %v3984
        %v4049 = vmul.f32 %v3654, %v3985
        %v4050 = vmul.f32 %v3655, %v3986
        %v4051 = vmul.f32 %v3656, %v3987
        %v4052 = vmul.f32 %v3657, %v3988
        %v4053 = vmul.f32 %v3658, %v3989
        %v4054 = vmul.f32 %v3659, %v3990
        %v4055 = vmul.f32 %v3660, %v3991
        %v4056 = vmul.f32 %v3661, %v3992
        %v4057 = vmul.f32 %v3662, %v3993
        %v4058 = vmul.f32 %v3663, %v3994
        %v4059 = vmul.f32 %v3664, %v3995
        %v4060 = vmul.f32 %v3665, %v3996
        %v4061 = vmul.f32 %v3666, %v3997
        %v4062 = vmul.f32 %v3667, %v3998
        %v4063 = vmul.f32 %v3668, %v3999
        %v4064 = vmul.f32 %v3669, %v4000
        %v4065 = vmul.f32 %v3670, %v4001
        %v4066 = vmul.f32 %v3671, %v4002
        %v4067 = vmul.f32 %v3672, %v4003
        %v4068 = vmul.f32 %v3673, %v4004
        %v4069 = vmul.f32 %v3674, %v4005
        %v4070 = vmul.f32 %v3675, %v4006
        %v4072 = vlaneseq
        %v4073 = vshrl.u32 %v4072, 7
        %v4074 = vsub.s32 0, %v4073
        %v4075 = vrot.slane %v3483, %v4074
        %v4076 = vlaneseq
        %v4077 = vshrl.u32 %v4076, 7
        %v4078 = vsub.s32 1, %v4077
        %v4079 = vrot.slane %v3483, %v4078
        %v4082 = vadd.f32 %v4007, %v4075
        %v4083 = vadd.f32 %v4008, %v4079
        %v4084 = vadd.f32 %v4009, %v4075
        %v4085 = vadd.f32 %v4010, %v4079
        %v4086 = vadd.f32 %v4011, %v4075
        %v4087 = vadd.f32 %v4012, %v4079
        %v4088 = vadd.f32 %v4013, %v4075
        %v4089 = vadd.f32 %v4014, %v4079
        %v4090 = vadd.f32 %v4015, %v4075
        %v4091 = vadd.f32 %v4016, %v4079
        %v4092 = vadd.f32 %v4017, %v4075
        %v4093 = vadd.f32 %v4018, %v4079
        %v4094 = vadd.f32 %v4019, %v4075
        %v4095 = vadd.f32 %v4020, %v4079
        %v4096 = vadd.f32 %v4021, %v4075
        %v4097 = vadd.f32 %v4022, %v4079
        %v4098 = vadd.f32 %v4023, %v4075
        %v4099 = vadd.f32 %v4024, %v4079
        %v4100 = vadd.f32 %v4025, %v4075
        %v4101 = vadd.f32 %v4026, %v4079
        %v4102 = vadd.f32 %v4027, %v4075
        %v4103 = vadd.f32 %v4028, %v4079
        %v4104 = vadd.f32 %v4029, %v4075
        %v4105 = vadd.f32 %v4030, %v4079
        %v4106 = vadd.f32 %v4031, %v4075
        %v4107 = vadd.f32 %v4032, %v4079
        %v4108 = vadd.f32 %v4033, %v4075
        %v4109 = vadd.f32 %v4034, %v4079
        %v4110 = vadd.f32 %v4035, %v4075
        %v4111 = vadd.f32 %v4036, %v4079
        %v4112 = vadd.f32 %v4037, %v4075
        %v4113 = vadd.f32 %v4038, %v4079
        %v4114 = vadd.f32 %v4039, %v4075
        %v4115 = vadd.f32 %v4040, %v4079
        %v4116 = vadd.f32 %v4041, %v4075
        %v4117 = vadd.f32 %v4042, %v4079
        %v4118 = vadd.f32 %v4043, %v4075
        %v4119 = vadd.f32 %v4044, %v4079
        %v4120 = vadd.f32 %v4045, %v4075
        %v4121 = vadd.f32 %v4046, %v4079
        %v4122 = vadd.f32 %v4047, %v4075
        %v4123 = vadd.f32 %v4048, %v4079
        %v4124 = vadd.f32 %v4049, %v4075
        %v4125 = vadd.f32 %v4050, %v4079
        %v4126 = vadd.f32 %v4051, %v4075
        %v4127 = vadd.f32 %v4052, %v4079
        %v4128 = vadd.f32 %v4053, %v4075
        %v4129 = vadd.f32 %v4054, %v4079
        %v4130 = vadd.f32 %v4055, %v4075
        %v4131 = vadd.f32 %v4056, %v4079
        %v4132 = vadd.f32 %v4057, %v4075
        %v4133 = vadd.f32 %v4058, %v4079
        %v4134 = vadd.f32 %v4059, %v4075
        %v4135 = vadd.f32 %v4060, %v4079
        %v4136 = vadd.f32 %v4061, %v4075
        %v4137 = vadd.f32 %v4062, %v4079
        %v4138 = vadd.f32 %v4063, %v4075
        %v4139 = vadd.f32 %v4064, %v4079
        %v4140 = vadd.f32 %v4065, %v4075
        %v4141 = vadd.f32 %v4066, %v4079
        %v4142 = vadd.f32 %v4067, %v4075
        %v4143 = vadd.f32 %v4068, %v4079
        %v4144 = vadd.f32 %v4069, %v4075
        %v4145 = vadd.f32 %v4070, %v4079
        %v4146 = vmax.f32 %v4082, 0.0
        %v4147 = vmax.f32 %v4083, 0.0
        %v4148 = vmax.f32 %v4084, 0.0
        %v4149 = vmax.f32 %v4085, 0.0
        %v4150 = vmax.f32 %v4086, 0.0
        %v4151 = vmax.f32 %v4087, 0.0
        %v4152 = vmax.f32 %v4088, 0.0
        %v4153 = vmax.f32 %v4089, 0.0
        %v4154 = vmax.f32 %v4090, 0.0
        %v4155 = vmax.f32 %v4091, 0.0
        %v4156 = vmax.f32 %v4092, 0.0
        %v4157 = vmax.f32 %v4093, 0.0
        %v4158 = vmax.f32 %v4094, 0.0
        %v4159 = vmax.f32 %v4095, 0.0
        %v4160 = vmax.f32 %v4096, 0.0
        %v4161 = vmax.f32 %v4097, 0.0
        %v4162 = vmax.f32 %v4098, 0.0
        %v4163 = vmax.f32 %v4099, 0.0
        %v4164 = vmax.f32 %v4100, 0.0
        %v4165 = vmax.f32 %v4101, 0.0
        %v4166 = vmax.f32 %v4102, 0.0
        %v4167 = vmax.f32 %v4103, 0.0
        %v4168 = vmax.f32 %v4104, 0.0
        %v4169 = vmax.f32 %v4105, 0.0
        %v4170 = vmax.f32 %v4106, 0.0
        %v4171 = vmax.f32 %v4107, 0.0
        %v4172 = vmax.f32 %v4108, 0.0
        %v4173 = vmax.f32 %v4109, 0.0
        %v4174 = vmax.f32 %v4110, 0.0
        %v4175 = vmax.f32 %v4111, 0.0
        %v4176 = vmax.f32 %v4112, 0.0
        %v4177 = vmax.f32 %v4113, 0.0
        %v4178 = vmax.f32 %v4114, 0.0
        %v4179 = vmax.f32 %v4115, 0.0
        %v4180 = vmax.f32 %v4116, 0.0
        %v4181 = vmax.f32 %v4117, 0.0
        %v4182 = vmax.f32 %v4118, 0.0
        %v4183 = vmax.f32 %v4119, 0.0
        %v4184 = vmax.f32 %v4120, 0.0
        %v4185 = vmax.f32 %v4121, 0.0
        %v4186 = vmax.f32 %v4122, 0.0
        %v4187 = vmax.f32 %v4123, 0.0
        %v4188 = vmax.f32 %v4124, 0.0
        %v4189 = vmax.f32 %v4125, 0.0
        %v4190 = vmax.f32 %v4126, 0.0
        %v4191 = vmax.f32 %v4127, 0.0
        %v4192 = vmax.f32 %v4128, 0.0
        %v4193 = vmax.f32 %v4129, 0.0
        %v4194 = vmax.f32 %v4130, 0.0
        %v4195 = vmax.f32 %v4131, 0.0
        %v4196 = vmax.f32 %v4132, 0.0
        %v4197 = vmax.f32 %v4133, 0.0
        %v4198 = vmax.f32 %v4134, 0.0
        %v4199 = vmax.f32 %v4135, 0.0
        %v4200 = vmax.f32 %v4136, 0.0
        %v4201 = vmax.f32 %v4137, 0.0
        %v4202 = vmax.f32 %v4138, 0.0
        %v4203 = vmax.f32 %v4139, 0.0
        %v4204 = vmax.f32 %v4140, 0.0
        %v4205 = vmax.f32 %v4141, 0.0
        %v4206 = vmax.f32 %v4142, 0.0
        %v4207 = vmax.f32 %v4143, 0.0
        %v4208 = vmax.f32 %v4144, 0.0
        %v4209 = vmax.f32 %v4145, 0.0
        %v4210 = vpack.c.bf16 %v4148, %v4146
        %v4211 = vpack.c.bf16 %v4149, %v4147
        %v4212 = vpack.c.bf16 %v4152, %v4150
        %v4213 = vpack.c.bf16 %v4153, %v4151
        %v4214 = vpack.c.bf16 %v4156, %v4154
        %v4215 = vpack.c.bf16 %v4157, %v4155
        %v4216 = vpack.c.bf16 %v4160, %v4158
        %v4217 = vpack.c.bf16 %v4161, %v4159
        %v4218 = vpack.c.bf16 %v4164, %v4162
        %v4219 = vpack.c.bf16 %v4165, %v4163
        %v4220 = vpack.c.bf16 %v4168, %v4166
        %v4221 = vpack.c.bf16 %v4169, %v4167
        %v4222 = vpack.c.bf16 %v4172, %v4170
        %v4223 = vpack.c.bf16 %v4173, %v4171
        %v4224 = vpack.c.bf16 %v4176, %v4174
        %v4225 = vpack.c.bf16 %v4177, %v4175
        %v4226 = vpack.c.bf16 %v4180, %v4178
        %v4227 = vpack.c.bf16 %v4181, %v4179
        %v4228 = vpack.c.bf16 %v4184, %v4182
        %v4229 = vpack.c.bf16 %v4185, %v4183
        %v4230 = vpack.c.bf16 %v4188, %v4186
        %v4231 = vpack.c.bf16 %v4189, %v4187
        %v4232 = vpack.c.bf16 %v4192, %v4190
        %v4233 = vpack.c.bf16 %v4193, %v4191
        %v4234 = vpack.c.bf16 %v4196, %v4194
        %v4235 = vpack.c.bf16 %v4197, %v4195
        %v4236 = vpack.c.bf16 %v4200, %v4198
        %v4237 = vpack.c.bf16 %v4201, %v4199
        %v4238 = vpack.c.bf16 %v4204, %v4202
        %v4239 = vpack.c.bf16 %v4205, %v4203
        %v4240 = vpack.c.bf16 %v4208, %v4206
        %v4241 = vpack.c.bf16 %v4209, %v4207
        %v4242 = vld [vmem:[#allocation8] sm:$0xff]
        %v4243 = vld [vmem:[#allocation8 + $0x8] sm:$0xff]
        %v4244 = vld [vmem:[#allocation8 + $0x10] sm:$0xff]
        %v4245 = vld [vmem:[#allocation8 + $0x18] sm:$0xff]
        %v4246 = vld [vmem:[#allocation8 + $0x20] sm:$0xff]
        %v4247 = vld [vmem:[#allocation8 + $0x28] sm:$0xff]
        %v4248 = vld [vmem:[#allocation8 + $0x30] sm:$0xff]
        %v4249 = vld [vmem:[#allocation8 + $0x38] sm:$0xff]
        %v4250 = vld [vmem:[#allocation8 + $0x40] sm:$0xff]
        %v4251 = vld [vmem:[#allocation8 + $0x48] sm:$0xff]
        %v4252 = vld [vmem:[#allocation8 + $0x50] sm:$0xff]
        %v4253 = vld [vmem:[#allocation8 + $0x58] sm:$0xff]
        %v4254 = vld [vmem:[#allocation8 + $0x60] sm:$0xff]
        %v4255 = vld [vmem:[#allocation8 + $0x68] sm:$0xff]
        %v4256 = vld [vmem:[#allocation8 + $0x70] sm:$0xff]
        %v4257 = vld [vmem:[#allocation8 + $0x78] sm:$0xff]
        %v4258 = vld [vmem:[#allocation8 + $0x80] sm:$0xff]
        %v4259 = vld [vmem:[#allocation8 + $0x88] sm:$0xff]
        %v4260 = vld [vmem:[#allocation8 + $0x90] sm:$0xff]
        %v4261 = vld [vmem:[#allocation8 + $0x98] sm:$0xff]
        %v4262 = vld [vmem:[#allocation8 + $0xa0] sm:$0xff]
        %v4263 = vld [vmem:[#allocation8 + $0xa8] sm:$0xff]
        %v4264 = vld [vmem:[#allocation8 + $0xb0] sm:$0xff]
        %v4265 = vld [vmem:[#allocation8 + $0xb8] sm:$0xff]
        %v4266 = vld [vmem:[#allocation8 + $0xc0] sm:$0xff]
        %v4267 = vld [vmem:[#allocation8 + $0xc8] sm:$0xff]
        %v4268 = vld [vmem:[#allocation8 + $0xd0] sm:$0xff]
        %v4269 = vld [vmem:[#allocation8 + $0xd8] sm:$0xff]
        %v4270 = vld [vmem:[#allocation8 + $0xe0] sm:$0xff]
        %v4271 = vld [vmem:[#allocation8 + $0xe8] sm:$0xff]
        %v4272 = vld [vmem:[#allocation8 + $0xf0] sm:$0xff]
        %v4273 = vld [vmem:[#allocation8 + $0xf8] sm:$0xff]
        %v4274 = vld [vmem:[#allocation8 + $0x100] sm:$0xff]
        %v4275 = vld [vmem:[#allocation8 + $0x108] sm:$0xff]
        %v4276 = vld [vmem:[#allocation8 + $0x110] sm:$0xff]
        %v4277 = vld [vmem:[#allocation8 + $0x118] sm:$0xff]
        %v4278 = vld [vmem:[#allocation8 + $0x120] sm:$0xff]
        %v4279 = vld [vmem:[#allocation8 + $0x128] sm:$0xff]
        %v4280 = vld [vmem:[#allocation8 + $0x130] sm:$0xff]
        %v4281 = vld [vmem:[#allocation8 + $0x138] sm:$0xff]
        %v4282 = vld [vmem:[#allocation8 + $0x140] sm:$0xff]
        %v4283 = vld [vmem:[#allocation8 + $0x148] sm:$0xff]
        %v4284 = vld [vmem:[#allocation8 + $0x150] sm:$0xff]
        %v4285 = vld [vmem:[#allocation8 + $0x158] sm:$0xff]
        %v4286 = vld [vmem:[#allocation8 + $0x160] sm:$0xff]
        %v4287 = vld [vmem:[#allocation8 + $0x168] sm:$0xff]
        %v4288 = vld [vmem:[#allocation8 + $0x170] sm:$0xff]
        %v4289 = vld [vmem:[#allocation8 + $0x178] sm:$0xff]
        %v4290 = vld [vmem:[#allocation8 + $0x180] sm:$0xff]
        %v4291 = vld [vmem:[#allocation8 + $0x188] sm:$0xff]
        %v4292 = vld [vmem:[#allocation8 + $0x190] sm:$0xff]
        %v4293 = vld [vmem:[#allocation8 + $0x198] sm:$0xff]
        %v4294 = vld [vmem:[#allocation8 + $0x1a0] sm:$0xff]
        %v4295 = vld [vmem:[#allocation8 + $0x1a8] sm:$0xff]
        %v4296 = vld [vmem:[#allocation8 + $0x1b0] sm:$0xff]
        %v4297 = vld [vmem:[#allocation8 + $0x1b8] sm:$0xff]
        %v4298 = vld [vmem:[#allocation8 + $0x1c0] sm:$0xff]
        %v4299 = vld [vmem:[#allocation8 + $0x1c8] sm:$0xff]
        %v4300 = vld [vmem:[#allocation8 + $0x1d0] sm:$0xff]
        %v4301 = vld [vmem:[#allocation8 + $0x1d8] sm:$0xff]
        %v4302 = vld [vmem:[#allocation8 + $0x1e0] sm:$0xff]
        %v4303 = vld [vmem:[#allocation8 + $0x1e8] sm:$0xff]
        %v4304 = vld [vmem:[#allocation8 + $0x1f0] sm:$0xff]
        %v4305 = vld [vmem:[#allocation8 + $0x1f8] sm:$0xff]
        %v4306 = vld [vmem:[#allocation11] ss:$8 sm:$0xf]
        %v4308 = vlaneseq
        %v4309 = vshrl.u32 %v4308, 7
        %v4310 = vsub.s32 0, %v4309
        %v4311 = vrot.slane %v4306, %v4310
        %v4312 = vlaneseq
        %v4313 = vshrl.u32 %v4312, 7
        %v4314 = vsub.s32 1, %v4313
        %v4315 = vrot.slane %v4306, %v4314
        %v4316 = vlaneseq
        %v4317 = vshrl.u32 %v4316, 7
        %v4318 = vsub.s32 2, %v4317
        %v4319 = vrot.slane %v4306, %v4318
        %v4320 = vlaneseq
        %v4321 = vshrl.u32 %v4320, 7
        %v4322 = vsub.s32 3, %v4321
        %v4323 = vrot.slane %v4306, %v4322
        %v4392 = vunpack.c.l.b16 %v4242
        %v4393 = vunpack.c.h.b16 %v4242
        %v4394 = vunpack.c.l.b16 %v4243
        %v4395 = vunpack.c.h.b16 %v4243
        %v4396 = vunpack.c.l.b16 %v4244
        %v4397 = vunpack.c.h.b16 %v4244
        %v4398 = vunpack.c.l.b16 %v4245
        %v4399 = vunpack.c.h.b16 %v4245
        %v4400 = vunpack.c.l.b16 %v4246
        %v4401 = vunpack.c.h.b16 %v4246
        %v4402 = vunpack.c.l.b16 %v4247
        %v4403 = vunpack.c.h.b16 %v4247
        %v4404 = vunpack.c.l.b16 %v4248
        %v4405 = vunpack.c.h.b16 %v4248
        %v4406 = vunpack.c.l.b16 %v4249
        %v4407 = vunpack.c.h.b16 %v4249
        %v4408 = vunpack.c.l.b16 %v4250
        %v4409 = vunpack.c.h.b16 %v4250
        %v4410 = vunpack.c.l.b16 %v4251
        %v4411 = vunpack.c.h.b16 %v4251
        %v4412 = vunpack.c.l.b16 %v4252
        %v4413 = vunpack.c.h.b16 %v4252
        %v4414 = vunpack.c.l.b16 %v4253
        %v4415 = vunpack.c.h.b16 %v4253
        %v4416 = vunpack.c.l.b16 %v4254
        %v4417 = vunpack.c.h.b16 %v4254
        %v4418 = vunpack.c.l.b16 %v4255
        %v4419 = vunpack.c.h.b16 %v4255
        %v4420 = vunpack.c.l.b16 %v4256
        %v4421 = vunpack.c.h.b16 %v4256
        %v4422 = vunpack.c.l.b16 %v4257
        %v4423 = vunpack.c.h.b16 %v4257
        %v4424 = vunpack.c.l.b16 %v4258
        %v4425 = vunpack.c.h.b16 %v4258
        %v4426 = vunpack.c.l.b16 %v4259
        %v4427 = vunpack.c.h.b16 %v4259
        %v4428 = vunpack.c.l.b16 %v4260
        %v4429 = vunpack.c.h.b16 %v4260
        %v4430 = vunpack.c.l.b16 %v4261
        %v4431 = vunpack.c.h.b16 %v4261
        %v4432 = vunpack.c.l.b16 %v4262
        %v4433 = vunpack.c.h.b16 %v4262
        %v4434 = vunpack.c.l.b16 %v4263
        %v4435 = vunpack.c.h.b16 %v4263
        %v4436 = vunpack.c.l.b16 %v4264
        %v4437 = vunpack.c.h.b16 %v4264
        %v4438 = vunpack.c.l.b16 %v4265
        %v4439 = vunpack.c.h.b16 %v4265
        %v4440 = vunpack.c.l.b16 %v4266
        %v4441 = vunpack.c.h.b16 %v4266
        %v4442 = vunpack.c.l.b16 %v4267
        %v4443 = vunpack.c.h.b16 %v4267
        %v4444 = vunpack.c.l.b16 %v4268
        %v4445 = vunpack.c.h.b16 %v4268
        %v4446 = vunpack.c.l.b16 %v4269
        %v4447 = vunpack.c.h.b16 %v4269
        %v4448 = vunpack.c.l.b16 %v4270
        %v4449 = vunpack.c.h.b16 %v4270
        %v4450 = vunpack.c.l.b16 %v4271
        %v4451 = vunpack.c.h.b16 %v4271
        %v4452 = vunpack.c.l.b16 %v4272
        %v4453 = vunpack.c.h.b16 %v4272
        %v4454 = vunpack.c.l.b16 %v4273
        %v4455 = vunpack.c.h.b16 %v4273
        %v4456 = vunpack.c.l.b16 %v4274
        %v4457 = vunpack.c.h.b16 %v4274
        %v4458 = vunpack.c.l.b16 %v4275
        %v4459 = vunpack.c.h.b16 %v4275
        %v4460 = vunpack.c.l.b16 %v4276
        %v4461 = vunpack.c.h.b16 %v4276
        %v4462 = vunpack.c.l.b16 %v4277
        %v4463 = vunpack.c.h.b16 %v4277
        %v4464 = vunpack.c.l.b16 %v4278
        %v4465 = vunpack.c.h.b16 %v4278
        %v4466 = vunpack.c.l.b16 %v4279
        %v4467 = vunpack.c.h.b16 %v4279
        %v4468 = vunpack.c.l.b16 %v4280
        %v4469 = vunpack.c.h.b16 %v4280
        %v4470 = vunpack.c.l.b16 %v4281
        %v4471 = vunpack.c.h.b16 %v4281
        %v4472 = vunpack.c.l.b16 %v4282
        %v4473 = vunpack.c.h.b16 %v4282
        %v4474 = vunpack.c.l.b16 %v4283
        %v4475 = vunpack.c.h.b16 %v4283
        %v4476 = vunpack.c.l.b16 %v4284
        %v4477 = vunpack.c.h.b16 %v4284
        %v4478 = vunpack.c.l.b16 %v4285
        %v4479 = vunpack.c.h.b16 %v4285
        %v4480 = vunpack.c.l.b16 %v4286
        %v4481 = vunpack.c.h.b16 %v4286
        %v4482 = vunpack.c.l.b16 %v4287
        %v4483 = vunpack.c.h.b16 %v4287
        %v4484 = vunpack.c.l.b16 %v4288
        %v4485 = vunpack.c.h.b16 %v4288
        %v4486 = vunpack.c.l.b16 %v4289
        %v4487 = vunpack.c.h.b16 %v4289
        %v4488 = vunpack.c.l.b16 %v4290
        %v4489 = vunpack.c.h.b16 %v4290
        %v4490 = vunpack.c.l.b16 %v4291
        %v4491 = vunpack.c.h.b16 %v4291
        %v4492 = vunpack.c.l.b16 %v4292
        %v4493 = vunpack.c.h.b16 %v4292
        %v4494 = vunpack.c.l.b16 %v4293
        %v4495 = vunpack.c.h.b16 %v4293
        %v4496 = vunpack.c.l.b16 %v4294
        %v4497 = vunpack.c.h.b16 %v4294
        %v4498 = vunpack.c.l.b16 %v4295
        %v4499 = vunpack.c.h.b16 %v4295
        %v4500 = vunpack.c.l.b16 %v4296
        %v4501 = vunpack.c.h.b16 %v4296
        %v4502 = vunpack.c.l.b16 %v4297
        %v4503 = vunpack.c.h.b16 %v4297
        %v4504 = vunpack.c.l.b16 %v4298
        %v4505 = vunpack.c.h.b16 %v4298
        %v4506 = vunpack.c.l.b16 %v4299
        %v4507 = vunpack.c.h.b16 %v4299
        %v4508 = vunpack.c.l.b16 %v4300
        %v4509 = vunpack.c.h.b16 %v4300
        %v4510 = vunpack.c.l.b16 %v4301
        %v4511 = vunpack.c.h.b16 %v4301
        %v4512 = vunpack.c.l.b16 %v4302
        %v4513 = vunpack.c.h.b16 %v4302
        %v4514 = vunpack.c.l.b16 %v4303
        %v4515 = vunpack.c.h.b16 %v4303
        %v4516 = vunpack.c.l.b16 %v4304
        %v4517 = vunpack.c.h.b16 %v4304
        %v4518 = vunpack.c.l.b16 %v4305
        %v4519 = vunpack.c.h.b16 %v4305
        %v4520 = vpack.c.b16 %v4396, %v4392
        %v4521 = vpack.c.b16 %v4397, %v4393
        %v4522 = vpack.c.b16 %v4398, %v4394
        %v4523 = vpack.c.b16 %v4399, %v4395
        %v4524 = vpack.c.b16 %v4404, %v4400
        %v4525 = vpack.c.b16 %v4405, %v4401
        %v4526 = vpack.c.b16 %v4406, %v4402
        %v4527 = vpack.c.b16 %v4407, %v4403
        %v4528 = vpack.c.b16 %v4412, %v4408
        %v4529 = vpack.c.b16 %v4413, %v4409
        %v4530 = vpack.c.b16 %v4414, %v4410
        %v4531 = vpack.c.b16 %v4415, %v4411
        %v4532 = vpack.c.b16 %v4420, %v4416
        %v4533 = vpack.c.b16 %v4421, %v4417
        %v4534 = vpack.c.b16 %v4422, %v4418
        %v4535 = vpack.c.b16 %v4423, %v4419
        %v4536 = vpack.c.b16 %v4428, %v4424
        %v4537 = vpack.c.b16 %v4429, %v4425
        %v4538 = vpack.c.b16 %v4430, %v4426
        %v4539 = vpack.c.b16 %v4431, %v4427
        %v4540 = vpack.c.b16 %v4436, %v4432
        %v4541 = vpack.c.b16 %v4437, %v4433
        %v4542 = vpack.c.b16 %v4438, %v4434
        %v4543 = vpack.c.b16 %v4439, %v4435
        %v4544 = vpack.c.b16 %v4444, %v4440
        %v4545 = vpack.c.b16 %v4445, %v4441
        %v4546 = vpack.c.b16 %v4446, %v4442
        %v4547 = vpack.c.b16 %v4447, %v4443
        %v4548 = vpack.c.b16 %v4452, %v4448
        %v4549 = vpack.c.b16 %v4453, %v4449
        %v4550 = vpack.c.b16 %v4454, %v4450
        %v4551 = vpack.c.b16 %v4455, %v4451
        %v4552 = vpack.c.b16 %v4460, %v4456
        %v4553 = vpack.c.b16 %v4461, %v4457
        %v4554 = vpack.c.b16 %v4462, %v4458
        %v4555 = vpack.c.b16 %v4463, %v4459
        %v4556 = vpack.c.b16 %v4468, %v4464
        %v4557 = vpack.c.b16 %v4469, %v4465
        %v4558 = vpack.c.b16 %v4470, %v4466
        %v4559 = vpack.c.b16 %v4471, %v4467
        %v4560 = vpack.c.b16 %v4476, %v4472
        %v4561 = vpack.c.b16 %v4477, %v4473
        %v4562 = vpack.c.b16 %v4478, %v4474
        %v4563 = vpack.c.b16 %v4479, %v4475
        %v4564 = vpack.c.b16 %v4484, %v4480
        %v4565 = vpack.c.b16 %v4485, %v4481
        %v4566 = vpack.c.b16 %v4486, %v4482
        %v4567 = vpack.c.b16 %v4487, %v4483
        %v4568 = vpack.c.b16 %v4492, %v4488
        %v4569 = vpack.c.b16 %v4493, %v4489
        %v4570 = vpack.c.b16 %v4494, %v4490
        %v4571 = vpack.c.b16 %v4495, %v4491
        %v4572 = vpack.c.b16 %v4500, %v4496
        %v4573 = vpack.c.b16 %v4501, %v4497
        %v4574 = vpack.c.b16 %v4502, %v4498
        %v4575 = vpack.c.b16 %v4503, %v4499
        %v4576 = vpack.c.b16 %v4508, %v4504
        %v4577 = vpack.c.b16 %v4509, %v4505
        %v4578 = vpack.c.b16 %v4510, %v4506
        %v4579 = vpack.c.b16 %v4511, %v4507
        %v4580 = vpack.c.b16 %v4516, %v4512
        %v4581 = vpack.c.b16 %v4517, %v4513
        %v4582 = vpack.c.b16 %v4518, %v4514
        %v4583 = vpack.c.b16 %v4519, %v4515
        %4648 = vmatprep.subr.bf16.mxu0 %v4521
        %4649 = vmatpush1.bf16.msra.mxu0 %v4520
        %4650 = vmatprep.subr.bf16.mxu0 %v4525
        %4651 = vmatpush1.bf16.msra.mxu0 %v4524
        %4652 = vmatprep.subr.bf16.mxu0 %v4529
        %4653 = vmatpush1.bf16.msra.mxu0 %v4528
        %4654 = vmatprep.subr.bf16.mxu0 %v4533
        %4655 = vmatpush1.bf16.msra.mxu0 %v4532
        %4656 = vmatprep.subr.bf16.mxu0 %v4537
        %4657 = vmatpush1.bf16.msra.mxu0 %v4536
        %4658 = vmatprep.subr.bf16.mxu0 %v4541
        %4659 = vmatpush1.bf16.msra.mxu0 %v4540
        %4660 = vmatprep.subr.bf16.mxu0 %v4545
        %4661 = vmatpush1.bf16.msra.mxu0 %v4544
        %4662 = vmatprep.subr.bf16.mxu0 %v4549
        %4663 = vmatpush1.bf16.msra.mxu0 %v4548
        %4664 = vmatprep.subr.bf16.mxu0 %v4553
        %4665 = vmatpush1.bf16.msra.mxu0 %v4552
        %4666 = vmatprep.subr.bf16.mxu0 %v4557
        %4667 = vmatpush1.bf16.msra.mxu0 %v4556
        %4668 = vmatprep.subr.bf16.mxu0 %v4561
        %4669 = vmatpush1.bf16.msra.mxu0 %v4560
        %4670 = vmatprep.subr.bf16.mxu0 %v4565
        %4671 = vmatpush1.bf16.msra.mxu0 %v4564
        %4672 = vmatprep.subr.bf16.mxu0 %v4569
        %4673 = vmatpush1.bf16.msra.mxu0 %v4568
        %4674 = vmatprep.subr.bf16.mxu0 %v4573
        %4675 = vmatpush1.bf16.msra.mxu0 %v4572
        %4676 = vmatprep.subr.bf16.mxu0 %v4577
        %4677 = vmatpush1.bf16.msra.mxu0 %v4576
        %4678 = vmatprep.subr.bf16.mxu0 %v4581
        %4679 = vmatpush1.bf16.msra.mxu0 %v4580
        %4680 = vmatprep.mubr.bf16.mxu0 %v4211
        %4681 = vmatmul.mubr.bf16.gmra.mrb[0].mxu0 %v4210
        %v4682 = vpop.f32.mrb[0].mxu0
        %v4683 = vadd.f32 %v4311, %v4682
        %v4684 = vpop.f32.mrb[0].mxu0
        %v4685 = vadd.f32 %v4315, %v4684
        %v4686 = vpop.f32.mrb[0].mxu0
        %v4687 = vadd.f32 %v4311, %v4686
        %v4688 = vpop.f32.mrb[0].mxu0
        %v4689 = vadd.f32 %v4315, %v4688
        %4690 = vmatprep.mubr.bf16.mxu0 %v4213
        %4691 = vmatmul.mubr.bf16.gmra.mrb[0].mxu0 %v4212
        %v4692 = vpop.f32.mrb[0].mxu0
        %v4693 = vadd.f32 %v4311, %v4692
        %v4694 = vpop.f32.mrb[0].mxu0
        %v4695 = vadd.f32 %v4315, %v4694
        %v4696 = vpop.f32.mrb[0].mxu0
        %v4697 = vadd.f32 %v4311, %v4696
        %v4698 = vpop.f32.mrb[0].mxu0
        %v4699 = vadd.f32 %v4315, %v4698
        %4700 = vmatprep.mubr.bf16.mxu0 %v4215
        %4701 = vmatmul.mubr.bf16.gmra.mrb[0].mxu0 %v4214
        %v4702 = vpop.f32.mrb[0].mxu0
        %v4703 = vadd.f32 %v4311, %v4702
        %v4704 = vpop.f32.mrb[0].mxu0
        %v4705 = vadd.f32 %v4315, %v4704
        %v4706 = vpop.f32.mrb[0].mxu0
        %v4707 = vadd.f32 %v4311, %v4706
        %v4708 = vpop.f32.mrb[0].mxu0
        %v4709 = vadd.f32 %v4315, %v4708
        %4710 = vmatprep.mubr.bf16.mxu0 %v4217
        %4711 = vmatmul.mubr.bf16.gmra.mrb[0].mxu0 %v4216
        %v4712 = vpop.f32.mrb[0].mxu0
        %v4713 = vadd.f32 %v4311, %v4712
        %v4714 = vpop.f32.mrb[0].mxu0
        %v4715 = vadd.f32 %v4315, %v4714
        %v4716 = vpop.f32.mrb[0].mxu0
        %v4717 = vadd.f32 %v4311, %v4716
        %v4718 = vpop.f32.mrb[0].mxu0
        %v4719 = vadd.f32 %v4315, %v4718
        %4720 = vmatprep.mubr.bf16.mxu0 %v4219
        %4721 = vmatmul.mubr.bf16.gmra.mrb[0].mxu0 %v4218
        %v4722 = vpop.f32.mrb[0].mxu0
        %v4723 = vadd.f32 %v4311, %v4722
        %v4724 = vpop.f32.mrb[0].mxu0
        %v4725 = vadd.f32 %v4315, %v4724
        %v4726 = vpop.f32.mrb[0].mxu0
        %v4727 = vadd.f32 %v4311, %v4726
        %v4728 = vpop.f32.mrb[0].mxu0
        %v4729 = vadd.f32 %v4315, %v4728
        %4730 = vmatprep.mubr.bf16.mxu0 %v4221
        %4731 = vmatmul.mubr.bf16.gmra.mrb[0].mxu0 %v4220
        %v4732 = vpop.f32.mrb[0].mxu0
        %v4733 = vadd.f32 %v4311, %v4732
        %v4734 = vpop.f32.mrb[0].mxu0
        %v4735 = vadd.f32 %v4315, %v4734
        %v4736 = vpop.f32.mrb[0].mxu0
        %v4737 = vadd.f32 %v4311, %v4736
        %v4738 = vpop.f32.mrb[0].mxu0
        %v4739 = vadd.f32 %v4315, %v4738
        %4740 = vmatprep.mubr.bf16.mxu0 %v4223
        %4741 = vmatmul.mubr.bf16.gmra.mrb[0].mxu0 %v4222
        %v4742 = vpop.f32.mrb[0].mxu0
        %v4743 = vadd.f32 %v4311, %v4742
        %v4744 = vpop.f32.mrb[0].mxu0
        %v4745 = vadd.f32 %v4315, %v4744
        %v4746 = vpop.f32.mrb[0].mxu0
        %v4747 = vadd.f32 %v4311, %v4746
        %v4748 = vpop.f32.mrb[0].mxu0
        %v4749 = vadd.f32 %v4315, %v4748
        %4750 = vmatprep.mubr.bf16.mxu0 %v4225
        %4751 = vmatmul.mubr.bf16.gmra.mrb[0].mxu0 %v4224
        %v4752 = vpop.f32.mrb[0].mxu0
        %v4753 = vadd.f32 %v4311, %v4752
        %v4754 = vpop.f32.mrb[0].mxu0
        %v4755 = vadd.f32 %v4315, %v4754
        %v4756 = vpop.f32.mrb[0].mxu0
        %v4757 = vadd.f32 %v4311, %v4756
        %v4758 = vpop.f32.mrb[0].mxu0
        %v4759 = vadd.f32 %v4315, %v4758
        %4760 = vmatprep.mubr.bf16.mxu0 %v4227
        %4761 = vmatmul.mubr.bf16.gmra.mrb[0].mxu0 %v4226
        %v4762 = vpop.f32.mrb[0].mxu0
        %v4763 = vadd.f32 %v4311, %v4762
        %v4764 = vpop.f32.mrb[0].mxu0
        %v4765 = vadd.f32 %v4315, %v4764
        %v4766 = vpop.f32.mrb[0].mxu0
        %v4767 = vadd.f32 %v4311, %v4766
        %v4768 = vpop.f32.mrb[0].mxu0
        %v4769 = vadd.f32 %v4315, %v4768
        %4770 = vmatprep.mubr.bf16.mxu0 %v4229
        %4771 = vmatmul.mubr.bf16.gmra.mrb[0].mxu0 %v4228
        %v4772 = vpop.f32.mrb[0].mxu0
        %v4773 = vadd.f32 %v4311, %v4772
        %v4774 = vpop.f32.mrb[0].mxu0
        %v4775 = vadd.f32 %v4315, %v4774
        %v4776 = vpop.f32.mrb[0].mxu0
        %v4777 = vadd.f32 %v4311, %v4776
        %v4778 = vpop.f32.mrb[0].mxu0
        %v4779 = vadd.f32 %v4315, %v4778
        %4780 = vmatprep.mubr.bf16.mxu0 %v4231
        %4781 = vmatmul.mubr.bf16.gmra.mrb[0].mxu0 %v4230
        %v4782 = vpop.f32.mrb[0].mxu0
        %v4783 = vadd.f32 %v4311, %v4782
        %v4784 = vpop.f32.mrb[0].mxu0
        %v4785 = vadd.f32 %v4315, %v4784
        %v4786 = vpop.f32.mrb[0].mxu0
        %v4787 = vadd.f32 %v4311, %v4786
        %v4788 = vpop.f32.mrb[0].mxu0
        %v4789 = vadd.f32 %v4315, %v4788
        %4790 = vmatprep.mubr.bf16.mxu0 %v4233
        %4791 = vmatmul.mubr.bf16.gmra.mrb[0].mxu0 %v4232
        %v4792 = vpop.f32.mrb[0].mxu0
        %v4793 = vadd.f32 %v4311, %v4792
        %v4794 = vpop.f32.mrb[0].mxu0
        %v4795 = vadd.f32 %v4315, %v4794
        %v4796 = vpop.f32.mrb[0].mxu0
        %v4797 = vadd.f32 %v4311, %v4796
        %v4798 = vpop.f32.mrb[0].mxu0
        %v4799 = vadd.f32 %v4315, %v4798
        %4800 = vmatprep.mubr.bf16.mxu0 %v4235
        %4801 = vmatmul.mubr.bf16.gmra.mrb[0].mxu0 %v4234
        %v4802 = vpop.f32.mrb[0].mxu0
        %v4803 = vadd.f32 %v4311, %v4802
        %v4804 = vpop.f32.mrb[0].mxu0
        %v4805 = vadd.f32 %v4315, %v4804
        %v4806 = vpop.f32.mrb[0].mxu0
        %v4807 = vadd.f32 %v4311, %v4806
        %v4808 = vpop.f32.mrb[0].mxu0
        %v4809 = vadd.f32 %v4315, %v4808
        %4810 = vmatprep.mubr.bf16.mxu0 %v4237
        %4811 = vmatmul.mubr.bf16.gmra.mrb[0].mxu0 %v4236
        %v4812 = vpop.f32.mrb[0].mxu0
        %v4813 = vadd.f32 %v4311, %v4812
        %v4814 = vpop.f32.mrb[0].mxu0
        %v4815 = vadd.f32 %v4315, %v4814
        %v4816 = vpop.f32.mrb[0].mxu0
        %v4817 = vadd.f32 %v4311, %v4816
        %v4818 = vpop.f32.mrb[0].mxu0
        %v4819 = vadd.f32 %v4315, %v4818
        %4820 = vmatprep.mubr.bf16.mxu0 %v4239
        %4821 = vmatmul.mubr.bf16.gmra.mrb[0].mxu0 %v4238
        %v4822 = vpop.f32.mrb[0].mxu0
        %v4823 = vadd.f32 %v4311, %v4822
        %v4824 = vpop.f32.mrb[0].mxu0
        %v4825 = vadd.f32 %v4315, %v4824
        %v4826 = vpop.f32.mrb[0].mxu0
        %v4827 = vadd.f32 %v4311, %v4826
        %v4828 = vpop.f32.mrb[0].mxu0
        %v4829 = vadd.f32 %v4315, %v4828
        %4830 = vmatprep.mubr.bf16.mxu0 %v4241
        %4831 = vmatmul.mubr.bf16.gmra.mrb[0].mxu0 %v4240
        %v4832 = vpop.f32.mrb[0].mxu0
        %v4833 = vadd.f32 %v4311, %v4832
        %v4834 = vpop.f32.mrb[0].mxu0
        %v4835 = vadd.f32 %v4315, %v4834
        %v4836 = vpop.f32.mrb[0].mxu0
        %v4837 = vadd.f32 %v4311, %v4836
        %v4838 = vpop.f32.mrb[0].mxu0
        %v4839 = vadd.f32 %v4315, %v4838
        %4840 = vdwg.mxu0
        %4841 = vmatprep.subr.bf16.mxu0 %v4523
        %4842 = vmatpush1.bf16.msra.mxu0 %v4522
        %4843 = vmatprep.subr.bf16.mxu0 %v4527
        %4844 = vmatpush1.bf16.msra.mxu0 %v4526
        %4845 = vmatprep.subr.bf16.mxu0 %v4531
        %4846 = vmatpush1.bf16.msra.mxu0 %v4530
        %4847 = vmatprep.subr.bf16.mxu0 %v4535
        %4848 = vmatpush1.bf16.msra.mxu0 %v4534
        %4849 = vmatprep.subr.bf16.mxu0 %v4539
        %4850 = vmatpush1.bf16.msra.mxu0 %v4538
        %4851 = vmatprep.subr.bf16.mxu0 %v4543
        %4852 = vmatpush1.bf16.msra.mxu0 %v4542
        %4853 = vmatprep.subr.bf16.mxu0 %v4547
        %4854 = vmatpush1.bf16.msra.mxu0 %v4546
        %4855 = vmatprep.subr.bf16.mxu0 %v4551
        %4856 = vmatpush1.bf16.msra.mxu0 %v4550
        %4857 = vmatprep.subr.bf16.mxu0 %v4555
        %4858 = vmatpush1.bf16.msra.mxu0 %v4554
        %4859 = vmatprep.subr.bf16.mxu0 %v4559
        %4860 = vmatpush1.bf16.msra.mxu0 %v4558
        %4861 = vmatprep.subr.bf16.mxu0 %v4563
        %4862 = vmatpush1.bf16.msra.mxu0 %v4562
        %4863 = vmatprep.subr.bf16.mxu0 %v4567
        %4864 = vmatpush1.bf16.msra.mxu0 %v4566
        %4865 = vmatprep.subr.bf16.mxu0 %v4571
        %4866 = vmatpush1.bf16.msra.mxu0 %v4570
        %4867 = vmatprep.subr.bf16.mxu0 %v4575
        %4868 = vmatpush1.bf16.msra.mxu0 %v4574
        %4869 = vmatprep.subr.bf16.mxu0 %v4579
        %4870 = vmatpush1.bf16.msra.mxu0 %v4578
        %4871 = vmatprep.subr.bf16.mxu0 %v4583
        %4872 = vmatpush1.bf16.msra.mxu0 %v4582
        %4873 = vmatprep.mubr.bf16.mxu0 %v4211
        %4874 = vmatmul.mubr.bf16.gmra.mrb[0].mxu0 %v4210
        %v4875 = vpop.f32.mrb[0].mxu0
        %v4876 = vadd.f32 %v4319, %v4875
        %v4877 = vpop.f32.mrb[0].mxu0
        %v4878 = vadd.f32 %v4323, %v4877
        %v4879 = vpop.f32.mrb[0].mxu0
        %v4880 = vadd.f32 %v4319, %v4879
        %v4881 = vpop.f32.mrb[0].mxu0
        %v4882 = vadd.f32 %v4323, %v4881
        %4883 = vmatprep.mubr.bf16.mxu0 %v4213
        %4884 = vmatmul.mubr.bf16.gmra.mrb[0].mxu0 %v4212
        %v4885 = vpop.f32.mrb[0].mxu0
        %v4886 = vadd.f32 %v4319, %v4885
        %v4887 = vpop.f32.mrb[0].mxu0
        %v4888 = vadd.f32 %v4323, %v4887
        %v4889 = vpop.f32.mrb[0].mxu0
        %v4890 = vadd.f32 %v4319, %v4889
        %v4891 = vpop.f32.mrb[0].mxu0
        %v4892 = vadd.f32 %v4323, %v4891
        %4893 = vmatprep.mubr.bf16.mxu0 %v4215
        %4894 = vmatmul.mubr.bf16.gmra.mrb[0].mxu0 %v4214
        %v4895 = vpop.f32.mrb[0].mxu0
        %v4896 = vadd.f32 %v4319, %v4895
        %v4897 = vpop.f32.mrb[0].mxu0
        %v4898 = vadd.f32 %v4323, %v4897
        %v4899 = vpop.f32.mrb[0].mxu0
        %v4900 = vadd.f32 %v4319, %v4899
        %v4901 = vpop.f32.mrb[0].mxu0
        %v4902 = vadd.f32 %v4323, %v4901
        %4903 = vmatprep.mubr.bf16.mxu0 %v4217
        %4904 = vmatmul.mubr.bf16.gmra.mrb[0].mxu0 %v4216
        %v4905 = vpop.f32.mrb[0].mxu0
        %v4906 = vadd.f32 %v4319, %v4905
        %v4907 = vpop.f32.mrb[0].mxu0
        %v4908 = vadd.f32 %v4323, %v4907
        %v4909 = vpop.f32.mrb[0].mxu0
        %v4910 = vadd.f32 %v4319, %v4909
        %v4911 = vpop.f32.mrb[0].mxu0
        %v4912 = vadd.f32 %v4323, %v4911
        %4913 = vmatprep.mubr.bf16.mxu0 %v4219
        %4914 = vmatmul.mubr.bf16.gmra.mrb[0].mxu0 %v4218
        %v4915 = vpop.f32.mrb[0].mxu0
        %v4916 = vadd.f32 %v4319, %v4915
        %v4917 = vpop.f32.mrb[0].mxu0
        %v4918 = vadd.f32 %v4323, %v4917
        %v4919 = vpop.f32.mrb[0].mxu0
        %v4920 = vadd.f32 %v4319, %v4919
        %v4921 = vpop.f32.mrb[0].mxu0
        %v4922 = vadd.f32 %v4323, %v4921
        %4923 = vmatprep.mubr.bf16.mxu0 %v4221
        %4924 = vmatmul.mubr.bf16.gmra.mrb[0].mxu0 %v4220
        %v4925 = vpop.f32.mrb[0].mxu0
        %v4926 = vadd.f32 %v4319, %v4925
        %v4927 = vpop.f32.mrb[0].mxu0
        %v4928 = vadd.f32 %v4323, %v4927
        %v4929 = vpop.f32.mrb[0].mxu0
        %v4930 = vadd.f32 %v4319, %v4929
        %v4931 = vpop.f32.mrb[0].mxu0
        %v4932 = vadd.f32 %v4323, %v4931
        %4933 = vmatprep.mubr.bf16.mxu0 %v4223
        %4934 = vmatmul.mubr.bf16.gmra.mrb[0].mxu0 %v4222
        %v4935 = vpop.f32.mrb[0].mxu0
        %v4936 = vadd.f32 %v4319, %v4935
        %v4937 = vpop.f32.mrb[0].mxu0
        %v4938 = vadd.f32 %v4323, %v4937
        %v4939 = vpop.f32.mrb[0].mxu0
        %v4940 = vadd.f32 %v4319, %v4939
        %v4941 = vpop.f32.mrb[0].mxu0
        %v4942 = vadd.f32 %v4323, %v4941
        %4943 = vmatprep.mubr.bf16.mxu0 %v4225
        %4944 = vmatmul.mubr.bf16.gmra.mrb[0].mxu0 %v4224
        %v4945 = vpop.f32.mrb[0].mxu0
        %v4946 = vadd.f32 %v4319, %v4945
        %v4947 = vpop.f32.mrb[0].mxu0
        %v4948 = vadd.f32 %v4323, %v4947
        %v4949 = vpop.f32.mrb[0].mxu0
        %v4950 = vadd.f32 %v4319, %v4949
        %v4951 = vpop.f32.mrb[0].mxu0
        %v4952 = vadd.f32 %v4323, %v4951
        %4953 = vmatprep.mubr.bf16.mxu0 %v4227
        %4954 = vmatmul.mubr.bf16.gmra.mrb[0].mxu0 %v4226
        %v4955 = vpop.f32.mrb[0].mxu0
        %v4956 = vadd.f32 %v4319, %v4955
        %v4957 = vpop.f32.mrb[0].mxu0
        %v4958 = vadd.f32 %v4323, %v4957
        %v4959 = vpop.f32.mrb[0].mxu0
        %v4960 = vadd.f32 %v4319, %v4959
        %v4961 = vpop.f32.mrb[0].mxu0
        %v4962 = vadd.f32 %v4323, %v4961
        %4963 = vmatprep.mubr.bf16.mxu0 %v4229
        %4964 = vmatmul.mubr.bf16.gmra.mrb[0].mxu0 %v4228
        %v4965 = vpop.f32.mrb[0].mxu0
        %v4966 = vadd.f32 %v4319, %v4965
        %v4967 = vpop.f32.mrb[0].mxu0
        %v4968 = vadd.f32 %v4323, %v4967
        %v4969 = vpop.f32.mrb[0].mxu0
        %v4970 = vadd.f32 %v4319, %v4969
        %v4971 = vpop.f32.mrb[0].mxu0
        %v4972 = vadd.f32 %v4323, %v4971
        %4973 = vmatprep.mubr.bf16.mxu0 %v4231
        %4974 = vmatmul.mubr.bf16.gmra.mrb[0].mxu0 %v4230
        %v4975 = vpop.f32.mrb[0].mxu0
        %v4976 = vadd.f32 %v4319, %v4975
        %v4977 = vpop.f32.mrb[0].mxu0
        %v4978 = vadd.f32 %v4323, %v4977
        %v4979 = vpop.f32.mrb[0].mxu0
        %v4980 = vadd.f32 %v4319, %v4979
        %v4981 = vpop.f32.mrb[0].mxu0
        %v4982 = vadd.f32 %v4323, %v4981
        %4983 = vmatprep.mubr.bf16.mxu0 %v4233
        %4984 = vmatmul.mubr.bf16.gmra.mrb[0].mxu0 %v4232
        %v4985 = vpop.f32.mrb[0].mxu0
        %v4986 = vadd.f32 %v4319, %v4985
        %v4987 = vpop.f32.mrb[0].mxu0
        %v4988 = vadd.f32 %v4323, %v4987
        %v4989 = vpop.f32.mrb[0].mxu0
        %v4990 = vadd.f32 %v4319, %v4989
        %v4991 = vpop.f32.mrb[0].mxu0
        %v4992 = vadd.f32 %v4323, %v4991
        %4993 = vmatprep.mubr.bf16.mxu0 %v4235
        %4994 = vmatmul.mubr.bf16.gmra.mrb[0].mxu0 %v4234
        %v4995 = vpop.f32.mrb[0].mxu0
        %v4996 = vadd.f32 %v4319, %v4995
        %v4997 = vpop.f32.mrb[0].mxu0
        %v4998 = vadd.f32 %v4323, %v4997
        %v4999 = vpop.f32.mrb[0].mxu0
        %v5000 = vadd.f32 %v4319, %v4999
        %v5001 = vpop.f32.mrb[0].mxu0
        %v5002 = vadd.f32 %v4323, %v5001
        %5003 = vmatprep.mubr.bf16.mxu0 %v4237
        %5004 = vmatmul.mubr.bf16.gmra.mrb[0].mxu0 %v4236
        %v5005 = vpop.f32.mrb[0].mxu0
        %v5006 = vadd.f32 %v4319, %v5005
        %v5007 = vpop.f32.mrb[0].mxu0
        %v5008 = vadd.f32 %v4323, %v5007
        %v5009 = vpop.f32.mrb[0].mxu0
        %v5010 = vadd.f32 %v4319, %v5009
        %v5011 = vpop.f32.mrb[0].mxu0
        %v5012 = vadd.f32 %v4323, %v5011
        %5013 = vmatprep.mubr.bf16.mxu0 %v4239
        %5014 = vmatmul.mubr.bf16.gmra.mrb[0].mxu0 %v4238
        %v5015 = vpop.f32.mrb[0].mxu0
        %v5016 = vadd.f32 %v4319, %v5015
        %v5017 = vpop.f32.mrb[0].mxu0
        %v5018 = vadd.f32 %v4323, %v5017
        %v5019 = vpop.f32.mrb[0].mxu0
        %v5020 = vadd.f32 %v4319, %v5019
        %v5021 = vpop.f32.mrb[0].mxu0
        %v5022 = vadd.f32 %v4323, %v5021
        %5023 = vmatprep.mubr.bf16.mxu0 %v4241
        %5024 = vmatmul.mubr.bf16.gmra.mrb[0].mxu0 %v4240
        %v5025 = vpop.f32.mrb[0].mxu0
        %v5026 = vadd.f32 %v4319, %v5025
        %v5027 = vpop.f32.mrb[0].mxu0
        %v5028 = vadd.f32 %v4323, %v5027
        %v5029 = vpop.f32.mrb[0].mxu0
        %v5030 = vadd.f32 %v4319, %v5029
        %v5031 = vpop.f32.mrb[0].mxu0
        %v5032 = vadd.f32 %v4323, %v5031
        %5033 = vdwg.mxu0
        %s5034 = scalar_lea.vmem [#allocation11], 1
        %v5035 = vld [vmem:[%s5034] ss:$8 sm:$0xf]
        %s5036 = scalar_lea.vmem [#allocation11], 2
        %v5037 = vld [vmem:[%s5036] ss:$8 sm:$0xf]
        %v5038 = vadd.f32 %v4683, %v4685
        %v5039 = vadd.f32 %v5038, %v4876
        %v5040 = vadd.f32 %v5039, %v4878
        %5041 = vadd.xlane.f32.xlu0 %v5040
        %v5042 = vpop.xlane.xlu0 %5041
        %v5043 = vadd.f32 %v4687, %v4689
        %v5044 = vadd.f32 %v5043, %v4880
        %v5045 = vadd.f32 %v5044, %v4882
        %5046 = vadd.xlane.f32.xlu0 %v5045
        %v5047 = vpop.xlane.xlu0 %5046
        %v5048 = vadd.f32 %v4693, %v4695
        %v5049 = vadd.f32 %v5048, %v4886
        %v5050 = vadd.f32 %v5049, %v4888
        %5051 = vadd.xlane.f32.xlu0 %v5050
        %v5052 = vpop.xlane.xlu0 %5051
        %v5053 = vadd.f32 %v4697, %v4699
        %v5054 = vadd.f32 %v5053, %v4890
        %v5055 = vadd.f32 %v5054, %v4892
        %5056 = vadd.xlane.f32.xlu0 %v5055
        %v5057 = vpop.xlane.xlu0 %5056
        %v5058 = vadd.f32 %v4703, %v4705
        %v5059 = vadd.f32 %v5058, %v4896
        %v5060 = vadd.f32 %v5059, %v4898
        %5061 = vadd.xlane.f32.xlu0 %v5060
        %v5062 = vpop.xlane.xlu0 %5061
        %v5063 = vadd.f32 %v4707, %v4709
        %v5064 = vadd.f32 %v5063, %v4900
        %v5065 = vadd.f32 %v5064, %v4902
        %5066 = vadd.xlane.f32.xlu0 %v5065
        %v5067 = vpop.xlane.xlu0 %5066
        %v5068 = vadd.f32 %v4713, %v4715
        %v5069 = vadd.f32 %v5068, %v4906
        %v5070 = vadd.f32 %v5069, %v4908
        %5071 = vadd.xlane.f32.xlu0 %v5070
        %v5072 = vpop.xlane.xlu0 %5071
        %v5073 = vadd.f32 %v4717, %v4719
        %v5074 = vadd.f32 %v5073, %v4910
        %v5075 = vadd.f32 %v5074, %v4912
        %5076 = vadd.xlane.f32.xlu0 %v5075
        %v5077 = vpop.xlane.xlu0 %5076
        %v5078 = vadd.f32 %v4723, %v4725
        %v5079 = vadd.f32 %v5078, %v4916
        %v5080 = vadd.f32 %v5079, %v4918
        %5081 = vadd.xlane.f32.xlu0 %v5080
        %v5082 = vpop.xlane.xlu0 %5081
        %v5083 = vadd.f32 %v4727, %v4729
        %v5084 = vadd.f32 %v5083, %v4920
        %v5085 = vadd.f32 %v5084, %v4922
        %5086 = vadd.xlane.f32.xlu0 %v5085
        %v5087 = vpop.xlane.xlu0 %5086
        %v5088 = vadd.f32 %v4733, %v4735
        %v5089 = vadd.f32 %v5088, %v4926
        %v5090 = vadd.f32 %v5089, %v4928
        %5091 = vadd.xlane.f32.xlu0 %v5090
        %v5092 = vpop.xlane.xlu0 %5091
        %v5093 = vadd.f32 %v4737, %v4739
        %v5094 = vadd.f32 %v5093, %v4930
        %v5095 = vadd.f32 %v5094, %v4932
        %5096 = vadd.xlane.f32.xlu0 %v5095
        %v5097 = vpop.xlane.xlu0 %5096
        %v5098 = vadd.f32 %v4743, %v4745
        %v5099 = vadd.f32 %v5098, %v4936
        %v5100 = vadd.f32 %v5099, %v4938
        %5101 = vadd.xlane.f32.xlu0 %v5100
        %v5102 = vpop.xlane.xlu0 %5101
        %v5103 = vadd.f32 %v4747, %v4749
        %v5104 = vadd.f32 %v5103, %v4940
        %v5105 = vadd.f32 %v5104, %v4942
        %5106 = vadd.xlane.f32.xlu0 %v5105
        %v5107 = vpop.xlane.xlu0 %5106
        %v5108 = vadd.f32 %v4753, %v4755
        %v5109 = vadd.f32 %v5108, %v4946
        %v5110 = vadd.f32 %v5109, %v4948
        %5111 = vadd.xlane.f32.xlu0 %v5110
        %v5112 = vpop.xlane.xlu0 %5111
        %v5113 = vadd.f32 %v4757, %v4759
        %v5114 = vadd.f32 %v5113, %v4950
        %v5115 = vadd.f32 %v5114, %v4952
        %5116 = vadd.xlane.f32.xlu0 %v5115
        %v5117 = vpop.xlane.xlu0 %5116
        %v5118 = vadd.f32 %v4763, %v4765
        %v5119 = vadd.f32 %v5118, %v4956
        %v5120 = vadd.f32 %v5119, %v4958
        %5121 = vadd.xlane.f32.xlu0 %v5120
        %v5122 = vpop.xlane.xlu0 %5121
        %v5123 = vadd.f32 %v4767, %v4769
        %v5124 = vadd.f32 %v5123, %v4960
        %v5125 = vadd.f32 %v5124, %v4962
        %5126 = vadd.xlane.f32.xlu0 %v5125
        %v5127 = vpop.xlane.xlu0 %5126
        %v5128 = vadd.f32 %v4773, %v4775
        %v5129 = vadd.f32 %v5128, %v4966
        %v5130 = vadd.f32 %v5129, %v4968
        %5131 = vadd.xlane.f32.xlu0 %v5130
        %v5132 = vpop.xlane.xlu0 %5131
        %v5133 = vadd.f32 %v4777, %v4779
        %v5134 = vadd.f32 %v5133, %v4970
        %v5135 = vadd.f32 %v5134, %v4972
        %5136 = vadd.xlane.f32.xlu0 %v5135
        %v5137 = vpop.xlane.xlu0 %5136
        %v5138 = vadd.f32 %v4783, %v4785
        %v5139 = vadd.f32 %v5138, %v4976
        %v5140 = vadd.f32 %v5139, %v4978
        %5141 = vadd.xlane.f32.xlu0 %v5140
        %v5142 = vpop.xlane.xlu0 %5141
        %v5143 = vadd.f32 %v4787, %v4789
        %v5144 = vadd.f32 %v5143, %v4980
        %v5145 = vadd.f32 %v5144, %v4982
        %5146 = vadd.xlane.f32.xlu0 %v5145
        %v5147 = vpop.xlane.xlu0 %5146
        %v5148 = vadd.f32 %v4793, %v4795
        %v5149 = vadd.f32 %v5148, %v4986
        %v5150 = vadd.f32 %v5149, %v4988
        %5151 = vadd.xlane.f32.xlu0 %v5150
        %v5152 = vpop.xlane.xlu0 %5151
        %v5153 = vadd.f32 %v4797, %v4799
        %v5154 = vadd.f32 %v5153, %v4990
        %v5155 = vadd.f32 %v5154, %v4992
        %5156 = vadd.xlane.f32.xlu0 %v5155
        %v5157 = vpop.xlane.xlu0 %5156
        %v5158 = vadd.f32 %v4803, %v4805
        %v5159 = vadd.f32 %v5158, %v4996
        %v5160 = vadd.f32 %v5159, %v4998
        %5161 = vadd.xlane.f32.xlu0 %v5160
        %v5162 = vpop.xlane.xlu0 %5161
        %v5163 = vadd.f32 %v4807, %v4809
        %v5164 = vadd.f32 %v5163, %v5000
        %v5165 = vadd.f32 %v5164, %v5002
        %5166 = vadd.xlane.f32.xlu0 %v5165
        %v5167 = vpop.xlane.xlu0 %5166
        %v5168 = vadd.f32 %v4813, %v4815
        %v5169 = vadd.f32 %v5168, %v5006
        %v5170 = vadd.f32 %v5169, %v5008
        %5171 = vadd.xlane.f32.xlu0 %v5170
        %v5172 = vpop.xlane.xlu0 %5171
        %v5173 = vadd.f32 %v4817, %v4819
        %v5174 = vadd.f32 %v5173, %v5010
        %v5175 = vadd.f32 %v5174, %v5012
        %5176 = vadd.xlane.f32.xlu0 %v5175
        %v5177 = vpop.xlane.xlu0 %5176
        %v5178 = vadd.f32 %v4823, %v4825
        %v5179 = vadd.f32 %v5178, %v5016
        %v5180 = vadd.f32 %v5179, %v5018
        %5181 = vadd.xlane.f32.xlu0 %v5180
        %v5182 = vpop.xlane.xlu0 %5181
        %v5183 = vadd.f32 %v4827, %v4829
        %v5184 = vadd.f32 %v5183, %v5020
        %v5185 = vadd.f32 %v5184, %v5022
        %5186 = vadd.xlane.f32.xlu0 %v5185
        %v5187 = vpop.xlane.xlu0 %5186
        %v5188 = vadd.f32 %v4833, %v4835
        %v5189 = vadd.f32 %v5188, %v5026
        %v5190 = vadd.f32 %v5189, %v5028
        %5191 = vadd.xlane.f32.xlu0 %v5190
        %v5192 = vpop.xlane.xlu0 %5191
        %v5193 = vadd.f32 %v4837, %v4839
        %v5194 = vadd.f32 %v5193, %v5030
        %v5195 = vadd.f32 %v5194, %v5032
        %5196 = vadd.xlane.f32.xlu0 %v5195
        %v5197 = vpop.xlane.xlu0 %5196
        %v5198 = vrcp.pop 512.0
        %v5199 = vmul.f32 %v5042, %v5198
        %v5200 = vmul.f32 %v5047, %v5198
        %v5201 = vmul.f32 %v5052, %v5198
        %v5202 = vmul.f32 %v5057, %v5198
        %v5203 = vmul.f32 %v5062, %v5198
        %v5204 = vmul.f32 %v5067, %v5198
        %v5205 = vmul.f32 %v5072, %v5198
        %v5206 = vmul.f32 %v5077, %v5198
        %v5207 = vmul.f32 %v5082, %v5198
        %v5208 = vmul.f32 %v5087, %v5198
        %v5209 = vmul.f32 %v5092, %v5198
        %v5210 = vmul.f32 %v5097, %v5198
        %v5211 = vmul.f32 %v5102, %v5198
        %v5212 = vmul.f32 %v5107, %v5198
        %v5213 = vmul.f32 %v5112, %v5198
        %v5214 = vmul.f32 %v5117, %v5198
        %v5215 = vmul.f32 %v5122, %v5198
        %v5216 = vmul.f32 %v5127, %v5198
        %v5217 = vmul.f32 %v5132, %v5198
        %v5218 = vmul.f32 %v5137, %v5198
        %v5219 = vmul.f32 %v5142, %v5198
        %v5220 = vmul.f32 %v5147, %v5198
        %v5221 = vmul.f32 %v5152, %v5198
        %v5222 = vmul.f32 %v5157, %v5198
        %v5223 = vmul.f32 %v5162, %v5198
        %v5224 = vmul.f32 %v5167, %v5198
        %v5225 = vmul.f32 %v5172, %v5198
        %v5226 = vmul.f32 %v5177, %v5198
        %v5227 = vmul.f32 %v5182, %v5198
        %v5228 = vmul.f32 %v5187, %v5198
        %v5229 = vmul.f32 %v5192, %v5198
        %v5230 = vmul.f32 %v5197, %v5198
        %v5231 = vsub.f32 %v4683, %v5199
        %v5232 = vsub.f32 %v4685, %v5199
        %v5233 = vsub.f32 %v4876, %v5199
        %v5234 = vsub.f32 %v4878, %v5199
        %v5235 = vsub.f32 %v4687, %v5200
        %v5236 = vsub.f32 %v4689, %v5200
        %v5237 = vsub.f32 %v4880, %v5200
        %v5238 = vsub.f32 %v4882, %v5200
        %v5239 = vsub.f32 %v4693, %v5201
        %v5240 = vsub.f32 %v4695, %v5201
        %v5241 = vsub.f32 %v4886, %v5201
        %v5242 = vsub.f32 %v4888, %v5201
        %v5243 = vsub.f32 %v4697, %v5202
        %v5244 = vsub.f32 %v4699, %v5202
        %v5245 = vsub.f32 %v4890, %v5202
        %v5246 = vsub.f32 %v4892, %v5202
        %v5247 = vsub.f32 %v4703, %v5203
        %v5248 = vsub.f32 %v4705, %v5203
        %v5249 = vsub.f32 %v4896, %v5203
        %v5250 = vsub.f32 %v4898, %v5203
        %v5251 = vsub.f32 %v4707, %v5204
        %v5252 = vsub.f32 %v4709, %v5204
        %v5253 = vsub.f32 %v4900, %v5204
        %v5254 = vsub.f32 %v4902, %v5204
        %v5255 = vsub.f32 %v4713, %v5205
        %v5256 = vsub.f32 %v4715, %v5205
        %v5257 = vsub.f32 %v4906, %v5205
        %v5258 = vsub.f32 %v4908, %v5205
        %v5259 = vsub.f32 %v4717, %v5206
        %v5260 = vsub.f32 %v4719, %v5206
        %v5261 = vsub.f32 %v4910, %v5206
        %v5262 = vsub.f32 %v4912, %v5206
        %v5263 = vsub.f32 %v4723, %v5207
        %v5264 = vsub.f32 %v4725, %v5207
        %v5265 = vsub.f32 %v4916, %v5207
        %v5266 = vsub.f32 %v4918, %v5207
        %v5267 = vsub.f32 %v4727, %v5208
        %v5268 = vsub.f32 %v4729, %v5208
        %v5269 = vsub.f32 %v4920, %v5208
        %v5270 = vsub.f32 %v4922, %v5208
        %v5271 = vsub.f32 %v4733, %v5209
        %v5272 = vsub.f32 %v4735, %v5209
        %v5273 = vsub.f32 %v4926, %v5209
        %v5274 = vsub.f32 %v4928, %v5209
        %v5275 = vsub.f32 %v4737, %v5210
        %v5276 = vsub.f32 %v4739, %v5210
        %v5277 = vsub.f32 %v4930, %v5210
        %v5278 = vsub.f32 %v4932, %v5210
        %v5279 = vsub.f32 %v4743, %v5211
        %v5280 = vsub.f32 %v4745, %v5211
        %v5281 = vsub.f32 %v4936, %v5211
        %v5282 = vsub.f32 %v4938, %v5211
        %v5283 = vsub.f32 %v4747, %v5212
        %v5284 = vsub.f32 %v4749, %v5212
        %v5285 = vsub.f32 %v4940, %v5212
        %v5286 = vsub.f32 %v4942, %v5212
        %v5287 = vsub.f32 %v4753, %v5213
        %v5288 = vsub.f32 %v4755, %v5213
        %v5289 = vsub.f32 %v4946, %v5213
        %v5290 = vsub.f32 %v4948, %v5213
        %v5291 = vsub.f32 %v4757, %v5214
        %v5292 = vsub.f32 %v4759, %v5214
        %v5293 = vsub.f32 %v4950, %v5214
        %v5294 = vsub.f32 %v4952, %v5214
        %v5295 = vsub.f32 %v4763, %v5215
        %v5296 = vsub.f32 %v4765, %v5215
        %v5297 = vsub.f32 %v4956, %v5215
        %v5298 = vsub.f32 %v4958, %v5215
        %v5299 = vsub.f32 %v4767, %v5216
        %v5300 = vsub.f32 %v4769, %v5216
        %v5301 = vsub.f32 %v4960, %v5216
        %v5302 = vsub.f32 %v4962, %v5216
        %v5303 = vsub.f32 %v4773, %v5217
        %v5304 = vsub.f32 %v4775, %v5217
        %v5305 = vsub.f32 %v4966, %v5217
        %v5306 = vsub.f32 %v4968, %v5217
        %v5307 = vsub.f32 %v4777, %v5218
        %v5308 = vsub.f32 %v4779, %v5218
        %v5309 = vsub.f32 %v4970, %v5218
        %v5310 = vsub.f32 %v4972, %v5218
        %v5311 = vsub.f32 %v4783, %v5219
        %v5312 = vsub.f32 %v4785, %v5219
        %v5313 = vsub.f32 %v4976, %v5219
        %v5314 = vsub.f32 %v4978, %v5219
        %v5315 = vsub.f32 %v4787, %v5220
        %v5316 = vsub.f32 %v4789, %v5220
        %v5317 = vsub.f32 %v4980, %v5220
        %v5318 = vsub.f32 %v4982, %v5220
        %v5319 = vsub.f32 %v4793, %v5221
        %v5320 = vsub.f32 %v4795, %v5221
        %v5321 = vsub.f32 %v4986, %v5221
        %v5322 = vsub.f32 %v4988, %v5221
        %v5323 = vsub.f32 %v4797, %v5222
        %v5324 = vsub.f32 %v4799, %v5222
        %v5325 = vsub.f32 %v4990, %v5222
        %v5326 = vsub.f32 %v4992, %v5222
        %v5327 = vsub.f32 %v4803, %v5223
        %v5328 = vsub.f32 %v4805, %v5223
        %v5329 = vsub.f32 %v4996, %v5223
        %v5330 = vsub.f32 %v4998, %v5223
        %v5331 = vsub.f32 %v4807, %v5224
        %v5332 = vsub.f32 %v4809, %v5224
        %v5333 = vsub.f32 %v5000, %v5224
        %v5334 = vsub.f32 %v5002, %v5224
        %v5335 = vsub.f32 %v4813, %v5225
        %v5336 = vsub.f32 %v4815, %v5225
        %v5337 = vsub.f32 %v5006, %v5225
        %v5338 = vsub.f32 %v5008, %v5225
        %v5339 = vsub.f32 %v4817, %v5226
        %v5340 = vsub.f32 %v4819, %v5226
        %v5341 = vsub.f32 %v5010, %v5226
        %v5342 = vsub.f32 %v5012, %v5226
        %v5343 = vsub.f32 %v4823, %v5227
        %v5344 = vsub.f32 %v4825, %v5227
        %v5345 = vsub.f32 %v5016, %v5227
        %v5346 = vsub.f32 %v5018, %v5227
        %v5347 = vsub.f32 %v4827, %v5228
        %v5348 = vsub.f32 %v4829, %v5228
        %v5349 = vsub.f32 %v5020, %v5228
        %v5350 = vsub.f32 %v5022, %v5228
        %v5351 = vsub.f32 %v4833, %v5229
        %v5352 = vsub.f32 %v4835, %v5229
        %v5353 = vsub.f32 %v5026, %v5229
        %v5354 = vsub.f32 %v5028, %v5229
        %v5355 = vsub.f32 %v4837, %v5230
        %v5356 = vsub.f32 %v4839, %v5230
        %v5357 = vsub.f32 %v5030, %v5230
        %v5358 = vsub.f32 %v5032, %v5230
        %v5359 = vmul.f32 %v5231, %v5231
        %v5360 = vmul.f32 %v5232, %v5232
        %v5361 = vmul.f32 %v5233, %v5233
        %v5362 = vmul.f32 %v5234, %v5234
        %v5363 = vmul.f32 %v5235, %v5235
        %v5364 = vmul.f32 %v5236, %v5236
        %v5365 = vmul.f32 %v5237, %v5237
        %v5366 = vmul.f32 %v5238, %v5238
        %v5367 = vmul.f32 %v5239, %v5239
        %v5368 = vmul.f32 %v5240, %v5240
        %v5369 = vmul.f32 %v5241, %v5241
        %v5370 = vmul.f32 %v5242, %v5242
        %v5371 = vmul.f32 %v5243, %v5243
        %v5372 = vmul.f32 %v5244, %v5244
        %v5373 = vmul.f32 %v5245, %v5245
        %v5374 = vmul.f32 %v5246, %v5246
        %v5375 = vmul.f32 %v5247, %v5247
        %v5376 = vmul.f32 %v5248, %v5248
        %v5377 = vmul.f32 %v5249, %v5249
        %v5378 = vmul.f32 %v5250, %v5250
        %v5379 = vmul.f32 %v5251, %v5251
        %v5380 = vmul.f32 %v5252, %v5252
        %v5381 = vmul.f32 %v5253, %v5253
        %v5382 = vmul.f32 %v5254, %v5254
        %v5383 = vmul.f32 %v5255, %v5255
        %v5384 = vmul.f32 %v5256, %v5256
        %v5385 = vmul.f32 %v5257, %v5257
        %v5386 = vmul.f32 %v5258, %v5258
        %v5387 = vmul.f32 %v5259, %v5259
        %v5388 = vmul.f32 %v5260, %v5260
        %v5389 = vmul.f32 %v5261, %v5261
        %v5390 = vmul.f32 %v5262, %v5262
        %v5391 = vmul.f32 %v5263, %v5263
        %v5392 = vmul.f32 %v5264, %v5264
        %v5393 = vmul.f32 %v5265, %v5265
        %v5394 = vmul.f32 %v5266, %v5266
        %v5395 = vmul.f32 %v5267, %v5267
        %v5396 = vmul.f32 %v5268, %v5268
        %v5397 = vmul.f32 %v5269, %v5269
        %v5398 = vmul.f32 %v5270, %v5270
        %v5399 = vmul.f32 %v5271, %v5271
        %v5400 = vmul.f32 %v5272, %v5272
        %v5401 = vmul.f32 %v5273, %v5273
        %v5402 = vmul.f32 %v5274, %v5274
        %v5403 = vmul.f32 %v5275, %v5275
        %v5404 = vmul.f32 %v5276, %v5276
        %v5405 = vmul.f32 %v5277, %v5277
        %v5406 = vmul.f32 %v5278, %v5278
        %v5407 = vmul.f32 %v5279, %v5279
        %v5408 = vmul.f32 %v5280, %v5280
        %v5409 = vmul.f32 %v5281, %v5281
        %v5410 = vmul.f32 %v5282, %v5282
        %v5411 = vmul.f32 %v5283, %v5283
        %v5412 = vmul.f32 %v5284, %v5284
        %v5413 = vmul.f32 %v5285, %v5285
        %v5414 = vmul.f32 %v5286, %v5286
        %v5415 = vmul.f32 %v5287, %v5287
        %v5416 = vmul.f32 %v5288, %v5288
        %v5417 = vmul.f32 %v5289, %v5289
        %v5418 = vmul.f32 %v5290, %v5290
        %v5419 = vmul.f32 %v5291, %v5291
        %v5420 = vmul.f32 %v5292, %v5292
        %v5421 = vmul.f32 %v5293, %v5293
        %v5422 = vmul.f32 %v5294, %v5294
        %v5423 = vmul.f32 %v5295, %v5295
        %v5424 = vmul.f32 %v5296, %v5296
        %v5425 = vmul.f32 %v5297, %v5297
        %v5426 = vmul.f32 %v5298, %v5298
        %v5427 = vmul.f32 %v5299, %v5299
        %v5428 = vmul.f32 %v5300, %v5300
        %v5429 = vmul.f32 %v5301, %v5301
        %v5430 = vmul.f32 %v5302, %v5302
        %v5431 = vmul.f32 %v5303, %v5303
        %v5432 = vmul.f32 %v5304, %v5304
        %v5433 = vmul.f32 %v5305, %v5305
        %v5434 = vmul.f32 %v5306, %v5306
        %v5435 = vmul.f32 %v5307, %v5307
        %v5436 = vmul.f32 %v5308, %v5308
        %v5437 = vmul.f32 %v5309, %v5309
        %v5438 = vmul.f32 %v5310, %v5310
        %v5439 = vmul.f32 %v5311, %v5311
        %v5440 = vmul.f32 %v5312, %v5312
        %v5441 = vmul.f32 %v5313, %v5313
        %v5442 = vmul.f32 %v5314, %v5314
        %v5443 = vmul.f32 %v5315, %v5315
        %v5444 = vmul.f32 %v5316, %v5316
        %v5445 = vmul.f32 %v5317, %v5317
        %v5446 = vmul.f32 %v5318, %v5318
        %v5447 = vmul.f32 %v5319, %v5319
        %v5448 = vmul.f32 %v5320, %v5320
        %v5449 = vmul.f32 %v5321, %v5321
        %v5450 = vmul.f32 %v5322, %v5322
        %v5451 = vmul.f32 %v5323, %v5323
        %v5452 = vmul.f32 %v5324, %v5324
        %v5453 = vmul.f32 %v5325, %v5325
        %v5454 = vmul.f32 %v5326, %v5326
        %v5455 = vmul.f32 %v5327, %v5327
        %v5456 = vmul.f32 %v5328, %v5328
        %v5457 = vmul.f32 %v5329, %v5329
        %v5458 = vmul.f32 %v5330, %v5330
        %v5459 = vmul.f32 %v5331, %v5331
        %v5460 = vmul.f32 %v5332, %v5332
        %v5461 = vmul.f32 %v5333, %v5333
        %v5462 = vmul.f32 %v5334, %v5334
        %v5463 = vmul.f32 %v5335, %v5335
        %v5464 = vmul.f32 %v5336, %v5336
        %v5465 = vmul.f32 %v5337, %v5337
        %v5466 = vmul.f32 %v5338, %v5338
        %v5467 = vmul.f32 %v5339, %v5339
        %v5468 = vmul.f32 %v5340, %v5340
        %v5469 = vmul.f32 %v5341, %v5341
        %v5470 = vmul.f32 %v5342, %v5342
        %v5471 = vmul.f32 %v5343, %v5343
        %v5472 = vmul.f32 %v5344, %v5344
        %v5473 = vmul.f32 %v5345, %v5345
        %v5474 = vmul.f32 %v5346, %v5346
        %v5475 = vmul.f32 %v5347, %v5347
        %v5476 = vmul.f32 %v5348, %v5348
        %v5477 = vmul.f32 %v5349, %v5349
        %v5478 = vmul.f32 %v5350, %v5350
        %v5479 = vmul.f32 %v5351, %v5351
        %v5480 = vmul.f32 %v5352, %v5352
        %v5481 = vmul.f32 %v5353, %v5353
        %v5482 = vmul.f32 %v5354, %v5354
        %v5483 = vmul.f32 %v5355, %v5355
        %v5484 = vmul.f32 %v5356, %v5356
        %v5485 = vmul.f32 %v5357, %v5357
        %v5486 = vmul.f32 %v5358, %v5358
        %v5487 = vadd.f32 %v5359, %v5360
        %v5488 = vadd.f32 %v5487, %v5361
        %v5489 = vadd.f32 %v5488, %v5362
        %5490 = vadd.xlane.f32.xlu0 %v5489
        %v5491 = vpop.xlane.xlu0 %5490
        %v5492 = vadd.f32 %v5363, %v5364
        %v5493 = vadd.f32 %v5492, %v5365
        %v5494 = vadd.f32 %v5493, %v5366
        %5495 = vadd.xlane.f32.xlu0 %v5494
        %v5496 = vpop.xlane.xlu0 %5495
        %v5497 = vadd.f32 %v5367, %v5368
        %v5498 = vadd.f32 %v5497, %v5369
        %v5499 = vadd.f32 %v5498, %v5370
        %5500 = vadd.xlane.f32.xlu0 %v5499
        %v5501 = vpop.xlane.xlu0 %5500
        %v5502 = vadd.f32 %v5371, %v5372
        %v5503 = vadd.f32 %v5502, %v5373
        %v5504 = vadd.f32 %v5503, %v5374
        %5505 = vadd.xlane.f32.xlu0 %v5504
        %v5506 = vpop.xlane.xlu0 %5505
        %v5507 = vadd.f32 %v5375, %v5376
        %v5508 = vadd.f32 %v5507, %v5377
        %v5509 = vadd.f32 %v5508, %v5378
        %5510 = vadd.xlane.f32.xlu0 %v5509
        %v5511 = vpop.xlane.xlu0 %5510
        %v5512 = vadd.f32 %v5379, %v5380
        %v5513 = vadd.f32 %v5512, %v5381
        %v5514 = vadd.f32 %v5513, %v5382
        %5515 = vadd.xlane.f32.xlu0 %v5514
        %v5516 = vpop.xlane.xlu0 %5515
        %v5517 = vadd.f32 %v5383, %v5384
        %v5518 = vadd.f32 %v5517, %v5385
        %v5519 = vadd.f32 %v5518, %v5386
        %5520 = vadd.xlane.f32.xlu0 %v5519
        %v5521 = vpop.xlane.xlu0 %5520
        %v5522 = vadd.f32 %v5387, %v5388
        %v5523 = vadd.f32 %v5522, %v5389
        %v5524 = vadd.f32 %v5523, %v5390
        %5525 = vadd.xlane.f32.xlu0 %v5524
        %v5526 = vpop.xlane.xlu0 %5525
        %v5527 = vadd.f32 %v5391, %v5392
        %v5528 = vadd.f32 %v5527, %v5393
        %v5529 = vadd.f32 %v5528, %v5394
        %5530 = vadd.xlane.f32.xlu0 %v5529
        %v5531 = vpop.xlane.xlu0 %5530
        %v5532 = vadd.f32 %v5395, %v5396
        %v5533 = vadd.f32 %v5532, %v5397
        %v5534 = vadd.f32 %v5533, %v5398
        %5535 = vadd.xlane.f32.xlu0 %v5534
        %v5536 = vpop.xlane.xlu0 %5535
        %v5537 = vadd.f32 %v5399, %v5400
        %v5538 = vadd.f32 %v5537, %v5401
        %v5539 = vadd.f32 %v5538, %v5402
        %5540 = vadd.xlane.f32.xlu0 %v5539
        %v5541 = vpop.xlane.xlu0 %5540
        %v5542 = vadd.f32 %v5403, %v5404
        %v5543 = vadd.f32 %v5542, %v5405
        %v5544 = vadd.f32 %v5543, %v5406
        %5545 = vadd.xlane.f32.xlu0 %v5544
        %v5546 = vpop.xlane.xlu0 %5545
        %v5547 = vadd.f32 %v5407, %v5408
        %v5548 = vadd.f32 %v5547, %v5409
        %v5549 = vadd.f32 %v5548, %v5410
        %5550 = vadd.xlane.f32.xlu0 %v5549
        %v5551 = vpop.xlane.xlu0 %5550
        %v5552 = vadd.f32 %v5411, %v5412
        %v5553 = vadd.f32 %v5552, %v5413
        %v5554 = vadd.f32 %v5553, %v5414
        %5555 = vadd.xlane.f32.xlu0 %v5554
        %v5556 = vpop.xlane.xlu0 %5555
        %v5557 = vadd.f32 %v5415, %v5416
        %v5558 = vadd.f32 %v5557, %v5417
        %v5559 = vadd.f32 %v5558, %v5418
        %5560 = vadd.xlane.f32.xlu0 %v5559
        %v5561 = vpop.xlane.xlu0 %5560
        %v5562 = vadd.f32 %v5419, %v5420
        %v5563 = vadd.f32 %v5562, %v5421
        %v5564 = vadd.f32 %v5563, %v5422
        %5565 = vadd.xlane.f32.xlu0 %v5564
        %v5566 = vpop.xlane.xlu0 %5565
        %v5567 = vadd.f32 %v5423, %v5424
        %v5568 = vadd.f32 %v5567, %v5425
        %v5569 = vadd.f32 %v5568, %v5426
        %5570 = vadd.xlane.f32.xlu0 %v5569
        %v5571 = vpop.xlane.xlu0 %5570
        %v5572 = vadd.f32 %v5427, %v5428
        %v5573 = vadd.f32 %v5572, %v5429
        %v5574 = vadd.f32 %v5573, %v5430
        %5575 = vadd.xlane.f32.xlu0 %v5574
        %v5576 = vpop.xlane.xlu0 %5575
        %v5577 = vadd.f32 %v5431, %v5432
        %v5578 = vadd.f32 %v5577, %v5433
        %v5579 = vadd.f32 %v5578, %v5434
        %5580 = vadd.xlane.f32.xlu0 %v5579
        %v5581 = vpop.xlane.xlu0 %5580
        %v5582 = vadd.f32 %v5435, %v5436
        %v5583 = vadd.f32 %v5582, %v5437
        %v5584 = vadd.f32 %v5583, %v5438
        %5585 = vadd.xlane.f32.xlu0 %v5584
        %v5586 = vpop.xlane.xlu0 %5585
        %v5587 = vadd.f32 %v5439, %v5440
        %v5588 = vadd.f32 %v5587, %v5441
        %v5589 = vadd.f32 %v5588, %v5442
        %5590 = vadd.xlane.f32.xlu0 %v5589
        %v5591 = vpop.xlane.xlu0 %5590
        %v5592 = vadd.f32 %v5443, %v5444
        %v5593 = vadd.f32 %v5592, %v5445
        %v5594 = vadd.f32 %v5593, %v5446
        %5595 = vadd.xlane.f32.xlu0 %v5594
        %v5596 = vpop.xlane.xlu0 %5595
        %v5597 = vadd.f32 %v5447, %v5448
        %v5598 = vadd.f32 %v5597, %v5449
        %v5599 = vadd.f32 %v5598, %v5450
        %5600 = vadd.xlane.f32.xlu0 %v5599
        %v5601 = vpop.xlane.xlu0 %5600
        %v5602 = vadd.f32 %v5451, %v5452
        %v5603 = vadd.f32 %v5602, %v5453
        %v5604 = vadd.f32 %v5603, %v5454
        %5605 = vadd.xlane.f32.xlu0 %v5604
        %v5606 = vpop.xlane.xlu0 %5605
        %v5607 = vadd.f32 %v5455, %v5456
        %v5608 = vadd.f32 %v5607, %v5457
        %v5609 = vadd.f32 %v5608, %v5458
        %5610 = vadd.xlane.f32.xlu0 %v5609
        %v5611 = vpop.xlane.xlu0 %5610
        %v5612 = vadd.f32 %v5459, %v5460
        %v5613 = vadd.f32 %v5612, %v5461
        %v5614 = vadd.f32 %v5613, %v5462
        %5615 = vadd.xlane.f32.xlu0 %v5614
        %v5616 = vpop.xlane.xlu0 %5615
        %v5617 = vadd.f32 %v5463, %v5464
        %v5618 = vadd.f32 %v5617, %v5465
        %v5619 = vadd.f32 %v5618, %v5466
        %5620 = vadd.xlane.f32.xlu0 %v5619
        %v5621 = vpop.xlane.xlu0 %5620
        %v5622 = vadd.f32 %v5467, %v5468
        %v5623 = vadd.f32 %v5622, %v5469
        %v5624 = vadd.f32 %v5623, %v5470
        %5625 = vadd.xlane.f32.xlu0 %v5624
        %v5626 = vpop.xlane.xlu0 %5625
        %v5627 = vadd.f32 %v5471, %v5472
        %v5628 = vadd.f32 %v5627, %v5473
        %v5629 = vadd.f32 %v5628, %v5474
        %5630 = vadd.xlane.f32.xlu0 %v5629
        %v5631 = vpop.xlane.xlu0 %5630
        %v5632 = vadd.f32 %v5475, %v5476
        %v5633 = vadd.f32 %v5632, %v5477
        %v5634 = vadd.f32 %v5633, %v5478
        %5635 = vadd.xlane.f32.xlu0 %v5634
        %v5636 = vpop.xlane.xlu0 %5635
        %v5637 = vadd.f32 %v5479, %v5480
        %v5638 = vadd.f32 %v5637, %v5481
        %v5639 = vadd.f32 %v5638, %v5482
        %5640 = vadd.xlane.f32.xlu0 %v5639
        %v5641 = vpop.xlane.xlu0 %5640
        %v5642 = vadd.f32 %v5483, %v5484
        %v5643 = vadd.f32 %v5642, %v5485
        %v5644 = vadd.f32 %v5643, %v5486
        %5645 = vadd.xlane.f32.xlu0 %v5644
        %v5646 = vpop.xlane.xlu0 %5645
        %v5647 = vmul.f32 %v5491, %v5198
        %v5648 = vmul.f32 %v5496, %v5198
        %v5649 = vmul.f32 %v5501, %v5198
        %v5650 = vmul.f32 %v5506, %v5198
        %v5651 = vmul.f32 %v5511, %v5198
        %v5652 = vmul.f32 %v5516, %v5198
        %v5653 = vmul.f32 %v5521, %v5198
        %v5654 = vmul.f32 %v5526, %v5198
        %v5655 = vmul.f32 %v5531, %v5198
        %v5656 = vmul.f32 %v5536, %v5198
        %v5657 = vmul.f32 %v5541, %v5198
        %v5658 = vmul.f32 %v5546, %v5198
        %v5659 = vmul.f32 %v5551, %v5198
        %v5660 = vmul.f32 %v5556, %v5198
        %v5661 = vmul.f32 %v5561, %v5198
        %v5662 = vmul.f32 %v5566, %v5198
        %v5663 = vmul.f32 %v5571, %v5198
        %v5664 = vmul.f32 %v5576, %v5198
        %v5665 = vmul.f32 %v5581, %v5198
        %v5666 = vmul.f32 %v5586, %v5198
        %v5667 = vmul.f32 %v5591, %v5198
        %v5668 = vmul.f32 %v5596, %v5198
        %v5669 = vmul.f32 %v5601, %v5198
        %v5670 = vmul.f32 %v5606, %v5198
        %v5671 = vmul.f32 %v5611, %v5198
        %v5672 = vmul.f32 %v5616, %v5198
        %v5673 = vmul.f32 %v5621, %v5198
        %v5674 = vmul.f32 %v5626, %v5198
        %v5675 = vmul.f32 %v5631, %v5198
        %v5676 = vmul.f32 %v5636, %v5198
        %v5677 = vmul.f32 %v5641, %v5198
        %v5678 = vmul.f32 %v5646, %v5198
        %v5679 = vadd.f32 %v5647, 1e-05
        %v5680 = vadd.f32 %v5648, 1e-05
        %v5681 = vadd.f32 %v5649, 1e-05
        %v5682 = vadd.f32 %v5650, 1e-05
        %v5683 = vadd.f32 %v5651, 1e-05
        %v5684 = vadd.f32 %v5652, 1e-05
        %v5685 = vadd.f32 %v5653, 1e-05
        %v5686 = vadd.f32 %v5654, 1e-05
        %v5687 = vadd.f32 %v5655, 1e-05
        %v5688 = vadd.f32 %v5656, 1e-05
        %v5689 = vadd.f32 %v5657, 1e-05
        %v5690 = vadd.f32 %v5658, 1e-05
        %v5691 = vadd.f32 %v5659, 1e-05
        %v5692 = vadd.f32 %v5660, 1e-05
        %v5693 = vadd.f32 %v5661, 1e-05
        %v5694 = vadd.f32 %v5662, 1e-05
        %v5695 = vadd.f32 %v5663, 1e-05
        %v5696 = vadd.f32 %v5664, 1e-05
        %v5697 = vadd.f32 %v5665, 1e-05
        %v5698 = vadd.f32 %v5666, 1e-05
        %v5699 = vadd.f32 %v5667, 1e-05
        %v5700 = vadd.f32 %v5668, 1e-05
        %v5701 = vadd.f32 %v5669, 1e-05
        %v5702 = vadd.f32 %v5670, 1e-05
        %v5703 = vadd.f32 %v5671, 1e-05
        %v5704 = vadd.f32 %v5672, 1e-05
        %v5705 = vadd.f32 %v5673, 1e-05
        %v5706 = vadd.f32 %v5674, 1e-05
        %v5707 = vadd.f32 %v5675, 1e-05
        %v5708 = vadd.f32 %v5676, 1e-05
        %v5709 = vadd.f32 %v5677, 1e-05
        %v5710 = vadd.f32 %v5678, 1e-05
        %v5711 = vrsqrt.pop %v5679
        %v5712 = vrsqrt.pop %v5680
        %v5713 = vrsqrt.pop %v5681
        %v5714 = vrsqrt.pop %v5682
        %v5715 = vrsqrt.pop %v5683
        %v5716 = vrsqrt.pop %v5684
        %v5717 = vrsqrt.pop %v5685
        %v5718 = vrsqrt.pop %v5686
        %v5719 = vrsqrt.pop %v5687
        %v5720 = vrsqrt.pop %v5688
        %v5721 = vrsqrt.pop %v5689
        %v5722 = vrsqrt.pop %v5690
        %v5723 = vrsqrt.pop %v5691
        %v5724 = vrsqrt.pop %v5692
        %v5725 = vrsqrt.pop %v5693
        %v5726 = vrsqrt.pop %v5694
        %v5727 = vrsqrt.pop %v5695
        %v5728 = vrsqrt.pop %v5696
        %v5729 = vrsqrt.pop %v5697
        %v5730 = vrsqrt.pop %v5698
        %v5731 = vrsqrt.pop %v5699
        %v5732 = vrsqrt.pop %v5700
        %v5733 = vrsqrt.pop %v5701
        %v5734 = vrsqrt.pop %v5702
        %v5735 = vrsqrt.pop %v5703
        %v5736 = vrsqrt.pop %v5704
        %v5737 = vrsqrt.pop %v5705
        %v5738 = vrsqrt.pop %v5706
        %v5739 = vrsqrt.pop %v5707
        %v5740 = vrsqrt.pop %v5708
        %v5741 = vrsqrt.pop %v5709
        %v5742 = vrsqrt.pop %v5710
        %v5744 = vlaneseq
        %v5745 = vshrl.u32 %v5744, 7
        %v5746 = vsub.s32 0, %v5745
        %v5747 = vrot.slane %v5035, %v5746
        %v5748 = vlaneseq
        %v5749 = vshrl.u32 %v5748, 7
        %v5750 = vsub.s32 1, %v5749
        %v5751 = vrot.slane %v5035, %v5750
        %v5752 = vlaneseq
        %v5753 = vshrl.u32 %v5752, 7
        %v5754 = vsub.s32 2, %v5753
        %v5755 = vrot.slane %v5035, %v5754
        %v5756 = vlaneseq
        %v5757 = vshrl.u32 %v5756, 7
        %v5758 = vsub.s32 3, %v5757
        %v5759 = vrot.slane %v5035, %v5758
        %v5764 = vmul.f32 %v5711, %v5747
        %v5765 = vmul.f32 %v5711, %v5751
        %v5766 = vmul.f32 %v5711, %v5755
        %v5767 = vmul.f32 %v5711, %v5759
        %v5768 = vmul.f32 %v5712, %v5747
        %v5769 = vmul.f32 %v5712, %v5751
        %v5770 = vmul.f32 %v5712, %v5755
        %v5771 = vmul.f32 %v5712, %v5759
        %v5772 = vmul.f32 %v5713, %v5747
        %v5773 = vmul.f32 %v5713, %v5751
        %v5774 = vmul.f32 %v5713, %v5755
        %v5775 = vmul.f32 %v5713, %v5759
        %v5776 = vmul.f32 %v5714, %v5747
        %v5777 = vmul.f32 %v5714, %v5751
        %v5778 = vmul.f32 %v5714, %v5755
        %v5779 = vmul.f32 %v5714, %v5759
        %v5780 = vmul.f32 %v5715, %v5747
        %v5781 = vmul.f32 %v5715, %v5751
        %v5782 = vmul.f32 %v5715, %v5755
        %v5783 = vmul.f32 %v5715, %v5759
        %v5784 = vmul.f32 %v5716, %v5747
        %v5785 = vmul.f32 %v5716, %v5751
        %v5786 = vmul.f32 %v5716, %v5755
        %v5787 = vmul.f32 %v5716, %v5759
        %v5788 = vmul.f32 %v5717, %v5747
        %v5789 = vmul.f32 %v5717, %v5751
        %v5790 = vmul.f32 %v5717, %v5755
        %v5791 = vmul.f32 %v5717, %v5759
        %v5792 = vmul.f32 %v5718, %v5747
        %v5793 = vmul.f32 %v5718, %v5751
        %v5794 = vmul.f32 %v5718, %v5755
        %v5795 = vmul.f32 %v5718, %v5759
        %v5796 = vmul.f32 %v5719, %v5747
        %v5797 = vmul.f32 %v5719, %v5751
        %v5798 = vmul.f32 %v5719, %v5755
        %v5799 = vmul.f32 %v5719, %v5759
        %v5800 = vmul.f32 %v5720, %v5747
        %v5801 = vmul.f32 %v5720, %v5751
        %v5802 = vmul.f32 %v5720, %v5755
        %v5803 = vmul.f32 %v5720, %v5759
        %v5804 = vmul.f32 %v5721, %v5747
        %v5805 = vmul.f32 %v5721, %v5751
        %v5806 = vmul.f32 %v5721, %v5755
        %v5807 = vmul.f32 %v5721, %v5759
        %v5808 = vmul.f32 %v5722, %v5747
        %v5809 = vmul.f32 %v5722, %v5751
        %v5810 = vmul.f32 %v5722, %v5755
        %v5811 = vmul.f32 %v5722, %v5759
        %v5812 = vmul.f32 %v5723, %v5747
        %v5813 = vmul.f32 %v5723, %v5751
        %v5814 = vmul.f32 %v5723, %v5755
        %v5815 = vmul.f32 %v5723, %v5759
        %v5816 = vmul.f32 %v5724, %v5747
        %v5817 = vmul.f32 %v5724, %v5751
        %v5818 = vmul.f32 %v5724, %v5755
        %v5819 = vmul.f32 %v5724, %v5759
        %v5820 = vmul.f32 %v5725, %v5747
        %v5821 = vmul.f32 %v5725, %v5751
        %v5822 = vmul.f32 %v5725, %v5755
        %v5823 = vmul.f32 %v5725, %v5759
        %v5824 = vmul.f32 %v5726, %v5747
        %v5825 = vmul.f32 %v5726, %v5751
        %v5826 = vmul.f32 %v5726, %v5755
        %v5827 = vmul.f32 %v5726, %v5759
        %v5828 = vmul.f32 %v5727, %v5747
        %v5829 = vmul.f32 %v5727, %v5751
        %v5830 = vmul.f32 %v5727, %v5755
        %v5831 = vmul.f32 %v5727, %v5759
        %v5832 = vmul.f32 %v5728, %v5747
        %v5833 = vmul.f32 %v5728, %v5751
        %v5834 = vmul.f32 %v5728, %v5755
        %v5835 = vmul.f32 %v5728, %v5759
        %v5836 = vmul.f32 %v5729, %v5747
        %v5837 = vmul.f32 %v5729, %v5751
        %v5838 = vmul.f32 %v5729, %v5755
        %v5839 = vmul.f32 %v5729, %v5759
        %v5840 = vmul.f32 %v5730, %v5747
        %v5841 = vmul.f32 %v5730, %v5751
        %v5842 = vmul.f32 %v5730, %v5755
        %v5843 = vmul.f32 %v5730, %v5759
        %v5844 = vmul.f32 %v5731, %v5747
        %v5845 = vmul.f32 %v5731, %v5751
        %v5846 = vmul.f32 %v5731, %v5755
        %v5847 = vmul.f32 %v5731, %v5759
        %v5848 = vmul.f32 %v5732, %v5747
        %v5849 = vmul.f32 %v5732, %v5751
        %v5850 = vmul.f32 %v5732, %v5755
        %v5851 = vmul.f32 %v5732, %v5759
        %v5852 = vmul.f32 %v5733, %v5747
        %v5853 = vmul.f32 %v5733, %v5751
        %v5854 = vmul.f32 %v5733, %v5755
        %v5855 = vmul.f32 %v5733, %v5759
        %v5856 = vmul.f32 %v5734, %v5747
        %v5857 = vmul.f32 %v5734, %v5751
        %v5858 = vmul.f32 %v5734, %v5755
        %v5859 = vmul.f32 %v5734, %v5759
        %v5860 = vmul.f32 %v5735, %v5747
        %v5861 = vmul.f32 %v5735, %v5751
        %v5862 = vmul.f32 %v5735, %v5755
        %v5863 = vmul.f32 %v5735, %v5759
        %v5864 = vmul.f32 %v5736, %v5747
        %v5865 = vmul.f32 %v5736, %v5751
        %v5866 = vmul.f32 %v5736, %v5755
        %v5867 = vmul.f32 %v5736, %v5759
        %v5868 = vmul.f32 %v5737, %v5747
        %v5869 = vmul.f32 %v5737, %v5751
        %v5870 = vmul.f32 %v5737, %v5755
        %v5871 = vmul.f32 %v5737, %v5759
        %v5872 = vmul.f32 %v5738, %v5747
        %v5873 = vmul.f32 %v5738, %v5751
        %v5874 = vmul.f32 %v5738, %v5755
        %v5875 = vmul.f32 %v5738, %v5759
        %v5876 = vmul.f32 %v5739, %v5747
        %v5877 = vmul.f32 %v5739, %v5751
        %v5878 = vmul.f32 %v5739, %v5755
        %v5879 = vmul.f32 %v5739, %v5759
        %v5880 = vmul.f32 %v5740, %v5747
        %v5881 = vmul.f32 %v5740, %v5751
        %v5882 = vmul.f32 %v5740, %v5755
        %v5883 = vmul.f32 %v5740, %v5759
        %v5884 = vmul.f32 %v5741, %v5747
        %v5885 = vmul.f32 %v5741, %v5751
        %v5886 = vmul.f32 %v5741, %v5755
        %v5887 = vmul.f32 %v5741, %v5759
        %v5888 = vmul.f32 %v5742, %v5747
        %v5889 = vmul.f32 %v5742, %v5751
        %v5890 = vmul.f32 %v5742, %v5755
        %v5891 = vmul.f32 %v5742, %v5759
        %v5892 = vmul.f32 %v5231, %v5764
        %v5893 = vmul.f32 %v5232, %v5765
        %v5894 = vmul.f32 %v5233, %v5766
        %v5895 = vmul.f32 %v5234, %v5767
        %v5896 = vmul.f32 %v5235, %v5768
        %v5897 = vmul.f32 %v5236, %v5769
        %v5898 = vmul.f32 %v5237, %v5770
        %v5899 = vmul.f32 %v5238, %v5771
        %v5900 = vmul.f32 %v5239, %v5772
        %v5901 = vmul.f32 %v5240, %v5773
        %v5902 = vmul.f32 %v5241, %v5774
        %v5903 = vmul.f32 %v5242, %v5775
        %v5904 = vmul.f32 %v5243, %v5776
        %v5905 = vmul.f32 %v5244, %v5777
        %v5906 = vmul.f32 %v5245, %v5778
        %v5907 = vmul.f32 %v5246, %v5779
        %v5908 = vmul.f32 %v5247, %v5780
        %v5909 = vmul.f32 %v5248, %v5781
        %v5910 = vmul.f32 %v5249, %v5782
        %v5911 = vmul.f32 %v5250, %v5783
        %v5912 = vmul.f32 %v5251, %v5784
        %v5913 = vmul.f32 %v5252, %v5785
        %v5914 = vmul.f32 %v5253, %v5786
        %v5915 = vmul.f32 %v5254, %v5787
        %v5916 = vmul.f32 %v5255, %v5788
        %v5917 = vmul.f32 %v5256, %v5789
        %v5918 = vmul.f32 %v5257, %v5790
        %v5919 = vmul.f32 %v5258, %v5791
        %v5920 = vmul.f32 %v5259, %v5792
        %v5921 = vmul.f32 %v5260, %v5793
        %v5922 = vmul.f32 %v5261, %v5794
        %v5923 = vmul.f32 %v5262, %v5795
        %v5924 = vmul.f32 %v5263, %v5796
        %v5925 = vmul.f32 %v5264, %v5797
        %v5926 = vmul.f32 %v5265, %v5798
        %v5927 = vmul.f32 %v5266, %v5799
        %v5928 = vmul.f32 %v5267, %v5800
        %v5929 = vmul.f32 %v5268, %v5801
        %v5930 = vmul.f32 %v5269, %v5802
        %v5931 = vmul.f32 %v5270, %v5803
        %v5932 = vmul.f32 %v5271, %v5804
        %v5933 = vmul.f32 %v5272, %v5805
        %v5934 = vmul.f32 %v5273, %v5806
        %v5935 = vmul.f32 %v5274, %v5807
        %v5936 = vmul.f32 %v5275, %v5808
        %v5937 = vmul.f32 %v5276, %v5809
        %v5938 = vmul.f32 %v5277, %v5810
        %v5939 = vmul.f32 %v5278, %v5811
        %v5940 = vmul.f32 %v5279, %v5812
        %v5941 = vmul.f32 %v5280, %v5813
        %v5942 = vmul.f32 %v5281, %v5814
        %v5943 = vmul.f32 %v5282, %v5815
        %v5944 = vmul.f32 %v5283, %v5816
        %v5945 = vmul.f32 %v5284, %v5817
        %v5946 = vmul.f32 %v5285, %v5818
        %v5947 = vmul.f32 %v5286, %v5819
        %v5948 = vmul.f32 %v5287, %v5820
        %v5949 = vmul.f32 %v5288, %v5821
        %v5950 = vmul.f32 %v5289, %v5822
        %v5951 = vmul.f32 %v5290, %v5823
        %v5952 = vmul.f32 %v5291, %v5824
        %v5953 = vmul.f32 %v5292, %v5825
        %v5954 = vmul.f32 %v5293, %v5826
        %v5955 = vmul.f32 %v5294, %v5827
        %v5956 = vmul.f32 %v5295, %v5828
        %v5957 = vmul.f32 %v5296, %v5829
        %v5958 = vmul.f32 %v5297, %v5830
        %v5959 = vmul.f32 %v5298, %v5831
        %v5960 = vmul.f32 %v5299, %v5832
        %v5961 = vmul.f32 %v5300, %v5833
        %v5962 = vmul.f32 %v5301, %v5834
        %v5963 = vmul.f32 %v5302, %v5835
        %v5964 = vmul.f32 %v5303, %v5836
        %v5965 = vmul.f32 %v5304, %v5837
        %v5966 = vmul.f32 %v5305, %v5838
        %v5967 = vmul.f32 %v5306, %v5839
        %v5968 = vmul.f32 %v5307, %v5840
        %v5969 = vmul.f32 %v5308, %v5841
        %v5970 = vmul.f32 %v5309, %v5842
        %v5971 = vmul.f32 %v5310, %v5843
        %v5972 = vmul.f32 %v5311, %v5844
        %v5973 = vmul.f32 %v5312, %v5845
        %v5974 = vmul.f32 %v5313, %v5846
        %v5975 = vmul.f32 %v5314, %v5847
        %v5976 = vmul.f32 %v5315, %v5848
        %v5977 = vmul.f32 %v5316, %v5849
        %v5978 = vmul.f32 %v5317, %v5850
        %v5979 = vmul.f32 %v5318, %v5851
        %v5980 = vmul.f32 %v5319, %v5852
        %v5981 = vmul.f32 %v5320, %v5853
        %v5982 = vmul.f32 %v5321, %v5854
        %v5983 = vmul.f32 %v5322, %v5855
        %v5984 = vmul.f32 %v5323, %v5856
        %v5985 = vmul.f32 %v5324, %v5857
        %v5986 = vmul.f32 %v5325, %v5858
        %v5987 = vmul.f32 %v5326, %v5859
        %v5988 = vmul.f32 %v5327, %v5860
        %v5989 = vmul.f32 %v5328, %v5861
        %v5990 = vmul.f32 %v5329, %v5862
        %v5991 = vmul.f32 %v5330, %v5863
        %v5992 = vmul.f32 %v5331, %v5864
        %v5993 = vmul.f32 %v5332, %v5865
        %v5994 = vmul.f32 %v5333, %v5866
        %v5995 = vmul.f32 %v5334, %v5867
        %v5996 = vmul.f32 %v5335, %v5868
        %v5997 = vmul.f32 %v5336, %v5869
        %v5998 = vmul.f32 %v5337, %v5870
        %v5999 = vmul.f32 %v5338, %v5871
        %v6000 = vmul.f32 %v5339, %v5872
        %v6001 = vmul.f32 %v5340, %v5873
        %v6002 = vmul.f32 %v5341, %v5874
        %v6003 = vmul.f32 %v5342, %v5875
        %v6004 = vmul.f32 %v5343, %v5876
        %v6005 = vmul.f32 %v5344, %v5877
        %v6006 = vmul.f32 %v5345, %v5878
        %v6007 = vmul.f32 %v5346, %v5879
        %v6008 = vmul.f32 %v5347, %v5880
        %v6009 = vmul.f32 %v5348, %v5881
        %v6010 = vmul.f32 %v5349, %v5882
        %v6011 = vmul.f32 %v5350, %v5883
        %v6012 = vmul.f32 %v5351, %v5884
        %v6013 = vmul.f32 %v5352, %v5885
        %v6014 = vmul.f32 %v5353, %v5886
        %v6015 = vmul.f32 %v5354, %v5887
        %v6016 = vmul.f32 %v5355, %v5888
        %v6017 = vmul.f32 %v5356, %v5889
        %v6018 = vmul.f32 %v5357, %v5890
        %v6019 = vmul.f32 %v5358, %v5891
        %v6021 = vlaneseq
        %v6022 = vshrl.u32 %v6021, 7
        %v6023 = vsub.s32 0, %v6022
        %v6024 = vrot.slane %v5037, %v6023
        %v6025 = vlaneseq
        %v6026 = vshrl.u32 %v6025, 7
        %v6027 = vsub.s32 1, %v6026
        %v6028 = vrot.slane %v5037, %v6027
        %v6029 = vlaneseq
        %v6030 = vshrl.u32 %v6029, 7
        %v6031 = vsub.s32 2, %v6030
        %v6032 = vrot.slane %v5037, %v6031
        %v6033 = vlaneseq
        %v6034 = vshrl.u32 %v6033, 7
        %v6035 = vsub.s32 3, %v6034
        %v6036 = vrot.slane %v5037, %v6035
        %v6041 = vadd.f32 %v5892, %v6024
        %v6042 = vadd.f32 %v5893, %v6028
        %v6043 = vadd.f32 %v5894, %v6032
        %v6044 = vadd.f32 %v5895, %v6036
        %v6045 = vadd.f32 %v5896, %v6024
        %v6046 = vadd.f32 %v5897, %v6028
        %v6047 = vadd.f32 %v5898, %v6032
        %v6048 = vadd.f32 %v5899, %v6036
        %v6049 = vadd.f32 %v5900, %v6024
        %v6050 = vadd.f32 %v5901, %v6028
        %v6051 = vadd.f32 %v5902, %v6032
        %v6052 = vadd.f32 %v5903, %v6036
        %v6053 = vadd.f32 %v5904, %v6024
        %v6054 = vadd.f32 %v5905, %v6028
        %v6055 = vadd.f32 %v5906, %v6032
        %v6056 = vadd.f32 %v5907, %v6036
        %v6057 = vadd.f32 %v5908, %v6024
        %v6058 = vadd.f32 %v5909, %v6028
        %v6059 = vadd.f32 %v5910, %v6032
        %v6060 = vadd.f32 %v5911, %v6036
        %v6061 = vadd.f32 %v5912, %v6024
        %v6062 = vadd.f32 %v5913, %v6028
        %v6063 = vadd.f32 %v5914, %v6032
        %v6064 = vadd.f32 %v5915, %v6036
        %v6065 = vadd.f32 %v5916, %v6024
        %v6066 = vadd.f32 %v5917, %v6028
        %v6067 = vadd.f32 %v5918, %v6032
        %v6068 = vadd.f32 %v5919, %v6036
        %v6069 = vadd.f32 %v5920, %v6024
        %v6070 = vadd.f32 %v5921, %v6028
        %v6071 = vadd.f32 %v5922, %v6032
        %v6072 = vadd.f32 %v5923, %v6036
        %v6073 = vadd.f32 %v5924, %v6024
        %v6074 = vadd.f32 %v5925, %v6028
        %v6075 = vadd.f32 %v5926, %v6032
        %v6076 = vadd.f32 %v5927, %v6036
        %v6077 = vadd.f32 %v5928, %v6024
        %v6078 = vadd.f32 %v5929, %v6028
        %v6079 = vadd.f32 %v5930, %v6032
        %v6080 = vadd.f32 %v5931, %v6036
        %v6081 = vadd.f32 %v5932, %v6024
        %v6082 = vadd.f32 %v5933, %v6028
        %v6083 = vadd.f32 %v5934, %v6032
        %v6084 = vadd.f32 %v5935, %v6036
        %v6085 = vadd.f32 %v5936, %v6024
        %v6086 = vadd.f32 %v5937, %v6028
        %v6087 = vadd.f32 %v5938, %v6032
        %v6088 = vadd.f32 %v5939, %v6036
        %v6089 = vadd.f32 %v5940, %v6024
        %v6090 = vadd.f32 %v5941, %v6028
        %v6091 = vadd.f32 %v5942, %v6032
        %v6092 = vadd.f32 %v5943, %v6036
        %v6093 = vadd.f32 %v5944, %v6024
        %v6094 = vadd.f32 %v5945, %v6028
        %v6095 = vadd.f32 %v5946, %v6032
        %v6096 = vadd.f32 %v5947, %v6036
        %v6097 = vadd.f32 %v5948, %v6024
        %v6098 = vadd.f32 %v5949, %v6028
        %v6099 = vadd.f32 %v5950, %v6032
        %v6100 = vadd.f32 %v5951, %v6036
        %v6101 = vadd.f32 %v5952, %v6024
        %v6102 = vadd.f32 %v5953, %v6028
        %v6103 = vadd.f32 %v5954, %v6032
        %v6104 = vadd.f32 %v5955, %v6036
        %v6105 = vadd.f32 %v5956, %v6024
        %v6106 = vadd.f32 %v5957, %v6028
        %v6107 = vadd.f32 %v5958, %v6032
        %v6108 = vadd.f32 %v5959, %v6036
        %v6109 = vadd.f32 %v5960, %v6024
        %v6110 = vadd.f32 %v5961, %v6028
        %v6111 = vadd.f32 %v5962, %v6032
        %v6112 = vadd.f32 %v5963, %v6036
        %v6113 = vadd.f32 %v5964, %v6024
        %v6114 = vadd.f32 %v5965, %v6028
        %v6115 = vadd.f32 %v5966, %v6032
        %v6116 = vadd.f32 %v5967, %v6036
        %v6117 = vadd.f32 %v5968, %v6024
        %v6118 = vadd.f32 %v5969, %v6028
        %v6119 = vadd.f32 %v5970, %v6032
        %v6120 = vadd.f32 %v5971, %v6036
        %v6121 = vadd.f32 %v5972, %v6024
        %v6122 = vadd.f32 %v5973, %v6028
        %v6123 = vadd.f32 %v5974, %v6032
        %v6124 = vadd.f32 %v5975, %v6036
        %v6125 = vadd.f32 %v5976, %v6024
        %v6126 = vadd.f32 %v5977, %v6028
        %v6127 = vadd.f32 %v5978, %v6032
        %v6128 = vadd.f32 %v5979, %v6036
        %v6129 = vadd.f32 %v5980, %v6024
        %v6130 = vadd.f32 %v5981, %v6028
        %v6131 = vadd.f32 %v5982, %v6032
        %v6132 = vadd.f32 %v5983, %v6036
        %v6133 = vadd.f32 %v5984, %v6024
        %v6134 = vadd.f32 %v5985, %v6028
        %v6135 = vadd.f32 %v5986, %v6032
        %v6136 = vadd.f32 %v5987, %v6036
        %v6137 = vadd.f32 %v5988, %v6024
        %v6138 = vadd.f32 %v5989, %v6028
        %v6139 = vadd.f32 %v5990, %v6032
        %v6140 = vadd.f32 %v5991, %v6036
        %v6141 = vadd.f32 %v5992, %v6024
        %v6142 = vadd.f32 %v5993, %v6028
        %v6143 = vadd.f32 %v5994, %v6032
        %v6144 = vadd.f32 %v5995, %v6036
        %v6145 = vadd.f32 %v5996, %v6024
        %v6146 = vadd.f32 %v5997, %v6028
        %v6147 = vadd.f32 %v5998, %v6032
        %v6148 = vadd.f32 %v5999, %v6036
        %v6149 = vadd.f32 %v6000, %v6024
        %v6150 = vadd.f32 %v6001, %v6028
        %v6151 = vadd.f32 %v6002, %v6032
        %v6152 = vadd.f32 %v6003, %v6036
        %v6153 = vadd.f32 %v6004, %v6024
        %v6154 = vadd.f32 %v6005, %v6028
        %v6155 = vadd.f32 %v6006, %v6032
        %v6156 = vadd.f32 %v6007, %v6036
        %v6157 = vadd.f32 %v6008, %v6024
        %v6158 = vadd.f32 %v6009, %v6028
        %v6159 = vadd.f32 %v6010, %v6032
        %v6160 = vadd.f32 %v6011, %v6036
        %v6161 = vadd.f32 %v6012, %v6024
        %v6162 = vadd.f32 %v6013, %v6028
        %v6163 = vadd.f32 %v6014, %v6032
        %v6164 = vadd.f32 %v6015, %v6036
        %v6165 = vadd.f32 %v6016, %v6024
        %v6166 = vadd.f32 %v6017, %v6028
        %v6167 = vadd.f32 %v6018, %v6032
        %v6168 = vadd.f32 %v6019, %v6036
        %v6169 = vld [vmem:[#allocation13] sm:$0xff]
        %v6170 = vld [vmem:[#allocation13 + $0x8] sm:$0xff]
        %v6171 = vld [vmem:[#allocation13 + $0x10] sm:$0xff]
        %v6172 = vld [vmem:[#allocation13 + $0x18] sm:$0xff]
        %v6173 = vld [vmem:[#allocation13 + $0x20] sm:$0xff]
        %v6174 = vld [vmem:[#allocation13 + $0x28] sm:$0xff]
        %v6175 = vld [vmem:[#allocation13 + $0x30] sm:$0xff]
        %v6176 = vld [vmem:[#allocation13 + $0x38] sm:$0xff]
        %v6177 = vld [vmem:[#allocation13 + $0x40] sm:$0xff]
        %v6178 = vld [vmem:[#allocation13 + $0x48] sm:$0xff]
        %v6179 = vld [vmem:[#allocation13 + $0x50] sm:$0xff]
        %v6180 = vld [vmem:[#allocation13 + $0x58] sm:$0xff]
        %v6181 = vld [vmem:[#allocation13 + $0x60] sm:$0xff]
        %v6182 = vld [vmem:[#allocation13 + $0x68] sm:$0xff]
        %v6183 = vld [vmem:[#allocation13 + $0x70] sm:$0xff]
        %v6184 = vld [vmem:[#allocation13 + $0x78] sm:$0xff]
        %v6185 = vld [vmem:[#allocation13 + $0x80] sm:$0xff]
        %v6186 = vld [vmem:[#allocation13 + $0x88] sm:$0xff]
        %v6187 = vld [vmem:[#allocation13 + $0x90] sm:$0xff]
        %v6188 = vld [vmem:[#allocation13 + $0x98] sm:$0xff]
        %v6189 = vld [vmem:[#allocation13 + $0xa0] sm:$0xff]
        %v6190 = vld [vmem:[#allocation13 + $0xa8] sm:$0xff]
        %v6191 = vld [vmem:[#allocation13 + $0xb0] sm:$0xff]
        %v6192 = vld [vmem:[#allocation13 + $0xb8] sm:$0xff]
        %v6193 = vld [vmem:[#allocation13 + $0xc0] sm:$0xff]
        %v6194 = vld [vmem:[#allocation13 + $0xc8] sm:$0xff]
        %v6195 = vld [vmem:[#allocation13 + $0xd0] sm:$0xff]
        %v6196 = vld [vmem:[#allocation13 + $0xd8] sm:$0xff]
        %v6197 = vld [vmem:[#allocation13 + $0xe0] sm:$0xff]
        %v6198 = vld [vmem:[#allocation13 + $0xe8] sm:$0xff]
        %v6199 = vld [vmem:[#allocation13 + $0xf0] sm:$0xff]
        %v6200 = vld [vmem:[#allocation13 + $0xf8] sm:$0xff]
        %v6201 = vld [vmem:[#allocation13 + $0x100] sm:$0xff]
        %v6202 = vld [vmem:[#allocation13 + $0x108] sm:$0xff]
        %v6203 = vld [vmem:[#allocation13 + $0x110] sm:$0xff]
        %v6204 = vld [vmem:[#allocation13 + $0x118] sm:$0xff]
        %v6205 = vld [vmem:[#allocation13 + $0x120] sm:$0xff]
        %v6206 = vld [vmem:[#allocation13 + $0x128] sm:$0xff]
        %v6207 = vld [vmem:[#allocation13 + $0x130] sm:$0xff]
        %v6208 = vld [vmem:[#allocation13 + $0x138] sm:$0xff]
        %v6209 = vld [vmem:[#allocation13 + $0x140] sm:$0xff]
        %v6210 = vld [vmem:[#allocation13 + $0x148] sm:$0xff]
        %v6211 = vld [vmem:[#allocation13 + $0x150] sm:$0xff]
        %v6212 = vld [vmem:[#allocation13 + $0x158] sm:$0xff]
        %v6213 = vld [vmem:[#allocation13 + $0x160] sm:$0xff]
        %v6214 = vld [vmem:[#allocation13 + $0x168] sm:$0xff]
        %v6215 = vld [vmem:[#allocation13 + $0x170] sm:$0xff]
        %v6216 = vld [vmem:[#allocation13 + $0x178] sm:$0xff]
        %v6217 = vld [vmem:[#allocation13 + $0x180] sm:$0xff]
        %v6218 = vld [vmem:[#allocation13 + $0x188] sm:$0xff]
        %v6219 = vld [vmem:[#allocation13 + $0x190] sm:$0xff]
        %v6220 = vld [vmem:[#allocation13 + $0x198] sm:$0xff]
        %v6221 = vld [vmem:[#allocation13 + $0x1a0] sm:$0xff]
        %v6222 = vld [vmem:[#allocation13 + $0x1a8] sm:$0xff]
        %v6223 = vld [vmem:[#allocation13 + $0x1b0] sm:$0xff]
        %v6224 = vld [vmem:[#allocation13 + $0x1b8] sm:$0xff]
        %v6225 = vld [vmem:[#allocation13 + $0x1c0] sm:$0xff]
        %v6226 = vld [vmem:[#allocation13 + $0x1c8] sm:$0xff]
        %v6227 = vld [vmem:[#allocation13 + $0x1d0] sm:$0xff]
        %v6228 = vld [vmem:[#allocation13 + $0x1d8] sm:$0xff]
        %v6229 = vld [vmem:[#allocation13 + $0x1e0] sm:$0xff]
        %v6230 = vld [vmem:[#allocation13 + $0x1e8] sm:$0xff]
        %v6231 = vld [vmem:[#allocation13 + $0x1f0] sm:$0xff]
        %v6232 = vld [vmem:[#allocation13 + $0x1f8] sm:$0xff]
        %v6233 = vld [vmem:[#allocation13 + $0x200] sm:$0xff]
        %v6234 = vld [vmem:[#allocation13 + $0x208] sm:$0xff]
        %v6235 = vld [vmem:[#allocation13 + $0x210] sm:$0xff]
        %v6236 = vld [vmem:[#allocation13 + $0x218] sm:$0xff]
        %v6237 = vld [vmem:[#allocation13 + $0x220] sm:$0xff]
        %v6238 = vld [vmem:[#allocation13 + $0x228] sm:$0xff]
        %v6239 = vld [vmem:[#allocation13 + $0x230] sm:$0xff]
        %v6240 = vld [vmem:[#allocation13 + $0x238] sm:$0xff]
        %v6241 = vld [vmem:[#allocation13 + $0x240] sm:$0xff]
        %v6242 = vld [vmem:[#allocation13 + $0x248] sm:$0xff]
        %v6243 = vld [vmem:[#allocation13 + $0x250] sm:$0xff]
        %v6244 = vld [vmem:[#allocation13 + $0x258] sm:$0xff]
        %v6245 = vld [vmem:[#allocation13 + $0x260] sm:$0xff]
        %v6246 = vld [vmem:[#allocation13 + $0x268] sm:$0xff]
        %v6247 = vld [vmem:[#allocation13 + $0x270] sm:$0xff]
        %v6248 = vld [vmem:[#allocation13 + $0x278] sm:$0xff]
        %v6249 = vld [vmem:[#allocation13 + $0x280] sm:$0xff]
        %v6250 = vld [vmem:[#allocation13 + $0x288] sm:$0xff]
        %v6251 = vld [vmem:[#allocation13 + $0x290] sm:$0xff]
        %v6252 = vld [vmem:[#allocation13 + $0x298] sm:$0xff]
        %v6253 = vld [vmem:[#allocation13 + $0x2a0] sm:$0xff]
        %v6254 = vld [vmem:[#allocation13 + $0x2a8] sm:$0xff]
        %v6255 = vld [vmem:[#allocation13 + $0x2b0] sm:$0xff]
        %v6256 = vld [vmem:[#allocation13 + $0x2b8] sm:$0xff]
        %v6257 = vld [vmem:[#allocation13 + $0x2c0] sm:$0xff]
        %v6258 = vld [vmem:[#allocation13 + $0x2c8] sm:$0xff]
        %v6259 = vld [vmem:[#allocation13 + $0x2d0] sm:$0xff]
        %v6260 = vld [vmem:[#allocation13 + $0x2d8] sm:$0xff]
        %v6261 = vld [vmem:[#allocation13 + $0x2e0] sm:$0xff]
        %v6262 = vld [vmem:[#allocation13 + $0x2e8] sm:$0xff]
        %v6263 = vld [vmem:[#allocation13 + $0x2f0] sm:$0xff]
        %v6264 = vld [vmem:[#allocation13 + $0x2f8] sm:$0xff]
        %v6265 = vld [vmem:[#allocation13 + $0x300] sm:$0xff]
        %v6266 = vld [vmem:[#allocation13 + $0x308] sm:$0xff]
        %v6267 = vld [vmem:[#allocation13 + $0x310] sm:$0xff]
        %v6268 = vld [vmem:[#allocation13 + $0x318] sm:$0xff]
        %v6269 = vld [vmem:[#allocation13 + $0x320] sm:$0xff]
        %v6270 = vld [vmem:[#allocation13 + $0x328] sm:$0xff]
        %v6271 = vld [vmem:[#allocation13 + $0x330] sm:$0xff]
        %v6272 = vld [vmem:[#allocation13 + $0x338] sm:$0xff]
        %v6273 = vld [vmem:[#allocation13 + $0x340] sm:$0xff]
        %v6274 = vld [vmem:[#allocation13 + $0x348] sm:$0xff]
        %v6275 = vld [vmem:[#allocation13 + $0x350] sm:$0xff]
        %v6276 = vld [vmem:[#allocation13 + $0x358] sm:$0xff]
        %v6277 = vld [vmem:[#allocation13 + $0x360] sm:$0xff]
        %v6278 = vld [vmem:[#allocation13 + $0x368] sm:$0xff]
        %v6279 = vld [vmem:[#allocation13 + $0x370] sm:$0xff]
        %v6280 = vld [vmem:[#allocation13 + $0x378] sm:$0xff]
        %v6281 = vld [vmem:[#allocation13 + $0x380] sm:$0xff]
        %v6282 = vld [vmem:[#allocation13 + $0x388] sm:$0xff]
        %v6283 = vld [vmem:[#allocation13 + $0x390] sm:$0xff]
        %v6284 = vld [vmem:[#allocation13 + $0x398] sm:$0xff]
        %v6285 = vld [vmem:[#allocation13 + $0x3a0] sm:$0xff]
        %v6286 = vld [vmem:[#allocation13 + $0x3a8] sm:$0xff]
        %v6287 = vld [vmem:[#allocation13 + $0x3b0] sm:$0xff]
        %v6288 = vld [vmem:[#allocation13 + $0x3b8] sm:$0xff]
        %v6289 = vld [vmem:[#allocation13 + $0x3c0] sm:$0xff]
        %v6290 = vld [vmem:[#allocation13 + $0x3c8] sm:$0xff]
        %v6291 = vld [vmem:[#allocation13 + $0x3d0] sm:$0xff]
        %v6292 = vld [vmem:[#allocation13 + $0x3d8] sm:$0xff]
        %v6293 = vld [vmem:[#allocation13 + $0x3e0] sm:$0xff]
        %v6294 = vld [vmem:[#allocation13 + $0x3e8] sm:$0xff]
        %v6295 = vld [vmem:[#allocation13 + $0x3f0] sm:$0xff]
        %v6296 = vld [vmem:[#allocation13 + $0x3f8] sm:$0xff]
        %v6297 = vld [vmem:[#allocation13 + $0x400] sm:$0xff]
        %v6298 = vld [vmem:[#allocation13 + $0x408] sm:$0xff]
        %v6299 = vld [vmem:[#allocation13 + $0x410] sm:$0xff]
        %v6300 = vld [vmem:[#allocation13 + $0x418] sm:$0xff]
        %v6301 = vld [vmem:[#allocation13 + $0x420] sm:$0xff]
        %v6302 = vld [vmem:[#allocation13 + $0x428] sm:$0xff]
        %v6303 = vld [vmem:[#allocation13 + $0x430] sm:$0xff]
        %v6304 = vld [vmem:[#allocation13 + $0x438] sm:$0xff]
        %v6305 = vld [vmem:[#allocation13 + $0x440] sm:$0xff]
        %v6306 = vld [vmem:[#allocation13 + $0x448] sm:$0xff]
        %v6307 = vld [vmem:[#allocation13 + $0x450] sm:$0xff]
        %v6308 = vld [vmem:[#allocation13 + $0x458] sm:$0xff]
        %v6309 = vld [vmem:[#allocation13 + $0x460] sm:$0xff]
        %v6310 = vld [vmem:[#allocation13 + $0x468] sm:$0xff]
        %v6311 = vld [vmem:[#allocation13 + $0x470] sm:$0xff]
        %v6312 = vld [vmem:[#allocation13 + $0x478] sm:$0xff]
        %v6313 = vld [vmem:[#allocation13 + $0x480] sm:$0xff]
        %v6314 = vld [vmem:[#allocation13 + $0x488] sm:$0xff]
        %v6315 = vld [vmem:[#allocation13 + $0x490] sm:$0xff]
        %v6316 = vld [vmem:[#allocation13 + $0x498] sm:$0xff]
        %v6317 = vld [vmem:[#allocation13 + $0x4a0] sm:$0xff]
        %v6318 = vld [vmem:[#allocation13 + $0x4a8] sm:$0xff]
        %v6319 = vld [vmem:[#allocation13 + $0x4b0] sm:$0xff]
        %v6320 = vld [vmem:[#allocation13 + $0x4b8] sm:$0xff]
        %v6321 = vld [vmem:[#allocation13 + $0x4c0] sm:$0xff]
        %v6322 = vld [vmem:[#allocation13 + $0x4c8] sm:$0xff]
        %v6323 = vld [vmem:[#allocation13 + $0x4d0] sm:$0xff]
        %v6324 = vld [vmem:[#allocation13 + $0x4d8] sm:$0xff]
        %v6325 = vld [vmem:[#allocation13 + $0x4e0] sm:$0xff]
        %v6326 = vld [vmem:[#allocation13 + $0x4e8] sm:$0xff]
        %v6327 = vld [vmem:[#allocation13 + $0x4f0] sm:$0xff]
        %v6328 = vld [vmem:[#allocation13 + $0x4f8] sm:$0xff]
        %v6329 = vld [vmem:[#allocation13 + $0x500] sm:$0xff]
        %v6330 = vld [vmem:[#allocation13 + $0x508] sm:$0xff]
        %v6331 = vld [vmem:[#allocation13 + $0x510] sm:$0xff]
        %v6332 = vld [vmem:[#allocation13 + $0x518] sm:$0xff]
        %v6333 = vld [vmem:[#allocation13 + $0x520] sm:$0xff]
        %v6334 = vld [vmem:[#allocation13 + $0x528] sm:$0xff]
        %v6335 = vld [vmem:[#allocation13 + $0x530] sm:$0xff]
        %v6336 = vld [vmem:[#allocation13 + $0x538] sm:$0xff]
        %v6337 = vld [vmem:[#allocation13 + $0x540] sm:$0xff]
        %v6338 = vld [vmem:[#allocation13 + $0x548] sm:$0xff]
        %v6339 = vld [vmem:[#allocation13 + $0x550] sm:$0xff]
        %v6340 = vld [vmem:[#allocation13 + $0x558] sm:$0xff]
        %v6341 = vld [vmem:[#allocation13 + $0x560] sm:$0xff]
        %v6342 = vld [vmem:[#allocation13 + $0x568] sm:$0xff]
        %v6343 = vld [vmem:[#allocation13 + $0x570] sm:$0xff]
        %v6344 = vld [vmem:[#allocation13 + $0x578] sm:$0xff]
        %v6345 = vld [vmem:[#allocation13 + $0x580] sm:$0xff]
        %v6346 = vld [vmem:[#allocation13 + $0x588] sm:$0xff]
        %v6347 = vld [vmem:[#allocation13 + $0x590] sm:$0xff]
        %v6348 = vld [vmem:[#allocation13 + $0x598] sm:$0xff]
        %v6349 = vld [vmem:[#allocation13 + $0x5a0] sm:$0xff]
        %v6350 = vld [vmem:[#allocation13 + $0x5a8] sm:$0xff]
        %v6351 = vld [vmem:[#allocation13 + $0x5b0] sm:$0xff]
        %v6352 = vld [vmem:[#allocation13 + $0x5b8] sm:$0xff]
        %v6353 = vld [vmem:[#allocation13 + $0x5c0] sm:$0xff]
        %v6354 = vld [vmem:[#allocation13 + $0x5c8] sm:$0xff]
        %v6355 = vld [vmem:[#allocation13 + $0x5d0] sm:$0xff]
        %v6356 = vld [vmem:[#allocation13 + $0x5d8] sm:$0xff]
        %v6357 = vld [vmem:[#allocation13 + $0x5e0] sm:$0xff]
        %v6358 = vld [vmem:[#allocation13 + $0x5e8] sm:$0xff]
        %v6359 = vld [vmem:[#allocation13 + $0x5f0] sm:$0xff]
        %v6360 = vld [vmem:[#allocation13 + $0x5f8] sm:$0xff]
        %v6361 = vld [vmem:[#allocation13 + $0x600] sm:$0xff]
        %v6362 = vld [vmem:[#allocation13 + $0x608] sm:$0xff]
        %v6363 = vld [vmem:[#allocation13 + $0x610] sm:$0xff]
        %v6364 = vld [vmem:[#allocation13 + $0x618] sm:$0xff]
        %v6365 = vld [vmem:[#allocation13 + $0x620] sm:$0xff]
        %v6366 = vld [vmem:[#allocation13 + $0x628] sm:$0xff]
        %v6367 = vld [vmem:[#allocation13 + $0x630] sm:$0xff]
        %v6368 = vld [vmem:[#allocation13 + $0x638] sm:$0xff]
        %v6369 = vld [vmem:[#allocation13 + $0x640] sm:$0xff]
        %v6370 = vld [vmem:[#allocation13 + $0x648] sm:$0xff]
        %v6371 = vld [vmem:[#allocation13 + $0x650] sm:$0xff]
        %v6372 = vld [vmem:[#allocation13 + $0x658] sm:$0xff]
        %v6373 = vld [vmem:[#allocation13 + $0x660] sm:$0xff]
        %v6374 = vld [vmem:[#allocation13 + $0x668] sm:$0xff]
        %v6375 = vld [vmem:[#allocation13 + $0x670] sm:$0xff]
        %v6376 = vld [vmem:[#allocation13 + $0x678] sm:$0xff]
        %v6377 = vld [vmem:[#allocation13 + $0x680] sm:$0xff]
        %v6378 = vld [vmem:[#allocation13 + $0x688] sm:$0xff]
        %v6379 = vld [vmem:[#allocation13 + $0x690] sm:$0xff]
        %v6380 = vld [vmem:[#allocation13 + $0x698] sm:$0xff]
        %v6381 = vld [vmem:[#allocation13 + $0x6a0] sm:$0xff]
        %v6382 = vld [vmem:[#allocation13 + $0x6a8] sm:$0xff]
        %v6383 = vld [vmem:[#allocation13 + $0x6b0] sm:$0xff]
        %v6384 = vld [vmem:[#allocation13 + $0x6b8] sm:$0xff]
        %v6385 = vld [vmem:[#allocation13 + $0x6c0] sm:$0xff]
        %v6386 = vld [vmem:[#allocation13 + $0x6c8] sm:$0xff]
        %v6387 = vld [vmem:[#allocation13 + $0x6d0] sm:$0xff]
        %v6388 = vld [vmem:[#allocation13 + $0x6d8] sm:$0xff]
        %v6389 = vld [vmem:[#allocation13 + $0x6e0] sm:$0xff]
        %v6390 = vld [vmem:[#allocation13 + $0x6e8] sm:$0xff]
        %v6391 = vld [vmem:[#allocation13 + $0x6f0] sm:$0xff]
        %v6392 = vld [vmem:[#allocation13 + $0x6f8] sm:$0xff]
        %v6393 = vld [vmem:[#allocation13 + $0x700] sm:$0xff]
        %v6394 = vld [vmem:[#allocation13 + $0x708] sm:$0xff]
        %v6395 = vld [vmem:[#allocation13 + $0x710] sm:$0xff]
        %v6396 = vld [vmem:[#allocation13 + $0x718] sm:$0xff]
        %v6397 = vld [vmem:[#allocation13 + $0x720] sm:$0xff]
        %v6398 = vld [vmem:[#allocation13 + $0x728] sm:$0xff]
        %v6399 = vld [vmem:[#allocation13 + $0x730] sm:$0xff]
        %v6400 = vld [vmem:[#allocation13 + $0x738] sm:$0xff]
        %v6401 = vld [vmem:[#allocation13 + $0x740] sm:$0xff]
        %v6402 = vld [vmem:[#allocation13 + $0x748] sm:$0xff]
        %v6403 = vld [vmem:[#allocation13 + $0x750] sm:$0xff]
        %v6404 = vld [vmem:[#allocation13 + $0x758] sm:$0xff]
        %v6405 = vld [vmem:[#allocation13 + $0x760] sm:$0xff]
        %v6406 = vld [vmem:[#allocation13 + $0x768] sm:$0xff]
        %v6407 = vld [vmem:[#allocation13 + $0x770] sm:$0xff]
        %v6408 = vld [vmem:[#allocation13 + $0x778] sm:$0xff]
        %v6409 = vld [vmem:[#allocation13 + $0x780] sm:$0xff]
        %v6410 = vld [vmem:[#allocation13 + $0x788] sm:$0xff]
        %v6411 = vld [vmem:[#allocation13 + $0x790] sm:$0xff]
        %v6412 = vld [vmem:[#allocation13 + $0x798] sm:$0xff]
        %v6413 = vld [vmem:[#allocation13 + $0x7a0] sm:$0xff]
        %v6414 = vld [vmem:[#allocation13 + $0x7a8] sm:$0xff]
        %v6415 = vld [vmem:[#allocation13 + $0x7b0] sm:$0xff]
        %v6416 = vld [vmem:[#allocation13 + $0x7b8] sm:$0xff]
        %v6417 = vld [vmem:[#allocation13 + $0x7c0] sm:$0xff]
        %v6418 = vld [vmem:[#allocation13 + $0x7c8] sm:$0xff]
        %v6419 = vld [vmem:[#allocation13 + $0x7d0] sm:$0xff]
        %v6420 = vld [vmem:[#allocation13 + $0x7d8] sm:$0xff]
        %v6421 = vld [vmem:[#allocation13 + $0x7e0] sm:$0xff]
        %v6422 = vld [vmem:[#allocation13 + $0x7e8] sm:$0xff]
        %v6423 = vld [vmem:[#allocation13 + $0x7f0] sm:$0xff]
        %v6424 = vld [vmem:[#allocation13 + $0x7f8] sm:$0xff]
        %s6425 = scalar_lea.vmem [#allocation11], 3
        %v6426 = vld [vmem:[%s6425] ss:$8 sm:$0xf]
        %v6428 = vlaneseq
        %v6429 = vshrl.u32 %v6428, 7
        %v6430 = vsub.s32 0, %v6429
        %v6431 = vrot.slane %v6426, %v6430
        %v6432 = vlaneseq
        %v6433 = vshrl.u32 %v6432, 7
        %v6434 = vsub.s32 1, %v6433
        %v6435 = vrot.slane %v6426, %v6434
        %v6436 = vlaneseq
        %v6437 = vshrl.u32 %v6436, 7
        %v6438 = vsub.s32 2, %v6437
        %v6439 = vrot.slane %v6426, %v6438
        %v6440 = vlaneseq
        %v6441 = vshrl.u32 %v6440, 7
        %v6442 = vsub.s32 3, %v6441
        %v6443 = vrot.slane %v6426, %v6442
        %v6704 = vunpack.c.l.b16 %v6169
        %v6705 = vunpack.c.h.b16 %v6169
        %v6706 = vunpack.c.l.b16 %v6170
        %v6707 = vunpack.c.h.b16 %v6170
        %v6708 = vunpack.c.l.b16 %v6171
        %v6709 = vunpack.c.h.b16 %v6171
        %v6710 = vunpack.c.l.b16 %v6172
        %v6711 = vunpack.c.h.b16 %v6172
        %v6712 = vunpack.c.l.b16 %v6173
        %v6713 = vunpack.c.h.b16 %v6173
        %v6714 = vunpack.c.l.b16 %v6174
        %v6715 = vunpack.c.h.b16 %v6174
        %v6716 = vunpack.c.l.b16 %v6175
        %v6717 = vunpack.c.h.b16 %v6175
        %v6718 = vunpack.c.l.b16 %v6176
        %v6719 = vunpack.c.h.b16 %v6176
        %v6720 = vunpack.c.l.b16 %v6177
        %v6721 = vunpack.c.h.b16 %v6177
        %v6722 = vunpack.c.l.b16 %v6178
        %v6723 = vunpack.c.h.b16 %v6178
        %v6724 = vunpack.c.l.b16 %v6179
        %v6725 = vunpack.c.h.b16 %v6179
        %v6726 = vunpack.c.l.b16 %v6180
        %v6727 = vunpack.c.h.b16 %v6180
        %v6728 = vunpack.c.l.b16 %v6181
        %v6729 = vunpack.c.h.b16 %v6181
        %v6730 = vunpack.c.l.b16 %v6182
        %v6731 = vunpack.c.h.b16 %v6182
        %v6732 = vunpack.c.l.b16 %v6183
        %v6733 = vunpack.c.h.b16 %v6183
        %v6734 = vunpack.c.l.b16 %v6184
        %v6735 = vunpack.c.h.b16 %v6184
        %v6736 = vunpack.c.l.b16 %v6185
        %v6737 = vunpack.c.h.b16 %v6185
        %v6738 = vunpack.c.l.b16 %v6186
        %v6739 = vunpack.c.h.b16 %v6186
        %v6740 = vunpack.c.l.b16 %v6187
        %v6741 = vunpack.c.h.b16 %v6187
        %v6742 = vunpack.c.l.b16 %v6188
        %v6743 = vunpack.c.h.b16 %v6188
        %v6744 = vunpack.c.l.b16 %v6189
        %v6745 = vunpack.c.h.b16 %v6189
        %v6746 = vunpack.c.l.b16 %v6190
        %v6747 = vunpack.c.h.b16 %v6190
        %v6748 = vunpack.c.l.b16 %v6191
        %v6749 = vunpack.c.h.b16 %v6191
        %v6750 = vunpack.c.l.b16 %v6192
        %v6751 = vunpack.c.h.b16 %v6192
        %v6752 = vunpack.c.l.b16 %v6193
        %v6753 = vunpack.c.h.b16 %v6193
        %v6754 = vunpack.c.l.b16 %v6194
        %v6755 = vunpack.c.h.b16 %v6194
        %v6756 = vunpack.c.l.b16 %v6195
        %v6757 = vunpack.c.h.b16 %v6195
        %v6758 = vunpack.c.l.b16 %v6196
        %v6759 = vunpack.c.h.b16 %v6196
        %v6760 = vunpack.c.l.b16 %v6197
        %v6761 = vunpack.c.h.b16 %v6197
        %v6762 = vunpack.c.l.b16 %v6198
        %v6763 = vunpack.c.h.b16 %v6198
        %v6764 = vunpack.c.l.b16 %v6199
        %v6765 = vunpack.c.h.b16 %v6199
        %v6766 = vunpack.c.l.b16 %v6200
        %v6767 = vunpack.c.h.b16 %v6200
        %v6768 = vunpack.c.l.b16 %v6201
        %v6769 = vunpack.c.h.b16 %v6201
        %v6770 = vunpack.c.l.b16 %v6202
        %v6771 = vunpack.c.h.b16 %v6202
        %v6772 = vunpack.c.l.b16 %v6203
        %v6773 = vunpack.c.h.b16 %v6203
        %v6774 = vunpack.c.l.b16 %v6204
        %v6775 = vunpack.c.h.b16 %v6204
        %v6776 = vunpack.c.l.b16 %v6205
        %v6777 = vunpack.c.h.b16 %v6205
        %v6778 = vunpack.c.l.b16 %v6206
        %v6779 = vunpack.c.h.b16 %v6206
        %v6780 = vunpack.c.l.b16 %v6207
        %v6781 = vunpack.c.h.b16 %v6207
        %v6782 = vunpack.c.l.b16 %v6208
        %v6783 = vunpack.c.h.b16 %v6208
        %v6784 = vunpack.c.l.b16 %v6209
        %v6785 = vunpack.c.h.b16 %v6209
        %v6786 = vunpack.c.l.b16 %v6210
        %v6787 = vunpack.c.h.b16 %v6210
        %v6788 = vunpack.c.l.b16 %v6211
        %v6789 = vunpack.c.h.b16 %v6211
        %v6790 = vunpack.c.l.b16 %v6212
        %v6791 = vunpack.c.h.b16 %v6212
        %v6792 = vunpack.c.l.b16 %v6213
        %v6793 = vunpack.c.h.b16 %v6213
        %v6794 = vunpack.c.l.b16 %v6214
        %v6795 = vunpack.c.h.b16 %v6214
        %v6796 = vunpack.c.l.b16 %v6215
        %v6797 = vunpack.c.h.b16 %v6215
        %v6798 = vunpack.c.l.b16 %v6216
        %v6799 = vunpack.c.h.b16 %v6216
        %v6800 = vunpack.c.l.b16 %v6217
        %v6801 = vunpack.c.h.b16 %v6217
        %v6802 = vunpack.c.l.b16 %v6218
        %v6803 = vunpack.c.h.b16 %v6218
        %v6804 = vunpack.c.l.b16 %v6219
        %v6805 = vunpack.c.h.b16 %v6219
        %v6806 = vunpack.c.l.b16 %v6220
        %v6807 = vunpack.c.h.b16 %v6220
        %v6808 = vunpack.c.l.b16 %v6221
        %v6809 = vunpack.c.h.b16 %v6221
        %v6810 = vunpack.c.l.b16 %v6222
        %v6811 = vunpack.c.h.b16 %v6222
        %v6812 = vunpack.c.l.b16 %v6223
        %v6813 = vunpack.c.h.b16 %v6223
        %v6814 = vunpack.c.l.b16 %v6224
        %v6815 = vunpack.c.h.b16 %v6224
        %v6816 = vunpack.c.l.b16 %v6225
        %v6817 = vunpack.c.h.b16 %v6225
        %v6818 = vunpack.c.l.b16 %v6226
        %v6819 = vunpack.c.h.b16 %v6226
        %v6820 = vunpack.c.l.b16 %v6227
        %v6821 = vunpack.c.h.b16 %v6227
        %v6822 = vunpack.c.l.b16 %v6228
        %v6823 = vunpack.c.h.b16 %v6228
        %v6824 = vunpack.c.l.b16 %v6229
        %v6825 = vunpack.c.h.b16 %v6229
        %v6826 = vunpack.c.l.b16 %v6230
        %v6827 = vunpack.c.h.b16 %v6230
        %v6828 = vunpack.c.l.b16 %v6231
        %v6829 = vunpack.c.h.b16 %v6231
        %v6830 = vunpack.c.l.b16 %v6232
        %v6831 = vunpack.c.h.b16 %v6232
        %v6832 = vunpack.c.l.b16 %v6233
        %v6833 = vunpack.c.h.b16 %v6233
        %v6834 = vunpack.c.l.b16 %v6234
        %v6835 = vunpack.c.h.b16 %v6234
        %v6836 = vunpack.c.l.b16 %v6235
        %v6837 = vunpack.c.h.b16 %v6235
        %v6838 = vunpack.c.l.b16 %v6236
        %v6839 = vunpack.c.h.b16 %v6236
        %v6840 = vunpack.c.l.b16 %v6237
        %v6841 = vunpack.c.h.b16 %v6237
        %v6842 = vunpack.c.l.b16 %v6238
        %v6843 = vunpack.c.h.b16 %v6238
        %v6844 = vunpack.c.l.b16 %v6239
        %v6845 = vunpack.c.h.b16 %v6239
        %v6846 = vunpack.c.l.b16 %v6240
        %v6847 = vunpack.c.h.b16 %v6240
        %v6848 = vunpack.c.l.b16 %v6241
        %v6849 = vunpack.c.h.b16 %v6241
        %v6850 = vunpack.c.l.b16 %v6242
        %v6851 = vunpack.c.h.b16 %v6242
        %v6852 = vunpack.c.l.b16 %v6243
        %v6853 = vunpack.c.h.b16 %v6243
        %v6854 = vunpack.c.l.b16 %v6244
        %v6855 = vunpack.c.h.b16 %v6244
        %v6856 = vunpack.c.l.b16 %v6245
        %v6857 = vunpack.c.h.b16 %v6245
        %v6858 = vunpack.c.l.b16 %v6246
        %v6859 = vunpack.c.h.b16 %v6246
        %v6860 = vunpack.c.l.b16 %v6247
        %v6861 = vunpack.c.h.b16 %v6247
        %v6862 = vunpack.c.l.b16 %v6248
        %v6863 = vunpack.c.h.b16 %v6248
        %v6864 = vunpack.c.l.b16 %v6249
        %v6865 = vunpack.c.h.b16 %v6249
        %v6866 = vunpack.c.l.b16 %v6250
        %v6867 = vunpack.c.h.b16 %v6250
        %v6868 = vunpack.c.l.b16 %v6251
        %v6869 = vunpack.c.h.b16 %v6251
        %v6870 = vunpack.c.l.b16 %v6252
        %v6871 = vunpack.c.h.b16 %v6252
        %v6872 = vunpack.c.l.b16 %v6253
        %v6873 = vunpack.c.h.b16 %v6253
        %v6874 = vunpack.c.l.b16 %v6254
        %v6875 = vunpack.c.h.b16 %v6254
        %v6876 = vunpack.c.l.b16 %v6255
        %v6877 = vunpack.c.h.b16 %v6255
        %v6878 = vunpack.c.l.b16 %v6256
        %v6879 = vunpack.c.h.b16 %v6256
        %v6880 = vunpack.c.l.b16 %v6257
        %v6881 = vunpack.c.h.b16 %v6257
        %v6882 = vunpack.c.l.b16 %v6258
        %v6883 = vunpack.c.h.b16 %v6258
        %v6884 = vunpack.c.l.b16 %v6259
        %v6885 = vunpack.c.h.b16 %v6259
        %v6886 = vunpack.c.l.b16 %v6260
        %v6887 = vunpack.c.h.b16 %v6260
        %v6888 = vunpack.c.l.b16 %v6261
        %v6889 = vunpack.c.h.b16 %v6261
        %v6890 = vunpack.c.l.b16 %v6262
        %v6891 = vunpack.c.h.b16 %v6262
        %v6892 = vunpack.c.l.b16 %v6263
        %v6893 = vunpack.c.h.b16 %v6263
        %v6894 = vunpack.c.l.b16 %v6264
        %v6895 = vunpack.c.h.b16 %v6264
        %v6896 = vunpack.c.l.b16 %v6265
        %v6897 = vunpack.c.h.b16 %v6265
        %v6898 = vunpack.c.l.b16 %v6266
        %v6899 = vunpack.c.h.b16 %v6266
        %v6900 = vunpack.c.l.b16 %v6267
        %v6901 = vunpack.c.h.b16 %v6267
        %v6902 = vunpack.c.l.b16 %v6268
        %v6903 = vunpack.c.h.b16 %v6268
        %v6904 = vunpack.c.l.b16 %v6269
        %v6905 = vunpack.c.h.b16 %v6269
        %v6906 = vunpack.c.l.b16 %v6270
        %v6907 = vunpack.c.h.b16 %v6270
        %v6908 = vunpack.c.l.b16 %v6271
        %v6909 = vunpack.c.h.b16 %v6271
        %v6910 = vunpack.c.l.b16 %v6272
        %v6911 = vunpack.c.h.b16 %v6272
        %v6912 = vunpack.c.l.b16 %v6273
        %v6913 = vunpack.c.h.b16 %v6273
        %v6914 = vunpack.c.l.b16 %v6274
        %v6915 = vunpack.c.h.b16 %v6274
        %v6916 = vunpack.c.l.b16 %v6275
        %v6917 = vunpack.c.h.b16 %v6275
        %v6918 = vunpack.c.l.b16 %v6276
        %v6919 = vunpack.c.h.b16 %v6276
        %v6920 = vunpack.c.l.b16 %v6277
        %v6921 = vunpack.c.h.b16 %v6277
        %v6922 = vunpack.c.l.b16 %v6278
        %v6923 = vunpack.c.h.b16 %v6278
        %v6924 = vunpack.c.l.b16 %v6279
        %v6925 = vunpack.c.h.b16 %v6279
        %v6926 = vunpack.c.l.b16 %v6280
        %v6927 = vunpack.c.h.b16 %v6280
        %v6928 = vunpack.c.l.b16 %v6281
        %v6929 = vunpack.c.h.b16 %v6281
        %v6930 = vunpack.c.l.b16 %v6282
        %v6931 = vunpack.c.h.b16 %v6282
        %v6932 = vunpack.c.l.b16 %v6283
        %v6933 = vunpack.c.h.b16 %v6283
        %v6934 = vunpack.c.l.b16 %v6284
        %v6935 = vunpack.c.h.b16 %v6284
        %v6936 = vunpack.c.l.b16 %v6285
        %v6937 = vunpack.c.h.b16 %v6285
        %v6938 = vunpack.c.l.b16 %v6286
        %v6939 = vunpack.c.h.b16 %v6286
        %v6940 = vunpack.c.l.b16 %v6287
        %v6941 = vunpack.c.h.b16 %v6287
        %v6942 = vunpack.c.l.b16 %v6288
        %v6943 = vunpack.c.h.b16 %v6288
        %v6944 = vunpack.c.l.b16 %v6289
        %v6945 = vunpack.c.h.b16 %v6289
        %v6946 = vunpack.c.l.b16 %v6290
        %v6947 = vunpack.c.h.b16 %v6290
        %v6948 = vunpack.c.l.b16 %v6291
        %v6949 = vunpack.c.h.b16 %v6291
        %v6950 = vunpack.c.l.b16 %v6292
        %v6951 = vunpack.c.h.b16 %v6292
        %v6952 = vunpack.c.l.b16 %v6293
        %v6953 = vunpack.c.h.b16 %v6293
        %v6954 = vunpack.c.l.b16 %v6294
        %v6955 = vunpack.c.h.b16 %v6294
        %v6956 = vunpack.c.l.b16 %v6295
        %v6957 = vunpack.c.h.b16 %v6295
        %v6958 = vunpack.c.l.b16 %v6296
        %v6959 = vunpack.c.h.b16 %v6296
        %v6960 = vunpack.c.l.b16 %v6297
        %v6961 = vunpack.c.h.b16 %v6297
        %v6962 = vunpack.c.l.b16 %v6298
        %v6963 = vunpack.c.h.b16 %v6298
        %v6964 = vunpack.c.l.b16 %v6299
        %v6965 = vunpack.c.h.b16 %v6299
        %v6966 = vunpack.c.l.b16 %v6300
        %v6967 = vunpack.c.h.b16 %v6300
        %v6968 = vunpack.c.l.b16 %v6301
        %v6969 = vunpack.c.h.b16 %v6301
        %v6970 = vunpack.c.l.b16 %v6302
        %v6971 = vunpack.c.h.b16 %v6302
        %v6972 = vunpack.c.l.b16 %v6303
        %v6973 = vunpack.c.h.b16 %v6303
        %v6974 = vunpack.c.l.b16 %v6304
        %v6975 = vunpack.c.h.b16 %v6304
        %v6976 = vunpack.c.l.b16 %v6305
        %v6977 = vunpack.c.h.b16 %v6305
        %v6978 = vunpack.c.l.b16 %v6306
        %v6979 = vunpack.c.h.b16 %v6306
        %v6980 = vunpack.c.l.b16 %v6307
        %v6981 = vunpack.c.h.b16 %v6307
        %v6982 = vunpack.c.l.b16 %v6308
        %v6983 = vunpack.c.h.b16 %v6308
        %v6984 = vunpack.c.l.b16 %v6309
        %v6985 = vunpack.c.h.b16 %v6309
        %v6986 = vunpack.c.l.b16 %v6310
        %v6987 = vunpack.c.h.b16 %v6310
        %v6988 = vunpack.c.l.b16 %v6311
        %v6989 = vunpack.c.h.b16 %v6311
        %v6990 = vunpack.c.l.b16 %v6312
        %v6991 = vunpack.c.h.b16 %v6312
        %v6992 = vunpack.c.l.b16 %v6313
        %v6993 = vunpack.c.h.b16 %v6313
        %v6994 = vunpack.c.l.b16 %v6314
        %v6995 = vunpack.c.h.b16 %v6314
        %v6996 = vunpack.c.l.b16 %v6315
        %v6997 = vunpack.c.h.b16 %v6315
        %v6998 = vunpack.c.l.b16 %v6316
        %v6999 = vunpack.c.h.b16 %v6316
        %v7000 = vunpack.c.l.b16 %v6317
        %v7001 = vunpack.c.h.b16 %v6317
        %v7002 = vunpack.c.l.b16 %v6318
        %v7003 = vunpack.c.h.b16 %v6318
        %v7004 = vunpack.c.l.b16 %v6319
        %v7005 = vunpack.c.h.b16 %v6319
        %v7006 = vunpack.c.l.b16 %v6320
        %v7007 = vunpack.c.h.b16 %v6320
        %v7008 = vunpack.c.l.b16 %v6321
        %v7009 = vunpack.c.h.b16 %v6321
        %v7010 = vunpack.c.l.b16 %v6322
        %v7011 = vunpack.c.h.b16 %v6322
        %v7012 = vunpack.c.l.b16 %v6323
        %v7013 = vunpack.c.h.b16 %v6323
        %v7014 = vunpack.c.l.b16 %v6324
        %v7015 = vunpack.c.h.b16 %v6324
        %v7016 = vunpack.c.l.b16 %v6325
        %v7017 = vunpack.c.h.b16 %v6325
        %v7018 = vunpack.c.l.b16 %v6326
        %v7019 = vunpack.c.h.b16 %v6326
        %v7020 = vunpack.c.l.b16 %v6327
        %v7021 = vunpack.c.h.b16 %v6327
        %v7022 = vunpack.c.l.b16 %v6328
        %v7023 = vunpack.c.h.b16 %v6328
        %v7024 = vunpack.c.l.b16 %v6329
        %v7025 = vunpack.c.h.b16 %v6329
        %v7026 = vunpack.c.l.b16 %v6330
        %v7027 = vunpack.c.h.b16 %v6330
        %v7028 = vunpack.c.l.b16 %v6331
        %v7029 = vunpack.c.h.b16 %v6331
        %v7030 = vunpack.c.l.b16 %v6332
        %v7031 = vunpack.c.h.b16 %v6332
        %v7032 = vunpack.c.l.b16 %v6333
        %v7033 = vunpack.c.h.b16 %v6333
        %v7034 = vunpack.c.l.b16 %v6334
        %v7035 = vunpack.c.h.b16 %v6334
        %v7036 = vunpack.c.l.b16 %v6335
        %v7037 = vunpack.c.h.b16 %v6335
        %v7038 = vunpack.c.l.b16 %v6336
        %v7039 = vunpack.c.h.b16 %v6336
        %v7040 = vunpack.c.l.b16 %v6337
        %v7041 = vunpack.c.h.b16 %v6337
        %v7042 = vunpack.c.l.b16 %v6338
        %v7043 = vunpack.c.h.b16 %v6338
        %v7044 = vunpack.c.l.b16 %v6339
        %v7045 = vunpack.c.h.b16 %v6339
        %v7046 = vunpack.c.l.b16 %v6340
        %v7047 = vunpack.c.h.b16 %v6340
        %v7048 = vunpack.c.l.b16 %v6341
        %v7049 = vunpack.c.h.b16 %v6341
        %v7050 = vunpack.c.l.b16 %v6342
        %v7051 = vunpack.c.h.b16 %v6342
        %v7052 = vunpack.c.l.b16 %v6343
        %v7053 = vunpack.c.h.b16 %v6343
        %v7054 = vunpack.c.l.b16 %v6344
        %v7055 = vunpack.c.h.b16 %v6344
        %v7056 = vunpack.c.l.b16 %v6345
        %v7057 = vunpack.c.h.b16 %v6345
        %v7058 = vunpack.c.l.b16 %v6346
        %v7059 = vunpack.c.h.b16 %v6346
        %v7060 = vunpack.c.l.b16 %v6347
        %v7061 = vunpack.c.h.b16 %v6347
        %v7062 = vunpack.c.l.b16 %v6348
        %v7063 = vunpack.c.h.b16 %v6348
        %v7064 = vunpack.c.l.b16 %v6349
        %v7065 = vunpack.c.h.b16 %v6349
        %v7066 = vunpack.c.l.b16 %v6350
        %v7067 = vunpack.c.h.b16 %v6350
        %v7068 = vunpack.c.l.b16 %v6351
        %v7069 = vunpack.c.h.b16 %v6351
        %v7070 = vunpack.c.l.b16 %v6352
        %v7071 = vunpack.c.h.b16 %v6352
        %v7072 = vunpack.c.l.b16 %v6353
        %v7073 = vunpack.c.h.b16 %v6353
        %v7074 = vunpack.c.l.b16 %v6354
        %v7075 = vunpack.c.h.b16 %v6354
        %v7076 = vunpack.c.l.b16 %v6355
        %v7077 = vunpack.c.h.b16 %v6355
        %v7078 = vunpack.c.l.b16 %v6356
        %v7079 = vunpack.c.h.b16 %v6356
        %v7080 = vunpack.c.l.b16 %v6357
        %v7081 = vunpack.c.h.b16 %v6357
        %v7082 = vunpack.c.l.b16 %v6358
        %v7083 = vunpack.c.h.b16 %v6358
        %v7084 = vunpack.c.l.b16 %v6359
        %v7085 = vunpack.c.h.b16 %v6359
        %v7086 = vunpack.c.l.b16 %v6360
        %v7087 = vunpack.c.h.b16 %v6360
        %v7088 = vunpack.c.l.b16 %v6361
        %v7089 = vunpack.c.h.b16 %v6361
        %v7090 = vunpack.c.l.b16 %v6362
        %v7091 = vunpack.c.h.b16 %v6362
        %v7092 = vunpack.c.l.b16 %v6363
        %v7093 = vunpack.c.h.b16 %v6363
        %v7094 = vunpack.c.l.b16 %v6364
        %v7095 = vunpack.c.h.b16 %v6364
        %v7096 = vunpack.c.l.b16 %v6365
        %v7097 = vunpack.c.h.b16 %v6365
        %v7098 = vunpack.c.l.b16 %v6366
        %v7099 = vunpack.c.h.b16 %v6366
        %v7100 = vunpack.c.l.b16 %v6367
        %v7101 = vunpack.c.h.b16 %v6367
        %v7102 = vunpack.c.l.b16 %v6368
        %v7103 = vunpack.c.h.b16 %v6368
        %v7104 = vunpack.c.l.b16 %v6369
        %v7105 = vunpack.c.h.b16 %v6369
        %v7106 = vunpack.c.l.b16 %v6370
        %v7107 = vunpack.c.h.b16 %v6370
        %v7108 = vunpack.c.l.b16 %v6371
        %v7109 = vunpack.c.h.b16 %v6371
        %v7110 = vunpack.c.l.b16 %v6372
        %v7111 = vunpack.c.h.b16 %v6372
        %v7112 = vunpack.c.l.b16 %v6373
        %v7113 = vunpack.c.h.b16 %v6373
        %v7114 = vunpack.c.l.b16 %v6374
        %v7115 = vunpack.c.h.b16 %v6374
        %v7116 = vunpack.c.l.b16 %v6375
        %v7117 = vunpack.c.h.b16 %v6375
        %v7118 = vunpack.c.l.b16 %v6376
        %v7119 = vunpack.c.h.b16 %v6376
        %v7120 = vunpack.c.l.b16 %v6377
        %v7121 = vunpack.c.h.b16 %v6377
        %v7122 = vunpack.c.l.b16 %v6378
        %v7123 = vunpack.c.h.b16 %v6378
        %v7124 = vunpack.c.l.b16 %v6379
        %v7125 = vunpack.c.h.b16 %v6379
        %v7126 = vunpack.c.l.b16 %v6380
        %v7127 = vunpack.c.h.b16 %v6380
        %v7128 = vunpack.c.l.b16 %v6381
        %v7129 = vunpack.c.h.b16 %v6381
        %v7130 = vunpack.c.l.b16 %v6382
        %v7131 = vunpack.c.h.b16 %v6382
        %v7132 = vunpack.c.l.b16 %v6383
        %v7133 = vunpack.c.h.b16 %v6383
        %v7134 = vunpack.c.l.b16 %v6384
        %v7135 = vunpack.c.h.b16 %v6384
        %v7136 = vunpack.c.l.b16 %v6385
        %v7137 = vunpack.c.h.b16 %v6385
        %v7138 = vunpack.c.l.b16 %v6386
        %v7139 = vunpack.c.h.b16 %v6386
        %v7140 = vunpack.c.l.b16 %v6387
        %v7141 = vunpack.c.h.b16 %v6387
        %v7142 = vunpack.c.l.b16 %v6388
        %v7143 = vunpack.c.h.b16 %v6388
        %v7144 = vunpack.c.l.b16 %v6389
        %v7145 = vunpack.c.h.b16 %v6389
        %v7146 = vunpack.c.l.b16 %v6390
        %v7147 = vunpack.c.h.b16 %v6390
        %v7148 = vunpack.c.l.b16 %v6391
        %v7149 = vunpack.c.h.b16 %v6391
        %v7150 = vunpack.c.l.b16 %v6392
        %v7151 = vunpack.c.h.b16 %v6392
        %v7152 = vunpack.c.l.b16 %v6393
        %v7153 = vunpack.c.h.b16 %v6393
        %v7154 = vunpack.c.l.b16 %v6394
        %v7155 = vunpack.c.h.b16 %v6394
        %v7156 = vunpack.c.l.b16 %v6395
        %v7157 = vunpack.c.h.b16 %v6395
        %v7158 = vunpack.c.l.b16 %v6396
        %v7159 = vunpack.c.h.b16 %v6396
        %v7160 = vunpack.c.l.b16 %v6397
        %v7161 = vunpack.c.h.b16 %v6397
        %v7162 = vunpack.c.l.b16 %v6398
        %v7163 = vunpack.c.h.b16 %v6398
        %v7164 = vunpack.c.l.b16 %v6399
        %v7165 = vunpack.c.h.b16 %v6399
        %v7166 = vunpack.c.l.b16 %v6400
        %v7167 = vunpack.c.h.b16 %v6400
        %v7168 = vunpack.c.l.b16 %v6401
        %v7169 = vunpack.c.h.b16 %v6401
        %v7170 = vunpack.c.l.b16 %v6402
        %v7171 = vunpack.c.h.b16 %v6402
        %v7172 = vunpack.c.l.b16 %v6403
        %v7173 = vunpack.c.h.b16 %v6403
        %v7174 = vunpack.c.l.b16 %v6404
        %v7175 = vunpack.c.h.b16 %v6404
        %v7176 = vunpack.c.l.b16 %v6405
        %v7177 = vunpack.c.h.b16 %v6405
        %v7178 = vunpack.c.l.b16 %v6406
        %v7179 = vunpack.c.h.b16 %v6406
        %v7180 = vunpack.c.l.b16 %v6407
        %v7181 = vunpack.c.h.b16 %v6407
        %v7182 = vunpack.c.l.b16 %v6408
        %v7183 = vunpack.c.h.b16 %v6408
        %v7184 = vunpack.c.l.b16 %v6409
        %v7185 = vunpack.c.h.b16 %v6409
        %v7186 = vunpack.c.l.b16 %v6410
        %v7187 = vunpack.c.h.b16 %v6410
        %v7188 = vunpack.c.l.b16 %v6411
        %v7189 = vunpack.c.h.b16 %v6411
        %v7190 = vunpack.c.l.b16 %v6412
        %v7191 = vunpack.c.h.b16 %v6412
        %v7192 = vunpack.c.l.b16 %v6413
        %v7193 = vunpack.c.h.b16 %v6413
        %v7194 = vunpack.c.l.b16 %v6414
        %v7195 = vunpack.c.h.b16 %v6414
        %v7196 = vunpack.c.l.b16 %v6415
        %v7197 = vunpack.c.h.b16 %v6415
        %v7198 = vunpack.c.l.b16 %v6416
        %v7199 = vunpack.c.h.b16 %v6416
        %v7200 = vunpack.c.l.b16 %v6417
        %v7201 = vunpack.c.h.b16 %v6417
        %v7202 = vunpack.c.l.b16 %v6418
        %v7203 = vunpack.c.h.b16 %v6418
        %v7204 = vunpack.c.l.b16 %v6419
        %v7205 = vunpack.c.h.b16 %v6419
        %v7206 = vunpack.c.l.b16 %v6420
        %v7207 = vunpack.c.h.b16 %v6420
        %v7208 = vunpack.c.l.b16 %v6421
        %v7209 = vunpack.c.h.b16 %v6421
        %v7210 = vunpack.c.l.b16 %v6422
        %v7211 = vunpack.c.h.b16 %v6422
        %v7212 = vunpack.c.l.b16 %v6423
        %v7213 = vunpack.c.h.b16 %v6423
        %v7214 = vunpack.c.l.b16 %v6424
        %v7215 = vunpack.c.h.b16 %v6424
        %v7216 = vpack.c.b16 %v6708, %v6704
        %v7217 = vpack.c.b16 %v6709, %v6705
        %v7218 = vpack.c.b16 %v6710, %v6706
        %v7219 = vpack.c.b16 %v6711, %v6707
        %v7220 = vpack.c.b16 %v6716, %v6712
        %v7221 = vpack.c.b16 %v6717, %v6713
        %v7222 = vpack.c.b16 %v6718, %v6714
        %v7223 = vpack.c.b16 %v6719, %v6715
        %v7224 = vpack.c.b16 %v6724, %v6720
        %v7225 = vpack.c.b16 %v6725, %v6721
        %v7226 = vpack.c.b16 %v6726, %v6722
        %v7227 = vpack.c.b16 %v6727, %v6723
        %v7228 = vpack.c.b16 %v6732, %v6728
        %v7229 = vpack.c.b16 %v6733, %v6729
        %v7230 = vpack.c.b16 %v6734, %v6730
        %v7231 = vpack.c.b16 %v6735, %v6731
        %v7232 = vpack.c.b16 %v6740, %v6736
        %v7233 = vpack.c.b16 %v6741, %v6737
        %v7234 = vpack.c.b16 %v6742, %v6738
        %v7235 = vpack.c.b16 %v6743, %v6739
        %v7236 = vpack.c.b16 %v6748, %v6744
        %v7237 = vpack.c.b16 %v6749, %v6745
        %v7238 = vpack.c.b16 %v6750, %v6746
        %v7239 = vpack.c.b16 %v6751, %v6747
        %v7240 = vpack.c.b16 %v6756, %v6752
        %v7241 = vpack.c.b16 %v6757, %v6753
        %v7242 = vpack.c.b16 %v6758, %v6754
        %v7243 = vpack.c.b16 %v6759, %v6755
        %v7244 = vpack.c.b16 %v6764, %v6760
        %v7245 = vpack.c.b16 %v6765, %v6761
        %v7246 = vpack.c.b16 %v6766, %v6762
        %v7247 = vpack.c.b16 %v6767, %v6763
        %v7248 = vpack.c.b16 %v6772, %v6768
        %v7249 = vpack.c.b16 %v6773, %v6769
        %v7250 = vpack.c.b16 %v6774, %v6770
        %v7251 = vpack.c.b16 %v6775, %v6771
        %v7252 = vpack.c.b16 %v6780, %v6776
        %v7253 = vpack.c.b16 %v6781, %v6777
        %v7254 = vpack.c.b16 %v6782, %v6778
        %v7255 = vpack.c.b16 %v6783, %v6779
        %v7256 = vpack.c.b16 %v6788, %v6784
        %v7257 = vpack.c.b16 %v6789, %v6785
        %v7258 = vpack.c.b16 %v6790, %v6786
        %v7259 = vpack.c.b16 %v6791, %v6787
        %v7260 = vpack.c.b16 %v6796, %v6792
        %v7261 = vpack.c.b16 %v6797, %v6793
        %v7262 = vpack.c.b16 %v6798, %v6794
        %v7263 = vpack.c.b16 %v6799, %v6795
        %v7264 = vpack.c.b16 %v6804, %v6800
        %v7265 = vpack.c.b16 %v6805, %v6801
        %v7266 = vpack.c.b16 %v6806, %v6802
        %v7267 = vpack.c.b16 %v6807, %v6803
        %v7268 = vpack.c.b16 %v6812, %v6808
        %v7269 = vpack.c.b16 %v6813, %v6809
        %v7270 = vpack.c.b16 %v6814, %v6810
        %v7271 = vpack.c.b16 %v6815, %v6811
        %v7272 = vpack.c.b16 %v6820, %v6816
        %v7273 = vpack.c.b16 %v6821, %v6817
        %v7274 = vpack.c.b16 %v6822, %v6818
        %v7275 = vpack.c.b16 %v6823, %v6819
        %v7276 = vpack.c.b16 %v6828, %v6824
        %v7277 = vpack.c.b16 %v6829, %v6825
        %v7278 = vpack.c.b16 %v6830, %v6826
        %v7279 = vpack.c.b16 %v6831, %v6827
        %v7280 = vpack.c.b16 %v6836, %v6832
        %v7281 = vpack.c.b16 %v6837, %v6833
        %v7282 = vpack.c.b16 %v6838, %v6834
        %v7283 = vpack.c.b16 %v6839, %v6835
        %v7284 = vpack.c.b16 %v6844, %v6840
        %v7285 = vpack.c.b16 %v6845, %v6841
        %v7286 = vpack.c.b16 %v6846, %v6842
        %v7287 = vpack.c.b16 %v6847, %v6843
        %v7288 = vpack.c.b16 %v6852, %v6848
        %v7289 = vpack.c.b16 %v6853, %v6849
        %v7290 = vpack.c.b16 %v6854, %v6850
        %v7291 = vpack.c.b16 %v6855, %v6851
        %v7292 = vpack.c.b16 %v6860, %v6856
        %v7293 = vpack.c.b16 %v6861, %v6857
        %v7294 = vpack.c.b16 %v6862, %v6858
        %v7295 = vpack.c.b16 %v6863, %v6859
        %v7296 = vpack.c.b16 %v6868, %v6864
        %v7297 = vpack.c.b16 %v6869, %v6865
        %v7298 = vpack.c.b16 %v6870, %v6866
        %v7299 = vpack.c.b16 %v6871, %v6867
        %v7300 = vpack.c.b16 %v6876, %v6872
        %v7301 = vpack.c.b16 %v6877, %v6873
        %v7302 = vpack.c.b16 %v6878, %v6874
        %v7303 = vpack.c.b16 %v6879, %v6875
        %v7304 = vpack.c.b16 %v6884, %v6880
        %v7305 = vpack.c.b16 %v6885, %v6881
        %v7306 = vpack.c.b16 %v6886, %v6882
        %v7307 = vpack.c.b16 %v6887, %v6883
        %v7308 = vpack.c.b16 %v6892, %v6888
        %v7309 = vpack.c.b16 %v6893, %v6889
        %v7310 = vpack.c.b16 %v6894, %v6890
        %v7311 = vpack.c.b16 %v6895, %v6891
        %v7312 = vpack.c.b16 %v6900, %v6896
        %v7313 = vpack.c.b16 %v6901, %v6897
        %v7314 = vpack.c.b16 %v6902, %v6898
        %v7315 = vpack.c.b16 %v6903, %v6899
        %v7316 = vpack.c.b16 %v6908, %v6904
        %v7317 = vpack.c.b16 %v6909, %v6905
        %v7318 = vpack.c.b16 %v6910, %v6906
        %v7319 = vpack.c.b16 %v6911, %v6907
        %v7320 = vpack.c.b16 %v6916, %v6912
        %v7321 = vpack.c.b16 %v6917, %v6913
        %v7322 = vpack.c.b16 %v6918, %v6914
        %v7323 = vpack.c.b16 %v6919, %v6915
        %v7324 = vpack.c.b16 %v6924, %v6920
        %v7325 = vpack.c.b16 %v6925, %v6921
        %v7326 = vpack.c.b16 %v6926, %v6922
        %v7327 = vpack.c.b16 %v6927, %v6923
        %v7328 = vpack.c.b16 %v6932, %v6928
        %v7329 = vpack.c.b16 %v6933, %v6929
        %v7330 = vpack.c.b16 %v6934, %v6930
        %v7331 = vpack.c.b16 %v6935, %v6931
        %v7332 = vpack.c.b16 %v6940, %v6936
        %v7333 = vpack.c.b16 %v6941, %v6937
        %v7334 = vpack.c.b16 %v6942, %v6938
        %v7335 = vpack.c.b16 %v6943, %v6939
        %v7336 = vpack.c.b16 %v6948, %v6944
        %v7337 = vpack.c.b16 %v6949, %v6945
        %v7338 = vpack.c.b16 %v6950, %v6946
        %v7339 = vpack.c.b16 %v6951, %v6947
        %v7340 = vpack.c.b16 %v6956, %v6952
        %v7341 = vpack.c.b16 %v6957, %v6953
        %v7342 = vpack.c.b16 %v6958, %v6954
        %v7343 = vpack.c.b16 %v6959, %v6955
        %v7344 = vpack.c.b16 %v6964, %v6960
        %v7345 = vpack.c.b16 %v6965, %v6961
        %v7346 = vpack.c.b16 %v6966, %v6962
        %v7347 = vpack.c.b16 %v6967, %v6963
        %v7348 = vpack.c.b16 %v6972, %v6968
        %v7349 = vpack.c.b16 %v6973, %v6969
        %v7350 = vpack.c.b16 %v6974, %v6970
        %v7351 = vpack.c.b16 %v6975, %v6971
        %v7352 = vpack.c.b16 %v6980, %v6976
        %v7353 = vpack.c.b16 %v6981, %v6977
        %v7354 = vpack.c.b16 %v6982, %v6978
        %v7355 = vpack.c.b16 %v6983, %v6979
        %v7356 = vpack.c.b16 %v6988, %v6984
        %v7357 = vpack.c.b16 %v6989, %v6985
        %v7358 = vpack.c.b16 %v6990, %v6986
        %v7359 = vpack.c.b16 %v6991, %v6987
        %v7360 = vpack.c.b16 %v6996, %v6992
        %v7361 = vpack.c.b16 %v6997, %v6993
        %v7362 = vpack.c.b16 %v6998, %v6994
        %v7363 = vpack.c.b16 %v6999, %v6995
        %v7364 = vpack.c.b16 %v7004, %v7000
        %v7365 = vpack.c.b16 %v7005, %v7001
        %v7366 = vpack.c.b16 %v7006, %v7002
        %v7367 = vpack.c.b16 %v7007, %v7003
        %v7368 = vpack.c.b16 %v7012, %v7008
        %v7369 = vpack.c.b16 %v7013, %v7009
        %v7370 = vpack.c.b16 %v7014, %v7010
        %v7371 = vpack.c.b16 %v7015, %v7011
        %v7372 = vpack.c.b16 %v7020, %v7016
        %v7373 = vpack.c.b16 %v7021, %v7017
        %v7374 = vpack.c.b16 %v7022, %v7018
        %v7375 = vpack.c.b16 %v7023, %v7019
        %v7376 = vpack.c.b16 %v7028, %v7024
        %v7377 = vpack.c.b16 %v7029, %v7025
        %v7378 = vpack.c.b16 %v7030, %v7026
        %v7379 = vpack.c.b16 %v7031, %v7027
        %v7380 = vpack.c.b16 %v7036, %v7032
        %v7381 = vpack.c.b16 %v7037, %v7033
        %v7382 = vpack.c.b16 %v7038, %v7034
        %v7383 = vpack.c.b16 %v7039, %v7035
        %v7384 = vpack.c.b16 %v7044, %v7040
        %v7385 = vpack.c.b16 %v7045, %v7041
        %v7386 = vpack.c.b16 %v7046, %v7042
        %v7387 = vpack.c.b16 %v7047, %v7043
        %v7388 = vpack.c.b16 %v7052, %v7048
        %v7389 = vpack.c.b16 %v7053, %v7049
        %v7390 = vpack.c.b16 %v7054, %v7050
        %v7391 = vpack.c.b16 %v7055, %v7051
        %v7392 = vpack.c.b16 %v7060, %v7056
        %v7393 = vpack.c.b16 %v7061, %v7057
        %v7394 = vpack.c.b16 %v7062, %v7058
        %v7395 = vpack.c.b16 %v7063, %v7059
        %v7396 = vpack.c.b16 %v7068, %v7064
        %v7397 = vpack.c.b16 %v7069, %v7065
        %v7398 = vpack.c.b16 %v7070, %v7066
        %v7399 = vpack.c.b16 %v7071, %v7067
        %v7400 = vpack.c.b16 %v7076, %v7072
        %v7401 = vpack.c.b16 %v7077, %v7073
        %v7402 = vpack.c.b16 %v7078, %v7074
        %v7403 = vpack.c.b16 %v7079, %v7075
        %v7404 = vpack.c.b16 %v7084, %v7080
        %v7405 = vpack.c.b16 %v7085, %v7081
        %v7406 = vpack.c.b16 %v7086, %v7082
        %v7407 = vpack.c.b16 %v7087, %v7083
        %v7408 = vpack.c.b16 %v7092, %v7088
        %v7409 = vpack.c.b16 %v7093, %v7089
        %v7410 = vpack.c.b16 %v7094, %v7090
        %v7411 = vpack.c.b16 %v7095, %v7091
        %v7412 = vpack.c.b16 %v7100, %v7096
        %v7413 = vpack.c.b16 %v7101, %v7097
        %v7414 = vpack.c.b16 %v7102, %v7098
        %v7415 = vpack.c.b16 %v7103, %v7099
        %v7416 = vpack.c.b16 %v7108, %v7104
        %v7417 = vpack.c.b16 %v7109, %v7105
        %v7418 = vpack.c.b16 %v7110, %v7106
        %v7419 = vpack.c.b16 %v7111, %v7107
        %v7420 = vpack.c.b16 %v7116, %v7112
        %v7421 = vpack.c.b16 %v7117, %v7113
        %v7422 = vpack.c.b16 %v7118, %v7114
        %v7423 = vpack.c.b16 %v7119, %v7115
        %v7424 = vpack.c.b16 %v7124, %v7120
        %v7425 = vpack.c.b16 %v7125, %v7121
        %v7426 = vpack.c.b16 %v7126, %v7122
        %v7427 = vpack.c.b16 %v7127, %v7123
        %v7428 = vpack.c.b16 %v7132, %v7128
        %v7429 = vpack.c.b16 %v7133, %v7129
        %v7430 = vpack.c.b16 %v7134, %v7130
        %v7431 = vpack.c.b16 %v7135, %v7131
        %v7432 = vpack.c.b16 %v7140, %v7136
        %v7433 = vpack.c.b16 %v7141, %v7137
        %v7434 = vpack.c.b16 %v7142, %v7138
        %v7435 = vpack.c.b16 %v7143, %v7139
        %v7436 = vpack.c.b16 %v7148, %v7144
        %v7437 = vpack.c.b16 %v7149, %v7145
        %v7438 = vpack.c.b16 %v7150, %v7146
        %v7439 = vpack.c.b16 %v7151, %v7147
        %v7440 = vpack.c.b16 %v7156, %v7152
        %v7441 = vpack.c.b16 %v7157, %v7153
        %v7442 = vpack.c.b16 %v7158, %v7154
        %v7443 = vpack.c.b16 %v7159, %v7155
        %v7444 = vpack.c.b16 %v7164, %v7160
        %v7445 = vpack.c.b16 %v7165, %v7161
        %v7446 = vpack.c.b16 %v7166, %v7162
        %v7447 = vpack.c.b16 %v7167, %v7163
        %v7448 = vpack.c.b16 %v7172, %v7168
        %v7449 = vpack.c.b16 %v7173, %v7169
        %v7450 = vpack.c.b16 %v7174, %v7170
        %v7451 = vpack.c.b16 %v7175, %v7171
        %v7452 = vpack.c.b16 %v7180, %v7176
        %v7453 = vpack.c.b16 %v7181, %v7177
        %v7454 = vpack.c.b16 %v7182, %v7178
        %v7455 = vpack.c.b16 %v7183, %v7179
        %v7456 = vpack.c.b16 %v7188, %v7184
        %v7457 = vpack.c.b16 %v7189, %v7185
        %v7458 = vpack.c.b16 %v7190, %v7186
        %v7459 = vpack.c.b16 %v7191, %v7187
        %v7460 = vpack.c.b16 %v7196, %v7192
        %v7461 = vpack.c.b16 %v7197, %v7193
        %v7462 = vpack.c.b16 %v7198, %v7194
        %v7463 = vpack.c.b16 %v7199, %v7195
        %v7464 = vpack.c.b16 %v7204, %v7200
        %v7465 = vpack.c.b16 %v7205, %v7201
        %v7466 = vpack.c.b16 %v7206, %v7202
        %v7467 = vpack.c.b16 %v7207, %v7203
        %v7468 = vpack.c.b16 %v7212, %v7208
        %v7469 = vpack.c.b16 %v7213, %v7209
        %v7470 = vpack.c.b16 %v7214, %v7210
        %v7471 = vpack.c.b16 %v7215, %v7211
        %7728 = vmatprep.subr.bf16.mxu0 %v7217
        %7729 = vmatpush1.bf16.msra.mxu0 %v7216
        %7730 = vmatprep.subr.bf16.mxu0 %v7221
        %7731 = vmatpush1.bf16.msra.mxu0 %v7220
        %7732 = vmatprep.subr.bf16.mxu0 %v7225
        %7733 = vmatpush1.bf16.msra.mxu0 %v7224
        %7734 = vmatprep.subr.bf16.mxu0 %v7229
        %7735 = vmatpush1.bf16.msra.mxu0 %v7228
        %7736 = vmatprep.subr.bf16.mxu0 %v7233
        %7737 = vmatpush1.bf16.msra.mxu0 %v7232
        %7738 = vmatprep.subr.bf16.mxu0 %v7237
        %7739 = vmatpush1.bf16.msra.mxu0 %v7236
        %7740 = vmatprep.subr.bf16.mxu0 %v7241
        %7741 = vmatpush1.bf16.msra.mxu0 %v7240
        %7742 = vmatprep.subr.bf16.mxu0 %v7245
        %7743 = vmatpush1.bf16.msra.mxu0 %v7244
        %7744 = vmatprep.subr.bf16.mxu0 %v7249
        %7745 = vmatpush1.bf16.msra.mxu0 %v7248
        %7746 = vmatprep.subr.bf16.mxu0 %v7253
        %7747 = vmatpush1.bf16.msra.mxu0 %v7252
        %7748 = vmatprep.subr.bf16.mxu0 %v7257
        %7749 = vmatpush1.bf16.msra.mxu0 %v7256
        %7750 = vmatprep.subr.bf16.mxu0 %v7261
        %7751 = vmatpush1.bf16.msra.mxu0 %v7260
        %7752 = vmatprep.subr.bf16.mxu0 %v7265
        %7753 = vmatpush1.bf16.msra.mxu0 %v7264
        %7754 = vmatprep.subr.bf16.mxu0 %v7269
        %7755 = vmatpush1.bf16.msra.mxu0 %v7268
        %7756 = vmatprep.subr.bf16.mxu0 %v7273
        %7757 = vmatpush1.bf16.msra.mxu0 %v7272
        %7758 = vmatprep.subr.bf16.mxu0 %v7277
        %7759 = vmatpush1.bf16.msra.mxu0 %v7276
        %7760 = vmatprep.mubr.bf16.mxu0 %v640
        %7761 = vmatmul.mubr.bf16.gmra.mrb[0].mxu0 %v639
        %v7762 = vpop.f32.mrb[0].mxu0
        %v7763 = vadd.f32 %v6431, %v7762
        %v7764 = vpop.f32.mrb[0].mxu0
        %v7765 = vadd.f32 %v6435, %v7764
        %v7766 = vpop.f32.mrb[0].mxu0
        %v7767 = vadd.f32 %v6431, %v7766
        %v7768 = vpop.f32.mrb[0].mxu0
        %v7769 = vadd.f32 %v6435, %v7768
        %7770 = vmatprep.mubr.bf16.mxu0 %v648
        %7771 = vmatmul.mubr.bf16.gmra.mrb[0].mxu0 %v647
        %v7772 = vpop.f32.mrb[0].mxu0
        %v7773 = vadd.f32 %v6431, %v7772
        %v7774 = vpop.f32.mrb[0].mxu0
        %v7775 = vadd.f32 %v6435, %v7774
        %v7776 = vpop.f32.mrb[0].mxu0
        %v7777 = vadd.f32 %v6431, %v7776
        %v7778 = vpop.f32.mrb[0].mxu0
        %v7779 = vadd.f32 %v6435, %v7778
        %7780 = vmatprep.mubr.bf16.mxu0 %v656
        %7781 = vmatmul.mubr.bf16.gmra.mrb[0].mxu0 %v655
        %v7782 = vpop.f32.mrb[0].mxu0
        %v7783 = vadd.f32 %v6431, %v7782
        %v7784 = vpop.f32.mrb[0].mxu0
        %v7785 = vadd.f32 %v6435, %v7784
        %v7786 = vpop.f32.mrb[0].mxu0
        %v7787 = vadd.f32 %v6431, %v7786
        %v7788 = vpop.f32.mrb[0].mxu0
        %v7789 = vadd.f32 %v6435, %v7788
        %7790 = vmatprep.mubr.bf16.mxu0 %v664
        %7791 = vmatmul.mubr.bf16.gmra.mrb[0].mxu0 %v663
        %v7792 = vpop.f32.mrb[0].mxu0
        %v7793 = vadd.f32 %v6431, %v7792
        %v7794 = vpop.f32.mrb[0].mxu0
        %v7795 = vadd.f32 %v6435, %v7794
        %v7796 = vpop.f32.mrb[0].mxu0
        %v7797 = vadd.f32 %v6431, %v7796
        %v7798 = vpop.f32.mrb[0].mxu0
        %v7799 = vadd.f32 %v6435, %v7798
        %7800 = vmatprep.mubr.bf16.mxu0 %v672
        %7801 = vmatmul.mubr.bf16.gmra.mrb[0].mxu0 %v671
        %v7802 = vpop.f32.mrb[0].mxu0
        %v7803 = vadd.f32 %v6431, %v7802
        %v7804 = vpop.f32.mrb[0].mxu0
        %v7805 = vadd.f32 %v6435, %v7804
        %v7806 = vpop.f32.mrb[0].mxu0
        %v7807 = vadd.f32 %v6431, %v7806
        %v7808 = vpop.f32.mrb[0].mxu0
        %v7809 = vadd.f32 %v6435, %v7808
        %7810 = vmatprep.mubr.bf16.mxu0 %v680
        %7811 = vmatmul.mubr.bf16.gmra.mrb[0].mxu0 %v679
        %v7812 = vpop.f32.mrb[0].mxu0
        %v7813 = vadd.f32 %v6431, %v7812
        %v7814 = vpop.f32.mrb[0].mxu0
        %v7815 = vadd.f32 %v6435, %v7814
        %v7816 = vpop.f32.mrb[0].mxu0
        %v7817 = vadd.f32 %v6431, %v7816
        %v7818 = vpop.f32.mrb[0].mxu0
        %v7819 = vadd.f32 %v6435, %v7818
        %7820 = vmatprep.mubr.bf16.mxu0 %v688
        %7821 = vmatmul.mubr.bf16.gmra.mrb[0].mxu0 %v687
        %v7822 = vpop.f32.mrb[0].mxu0
        %v7823 = vadd.f32 %v6431, %v7822
        %v7824 = vpop.f32.mrb[0].mxu0
        %v7825 = vadd.f32 %v6435, %v7824
        %v7826 = vpop.f32.mrb[0].mxu0
        %v7827 = vadd.f32 %v6431, %v7826
        %v7828 = vpop.f32.mrb[0].mxu0
        %v7829 = vadd.f32 %v6435, %v7828
        %7830 = vmatprep.mubr.bf16.mxu0 %v696
        %7831 = vmatmul.mubr.bf16.gmra.mrb[0].mxu0 %v695
        %v7832 = vpop.f32.mrb[0].mxu0
        %v7833 = vadd.f32 %v6431, %v7832
        %v7834 = vpop.f32.mrb[0].mxu0
        %v7835 = vadd.f32 %v6435, %v7834
        %v7836 = vpop.f32.mrb[0].mxu0
        %v7837 = vadd.f32 %v6431, %v7836
        %v7838 = vpop.f32.mrb[0].mxu0
        %v7839 = vadd.f32 %v6435, %v7838
        %7840 = vmatprep.mubr.bf16.mxu0 %v704
        %7841 = vmatmul.mubr.bf16.gmra.mrb[0].mxu0 %v703
        %v7842 = vpop.f32.mrb[0].mxu0
        %v7843 = vadd.f32 %v6431, %v7842
        %v7844 = vpop.f32.mrb[0].mxu0
        %v7845 = vadd.f32 %v6435, %v7844
        %v7846 = vpop.f32.mrb[0].mxu0
        %v7847 = vadd.f32 %v6431, %v7846
        %v7848 = vpop.f32.mrb[0].mxu0
        %v7849 = vadd.f32 %v6435, %v7848
        %7850 = vmatprep.mubr.bf16.mxu0 %v712
        %7851 = vmatmul.mubr.bf16.gmra.mrb[0].mxu0 %v711
        %v7852 = vpop.f32.mrb[0].mxu0
        %v7853 = vadd.f32 %v6431, %v7852
        %v7854 = vpop.f32.mrb[0].mxu0
        %v7855 = vadd.f32 %v6435, %v7854
        %v7856 = vpop.f32.mrb[0].mxu0
        %v7857 = vadd.f32 %v6431, %v7856
        %v7858 = vpop.f32.mrb[0].mxu0
        %v7859 = vadd.f32 %v6435, %v7858
        %7860 = vmatprep.mubr.bf16.mxu0 %v720
        %7861 = vmatmul.mubr.bf16.gmra.mrb[0].mxu0 %v719
        %v7862 = vpop.f32.mrb[0].mxu0
        %v7863 = vadd.f32 %v6431, %v7862
        %v7864 = vpop.f32.mrb[0].mxu0
        %v7865 = vadd.f32 %v6435, %v7864
        %v7866 = vpop.f32.mrb[0].mxu0
        %v7867 = vadd.f32 %v6431, %v7866
        %v7868 = vpop.f32.mrb[0].mxu0
        %v7869 = vadd.f32 %v6435, %v7868
        %7870 = vmatprep.mubr.bf16.mxu0 %v728
        %7871 = vmatmul.mubr.bf16.gmra.mrb[0].mxu0 %v727
        %v7872 = vpop.f32.mrb[0].mxu0
        %v7873 = vadd.f32 %v6431, %v7872
        %v7874 = vpop.f32.mrb[0].mxu0
        %v7875 = vadd.f32 %v6435, %v7874
        %v7876 = vpop.f32.mrb[0].mxu0
        %v7877 = vadd.f32 %v6431, %v7876
        %v7878 = vpop.f32.mrb[0].mxu0
        %v7879 = vadd.f32 %v6435, %v7878
        %7880 = vmatprep.mubr.bf16.mxu0 %v736
        %7881 = vmatmul.mubr.bf16.gmra.mrb[0].mxu0 %v735
        %v7882 = vpop.f32.mrb[0].mxu0
        %v7883 = vadd.f32 %v6431, %v7882
        %v7884 = vpop.f32.mrb[0].mxu0
        %v7885 = vadd.f32 %v6435, %v7884
        %v7886 = vpop.f32.mrb[0].mxu0
        %v7887 = vadd.f32 %v6431, %v7886
        %v7888 = vpop.f32.mrb[0].mxu0
        %v7889 = vadd.f32 %v6435, %v7888
        %7890 = vmatprep.mubr.bf16.mxu0 %v744
        %7891 = vmatmul.mubr.bf16.gmra.mrb[0].mxu0 %v743
        %v7892 = vpop.f32.mrb[0].mxu0
        %v7893 = vadd.f32 %v6431, %v7892
        %v7894 = vpop.f32.mrb[0].mxu0
        %v7895 = vadd.f32 %v6435, %v7894
        %v7896 = vpop.f32.mrb[0].mxu0
        %v7897 = vadd.f32 %v6431, %v7896
        %v7898 = vpop.f32.mrb[0].mxu0
        %v7899 = vadd.f32 %v6435, %v7898
        %7900 = vmatprep.mubr.bf16.mxu0 %v752
        %7901 = vmatmul.mubr.bf16.gmra.mrb[0].mxu0 %v751
        %v7902 = vpop.f32.mrb[0].mxu0
        %v7903 = vadd.f32 %v6431, %v7902
        %v7904 = vpop.f32.mrb[0].mxu0
        %v7905 = vadd.f32 %v6435, %v7904
        %v7906 = vpop.f32.mrb[0].mxu0
        %v7907 = vadd.f32 %v6431, %v7906
        %v7908 = vpop.f32.mrb[0].mxu0
        %v7909 = vadd.f32 %v6435, %v7908
        %7910 = vmatprep.mubr.bf16.mxu0 %v760
        %7911 = vmatmul.mubr.bf16.gmra.mrb[0].mxu0 %v759
        %v7912 = vpop.f32.mrb[0].mxu0
        %v7913 = vadd.f32 %v6431, %v7912
        %v7914 = vpop.f32.mrb[0].mxu0
        %v7915 = vadd.f32 %v6435, %v7914
        %v7916 = vpop.f32.mrb[0].mxu0
        %v7917 = vadd.f32 %v6431, %v7916
        %v7918 = vpop.f32.mrb[0].mxu0
        %v7919 = vadd.f32 %v6435, %v7918
        %7920 = vdwg.mxu0
        %7921 = vmatprep.subr.bf16.mxu0 %v7281
        %7922 = vmatpush1.bf16.msra.mxu0 %v7280
        %7923 = vmatprep.subr.bf16.mxu0 %v7285
        %7924 = vmatpush1.bf16.msra.mxu0 %v7284
        %7925 = vmatprep.subr.bf16.mxu0 %v7289
        %7926 = vmatpush1.bf16.msra.mxu0 %v7288
        %7927 = vmatprep.subr.bf16.mxu0 %v7293
        %7928 = vmatpush1.bf16.msra.mxu0 %v7292
        %7929 = vmatprep.subr.bf16.mxu0 %v7297
        %7930 = vmatpush1.bf16.msra.mxu0 %v7296
        %7931 = vmatprep.subr.bf16.mxu0 %v7301
        %7932 = vmatpush1.bf16.msra.mxu0 %v7300
        %7933 = vmatprep.subr.bf16.mxu0 %v7305
        %7934 = vmatpush1.bf16.msra.mxu0 %v7304
        %7935 = vmatprep.subr.bf16.mxu0 %v7309
        %7936 = vmatpush1.bf16.msra.mxu0 %v7308
        %7937 = vmatprep.subr.bf16.mxu0 %v7313
        %7938 = vmatpush1.bf16.msra.mxu0 %v7312
        %7939 = vmatprep.subr.bf16.mxu0 %v7317
        %7940 = vmatpush1.bf16.msra.mxu0 %v7316
        %7941 = vmatprep.subr.bf16.mxu0 %v7321
        %7942 = vmatpush1.bf16.msra.mxu0 %v7320
        %7943 = vmatprep.subr.bf16.mxu0 %v7325
        %7944 = vmatpush1.bf16.msra.mxu0 %v7324
        %7945 = vmatprep.subr.bf16.mxu0 %v7329
        %7946 = vmatpush1.bf16.msra.mxu0 %v7328
        %7947 = vmatprep.subr.bf16.mxu0 %v7333
        %7948 = vmatpush1.bf16.msra.mxu0 %v7332
        %7949 = vmatprep.subr.bf16.mxu0 %v7337
        %7950 = vmatpush1.bf16.msra.mxu0 %v7336
        %7951 = vmatprep.subr.bf16.mxu0 %v7341
        %7952 = vmatpush1.bf16.msra.mxu0 %v7340
        %7953 = vmatprep.mubr.bf16.mxu0 %v642
        %7954 = vmatmul.mubr.bf16.gmra.mrb[0].mxu0 %v641
        %v7955 = vpop.f32.mrb[0].mxu0
        %v7956 = vadd.f32 %v7763, %v7955
        %v7957 = vpop.f32.mrb[0].mxu0
        %v7958 = vadd.f32 %v7765, %v7957
        %v7959 = vpop.f32.mrb[0].mxu0
        %v7960 = vadd.f32 %v7767, %v7959
        %v7961 = vpop.f32.mrb[0].mxu0
        %v7962 = vadd.f32 %v7769, %v7961
        %7963 = vmatprep.mubr.bf16.mxu0 %v650
        %7964 = vmatmul.mubr.bf16.gmra.mrb[0].mxu0 %v649
        %v7965 = vpop.f32.mrb[0].mxu0
        %v7966 = vadd.f32 %v7773, %v7965
        %v7967 = vpop.f32.mrb[0].mxu0
        %v7968 = vadd.f32 %v7775, %v7967
        %v7969 = vpop.f32.mrb[0].mxu0
        %v7970 = vadd.f32 %v7777, %v7969
        %v7971 = vpop.f32.mrb[0].mxu0
        %v7972 = vadd.f32 %v7779, %v7971
        %7973 = vmatprep.mubr.bf16.mxu0 %v658
        %7974 = vmatmul.mubr.bf16.gmra.mrb[0].mxu0 %v657
        %v7975 = vpop.f32.mrb[0].mxu0
        %v7976 = vadd.f32 %v7783, %v7975
        %v7977 = vpop.f32.mrb[0].mxu0
        %v7978 = vadd.f32 %v7785, %v7977
        %v7979 = vpop.f32.mrb[0].mxu0
        %v7980 = vadd.f32 %v7787, %v7979
        %v7981 = vpop.f32.mrb[0].mxu0
        %v7982 = vadd.f32 %v7789, %v7981
        %7983 = vmatprep.mubr.bf16.mxu0 %v666
        %7984 = vmatmul.mubr.bf16.gmra.mrb[0].mxu0 %v665
        %v7985 = vpop.f32.mrb[0].mxu0
        %v7986 = vadd.f32 %v7793, %v7985
        %v7987 = vpop.f32.mrb[0].mxu0
        %v7988 = vadd.f32 %v7795, %v7987
        %v7989 = vpop.f32.mrb[0].mxu0
        %v7990 = vadd.f32 %v7797, %v7989
        %v7991 = vpop.f32.mrb[0].mxu0
        %v7992 = vadd.f32 %v7799, %v7991
        %7993 = vmatprep.mubr.bf16.mxu0 %v674
        %7994 = vmatmul.mubr.bf16.gmra.mrb[0].mxu0 %v673
        %v7995 = vpop.f32.mrb[0].mxu0
        %v7996 = vadd.f32 %v7803, %v7995
        %v7997 = vpop.f32.mrb[0].mxu0
        %v7998 = vadd.f32 %v7805, %v7997
        %v7999 = vpop.f32.mrb[0].mxu0
        %v8000 = vadd.f32 %v7807, %v7999
        %v8001 = vpop.f32.mrb[0].mxu0
        %v8002 = vadd.f32 %v7809, %v8001
        %8003 = vmatprep.mubr.bf16.mxu0 %v682
        %8004 = vmatmul.mubr.bf16.gmra.mrb[0].mxu0 %v681
        %v8005 = vpop.f32.mrb[0].mxu0
        %v8006 = vadd.f32 %v7813, %v8005
        %v8007 = vpop.f32.mrb[0].mxu0
        %v8008 = vadd.f32 %v7815, %v8007
        %v8009 = vpop.f32.mrb[0].mxu0
        %v8010 = vadd.f32 %v7817, %v8009
        %v8011 = vpop.f32.mrb[0].mxu0
        %v8012 = vadd.f32 %v7819, %v8011
        %8013 = vmatprep.mubr.bf16.mxu0 %v690
        %8014 = vmatmul.mubr.bf16.gmra.mrb[0].mxu0 %v689
        %v8015 = vpop.f32.mrb[0].mxu0
        %v8016 = vadd.f32 %v7823, %v8015
        %v8017 = vpop.f32.mrb[0].mxu0
        %v8018 = vadd.f32 %v7825, %v8017
        %v8019 = vpop.f32.mrb[0].mxu0
        %v8020 = vadd.f32 %v7827, %v8019
        %v8021 = vpop.f32.mrb[0].mxu0
        %v8022 = vadd.f32 %v7829, %v8021
        %8023 = vmatprep.mubr.bf16.mxu0 %v698
        %8024 = vmatmul.mubr.bf16.gmra.mrb[0].mxu0 %v697
        %v8025 = vpop.f32.mrb[0].mxu0
        %v8026 = vadd.f32 %v7833, %v8025
        %v8027 = vpop.f32.mrb[0].mxu0
        %v8028 = vadd.f32 %v7835, %v8027
        %v8029 = vpop.f32.mrb[0].mxu0
        %v8030 = vadd.f32 %v7837, %v8029
        %v8031 = vpop.f32.mrb[0].mxu0
        %v8032 = vadd.f32 %v7839, %v8031
        %8033 = vmatprep.mubr.bf16.mxu0 %v706
        %8034 = vmatmul.mubr.bf16.gmra.mrb[0].mxu0 %v705
        %v8035 = vpop.f32.mrb[0].mxu0
        %v8036 = vadd.f32 %v7843, %v8035
        %v8037 = vpop.f32.mrb[0].mxu0
        %v8038 = vadd.f32 %v7845, %v8037
        %v8039 = vpop.f32.mrb[0].mxu0
        %v8040 = vadd.f32 %v7847, %v8039
        %v8041 = vpop.f32.mrb[0].mxu0
        %v8042 = vadd.f32 %v7849, %v8041
        %8043 = vmatprep.mubr.bf16.mxu0 %v714
        %8044 = vmatmul.mubr.bf16.gmra.mrb[0].mxu0 %v713
        %v8045 = vpop.f32.mrb[0].mxu0
        %v8046 = vadd.f32 %v7853, %v8045
        %v8047 = vpop.f32.mrb[0].mxu0
        %v8048 = vadd.f32 %v7855, %v8047
        %v8049 = vpop.f32.mrb[0].mxu0
        %v8050 = vadd.f32 %v7857, %v8049
        %v8051 = vpop.f32.mrb[0].mxu0
        %v8052 = vadd.f32 %v7859, %v8051
        %8053 = vmatprep.mubr.bf16.mxu0 %v722
        %8054 = vmatmul.mubr.bf16.gmra.mrb[0].mxu0 %v721
        %v8055 = vpop.f32.mrb[0].mxu0
        %v8056 = vadd.f32 %v7863, %v8055
        %v8057 = vpop.f32.mrb[0].mxu0
        %v8058 = vadd.f32 %v7865, %v8057
        %v8059 = vpop.f32.mrb[0].mxu0
        %v8060 = vadd.f32 %v7867, %v8059
        %v8061 = vpop.f32.mrb[0].mxu0
        %v8062 = vadd.f32 %v7869, %v8061
        %8063 = vmatprep.mubr.bf16.mxu0 %v730
        %8064 = vmatmul.mubr.bf16.gmra.mrb[0].mxu0 %v729
        %v8065 = vpop.f32.mrb[0].mxu0
        %v8066 = vadd.f32 %v7873, %v8065
        %v8067 = vpop.f32.mrb[0].mxu0
        %v8068 = vadd.f32 %v7875, %v8067
        %v8069 = vpop.f32.mrb[0].mxu0
        %v8070 = vadd.f32 %v7877, %v8069
        %v8071 = vpop.f32.mrb[0].mxu0
        %v8072 = vadd.f32 %v7879, %v8071
        %8073 = vmatprep.mubr.bf16.mxu0 %v738
        %8074 = vmatmul.mubr.bf16.gmra.mrb[0].mxu0 %v737
        %v8075 = vpop.f32.mrb[0].mxu0
        %v8076 = vadd.f32 %v7883, %v8075
        %v8077 = vpop.f32.mrb[0].mxu0
        %v8078 = vadd.f32 %v7885, %v8077
        %v8079 = vpop.f32.mrb[0].mxu0
        %v8080 = vadd.f32 %v7887, %v8079
        %v8081 = vpop.f32.mrb[0].mxu0
        %v8082 = vadd.f32 %v7889, %v8081
        %8083 = vmatprep.mubr.bf16.mxu0 %v746
        %8084 = vmatmul.mubr.bf16.gmra.mrb[0].mxu0 %v745
        %v8085 = vpop.f32.mrb[0].mxu0
        %v8086 = vadd.f32 %v7893, %v8085
        %v8087 = vpop.f32.mrb[0].mxu0
        %v8088 = vadd.f32 %v7895, %v8087
        %v8089 = vpop.f32.mrb[0].mxu0
        %v8090 = vadd.f32 %v7897, %v8089
        %v8091 = vpop.f32.mrb[0].mxu0
        %v8092 = vadd.f32 %v7899, %v8091
        %8093 = vmatprep.mubr.bf16.mxu0 %v754
        %8094 = vmatmul.mubr.bf16.gmra.mrb[0].mxu0 %v753
        %v8095 = vpop.f32.mrb[0].mxu0
        %v8096 = vadd.f32 %v7903, %v8095
        %v8097 = vpop.f32.mrb[0].mxu0
        %v8098 = vadd.f32 %v7905, %v8097
        %v8099 = vpop.f32.mrb[0].mxu0
        %v8100 = vadd.f32 %v7907, %v8099
        %v8101 = vpop.f32.mrb[0].mxu0
        %v8102 = vadd.f32 %v7909, %v8101
        %8103 = vmatprep.mubr.bf16.mxu0 %v762
        %8104 = vmatmul.mubr.bf16.gmra.mrb[0].mxu0 %v761
        %v8105 = vpop.f32.mrb[0].mxu0
        %v8106 = vadd.f32 %v7913, %v8105
        %v8107 = vpop.f32.mrb[0].mxu0
        %v8108 = vadd.f32 %v7915, %v8107
        %v8109 = vpop.f32.mrb[0].mxu0
        %v8110 = vadd.f32 %v7917, %v8109
        %v8111 = vpop.f32.mrb[0].mxu0
        %v8112 = vadd.f32 %v7919, %v8111
        %8113 = vdwg.mxu0
        %8114 = vmatprep.subr.bf16.mxu0 %v7345
        %8115 = vmatpush1.bf16.msra.mxu0 %v7344
        %8116 = vmatprep.subr.bf16.mxu0 %v7349
        %8117 = vmatpush1.bf16.msra.mxu0 %v7348
        %8118 = vmatprep.subr.bf16.mxu0 %v7353
        %8119 = vmatpush1.bf16.msra.mxu0 %v7352
        %8120 = vmatprep.subr.bf16.mxu0 %v7357
        %8121 = vmatpush1.bf16.msra.mxu0 %v7356
        %8122 = vmatprep.subr.bf16.mxu0 %v7361
        %8123 = vmatpush1.bf16.msra.mxu0 %v7360
        %8124 = vmatprep.subr.bf16.mxu0 %v7365
        %8125 = vmatpush1.bf16.msra.mxu0 %v7364
        %8126 = vmatprep.subr.bf16.mxu0 %v7369
        %8127 = vmatpush1.bf16.msra.mxu0 %v7368
        %8128 = vmatprep.subr.bf16.mxu0 %v7373
        %8129 = vmatpush1.bf16.msra.mxu0 %v7372
        %8130 = vmatprep.subr.bf16.mxu0 %v7377
        %8131 = vmatpush1.bf16.msra.mxu0 %v7376
        %8132 = vmatprep.subr.bf16.mxu0 %v7381
        %8133 = vmatpush1.bf16.msra.mxu0 %v7380
        %8134 = vmatprep.subr.bf16.mxu0 %v7385
        %8135 = vmatpush1.bf16.msra.mxu0 %v7384
        %8136 = vmatprep.subr.bf16.mxu0 %v7389
        %8137 = vmatpush1.bf16.msra.mxu0 %v7388
        %8138 = vmatprep.subr.bf16.mxu0 %v7393
        %8139 = vmatpush1.bf16.msra.mxu0 %v7392
        %8140 = vmatprep.subr.bf16.mxu0 %v7397
        %8141 = vmatpush1.bf16.msra.mxu0 %v7396
        %8142 = vmatprep.subr.bf16.mxu0 %v7401
        %8143 = vmatpush1.bf16.msra.mxu0 %v7400
        %8144 = vmatprep.subr.bf16.mxu0 %v7405
        %8145 = vmatpush1.bf16.msra.mxu0 %v7404
        %8146 = vmatprep.mubr.bf16.mxu0 %v644
        %8147 = vmatmul.mubr.bf16.gmra.mrb[0].mxu0 %v643
        %v8148 = vpop.f32.mrb[0].mxu0
        %v8149 = vadd.f32 %v7956, %v8148
        %v8150 = vpop.f32.mrb[0].mxu0
        %v8151 = vadd.f32 %v7958, %v8150
        %v8152 = vpop.f32.mrb[0].mxu0
        %v8153 = vadd.f32 %v7960, %v8152
        %v8154 = vpop.f32.mrb[0].mxu0
        %v8155 = vadd.f32 %v7962, %v8154
        %8156 = vmatprep.mubr.bf16.mxu0 %v652
        %8157 = vmatmul.mubr.bf16.gmra.mrb[0].mxu0 %v651
        %v8158 = vpop.f32.mrb[0].mxu0
        %v8159 = vadd.f32 %v7966, %v8158
        %v8160 = vpop.f32.mrb[0].mxu0
        %v8161 = vadd.f32 %v7968, %v8160
        %v8162 = vpop.f32.mrb[0].mxu0
        %v8163 = vadd.f32 %v7970, %v8162
        %v8164 = vpop.f32.mrb[0].mxu0
        %v8165 = vadd.f32 %v7972, %v8164
        %8166 = vmatprep.mubr.bf16.mxu0 %v660
        %8167 = vmatmul.mubr.bf16.gmra.mrb[0].mxu0 %v659
        %v8168 = vpop.f32.mrb[0].mxu0
        %v8169 = vadd.f32 %v7976, %v8168
        %v8170 = vpop.f32.mrb[0].mxu0
        %v8171 = vadd.f32 %v7978, %v8170
        %v8172 = vpop.f32.mrb[0].mxu0
        %v8173 = vadd.f32 %v7980, %v8172
        %v8174 = vpop.f32.mrb[0].mxu0
        %v8175 = vadd.f32 %v7982, %v8174
        %8176 = vmatprep.mubr.bf16.mxu0 %v668
        %8177 = vmatmul.mubr.bf16.gmra.mrb[0].mxu0 %v667
        %v8178 = vpop.f32.mrb[0].mxu0
        %v8179 = vadd.f32 %v7986, %v8178
        %v8180 = vpop.f32.mrb[0].mxu0
        %v8181 = vadd.f32 %v7988, %v8180
        %v8182 = vpop.f32.mrb[0].mxu0
        %v8183 = vadd.f32 %v7990, %v8182
        %v8184 = vpop.f32.mrb[0].mxu0
        %v8185 = vadd.f32 %v7992, %v8184
        %8186 = vmatprep.mubr.bf16.mxu0 %v676
        %8187 = vmatmul.mubr.bf16.gmra.mrb[0].mxu0 %v675
        %v8188 = vpop.f32.mrb[0].mxu0
        %v8189 = vadd.f32 %v7996, %v8188
        %v8190 = vpop.f32.mrb[0].mxu0
        %v8191 = vadd.f32 %v7998, %v8190
        %v8192 = vpop.f32.mrb[0].mxu0
        %v8193 = vadd.f32 %v8000, %v8192
        %v8194 = vpop.f32.mrb[0].mxu0
        %v8195 = vadd.f32 %v8002, %v8194
        %8196 = vmatprep.mubr.bf16.mxu0 %v684
        %8197 = vmatmul.mubr.bf16.gmra.mrb[0].mxu0 %v683
        %v8198 = vpop.f32.mrb[0].mxu0
        %v8199 = vadd.f32 %v8006, %v8198
        %v8200 = vpop.f32.mrb[0].mxu0
        %v8201 = vadd.f32 %v8008, %v8200
        %v8202 = vpop.f32.mrb[0].mxu0
        %v8203 = vadd.f32 %v8010, %v8202
        %v8204 = vpop.f32.mrb[0].mxu0
        %v8205 = vadd.f32 %v8012, %v8204
        %8206 = vmatprep.mubr.bf16.mxu0 %v692
        %8207 = vmatmul.mubr.bf16.gmra.mrb[0].mxu0 %v691
        %v8208 = vpop.f32.mrb[0].mxu0
        %v8209 = vadd.f32 %v8016, %v8208
        %v8210 = vpop.f32.mrb[0].mxu0
        %v8211 = vadd.f32 %v8018, %v8210
        %v8212 = vpop.f32.mrb[0].mxu0
        %v8213 = vadd.f32 %v8020, %v8212
        %v8214 = vpop.f32.mrb[0].mxu0
        %v8215 = vadd.f32 %v8022, %v8214
        %8216 = vmatprep.mubr.bf16.mxu0 %v700
        %8217 = vmatmul.mubr.bf16.gmra.mrb[0].mxu0 %v699
        %v8218 = vpop.f32.mrb[0].mxu0
        %v8219 = vadd.f32 %v8026, %v8218
        %v8220 = vpop.f32.mrb[0].mxu0
        %v8221 = vadd.f32 %v8028, %v8220
        %v8222 = vpop.f32.mrb[0].mxu0
        %v8223 = vadd.f32 %v8030, %v8222
        %v8224 = vpop.f32.mrb[0].mxu0
        %v8225 = vadd.f32 %v8032, %v8224
        %8226 = vmatprep.mubr.bf16.mxu0 %v708
        %8227 = vmatmul.mubr.bf16.gmra.mrb[0].mxu0 %v707
        %v8228 = vpop.f32.mrb[0].mxu0
        %v8229 = vadd.f32 %v8036, %v8228
        %v8230 = vpop.f32.mrb[0].mxu0
        %v8231 = vadd.f32 %v8038, %v8230
        %v8232 = vpop.f32.mrb[0].mxu0
        %v8233 = vadd.f32 %v8040, %v8232
        %v8234 = vpop.f32.mrb[0].mxu0
        %v8235 = vadd.f32 %v8042, %v8234
        %8236 = vmatprep.mubr.bf16.mxu0 %v716
        %8237 = vmatmul.mubr.bf16.gmra.mrb[0].mxu0 %v715
        %v8238 = vpop.f32.mrb[0].mxu0
        %v8239 = vadd.f32 %v8046, %v8238
        %v8240 = vpop.f32.mrb[0].mxu0
        %v8241 = vadd.f32 %v8048, %v8240
        %v8242 = vpop.f32.mrb[0].mxu0
        %v8243 = vadd.f32 %v8050, %v8242
        %v8244 = vpop.f32.mrb[0].mxu0
        %v8245 = vadd.f32 %v8052, %v8244
        %8246 = vmatprep.mubr.bf16.mxu0 %v724
        %8247 = vmatmul.mubr.bf16.gmra.mrb[0].mxu0 %v723
        %v8248 = vpop.f32.mrb[0].mxu0
        %v8249 = vadd.f32 %v8056, %v8248
        %v8250 = vpop.f32.mrb[0].mxu0
        %v8251 = vadd.f32 %v8058, %v8250
        %v8252 = vpop.f32.mrb[0].mxu0
        %v8253 = vadd.f32 %v8060, %v8252
        %v8254 = vpop.f32.mrb[0].mxu0
        %v8255 = vadd.f32 %v8062, %v8254
        %8256 = vmatprep.mubr.bf16.mxu0 %v732
        %8257 = vmatmul.mubr.bf16.gmra.mrb[0].mxu0 %v731
        %v8258 = vpop.f32.mrb[0].mxu0
        %v8259 = vadd.f32 %v8066, %v8258
        %v8260 = vpop.f32.mrb[0].mxu0
        %v8261 = vadd.f32 %v8068, %v8260
        %v8262 = vpop.f32.mrb[0].mxu0
        %v8263 = vadd.f32 %v8070, %v8262
        %v8264 = vpop.f32.mrb[0].mxu0
        %v8265 = vadd.f32 %v8072, %v8264
        %8266 = vmatprep.mubr.bf16.mxu0 %v740
        %8267 = vmatmul.mubr.bf16.gmra.mrb[0].mxu0 %v739
        %v8268 = vpop.f32.mrb[0].mxu0
        %v8269 = vadd.f32 %v8076, %v8268
        %v8270 = vpop.f32.mrb[0].mxu0
        %v8271 = vadd.f32 %v8078, %v8270
        %v8272 = vpop.f32.mrb[0].mxu0
        %v8273 = vadd.f32 %v8080, %v8272
        %v8274 = vpop.f32.mrb[0].mxu0
        %v8275 = vadd.f32 %v8082, %v8274
        %8276 = vmatprep.mubr.bf16.mxu0 %v748
        %8277 = vmatmul.mubr.bf16.gmra.mrb[0].mxu0 %v747
        %v8278 = vpop.f32.mrb[0].mxu0
        %v8279 = vadd.f32 %v8086, %v8278
        %v8280 = vpop.f32.mrb[0].mxu0
        %v8281 = vadd.f32 %v8088, %v8280
        %v8282 = vpop.f32.mrb[0].mxu0
        %v8283 = vadd.f32 %v8090, %v8282
        %v8284 = vpop.f32.mrb[0].mxu0
        %v8285 = vadd.f32 %v8092, %v8284
        %8286 = vmatprep.mubr.bf16.mxu0 %v756
        %8287 = vmatmul.mubr.bf16.gmra.mrb[0].mxu0 %v755
        %v8288 = vpop.f32.mrb[0].mxu0
        %v8289 = vadd.f32 %v8096, %v8288
        %v8290 = vpop.f32.mrb[0].mxu0
        %v8291 = vadd.f32 %v8098, %v8290
        %v8292 = vpop.f32.mrb[0].mxu0
        %v8293 = vadd.f32 %v8100, %v8292
        %v8294 = vpop.f32.mrb[0].mxu0
        %v8295 = vadd.f32 %v8102, %v8294
        %8296 = vmatprep.mubr.bf16.mxu0 %v764
        %8297 = vmatmul.mubr.bf16.gmra.mrb[0].mxu0 %v763
        %v8298 = vpop.f32.mrb[0].mxu0
        %v8299 = vadd.f32 %v8106, %v8298
        %v8300 = vpop.f32.mrb[0].mxu0
        %v8301 = vadd.f32 %v8108, %v8300
        %v8302 = vpop.f32.mrb[0].mxu0
        %v8303 = vadd.f32 %v8110, %v8302
        %v8304 = vpop.f32.mrb[0].mxu0
        %v8305 = vadd.f32 %v8112, %v8304
        %8306 = vdwg.mxu0
        %8307 = vmatprep.subr.bf16.mxu0 %v7409
        %8308 = vmatpush1.bf16.msra.mxu0 %v7408
        %8309 = vmatprep.subr.bf16.mxu0 %v7413
        %8310 = vmatpush1.bf16.msra.mxu0 %v7412
        %8311 = vmatprep.subr.bf16.mxu0 %v7417
        %8312 = vmatpush1.bf16.msra.mxu0 %v7416
        %8313 = vmatprep.subr.bf16.mxu0 %v7421
        %8314 = vmatpush1.bf16.msra.mxu0 %v7420
        %8315 = vmatprep.subr.bf16.mxu0 %v7425
        %8316 = vmatpush1.bf16.msra.mxu0 %v7424
        %8317 = vmatprep.subr.bf16.mxu0 %v7429
        %8318 = vmatpush1.bf16.msra.mxu0 %v7428
        %8319 = vmatprep.subr.bf16.mxu0 %v7433
        %8320 = vmatpush1.bf16.msra.mxu0 %v7432
        %8321 = vmatprep.subr.bf16.mxu0 %v7437
        %8322 = vmatpush1.bf16.msra.mxu0 %v7436
        %8323 = vmatprep.subr.bf16.mxu0 %v7441
        %8324 = vmatpush1.bf16.msra.mxu0 %v7440
        %8325 = vmatprep.subr.bf16.mxu0 %v7445
        %8326 = vmatpush1.bf16.msra.mxu0 %v7444
        %8327 = vmatprep.subr.bf16.mxu0 %v7449
        %8328 = vmatpush1.bf16.msra.mxu0 %v7448
        %8329 = vmatprep.subr.bf16.mxu0 %v7453
        %8330 = vmatpush1.bf16.msra.mxu0 %v7452
        %8331 = vmatprep.subr.bf16.mxu0 %v7457
        %8332 = vmatpush1.bf16.msra.mxu0 %v7456
        %8333 = vmatprep.subr.bf16.mxu0 %v7461
        %8334 = vmatpush1.bf16.msra.mxu0 %v7460
        %8335 = vmatprep.subr.bf16.mxu0 %v7465
        %8336 = vmatpush1.bf16.msra.mxu0 %v7464
        %8337 = vmatprep.subr.bf16.mxu0 %v7469
        %8338 = vmatpush1.bf16.msra.mxu0 %v7468
        %8339 = vmatprep.mubr.bf16.mxu0 %v646
        %8340 = vmatmul.mubr.bf16.gmra.mrb[0].mxu0 %v645
        %v8341 = vpop.f32.mrb[0].mxu0
        %v8342 = vadd.f32 %v8149, %v8341
        %v8343 = vpop.f32.mrb[0].mxu0
        %v8344 = vadd.f32 %v8151, %v8343
        %v8345 = vpop.f32.mrb[0].mxu0
        %v8346 = vadd.f32 %v8153, %v8345
        %v8347 = vpop.f32.mrb[0].mxu0
        %v8348 = vadd.f32 %v8155, %v8347
        %8349 = vmatprep.mubr.bf16.mxu0 %v654
        %8350 = vmatmul.mubr.bf16.gmra.mrb[0].mxu0 %v653
        %v8351 = vpop.f32.mrb[0].mxu0
        %v8352 = vadd.f32 %v8159, %v8351
        %v8353 = vpop.f32.mrb[0].mxu0
        %v8354 = vadd.f32 %v8161, %v8353
        %v8355 = vpop.f32.mrb[0].mxu0
        %v8356 = vadd.f32 %v8163, %v8355
        %v8357 = vpop.f32.mrb[0].mxu0
        %v8358 = vadd.f32 %v8165, %v8357
        %8359 = vmatprep.mubr.bf16.mxu0 %v662
        %8360 = vmatmul.mubr.bf16.gmra.mrb[0].mxu0 %v661
        %v8361 = vpop.f32.mrb[0].mxu0
        %v8362 = vadd.f32 %v8169, %v8361
        %v8363 = vpop.f32.mrb[0].mxu0
        %v8364 = vadd.f32 %v8171, %v8363
        %v8365 = vpop.f32.mrb[0].mxu0
        %v8366 = vadd.f32 %v8173, %v8365
        %v8367 = vpop.f32.mrb[0].mxu0
        %v8368 = vadd.f32 %v8175, %v8367
        %8369 = vmatprep.mubr.bf16.mxu0 %v670
        %8370 = vmatmul.mubr.bf16.gmra.mrb[0].mxu0 %v669
        %v8371 = vpop.f32.mrb[0].mxu0
        %v8372 = vadd.f32 %v8179, %v8371
        %v8373 = vpop.f32.mrb[0].mxu0
        %v8374 = vadd.f32 %v8181, %v8373
        %v8375 = vpop.f32.mrb[0].mxu0
        %v8376 = vadd.f32 %v8183, %v8375
        %v8377 = vpop.f32.mrb[0].mxu0
        %v8378 = vadd.f32 %v8185, %v8377
        %8379 = vmatprep.mubr.bf16.mxu0 %v678
        %8380 = vmatmul.mubr.bf16.gmra.mrb[0].mxu0 %v677
        %v8381 = vpop.f32.mrb[0].mxu0
        %v8382 = vadd.f32 %v8189, %v8381
        %v8383 = vpop.f32.mrb[0].mxu0
        %v8384 = vadd.f32 %v8191, %v8383
        %v8385 = vpop.f32.mrb[0].mxu0
        %v8386 = vadd.f32 %v8193, %v8385
        %v8387 = vpop.f32.mrb[0].mxu0
        %v8388 = vadd.f32 %v8195, %v8387
        %8389 = vmatprep.mubr.bf16.mxu0 %v686
        %8390 = vmatmul.mubr.bf16.gmra.mrb[0].mxu0 %v685
        %v8391 = vpop.f32.mrb[0].mxu0
        %v8392 = vadd.f32 %v8199, %v8391
        %v8393 = vpop.f32.mrb[0].mxu0
        %v8394 = vadd.f32 %v8201, %v8393
        %v8395 = vpop.f32.mrb[0].mxu0
        %v8396 = vadd.f32 %v8203, %v8395
        %v8397 = vpop.f32.mrb[0].mxu0
        %v8398 = vadd.f32 %v8205, %v8397
        %8399 = vmatprep.mubr.bf16.mxu0 %v694
        %8400 = vmatmul.mubr.bf16.gmra.mrb[0].mxu0 %v693
        %v8401 = vpop.f32.mrb[0].mxu0
        %v8402 = vadd.f32 %v8209, %v8401
        %v8403 = vpop.f32.mrb[0].mxu0
        %v8404 = vadd.f32 %v8211, %v8403
        %v8405 = vpop.f32.mrb[0].mxu0
        %v8406 = vadd.f32 %v8213, %v8405
        %v8407 = vpop.f32.mrb[0].mxu0
        %v8408 = vadd.f32 %v8215, %v8407
        %8409 = vmatprep.mubr.bf16.mxu0 %v702
        %8410 = vmatmul.mubr.bf16.gmra.mrb[0].mxu0 %v701
        %v8411 = vpop.f32.mrb[0].mxu0
        %v8412 = vadd.f32 %v8219, %v8411
        %v8413 = vpop.f32.mrb[0].mxu0
        %v8414 = vadd.f32 %v8221, %v8413
        %v8415 = vpop.f32.mrb[0].mxu0
        %v8416 = vadd.f32 %v8223, %v8415
        %v8417 = vpop.f32.mrb[0].mxu0
        %v8418 = vadd.f32 %v8225, %v8417
        %8419 = vmatprep.mubr.bf16.mxu0 %v710
        %8420 = vmatmul.mubr.bf16.gmra.mrb[0].mxu0 %v709
        %v8421 = vpop.f32.mrb[0].mxu0
        %v8422 = vadd.f32 %v8229, %v8421
        %v8423 = vpop.f32.mrb[0].mxu0
        %v8424 = vadd.f32 %v8231, %v8423
        %v8425 = vpop.f32.mrb[0].mxu0
        %v8426 = vadd.f32 %v8233, %v8425
        %v8427 = vpop.f32.mrb[0].mxu0
        %v8428 = vadd.f32 %v8235, %v8427
        %8429 = vmatprep.mubr.bf16.mxu0 %v718
        %8430 = vmatmul.mubr.bf16.gmra.mrb[0].mxu0 %v717
        %v8431 = vpop.f32.mrb[0].mxu0
        %v8432 = vadd.f32 %v8239, %v8431
        %v8433 = vpop.f32.mrb[0].mxu0
        %v8434 = vadd.f32 %v8241, %v8433
        %v8435 = vpop.f32.mrb[0].mxu0
        %v8436 = vadd.f32 %v8243, %v8435
        %v8437 = vpop.f32.mrb[0].mxu0
        %v8438 = vadd.f32 %v8245, %v8437
        %8439 = vmatprep.mubr.bf16.mxu0 %v726
        %8440 = vmatmul.mubr.bf16.gmra.mrb[0].mxu0 %v725
        %v8441 = vpop.f32.mrb[0].mxu0
        %v8442 = vadd.f32 %v8249, %v8441
        %v8443 = vpop.f32.mrb[0].mxu0
        %v8444 = vadd.f32 %v8251, %v8443
        %v8445 = vpop.f32.mrb[0].mxu0
        %v8446 = vadd.f32 %v8253, %v8445
        %v8447 = vpop.f32.mrb[0].mxu0
        %v8448 = vadd.f32 %v8255, %v8447
        %8449 = vmatprep.mubr.bf16.mxu0 %v734
        %8450 = vmatmul.mubr.bf16.gmra.mrb[0].mxu0 %v733
        %v8451 = vpop.f32.mrb[0].mxu0
        %v8452 = vadd.f32 %v8259, %v8451
        %v8453 = vpop.f32.mrb[0].mxu0
        %v8454 = vadd.f32 %v8261, %v8453
        %v8455 = vpop.f32.mrb[0].mxu0
        %v8456 = vadd.f32 %v8263, %v8455
        %v8457 = vpop.f32.mrb[0].mxu0
        %v8458 = vadd.f32 %v8265, %v8457
        %8459 = vmatprep.mubr.bf16.mxu0 %v742
        %8460 = vmatmul.mubr.bf16.gmra.mrb[0].mxu0 %v741
        %v8461 = vpop.f32.mrb[0].mxu0
        %v8462 = vadd.f32 %v8269, %v8461
        %v8463 = vpop.f32.mrb[0].mxu0
        %v8464 = vadd.f32 %v8271, %v8463
        %v8465 = vpop.f32.mrb[0].mxu0
        %v8466 = vadd.f32 %v8273, %v8465
        %v8467 = vpop.f32.mrb[0].mxu0
        %v8468 = vadd.f32 %v8275, %v8467
        %8469 = vmatprep.mubr.bf16.mxu0 %v750
        %8470 = vmatmul.mubr.bf16.gmra.mrb[0].mxu0 %v749
        %v8471 = vpop.f32.mrb[0].mxu0
        %v8472 = vadd.f32 %v8279, %v8471
        %v8473 = vpop.f32.mrb[0].mxu0
        %v8474 = vadd.f32 %v8281, %v8473
        %v8475 = vpop.f32.mrb[0].mxu0
        %v8476 = vadd.f32 %v8283, %v8475
        %v8477 = vpop.f32.mrb[0].mxu0
        %v8478 = vadd.f32 %v8285, %v8477
        %8479 = vmatprep.mubr.bf16.mxu0 %v758
        %8480 = vmatmul.mubr.bf16.gmra.mrb[0].mxu0 %v757
        %v8481 = vpop.f32.mrb[0].mxu0
        %v8482 = vadd.f32 %v8289, %v8481
        %v8483 = vpop.f32.mrb[0].mxu0
        %v8484 = vadd.f32 %v8291, %v8483
        %v8485 = vpop.f32.mrb[0].mxu0
        %v8486 = vadd.f32 %v8293, %v8485
        %v8487 = vpop.f32.mrb[0].mxu0
        %v8488 = vadd.f32 %v8295, %v8487
        %8489 = vmatprep.mubr.bf16.mxu0 %v766
        %8490 = vmatmul.mubr.bf16.gmra.mrb[0].mxu0 %v765
        %v8491 = vpop.f32.mrb[0].mxu0
        %v8492 = vadd.f32 %v8299, %v8491
        %v8493 = vpop.f32.mrb[0].mxu0
        %v8494 = vadd.f32 %v8301, %v8493
        %v8495 = vpop.f32.mrb[0].mxu0
        %v8496 = vadd.f32 %v8303, %v8495
        %v8497 = vpop.f32.mrb[0].mxu0
        %v8498 = vadd.f32 %v8305, %v8497
        %8499 = vdwg.mxu0
        %8500 = vmatprep.subr.bf16.mxu0 %v7219
        %8501 = vmatpush1.bf16.msra.mxu0 %v7218
        %8502 = vmatprep.subr.bf16.mxu0 %v7223
        %8503 = vmatpush1.bf16.msra.mxu0 %v7222
        %8504 = vmatprep.subr.bf16.mxu0 %v7227
        %8505 = vmatpush1.bf16.msra.mxu0 %v7226
        %8506 = vmatprep.subr.bf16.mxu0 %v7231
        %8507 = vmatpush1.bf16.msra.mxu0 %v7230
        %8508 = vmatprep.subr.bf16.mxu0 %v7235
        %8509 = vmatpush1.bf16.msra.mxu0 %v7234
        %8510 = vmatprep.subr.bf16.mxu0 %v7239
        %8511 = vmatpush1.bf16.msra.mxu0 %v7238
        %8512 = vmatprep.subr.bf16.mxu0 %v7243
        %8513 = vmatpush1.bf16.msra.mxu0 %v7242
        %8514 = vmatprep.subr.bf16.mxu0 %v7247
        %8515 = vmatpush1.bf16.msra.mxu0 %v7246
        %8516 = vmatprep.subr.bf16.mxu0 %v7251
        %8517 = vmatpush1.bf16.msra.mxu0 %v7250
        %8518 = vmatprep.subr.bf16.mxu0 %v7255
        %8519 = vmatpush1.bf16.msra.mxu0 %v7254
        %8520 = vmatprep.subr.bf16.mxu0 %v7259
        %8521 = vmatpush1.bf16.msra.mxu0 %v7258
        %8522 = vmatprep.subr.bf16.mxu0 %v7263
        %8523 = vmatpush1.bf16.msra.mxu0 %v7262
        %8524 = vmatprep.subr.bf16.mxu0 %v7267
        %8525 = vmatpush1.bf16.msra.mxu0 %v7266
        %8526 = vmatprep.subr.bf16.mxu0 %v7271
        %8527 = vmatpush1.bf16.msra.mxu0 %v7270
        %8528 = vmatprep.subr.bf16.mxu0 %v7275
        %8529 = vmatpush1.bf16.msra.mxu0 %v7274
        %8530 = vmatprep.subr.bf16.mxu0 %v7279
        %8531 = vmatpush1.bf16.msra.mxu0 %v7278
        %8532 = vmatprep.mubr.bf16.mxu0 %v640
        %8533 = vmatmul.mubr.bf16.gmra.mrb[0].mxu0 %v639
        %v8534 = vpop.f32.mrb[0].mxu0
        %v8535 = vadd.f32 %v6439, %v8534
        %v8536 = vpop.f32.mrb[0].mxu0
        %v8537 = vadd.f32 %v6443, %v8536
        %v8538 = vpop.f32.mrb[0].mxu0
        %v8539 = vadd.f32 %v6439, %v8538
        %v8540 = vpop.f32.mrb[0].mxu0
        %v8541 = vadd.f32 %v6443, %v8540
        %8542 = vmatprep.mubr.bf16.mxu0 %v648
        %8543 = vmatmul.mubr.bf16.gmra.mrb[0].mxu0 %v647
        %v8544 = vpop.f32.mrb[0].mxu0
        %v8545 = vadd.f32 %v6439, %v8544
        %v8546 = vpop.f32.mrb[0].mxu0
        %v8547 = vadd.f32 %v6443, %v8546
        %v8548 = vpop.f32.mrb[0].mxu0
        %v8549 = vadd.f32 %v6439, %v8548
        %v8550 = vpop.f32.mrb[0].mxu0
        %v8551 = vadd.f32 %v6443, %v8550
        %8552 = vmatprep.mubr.bf16.mxu0 %v656
        %8553 = vmatmul.mubr.bf16.gmra.mrb[0].mxu0 %v655
        %v8554 = vpop.f32.mrb[0].mxu0
        %v8555 = vadd.f32 %v6439, %v8554
        %v8556 = vpop.f32.mrb[0].mxu0
        %v8557 = vadd.f32 %v6443, %v8556
        %v8558 = vpop.f32.mrb[0].mxu0
        %v8559 = vadd.f32 %v6439, %v8558
        %v8560 = vpop.f32.mrb[0].mxu0
        %v8561 = vadd.f32 %v6443, %v8560
        %8562 = vmatprep.mubr.bf16.mxu0 %v664
        %8563 = vmatmul.mubr.bf16.gmra.mrb[0].mxu0 %v663
        %v8564 = vpop.f32.mrb[0].mxu0
        %v8565 = vadd.f32 %v6439, %v8564
        %v8566 = vpop.f32.mrb[0].mxu0
        %v8567 = vadd.f32 %v6443, %v8566
        %v8568 = vpop.f32.mrb[0].mxu0
        %v8569 = vadd.f32 %v6439, %v8568
        %v8570 = vpop.f32.mrb[0].mxu0
        %v8571 = vadd.f32 %v6443, %v8570
        %8572 = vmatprep.mubr.bf16.mxu0 %v672
        %8573 = vmatmul.mubr.bf16.gmra.mrb[0].mxu0 %v671
        %v8574 = vpop.f32.mrb[0].mxu0
        %v8575 = vadd.f32 %v6439, %v8574
        %v8576 = vpop.f32.mrb[0].mxu0
        %v8577 = vadd.f32 %v6443, %v8576
        %v8578 = vpop.f32.mrb[0].mxu0
        %v8579 = vadd.f32 %v6439, %v8578
        %v8580 = vpop.f32.mrb[0].mxu0
        %v8581 = vadd.f32 %v6443, %v8580
        %8582 = vmatprep.mubr.bf16.mxu0 %v680
        %8583 = vmatmul.mubr.bf16.gmra.mrb[0].mxu0 %v679
        %v8584 = vpop.f32.mrb[0].mxu0
        %v8585 = vadd.f32 %v6439, %v8584
        %v8586 = vpop.f32.mrb[0].mxu0
        %v8587 = vadd.f32 %v6443, %v8586
        %v8588 = vpop.f32.mrb[0].mxu0
        %v8589 = vadd.f32 %v6439, %v8588
        %v8590 = vpop.f32.mrb[0].mxu0
        %v8591 = vadd.f32 %v6443, %v8590
        %8592 = vmatprep.mubr.bf16.mxu0 %v688
        %8593 = vmatmul.mubr.bf16.gmra.mrb[0].mxu0 %v687
        %v8594 = vpop.f32.mrb[0].mxu0
        %v8595 = vadd.f32 %v6439, %v8594
        %v8596 = vpop.f32.mrb[0].mxu0
        %v8597 = vadd.f32 %v6443, %v8596
        %v8598 = vpop.f32.mrb[0].mxu0
        %v8599 = vadd.f32 %v6439, %v8598
        %v8600 = vpop.f32.mrb[0].mxu0
        %v8601 = vadd.f32 %v6443, %v8600
        %8602 = vmatprep.mubr.bf16.mxu0 %v696
        %8603 = vmatmul.mubr.bf16.gmra.mrb[0].mxu0 %v695
        %v8604 = vpop.f32.mrb[0].mxu0
        %v8605 = vadd.f32 %v6439, %v8604
        %v8606 = vpop.f32.mrb[0].mxu0
        %v8607 = vadd.f32 %v6443, %v8606
        %v8608 = vpop.f32.mrb[0].mxu0
        %v8609 = vadd.f32 %v6439, %v8608
        %v8610 = vpop.f32.mrb[0].mxu0
        %v8611 = vadd.f32 %v6443, %v8610
        %8612 = vmatprep.mubr.bf16.mxu0 %v704
        %8613 = vmatmul.mubr.bf16.gmra.mrb[0].mxu0 %v703
        %v8614 = vpop.f32.mrb[0].mxu0
        %v8615 = vadd.f32 %v6439, %v8614
        %v8616 = vpop.f32.mrb[0].mxu0
        %v8617 = vadd.f32 %v6443, %v8616
        %v8618 = vpop.f32.mrb[0].mxu0
        %v8619 = vadd.f32 %v6439, %v8618
        %v8620 = vpop.f32.mrb[0].mxu0
        %v8621 = vadd.f32 %v6443, %v8620
        %8622 = vmatprep.mubr.bf16.mxu0 %v712
        %8623 = vmatmul.mubr.bf16.gmra.mrb[0].mxu0 %v711
        %v8624 = vpop.f32.mrb[0].mxu0
        %v8625 = vadd.f32 %v6439, %v8624
        %v8626 = vpop.f32.mrb[0].mxu0
        %v8627 = vadd.f32 %v6443, %v8626
        %v8628 = vpop.f32.mrb[0].mxu0
        %v8629 = vadd.f32 %v6439, %v8628
        %v8630 = vpop.f32.mrb[0].mxu0
        %v8631 = vadd.f32 %v6443, %v8630
        %8632 = vmatprep.mubr.bf16.mxu0 %v720
        %8633 = vmatmul.mubr.bf16.gmra.mrb[0].mxu0 %v719
        %v8634 = vpop.f32.mrb[0].mxu0
        %v8635 = vadd.f32 %v6439, %v8634
        %v8636 = vpop.f32.mrb[0].mxu0
        %v8637 = vadd.f32 %v6443, %v8636
        %v8638 = vpop.f32.mrb[0].mxu0
        %v8639 = vadd.f32 %v6439, %v8638
        %v8640 = vpop.f32.mrb[0].mxu0
        %v8641 = vadd.f32 %v6443, %v8640
        %8642 = vmatprep.mubr.bf16.mxu0 %v728
        %8643 = vmatmul.mubr.bf16.gmra.mrb[0].mxu0 %v727
        %v8644 = vpop.f32.mrb[0].mxu0
        %v8645 = vadd.f32 %v6439, %v8644
        %v8646 = vpop.f32.mrb[0].mxu0
        %v8647 = vadd.f32 %v6443, %v8646
        %v8648 = vpop.f32.mrb[0].mxu0
        %v8649 = vadd.f32 %v6439, %v8648
        %v8650 = vpop.f32.mrb[0].mxu0
        %v8651 = vadd.f32 %v6443, %v8650
        %8652 = vmatprep.mubr.bf16.mxu0 %v736
        %8653 = vmatmul.mubr.bf16.gmra.mrb[0].mxu0 %v735
        %v8654 = vpop.f32.mrb[0].mxu0
        %v8655 = vadd.f32 %v6439, %v8654
        %v8656 = vpop.f32.mrb[0].mxu0
        %v8657 = vadd.f32 %v6443, %v8656
        %v8658 = vpop.f32.mrb[0].mxu0
        %v8659 = vadd.f32 %v6439, %v8658
        %v8660 = vpop.f32.mrb[0].mxu0
        %v8661 = vadd.f32 %v6443, %v8660
        %8662 = vmatprep.mubr.bf16.mxu0 %v744
        %8663 = vmatmul.mubr.bf16.gmra.mrb[0].mxu0 %v743
        %v8664 = vpop.f32.mrb[0].mxu0
        %v8665 = vadd.f32 %v6439, %v8664
        %v8666 = vpop.f32.mrb[0].mxu0
        %v8667 = vadd.f32 %v6443, %v8666
        %v8668 = vpop.f32.mrb[0].mxu0
        %v8669 = vadd.f32 %v6439, %v8668
        %v8670 = vpop.f32.mrb[0].mxu0
        %v8671 = vadd.f32 %v6443, %v8670
        %8672 = vmatprep.mubr.bf16.mxu0 %v752
        %8673 = vmatmul.mubr.bf16.gmra.mrb[0].mxu0 %v751
        %v8674 = vpop.f32.mrb[0].mxu0
        %v8675 = vadd.f32 %v6439, %v8674
        %v8676 = vpop.f32.mrb[0].mxu0
        %v8677 = vadd.f32 %v6443, %v8676
        %v8678 = vpop.f32.mrb[0].mxu0
        %v8679 = vadd.f32 %v6439, %v8678
        %v8680 = vpop.f32.mrb[0].mxu0
        %v8681 = vadd.f32 %v6443, %v8680
        %8682 = vmatprep.mubr.bf16.mxu0 %v760
        %8683 = vmatmul.mubr.bf16.gmra.mrb[0].mxu0 %v759
        %v8684 = vpop.f32.mrb[0].mxu0
        %v8685 = vadd.f32 %v6439, %v8684
        %v8686 = vpop.f32.mrb[0].mxu0
        %v8687 = vadd.f32 %v6443, %v8686
        %v8688 = vpop.f32.mrb[0].mxu0
        %v8689 = vadd.f32 %v6439, %v8688
        %v8690 = vpop.f32.mrb[0].mxu0
        %v8691 = vadd.f32 %v6443, %v8690
        %8692 = vdwg.mxu0
        %8693 = vmatprep.subr.bf16.mxu0 %v7283
        %8694 = vmatpush1.bf16.msra.mxu0 %v7282
        %8695 = vmatprep.subr.bf16.mxu0 %v7287
        %8696 = vmatpush1.bf16.msra.mxu0 %v7286
        %8697 = vmatprep.subr.bf16.mxu0 %v7291
        %8698 = vmatpush1.bf16.msra.mxu0 %v7290
        %8699 = vmatprep.subr.bf16.mxu0 %v7295
        %8700 = vmatpush1.bf16.msra.mxu0 %v7294
        %8701 = vmatprep.subr.bf16.mxu0 %v7299
        %8702 = vmatpush1.bf16.msra.mxu0 %v7298
        %8703 = vmatprep.subr.bf16.mxu0 %v7303
        %8704 = vmatpush1.bf16.msra.mxu0 %v7302
        %8705 = vmatprep.subr.bf16.mxu0 %v7307
        %8706 = vmatpush1.bf16.msra.mxu0 %v7306
        %8707 = vmatprep.subr.bf16.mxu0 %v7311
        %8708 = vmatpush1.bf16.msra.mxu0 %v7310
        %8709 = vmatprep.subr.bf16.mxu0 %v7315
        %8710 = vmatpush1.bf16.msra.mxu0 %v7314
        %8711 = vmatprep.subr.bf16.mxu0 %v7319
        %8712 = vmatpush1.bf16.msra.mxu0 %v7318
        %8713 = vmatprep.subr.bf16.mxu0 %v7323
        %8714 = vmatpush1.bf16.msra.mxu0 %v7322
        %8715 = vmatprep.subr.bf16.mxu0 %v7327
        %8716 = vmatpush1.bf16.msra.mxu0 %v7326
        %8717 = vmatprep.subr.bf16.mxu0 %v7331
        %8718 = vmatpush1.bf16.msra.mxu0 %v7330
        %8719 = vmatprep.subr.bf16.mxu0 %v7335
        %8720 = vmatpush1.bf16.msra.mxu0 %v7334
        %8721 = vmatprep.subr.bf16.mxu0 %v7339
        %8722 = vmatpush1.bf16.msra.mxu0 %v7338
        %8723 = vmatprep.subr.bf16.mxu0 %v7343
        %8724 = vmatpush1.bf16.msra.mxu0 %v7342
        %8725 = vmatprep.mubr.bf16.mxu0 %v642
        %8726 = vmatmul.mubr.bf16.gmra.mrb[0].mxu0 %v641
        %v8727 = vpop.f32.mrb[0].mxu0
        %v8728 = vadd.f32 %v8535, %v8727
        %v8729 = vpop.f32.mrb[0].mxu0
        %v8730 = vadd.f32 %v8537, %v8729
        %v8731 = vpop.f32.mrb[0].mxu0
        %v8732 = vadd.f32 %v8539, %v8731
        %v8733 = vpop.f32.mrb[0].mxu0
        %v8734 = vadd.f32 %v8541, %v8733
        %8735 = vmatprep.mubr.bf16.mxu0 %v650
        %8736 = vmatmul.mubr.bf16.gmra.mrb[0].mxu0 %v649
        %v8737 = vpop.f32.mrb[0].mxu0
        %v8738 = vadd.f32 %v8545, %v8737
        %v8739 = vpop.f32.mrb[0].mxu0
        %v8740 = vadd.f32 %v8547, %v8739
        %v8741 = vpop.f32.mrb[0].mxu0
        %v8742 = vadd.f32 %v8549, %v8741
        %v8743 = vpop.f32.mrb[0].mxu0
        %v8744 = vadd.f32 %v8551, %v8743
        %8745 = vmatprep.mubr.bf16.mxu0 %v658
        %8746 = vmatmul.mubr.bf16.gmra.mrb[0].mxu0 %v657
        %v8747 = vpop.f32.mrb[0].mxu0
        %v8748 = vadd.f32 %v8555, %v8747
        %v8749 = vpop.f32.mrb[0].mxu0
        %v8750 = vadd.f32 %v8557, %v8749
        %v8751 = vpop.f32.mrb[0].mxu0
        %v8752 = vadd.f32 %v8559, %v8751
        %v8753 = vpop.f32.mrb[0].mxu0
        %v8754 = vadd.f32 %v8561, %v8753
        %8755 = vmatprep.mubr.bf16.mxu0 %v666
        %8756 = vmatmul.mubr.bf16.gmra.mrb[0].mxu0 %v665
        %v8757 = vpop.f32.mrb[0].mxu0
        %v8758 = vadd.f32 %v8565, %v8757
        %v8759 = vpop.f32.mrb[0].mxu0
        %v8760 = vadd.f32 %v8567, %v8759
        %v8761 = vpop.f32.mrb[0].mxu0
        %v8762 = vadd.f32 %v8569, %v8761
        %v8763 = vpop.f32.mrb[0].mxu0
        %v8764 = vadd.f32 %v8571, %v8763
        %8765 = vmatprep.mubr.bf16.mxu0 %v674
        %8766 = vmatmul.mubr.bf16.gmra.mrb[0].mxu0 %v673
        %v8767 = vpop.f32.mrb[0].mxu0
        %v8768 = vadd.f32 %v8575, %v8767
        %v8769 = vpop.f32.mrb[0].mxu0
        %v8770 = vadd.f32 %v8577, %v8769
        %v8771 = vpop.f32.mrb[0].mxu0
        %v8772 = vadd.f32 %v8579, %v8771
        %v8773 = vpop.f32.mrb[0].mxu0
        %v8774 = vadd.f32 %v8581, %v8773
        %8775 = vmatprep.mubr.bf16.mxu0 %v682
        %8776 = vmatmul.mubr.bf16.gmra.mrb[0].mxu0 %v681
        %v8777 = vpop.f32.mrb[0].mxu0
        %v8778 = vadd.f32 %v8585, %v8777
        %v8779 = vpop.f32.mrb[0].mxu0
        %v8780 = vadd.f32 %v8587, %v8779
        %v8781 = vpop.f32.mrb[0].mxu0
        %v8782 = vadd.f32 %v8589, %v8781
        %v8783 = vpop.f32.mrb[0].mxu0
        %v8784 = vadd.f32 %v8591, %v8783
        %8785 = vmatprep.mubr.bf16.mxu0 %v690
        %8786 = vmatmul.mubr.bf16.gmra.mrb[0].mxu0 %v689
        %v8787 = vpop.f32.mrb[0].mxu0
        %v8788 = vadd.f32 %v8595, %v8787
        %v8789 = vpop.f32.mrb[0].mxu0
        %v8790 = vadd.f32 %v8597, %v8789
        %v8791 = vpop.f32.mrb[0].mxu0
        %v8792 = vadd.f32 %v8599, %v8791
        %v8793 = vpop.f32.mrb[0].mxu0
        %v8794 = vadd.f32 %v8601, %v8793
        %8795 = vmatprep.mubr.bf16.mxu0 %v698
        %8796 = vmatmul.mubr.bf16.gmra.mrb[0].mxu0 %v697
        %v8797 = vpop.f32.mrb[0].mxu0
        %v8798 = vadd.f32 %v8605, %v8797
        %v8799 = vpop.f32.mrb[0].mxu0
        %v8800 = vadd.f32 %v8607, %v8799
        %v8801 = vpop.f32.mrb[0].mxu0
        %v8802 = vadd.f32 %v8609, %v8801
        %v8803 = vpop.f32.mrb[0].mxu0
        %v8804 = vadd.f32 %v8611, %v8803
        %8805 = vmatprep.mubr.bf16.mxu0 %v706
        %8806 = vmatmul.mubr.bf16.gmra.mrb[0].mxu0 %v705
        %v8807 = vpop.f32.mrb[0].mxu0
        %v8808 = vadd.f32 %v8615, %v8807
        %v8809 = vpop.f32.mrb[0].mxu0
        %v8810 = vadd.f32 %v8617, %v8809
        %v8811 = vpop.f32.mrb[0].mxu0
        %v8812 = vadd.f32 %v8619, %v8811
        %v8813 = vpop.f32.mrb[0].mxu0
        %v8814 = vadd.f32 %v8621, %v8813
        %8815 = vmatprep.mubr.bf16.mxu0 %v714
        %8816 = vmatmul.mubr.bf16.gmra.mrb[0].mxu0 %v713
        %v8817 = vpop.f32.mrb[0].mxu0
        %v8818 = vadd.f32 %v8625, %v8817
        %v8819 = vpop.f32.mrb[0].mxu0
        %v8820 = vadd.f32 %v8627, %v8819
        %v8821 = vpop.f32.mrb[0].mxu0
        %v8822 = vadd.f32 %v8629, %v8821
        %v8823 = vpop.f32.mrb[0].mxu0
        %v8824 = vadd.f32 %v8631, %v8823
        %8825 = vmatprep.mubr.bf16.mxu0 %v722
        %8826 = vmatmul.mubr.bf16.gmra.mrb[0].mxu0 %v721
        %v8827 = vpop.f32.mrb[0].mxu0
        %v8828 = vadd.f32 %v8635, %v8827
        %v8829 = vpop.f32.mrb[0].mxu0
        %v8830 = vadd.f32 %v8637, %v8829
        %v8831 = vpop.f32.mrb[0].mxu0
        %v8832 = vadd.f32 %v8639, %v8831
        %v8833 = vpop.f32.mrb[0].mxu0
        %v8834 = vadd.f32 %v8641, %v8833
        %8835 = vmatprep.mubr.bf16.mxu0 %v730
        %8836 = vmatmul.mubr.bf16.gmra.mrb[0].mxu0 %v729
        %v8837 = vpop.f32.mrb[0].mxu0
        %v8838 = vadd.f32 %v8645, %v8837
        %v8839 = vpop.f32.mrb[0].mxu0
        %v8840 = vadd.f32 %v8647, %v8839
        %v8841 = vpop.f32.mrb[0].mxu0
        %v8842 = vadd.f32 %v8649, %v8841
        %v8843 = vpop.f32.mrb[0].mxu0
        %v8844 = vadd.f32 %v8651, %v8843
        %8845 = vmatprep.mubr.bf16.mxu0 %v738
        %8846 = vmatmul.mubr.bf16.gmra.mrb[0].mxu0 %v737
        %v8847 = vpop.f32.mrb[0].mxu0
        %v8848 = vadd.f32 %v8655, %v8847
        %v8849 = vpop.f32.mrb[0].mxu0
        %v8850 = vadd.f32 %v8657, %v8849
        %v8851 = vpop.f32.mrb[0].mxu0
        %v8852 = vadd.f32 %v8659, %v8851
        %v8853 = vpop.f32.mrb[0].mxu0
        %v8854 = vadd.f32 %v8661, %v8853
        %8855 = vmatprep.mubr.bf16.mxu0 %v746
        %8856 = vmatmul.mubr.bf16.gmra.mrb[0].mxu0 %v745
        %v8857 = vpop.f32.mrb[0].mxu0
        %v8858 = vadd.f32 %v8665, %v8857
        %v8859 = vpop.f32.mrb[0].mxu0
        %v8860 = vadd.f32 %v8667, %v8859
        %v8861 = vpop.f32.mrb[0].mxu0
        %v8862 = vadd.f32 %v8669, %v8861
        %v8863 = vpop.f32.mrb[0].mxu0
        %v8864 = vadd.f32 %v8671, %v8863
        %8865 = vmatprep.mubr.bf16.mxu0 %v754
        %8866 = vmatmul.mubr.bf16.gmra.mrb[0].mxu0 %v753
        %v8867 = vpop.f32.mrb[0].mxu0
        %v8868 = vadd.f32 %v8675, %v8867
        %v8869 = vpop.f32.mrb[0].mxu0
        %v8870 = vadd.f32 %v8677, %v8869
        %v8871 = vpop.f32.mrb[0].mxu0
        %v8872 = vadd.f32 %v8679, %v8871
        %v8873 = vpop.f32.mrb[0].mxu0
        %v8874 = vadd.f32 %v8681, %v8873
        %8875 = vmatprep.mubr.bf16.mxu0 %v762
        %8876 = vmatmul.mubr.bf16.gmra.mrb[0].mxu0 %v761
        %v8877 = vpop.f32.mrb[0].mxu0
        %v8878 = vadd.f32 %v8685, %v8877
        %v8879 = vpop.f32.mrb[0].mxu0
        %v8880 = vadd.f32 %v8687, %v8879
        %v8881 = vpop.f32.mrb[0].mxu0
        %v8882 = vadd.f32 %v8689, %v8881
        %v8883 = vpop.f32.mrb[0].mxu0
        %v8884 = vadd.f32 %v8691, %v8883
        %8885 = vdwg.mxu0
        %8886 = vmatprep.subr.bf16.mxu0 %v7347
        %8887 = vmatpush1.bf16.msra.mxu0 %v7346
        %8888 = vmatprep.subr.bf16.mxu0 %v7351
        %8889 = vmatpush1.bf16.msra.mxu0 %v7350
        %8890 = vmatprep.subr.bf16.mxu0 %v7355
        %8891 = vmatpush1.bf16.msra.mxu0 %v7354
        %8892 = vmatprep.subr.bf16.mxu0 %v7359
        %8893 = vmatpush1.bf16.msra.mxu0 %v7358
        %8894 = vmatprep.subr.bf16.mxu0 %v7363
        %8895 = vmatpush1.bf16.msra.mxu0 %v7362
        %8896 = vmatprep.subr.bf16.mxu0 %v7367
        %8897 = vmatpush1.bf16.msra.mxu0 %v7366
        %8898 = vmatprep.subr.bf16.mxu0 %v7371
        %8899 = vmatpush1.bf16.msra.mxu0 %v7370
        %8900 = vmatprep.subr.bf16.mxu0 %v7375
        %8901 = vmatpush1.bf16.msra.mxu0 %v7374
        %8902 = vmatprep.subr.bf16.mxu0 %v7379
        %8903 = vmatpush1.bf16.msra.mxu0 %v7378
        %8904 = vmatprep.subr.bf16.mxu0 %v7383
        %8905 = vmatpush1.bf16.msra.mxu0 %v7382
        %8906 = vmatprep.subr.bf16.mxu0 %v7387
        %8907 = vmatpush1.bf16.msra.mxu0 %v7386
        %8908 = vmatprep.subr.bf16.mxu0 %v7391
        %8909 = vmatpush1.bf16.msra.mxu0 %v7390
        %8910 = vmatprep.subr.bf16.mxu0 %v7395
        %8911 = vmatpush1.bf16.msra.mxu0 %v7394
        %8912 = vmatprep.subr.bf16.mxu0 %v7399
        %8913 = vmatpush1.bf16.msra.mxu0 %v7398
        %8914 = vmatprep.subr.bf16.mxu0 %v7403
        %8915 = vmatpush1.bf16.msra.mxu0 %v7402
        %8916 = vmatprep.subr.bf16.mxu0 %v7407
        %8917 = vmatpush1.bf16.msra.mxu0 %v7406
        %8918 = vmatprep.mubr.bf16.mxu0 %v644
        %8919 = vmatmul.mubr.bf16.gmra.mrb[0].mxu0 %v643
        %v8920 = vpop.f32.mrb[0].mxu0
        %v8921 = vadd.f32 %v8728, %v8920
        %v8922 = vpop.f32.mrb[0].mxu0
        %v8923 = vadd.f32 %v8730, %v8922
        %v8924 = vpop.f32.mrb[0].mxu0
        %v8925 = vadd.f32 %v8732, %v8924
        %v8926 = vpop.f32.mrb[0].mxu0
        %v8927 = vadd.f32 %v8734, %v8926
        %8928 = vmatprep.mubr.bf16.mxu0 %v652
        %8929 = vmatmul.mubr.bf16.gmra.mrb[0].mxu0 %v651
        %v8930 = vpop.f32.mrb[0].mxu0
        %v8931 = vadd.f32 %v8738, %v8930
        %v8932 = vpop.f32.mrb[0].mxu0
        %v8933 = vadd.f32 %v8740, %v8932
        %v8934 = vpop.f32.mrb[0].mxu0
        %v8935 = vadd.f32 %v8742, %v8934
        %v8936 = vpop.f32.mrb[0].mxu0
        %v8937 = vadd.f32 %v8744, %v8936
        %8938 = vmatprep.mubr.bf16.mxu0 %v660
        %8939 = vmatmul.mubr.bf16.gmra.mrb[0].mxu0 %v659
        %v8940 = vpop.f32.mrb[0].mxu0
        %v8941 = vadd.f32 %v8748, %v8940
        %v8942 = vpop.f32.mrb[0].mxu0
        %v8943 = vadd.f32 %v8750, %v8942
        %v8944 = vpop.f32.mrb[0].mxu0
        %v8945 = vadd.f32 %v8752, %v8944
        %v8946 = vpop.f32.mrb[0].mxu0
        %v8947 = vadd.f32 %v8754, %v8946
        %8948 = vmatprep.mubr.bf16.mxu0 %v668
        %8949 = vmatmul.mubr.bf16.gmra.mrb[0].mxu0 %v667
        %v8950 = vpop.f32.mrb[0].mxu0
        %v8951 = vadd.f32 %v8758, %v8950
        %v8952 = vpop.f32.mrb[0].mxu0
        %v8953 = vadd.f32 %v8760, %v8952
        %v8954 = vpop.f32.mrb[0].mxu0
        %v8955 = vadd.f32 %v8762, %v8954
        %v8956 = vpop.f32.mrb[0].mxu0
        %v8957 = vadd.f32 %v8764, %v8956
        %8958 = vmatprep.mubr.bf16.mxu0 %v676
        %8959 = vmatmul.mubr.bf16.gmra.mrb[0].mxu0 %v675
        %v8960 = vpop.f32.mrb[0].mxu0
        %v8961 = vadd.f32 %v8768, %v8960
        %v8962 = vpop.f32.mrb[0].mxu0
        %v8963 = vadd.f32 %v8770, %v8962
        %v8964 = vpop.f32.mrb[0].mxu0
        %v8965 = vadd.f32 %v8772, %v8964
        %v8966 = vpop.f32.mrb[0].mxu0
        %v8967 = vadd.f32 %v8774, %v8966
        %8968 = vmatprep.mubr.bf16.mxu0 %v684
        %8969 = vmatmul.mubr.bf16.gmra.mrb[0].mxu0 %v683
        %v8970 = vpop.f32.mrb[0].mxu0
        %v8971 = vadd.f32 %v8778, %v8970
        %v8972 = vpop.f32.mrb[0].mxu0
        %v8973 = vadd.f32 %v8780, %v8972
        %v8974 = vpop.f32.mrb[0].mxu0
        %v8975 = vadd.f32 %v8782, %v8974
        %v8976 = vpop.f32.mrb[0].mxu0
        %v8977 = vadd.f32 %v8784, %v8976
        %8978 = vmatprep.mubr.bf16.mxu0 %v692
        %8979 = vmatmul.mubr.bf16.gmra.mrb[0].mxu0 %v691
        %v8980 = vpop.f32.mrb[0].mxu0
        %v8981 = vadd.f32 %v8788, %v8980
        %v8982 = vpop.f32.mrb[0].mxu0
        %v8983 = vadd.f32 %v8790, %v8982
        %v8984 = vpop.f32.mrb[0].mxu0
        %v8985 = vadd.f32 %v8792, %v8984
        %v8986 = vpop.f32.mrb[0].mxu0
        %v8987 = vadd.f32 %v8794, %v8986
        %8988 = vmatprep.mubr.bf16.mxu0 %v700
        %8989 = vmatmul.mubr.bf16.gmra.mrb[0].mxu0 %v699
        %v8990 = vpop.f32.mrb[0].mxu0
        %v8991 = vadd.f32 %v8798, %v8990
        %v8992 = vpop.f32.mrb[0].mxu0
        %v8993 = vadd.f32 %v8800, %v8992
        %v8994 = vpop.f32.mrb[0].mxu0
        %v8995 = vadd.f32 %v8802, %v8994
        %v8996 = vpop.f32.mrb[0].mxu0
        %v8997 = vadd.f32 %v8804, %v8996
        %8998 = vmatprep.mubr.bf16.mxu0 %v708
        %8999 = vmatmul.mubr.bf16.gmra.mrb[0].mxu0 %v707
        %v9000 = vpop.f32.mrb[0].mxu0
        %v9001 = vadd.f32 %v8808, %v9000
        %v9002 = vpop.f32.mrb[0].mxu0
        %v9003 = vadd.f32 %v8810, %v9002
        %v9004 = vpop.f32.mrb[0].mxu0
        %v9005 = vadd.f32 %v8812, %v9004
        %v9006 = vpop.f32.mrb[0].mxu0
        %v9007 = vadd.f32 %v8814, %v9006
        %9008 = vmatprep.mubr.bf16.mxu0 %v716
        %9009 = vmatmul.mubr.bf16.gmra.mrb[0].mxu0 %v715
        %v9010 = vpop.f32.mrb[0].mxu0
        %v9011 = vadd.f32 %v8818, %v9010
        %v9012 = vpop.f32.mrb[0].mxu0
        %v9013 = vadd.f32 %v8820, %v9012
        %v9014 = vpop.f32.mrb[0].mxu0
        %v9015 = vadd.f32 %v8822, %v9014
        %v9016 = vpop.f32.mrb[0].mxu0
        %v9017 = vadd.f32 %v8824, %v9016
        %9018 = vmatprep.mubr.bf16.mxu0 %v724
        %9019 = vmatmul.mubr.bf16.gmra.mrb[0].mxu0 %v723
        %v9020 = vpop.f32.mrb[0].mxu0
        %v9021 = vadd.f32 %v8828, %v9020
        %v9022 = vpop.f32.mrb[0].mxu0
        %v9023 = vadd.f32 %v8830, %v9022
        %v9024 = vpop.f32.mrb[0].mxu0
        %v9025 = vadd.f32 %v8832, %v9024
        %v9026 = vpop.f32.mrb[0].mxu0
        %v9027 = vadd.f32 %v8834, %v9026
        %9028 = vmatprep.mubr.bf16.mxu0 %v732
        %9029 = vmatmul.mubr.bf16.gmra.mrb[0].mxu0 %v731
        %v9030 = vpop.f32.mrb[0].mxu0
        %v9031 = vadd.f32 %v8838, %v9030
        %v9032 = vpop.f32.mrb[0].mxu0
        %v9033 = vadd.f32 %v8840, %v9032
        %v9034 = vpop.f32.mrb[0].mxu0
        %v9035 = vadd.f32 %v8842, %v9034
        %v9036 = vpop.f32.mrb[0].mxu0
        %v9037 = vadd.f32 %v8844, %v9036
        %9038 = vmatprep.mubr.bf16.mxu0 %v740
        %9039 = vmatmul.mubr.bf16.gmra.mrb[0].mxu0 %v739
        %v9040 = vpop.f32.mrb[0].mxu0
        %v9041 = vadd.f32 %v8848, %v9040
        %v9042 = vpop.f32.mrb[0].mxu0
        %v9043 = vadd.f32 %v8850, %v9042
        %v9044 = vpop.f32.mrb[0].mxu0
        %v9045 = vadd.f32 %v8852, %v9044
        %v9046 = vpop.f32.mrb[0].mxu0
        %v9047 = vadd.f32 %v8854, %v9046
        %9048 = vmatprep.mubr.bf16.mxu0 %v748
        %9049 = vmatmul.mubr.bf16.gmra.mrb[0].mxu0 %v747
        %v9050 = vpop.f32.mrb[0].mxu0
        %v9051 = vadd.f32 %v8858, %v9050
        %v9052 = vpop.f32.mrb[0].mxu0
        %v9053 = vadd.f32 %v8860, %v9052
        %v9054 = vpop.f32.mrb[0].mxu0
        %v9055 = vadd.f32 %v8862, %v9054
        %v9056 = vpop.f32.mrb[0].mxu0
        %v9057 = vadd.f32 %v8864, %v9056
        %9058 = vmatprep.mubr.bf16.mxu0 %v756
        %9059 = vmatmul.mubr.bf16.gmra.mrb[0].mxu0 %v755
        %v9060 = vpop.f32.mrb[0].mxu0
        %v9061 = vadd.f32 %v8868, %v9060
        %v9062 = vpop.f32.mrb[0].mxu0
        %v9063 = vadd.f32 %v8870, %v9062
        %v9064 = vpop.f32.mrb[0].mxu0
        %v9065 = vadd.f32 %v8872, %v9064
        %v9066 = vpop.f32.mrb[0].mxu0
        %v9067 = vadd.f32 %v8874, %v9066
        %9068 = vmatprep.mubr.bf16.mxu0 %v764
        %9069 = vmatmul.mubr.bf16.gmra.mrb[0].mxu0 %v763
        %v9070 = vpop.f32.mrb[0].mxu0
        %v9071 = vadd.f32 %v8878, %v9070
        %v9072 = vpop.f32.mrb[0].mxu0
        %v9073 = vadd.f32 %v8880, %v9072
        %v9074 = vpop.f32.mrb[0].mxu0
        %v9075 = vadd.f32 %v8882, %v9074
        %v9076 = vpop.f32.mrb[0].mxu0
        %v9077 = vadd.f32 %v8884, %v9076
        %9078 = vdwg.mxu0
        %9079 = vmatprep.subr.bf16.mxu0 %v7411
        %9080 = vmatpush1.bf16.msra.mxu0 %v7410
        %9081 = vmatprep.subr.bf16.mxu0 %v7415
        %9082 = vmatpush1.bf16.msra.mxu0 %v7414
        %9083 = vmatprep.subr.bf16.mxu0 %v7419
        %9084 = vmatpush1.bf16.msra.mxu0 %v7418
        %9085 = vmatprep.subr.bf16.mxu0 %v7423
        %9086 = vmatpush1.bf16.msra.mxu0 %v7422
        %9087 = vmatprep.subr.bf16.mxu0 %v7427
        %9088 = vmatpush1.bf16.msra.mxu0 %v7426
        %9089 = vmatprep.subr.bf16.mxu0 %v7431
        %9090 = vmatpush1.bf16.msra.mxu0 %v7430
        %9091 = vmatprep.subr.bf16.mxu0 %v7435
        %9092 = vmatpush1.bf16.msra.mxu0 %v7434
        %9093 = vmatprep.subr.bf16.mxu0 %v7439
        %9094 = vmatpush1.bf16.msra.mxu0 %v7438
        %9095 = vmatprep.subr.bf16.mxu0 %v7443
        %9096 = vmatpush1.bf16.msra.mxu0 %v7442
        %9097 = vmatprep.subr.bf16.mxu0 %v7447
        %9098 = vmatpush1.bf16.msra.mxu0 %v7446
        %9099 = vmatprep.subr.bf16.mxu0 %v7451
        %9100 = vmatpush1.bf16.msra.mxu0 %v7450
        %9101 = vmatprep.subr.bf16.mxu0 %v7455
        %9102 = vmatpush1.bf16.msra.mxu0 %v7454
        %9103 = vmatprep.subr.bf16.mxu0 %v7459
        %9104 = vmatpush1.bf16.msra.mxu0 %v7458
        %9105 = vmatprep.subr.bf16.mxu0 %v7463
        %9106 = vmatpush1.bf16.msra.mxu0 %v7462
        %9107 = vmatprep.subr.bf16.mxu0 %v7467
        %9108 = vmatpush1.bf16.msra.mxu0 %v7466
        %9109 = vmatprep.subr.bf16.mxu0 %v7471
        %9110 = vmatpush1.bf16.msra.mxu0 %v7470
        %9111 = vmatprep.mubr.bf16.mxu0 %v646
        %9112 = vmatmul.mubr.bf16.gmra.mrb[0].mxu0 %v645
        %v9113 = vpop.f32.mrb[0].mxu0
        %v9114 = vadd.f32 %v8921, %v9113
        %v9115 = vpop.f32.mrb[0].mxu0
        %v9116 = vadd.f32 %v8923, %v9115
        %v9117 = vpop.f32.mrb[0].mxu0
        %v9118 = vadd.f32 %v8925, %v9117
        %v9119 = vpop.f32.mrb[0].mxu0
        %v9120 = vadd.f32 %v8927, %v9119
        %9121 = vmatprep.mubr.bf16.mxu0 %v654
        %9122 = vmatmul.mubr.bf16.gmra.mrb[0].mxu0 %v653
        %v9123 = vpop.f32.mrb[0].mxu0
        %v9124 = vadd.f32 %v8931, %v9123
        %v9125 = vpop.f32.mrb[0].mxu0
        %v9126 = vadd.f32 %v8933, %v9125
        %v9127 = vpop.f32.mrb[0].mxu0
        %v9128 = vadd.f32 %v8935, %v9127
        %v9129 = vpop.f32.mrb[0].mxu0
        %v9130 = vadd.f32 %v8937, %v9129
        %9131 = vmatprep.mubr.bf16.mxu0 %v662
        %9132 = vmatmul.mubr.bf16.gmra.mrb[0].mxu0 %v661
        %v9133 = vpop.f32.mrb[0].mxu0
        %v9134 = vadd.f32 %v8941, %v9133
        %v9135 = vpop.f32.mrb[0].mxu0
        %v9136 = vadd.f32 %v8943, %v9135
        %v9137 = vpop.f32.mrb[0].mxu0
        %v9138 = vadd.f32 %v8945, %v9137
        %v9139 = vpop.f32.mrb[0].mxu0
        %v9140 = vadd.f32 %v8947, %v9139
        %9141 = vmatprep.mubr.bf16.mxu0 %v670
        %9142 = vmatmul.mubr.bf16.gmra.mrb[0].mxu0 %v669
        %v9143 = vpop.f32.mrb[0].mxu0
        %v9144 = vadd.f32 %v8951, %v9143
        %v9145 = vpop.f32.mrb[0].mxu0
        %v9146 = vadd.f32 %v8953, %v9145
        %v9147 = vpop.f32.mrb[0].mxu0
        %v9148 = vadd.f32 %v8955, %v9147
        %v9149 = vpop.f32.mrb[0].mxu0
        %v9150 = vadd.f32 %v8957, %v9149
        %9151 = vmatprep.mubr.bf16.mxu0 %v678
        %9152 = vmatmul.mubr.bf16.gmra.mrb[0].mxu0 %v677
        %v9153 = vpop.f32.mrb[0].mxu0
        %v9154 = vadd.f32 %v8961, %v9153
        %v9155 = vpop.f32.mrb[0].mxu0
        %v9156 = vadd.f32 %v8963, %v9155
        %v9157 = vpop.f32.mrb[0].mxu0
        %v9158 = vadd.f32 %v8965, %v9157
        %v9159 = vpop.f32.mrb[0].mxu0
        %v9160 = vadd.f32 %v8967, %v9159
        %9161 = vmatprep.mubr.bf16.mxu0 %v686
        %9162 = vmatmul.mubr.bf16.gmra.mrb[0].mxu0 %v685
        %v9163 = vpop.f32.mrb[0].mxu0
        %v9164 = vadd.f32 %v8971, %v9163
        %v9165 = vpop.f32.mrb[0].mxu0
        %v9166 = vadd.f32 %v8973, %v9165
        %v9167 = vpop.f32.mrb[0].mxu0
        %v9168 = vadd.f32 %v8975, %v9167
        %v9169 = vpop.f32.mrb[0].mxu0
        %v9170 = vadd.f32 %v8977, %v9169
        %9171 = vmatprep.mubr.bf16.mxu0 %v694
        %9172 = vmatmul.mubr.bf16.gmra.mrb[0].mxu0 %v693
        %v9173 = vpop.f32.mrb[0].mxu0
        %v9174 = vadd.f32 %v8981, %v9173
        %v9175 = vpop.f32.mrb[0].mxu0
        %v9176 = vadd.f32 %v8983, %v9175
        %v9177 = vpop.f32.mrb[0].mxu0
        %v9178 = vadd.f32 %v8985, %v9177
        %v9179 = vpop.f32.mrb[0].mxu0
        %v9180 = vadd.f32 %v8987, %v9179
        %9181 = vmatprep.mubr.bf16.mxu0 %v702
        %9182 = vmatmul.mubr.bf16.gmra.mrb[0].mxu0 %v701
        %v9183 = vpop.f32.mrb[0].mxu0
        %v9184 = vadd.f32 %v8991, %v9183
        %v9185 = vpop.f32.mrb[0].mxu0
        %v9186 = vadd.f32 %v8993, %v9185
        %v9187 = vpop.f32.mrb[0].mxu0
        %v9188 = vadd.f32 %v8995, %v9187
        %v9189 = vpop.f32.mrb[0].mxu0
        %v9190 = vadd.f32 %v8997, %v9189
        %9191 = vmatprep.mubr.bf16.mxu0 %v710
        %9192 = vmatmul.mubr.bf16.gmra.mrb[0].mxu0 %v709
        %v9193 = vpop.f32.mrb[0].mxu0
        %v9194 = vadd.f32 %v9001, %v9193
        %v9195 = vpop.f32.mrb[0].mxu0
        %v9196 = vadd.f32 %v9003, %v9195
        %v9197 = vpop.f32.mrb[0].mxu0
        %v9198 = vadd.f32 %v9005, %v9197
        %v9199 = vpop.f32.mrb[0].mxu0
        %v9200 = vadd.f32 %v9007, %v9199
        %9201 = vmatprep.mubr.bf16.mxu0 %v718
        %9202 = vmatmul.mubr.bf16.gmra.mrb[0].mxu0 %v717
        %v9203 = vpop.f32.mrb[0].mxu0
        %v9204 = vadd.f32 %v9011, %v9203
        %v9205 = vpop.f32.mrb[0].mxu0
        %v9206 = vadd.f32 %v9013, %v9205
        %v9207 = vpop.f32.mrb[0].mxu0
        %v9208 = vadd.f32 %v9015, %v9207
        %v9209 = vpop.f32.mrb[0].mxu0
        %v9210 = vadd.f32 %v9017, %v9209
        %9211 = vmatprep.mubr.bf16.mxu0 %v726
        %9212 = vmatmul.mubr.bf16.gmra.mrb[0].mxu0 %v725
        %v9213 = vpop.f32.mrb[0].mxu0
        %v9214 = vadd.f32 %v9021, %v9213
        %v9215 = vpop.f32.mrb[0].mxu0
        %v9216 = vadd.f32 %v9023, %v9215
        %v9217 = vpop.f32.mrb[0].mxu0
        %v9218 = vadd.f32 %v9025, %v9217
        %v9219 = vpop.f32.mrb[0].mxu0
        %v9220 = vadd.f32 %v9027, %v9219
        %9221 = vmatprep.mubr.bf16.mxu0 %v734
        %9222 = vmatmul.mubr.bf16.gmra.mrb[0].mxu0 %v733
        %v9223 = vpop.f32.mrb[0].mxu0
        %v9224 = vadd.f32 %v9031, %v9223
        %v9225 = vpop.f32.mrb[0].mxu0
        %v9226 = vadd.f32 %v9033, %v9225
        %v9227 = vpop.f32.mrb[0].mxu0
        %v9228 = vadd.f32 %v9035, %v9227
        %v9229 = vpop.f32.mrb[0].mxu0
        %v9230 = vadd.f32 %v9037, %v9229
        %9231 = vmatprep.mubr.bf16.mxu0 %v742
        %9232 = vmatmul.mubr.bf16.gmra.mrb[0].mxu0 %v741
        %v9233 = vpop.f32.mrb[0].mxu0
        %v9234 = vadd.f32 %v9041, %v9233
        %v9235 = vpop.f32.mrb[0].mxu0
        %v9236 = vadd.f32 %v9043, %v9235
        %v9237 = vpop.f32.mrb[0].mxu0
        %v9238 = vadd.f32 %v9045, %v9237
        %v9239 = vpop.f32.mrb[0].mxu0
        %v9240 = vadd.f32 %v9047, %v9239
        %9241 = vmatprep.mubr.bf16.mxu0 %v750
        %9242 = vmatmul.mubr.bf16.gmra.mrb[0].mxu0 %v749
        %v9243 = vpop.f32.mrb[0].mxu0
        %v9244 = vadd.f32 %v9051, %v9243
        %v9245 = vpop.f32.mrb[0].mxu0
        %v9246 = vadd.f32 %v9053, %v9245
        %v9247 = vpop.f32.mrb[0].mxu0
        %v9248 = vadd.f32 %v9055, %v9247
        %v9249 = vpop.f32.mrb[0].mxu0
        %v9250 = vadd.f32 %v9057, %v9249
        %9251 = vmatprep.mubr.bf16.mxu0 %v758
        %9252 = vmatmul.mubr.bf16.gmra.mrb[0].mxu0 %v757
        %v9253 = vpop.f32.mrb[0].mxu0
        %v9254 = vadd.f32 %v9061, %v9253
        %v9255 = vpop.f32.mrb[0].mxu0
        %v9256 = vadd.f32 %v9063, %v9255
        %v9257 = vpop.f32.mrb[0].mxu0
        %v9258 = vadd.f32 %v9065, %v9257
        %v9259 = vpop.f32.mrb[0].mxu0
        %v9260 = vadd.f32 %v9067, %v9259
        %9261 = vmatprep.mubr.bf16.mxu0 %v766
        %9262 = vmatmul.mubr.bf16.gmra.mrb[0].mxu0 %v765
        %v9263 = vpop.f32.mrb[0].mxu0
        %v9264 = vadd.f32 %v9071, %v9263
        %v9265 = vpop.f32.mrb[0].mxu0
        %v9266 = vadd.f32 %v9073, %v9265
        %v9267 = vpop.f32.mrb[0].mxu0
        %v9268 = vadd.f32 %v9075, %v9267
        %v9269 = vpop.f32.mrb[0].mxu0
        %v9270 = vadd.f32 %v9077, %v9269
        %9271 = vdwg.mxu0
        %s9272 = scalar_lea.vmem [#allocation11], 4
        %v9273 = vld [vmem:[%s9272] ss:$8 sm:$0xf]
        %s9274 = scalar_lea.vmem [#allocation11], 5
        %v9275 = vld [vmem:[%s9274] ss:$8 sm:$0xf]
        %v9276 = vadd.f32 %v8342, %v8344
        %v9277 = vadd.f32 %v9276, %v9114
        %v9278 = vadd.f32 %v9277, %v9116
        %9279 = vadd.xlane.f32.xlu0 %v9278
        %v9280 = vpop.xlane.xlu0 %9279
        %v9281 = vadd.f32 %v8346, %v8348
        %v9282 = vadd.f32 %v9281, %v9118
        %v9283 = vadd.f32 %v9282, %v9120
        %9284 = vadd.xlane.f32.xlu0 %v9283
        %v9285 = vpop.xlane.xlu0 %9284
        %v9286 = vadd.f32 %v8352, %v8354
        %v9287 = vadd.f32 %v9286, %v9124
        %v9288 = vadd.f32 %v9287, %v9126
        %9289 = vadd.xlane.f32.xlu0 %v9288
        %v9290 = vpop.xlane.xlu0 %9289
        %v9291 = vadd.f32 %v8356, %v8358
        %v9292 = vadd.f32 %v9291, %v9128
        %v9293 = vadd.f32 %v9292, %v9130
        %9294 = vadd.xlane.f32.xlu0 %v9293
        %v9295 = vpop.xlane.xlu0 %9294
        %v9296 = vadd.f32 %v8362, %v8364
        %v9297 = vadd.f32 %v9296, %v9134
        %v9298 = vadd.f32 %v9297, %v9136
        %9299 = vadd.xlane.f32.xlu0 %v9298
        %v9300 = vpop.xlane.xlu0 %9299
        %v9301 = vadd.f32 %v8366, %v8368
        %v9302 = vadd.f32 %v9301, %v9138
        %v9303 = vadd.f32 %v9302, %v9140
        %9304 = vadd.xlane.f32.xlu0 %v9303
        %v9305 = vpop.xlane.xlu0 %9304
        %v9306 = vadd.f32 %v8372, %v8374
        %v9307 = vadd.f32 %v9306, %v9144
        %v9308 = vadd.f32 %v9307, %v9146
        %9309 = vadd.xlane.f32.xlu0 %v9308
        %v9310 = vpop.xlane.xlu0 %9309
        %v9311 = vadd.f32 %v8376, %v8378
        %v9312 = vadd.f32 %v9311, %v9148
        %v9313 = vadd.f32 %v9312, %v9150
        %9314 = vadd.xlane.f32.xlu0 %v9313
        %v9315 = vpop.xlane.xlu0 %9314
        %v9316 = vadd.f32 %v8382, %v8384
        %v9317 = vadd.f32 %v9316, %v9154
        %v9318 = vadd.f32 %v9317, %v9156
        %9319 = vadd.xlane.f32.xlu0 %v9318
        %v9320 = vpop.xlane.xlu0 %9319
        %v9321 = vadd.f32 %v8386, %v8388
        %v9322 = vadd.f32 %v9321, %v9158
        %v9323 = vadd.f32 %v9322, %v9160
        %9324 = vadd.xlane.f32.xlu0 %v9323
        %v9325 = vpop.xlane.xlu0 %9324
        %v9326 = vadd.f32 %v8392, %v8394
        %v9327 = vadd.f32 %v9326, %v9164
        %v9328 = vadd.f32 %v9327, %v9166
        %9329 = vadd.xlane.f32.xlu0 %v9328
        %v9330 = vpop.xlane.xlu0 %9329
        %v9331 = vadd.f32 %v8396, %v8398
        %v9332 = vadd.f32 %v9331, %v9168
        %v9333 = vadd.f32 %v9332, %v9170
        %9334 = vadd.xlane.f32.xlu0 %v9333
        %v9335 = vpop.xlane.xlu0 %9334
        %v9336 = vadd.f32 %v8402, %v8404
        %v9337 = vadd.f32 %v9336, %v9174
        %v9338 = vadd.f32 %v9337, %v9176
        %9339 = vadd.xlane.f32.xlu0 %v9338
        %v9340 = vpop.xlane.xlu0 %9339
        %v9341 = vadd.f32 %v8406, %v8408
        %v9342 = vadd.f32 %v9341, %v9178
        %v9343 = vadd.f32 %v9342, %v9180
        %9344 = vadd.xlane.f32.xlu0 %v9343
        %v9345 = vpop.xlane.xlu0 %9344
        %v9346 = vadd.f32 %v8412, %v8414
        %v9347 = vadd.f32 %v9346, %v9184
        %v9348 = vadd.f32 %v9347, %v9186
        %9349 = vadd.xlane.f32.xlu0 %v9348
        %v9350 = vpop.xlane.xlu0 %9349
        %v9351 = vadd.f32 %v8416, %v8418
        %v9352 = vadd.f32 %v9351, %v9188
        %v9353 = vadd.f32 %v9352, %v9190
        %9354 = vadd.xlane.f32.xlu0 %v9353
        %v9355 = vpop.xlane.xlu0 %9354
        %v9356 = vadd.f32 %v8422, %v8424
        %v9357 = vadd.f32 %v9356, %v9194
        %v9358 = vadd.f32 %v9357, %v9196
        %9359 = vadd.xlane.f32.xlu0 %v9358
        %v9360 = vpop.xlane.xlu0 %9359
        %v9361 = vadd.f32 %v8426, %v8428
        %v9362 = vadd.f32 %v9361, %v9198
        %v9363 = vadd.f32 %v9362, %v9200
        %9364 = vadd.xlane.f32.xlu0 %v9363
        %v9365 = vpop.xlane.xlu0 %9364
        %v9366 = vadd.f32 %v8432, %v8434
        %v9367 = vadd.f32 %v9366, %v9204
        %v9368 = vadd.f32 %v9367, %v9206
        %9369 = vadd.xlane.f32.xlu0 %v9368
        %v9370 = vpop.xlane.xlu0 %9369
        %v9371 = vadd.f32 %v8436, %v8438
        %v9372 = vadd.f32 %v9371, %v9208
        %v9373 = vadd.f32 %v9372, %v9210
        %9374 = vadd.xlane.f32.xlu0 %v9373
        %v9375 = vpop.xlane.xlu0 %9374
        %v9376 = vadd.f32 %v8442, %v8444
        %v9377 = vadd.f32 %v9376, %v9214
        %v9378 = vadd.f32 %v9377, %v9216
        %9379 = vadd.xlane.f32.xlu0 %v9378
        %v9380 = vpop.xlane.xlu0 %9379
        %v9381 = vadd.f32 %v8446, %v8448
        %v9382 = vadd.f32 %v9381, %v9218
        %v9383 = vadd.f32 %v9382, %v9220
        %9384 = vadd.xlane.f32.xlu0 %v9383
        %v9385 = vpop.xlane.xlu0 %9384
        %v9386 = vadd.f32 %v8452, %v8454
        %v9387 = vadd.f32 %v9386, %v9224
        %v9388 = vadd.f32 %v9387, %v9226
        %9389 = vadd.xlane.f32.xlu0 %v9388
        %v9390 = vpop.xlane.xlu0 %9389
        %v9391 = vadd.f32 %v8456, %v8458
        %v9392 = vadd.f32 %v9391, %v9228
        %v9393 = vadd.f32 %v9392, %v9230
        %9394 = vadd.xlane.f32.xlu0 %v9393
        %v9395 = vpop.xlane.xlu0 %9394
        %v9396 = vadd.f32 %v8462, %v8464
        %v9397 = vadd.f32 %v9396, %v9234
        %v9398 = vadd.f32 %v9397, %v9236
        %9399 = vadd.xlane.f32.xlu0 %v9398
        %v9400 = vpop.xlane.xlu0 %9399
        %v9401 = vadd.f32 %v8466, %v8468
        %v9402 = vadd.f32 %v9401, %v9238
        %v9403 = vadd.f32 %v9402, %v9240
        %9404 = vadd.xlane.f32.xlu0 %v9403
        %v9405 = vpop.xlane.xlu0 %9404
        %v9406 = vadd.f32 %v8472, %v8474
        %v9407 = vadd.f32 %v9406, %v9244
        %v9408 = vadd.f32 %v9407, %v9246
        %9409 = vadd.xlane.f32.xlu0 %v9408
        %v9410 = vpop.xlane.xlu0 %9409
        %v9411 = vadd.f32 %v8476, %v8478
        %v9412 = vadd.f32 %v9411, %v9248
        %v9413 = vadd.f32 %v9412, %v9250
        %9414 = vadd.xlane.f32.xlu0 %v9413
        %v9415 = vpop.xlane.xlu0 %9414
        %v9416 = vadd.f32 %v8482, %v8484
        %v9417 = vadd.f32 %v9416, %v9254
        %v9418 = vadd.f32 %v9417, %v9256
        %9419 = vadd.xlane.f32.xlu0 %v9418
        %v9420 = vpop.xlane.xlu0 %9419
        %v9421 = vadd.f32 %v8486, %v8488
        %v9422 = vadd.f32 %v9421, %v9258
        %v9423 = vadd.f32 %v9422, %v9260
        %9424 = vadd.xlane.f32.xlu0 %v9423
        %v9425 = vpop.xlane.xlu0 %9424
        %v9426 = vadd.f32 %v8492, %v8494
        %v9427 = vadd.f32 %v9426, %v9264
        %v9428 = vadd.f32 %v9427, %v9266
        %9429 = vadd.xlane.f32.xlu0 %v9428
        %v9430 = vpop.xlane.xlu0 %9429
        %v9431 = vadd.f32 %v8496, %v8498
        %v9432 = vadd.f32 %v9431, %v9268
        %v9433 = vadd.f32 %v9432, %v9270
        %9434 = vadd.xlane.f32.xlu0 %v9433
        %v9435 = vpop.xlane.xlu0 %9434
        %v9436 = vmul.f32 %v9280, %v5198
        %v9437 = vmul.f32 %v9285, %v5198
        %v9438 = vmul.f32 %v9290, %v5198
        %v9439 = vmul.f32 %v9295, %v5198
        %v9440 = vmul.f32 %v9300, %v5198
        %v9441 = vmul.f32 %v9305, %v5198
        %v9442 = vmul.f32 %v9310, %v5198
        %v9443 = vmul.f32 %v9315, %v5198
        %v9444 = vmul.f32 %v9320, %v5198
        %v9445 = vmul.f32 %v9325, %v5198
        %v9446 = vmul.f32 %v9330, %v5198
        %v9447 = vmul.f32 %v9335, %v5198
        %v9448 = vmul.f32 %v9340, %v5198
        %v9449 = vmul.f32 %v9345, %v5198
        %v9450 = vmul.f32 %v9350, %v5198
        %v9451 = vmul.f32 %v9355, %v5198
        %v9452 = vmul.f32 %v9360, %v5198
        %v9453 = vmul.f32 %v9365, %v5198
        %v9454 = vmul.f32 %v9370, %v5198
        %v9455 = vmul.f32 %v9375, %v5198
        %v9456 = vmul.f32 %v9380, %v5198
        %v9457 = vmul.f32 %v9385, %v5198
        %v9458 = vmul.f32 %v9390, %v5198
        %v9459 = vmul.f32 %v9395, %v5198
        %v9460 = vmul.f32 %v9400, %v5198
        %v9461 = vmul.f32 %v9405, %v5198
        %v9462 = vmul.f32 %v9410, %v5198
        %v9463 = vmul.f32 %v9415, %v5198
        %v9464 = vmul.f32 %v9420, %v5198
        %v9465 = vmul.f32 %v9425, %v5198
        %v9466 = vmul.f32 %v9430, %v5198
        %v9467 = vmul.f32 %v9435, %v5198
        %v9468 = vsub.f32 %v8342, %v9436
        %v9469 = vsub.f32 %v8344, %v9436
        %v9470 = vsub.f32 %v9114, %v9436
        %v9471 = vsub.f32 %v9116, %v9436
        %v9472 = vsub.f32 %v8346, %v9437
        %v9473 = vsub.f32 %v8348, %v9437
        %v9474 = vsub.f32 %v9118, %v9437
        %v9475 = vsub.f32 %v9120, %v9437
        %v9476 = vsub.f32 %v8352, %v9438
        %v9477 = vsub.f32 %v8354, %v9438
        %v9478 = vsub.f32 %v9124, %v9438
        %v9479 = vsub.f32 %v9126, %v9438
        %v9480 = vsub.f32 %v8356, %v9439
        %v9481 = vsub.f32 %v8358, %v9439
        %v9482 = vsub.f32 %v9128, %v9439
        %v9483 = vsub.f32 %v9130, %v9439
        %v9484 = vsub.f32 %v8362, %v9440
        %v9485 = vsub.f32 %v8364, %v9440
        %v9486 = vsub.f32 %v9134, %v9440
        %v9487 = vsub.f32 %v9136, %v9440
        %v9488 = vsub.f32 %v8366, %v9441
        %v9489 = vsub.f32 %v8368, %v9441
        %v9490 = vsub.f32 %v9138, %v9441
        %v9491 = vsub.f32 %v9140, %v9441
        %v9492 = vsub.f32 %v8372, %v9442
        %v9493 = vsub.f32 %v8374, %v9442
        %v9494 = vsub.f32 %v9144, %v9442
        %v9495 = vsub.f32 %v9146, %v9442
        %v9496 = vsub.f32 %v8376, %v9443
        %v9497 = vsub.f32 %v8378, %v9443
        %v9498 = vsub.f32 %v9148, %v9443
        %v9499 = vsub.f32 %v9150, %v9443
        %v9500 = vsub.f32 %v8382, %v9444
        %v9501 = vsub.f32 %v8384, %v9444
        %v9502 = vsub.f32 %v9154, %v9444
        %v9503 = vsub.f32 %v9156, %v9444
        %v9504 = vsub.f32 %v8386, %v9445
        %v9505 = vsub.f32 %v8388, %v9445
        %v9506 = vsub.f32 %v9158, %v9445
        %v9507 = vsub.f32 %v9160, %v9445
        %v9508 = vsub.f32 %v8392, %v9446
        %v9509 = vsub.f32 %v8394, %v9446
        %v9510 = vsub.f32 %v9164, %v9446
        %v9511 = vsub.f32 %v9166, %v9446
        %v9512 = vsub.f32 %v8396, %v9447
        %v9513 = vsub.f32 %v8398, %v9447
        %v9514 = vsub.f32 %v9168, %v9447
        %v9515 = vsub.f32 %v9170, %v9447
        %v9516 = vsub.f32 %v8402, %v9448
        %v9517 = vsub.f32 %v8404, %v9448
        %v9518 = vsub.f32 %v9174, %v9448
        %v9519 = vsub.f32 %v9176, %v9448
        %v9520 = vsub.f32 %v8406, %v9449
        %v9521 = vsub.f32 %v8408, %v9449
        %v9522 = vsub.f32 %v9178, %v9449
        %v9523 = vsub.f32 %v9180, %v9449
        %v9524 = vsub.f32 %v8412, %v9450
        %v9525 = vsub.f32 %v8414, %v9450
        %v9526 = vsub.f32 %v9184, %v9450
        %v9527 = vsub.f32 %v9186, %v9450
        %v9528 = vsub.f32 %v8416, %v9451
        %v9529 = vsub.f32 %v8418, %v9451
        %v9530 = vsub.f32 %v9188, %v9451
        %v9531 = vsub.f32 %v9190, %v9451
        %v9532 = vsub.f32 %v8422, %v9452
        %v9533 = vsub.f32 %v8424, %v9452
        %v9534 = vsub.f32 %v9194, %v9452
        %v9535 = vsub.f32 %v9196, %v9452
        %v9536 = vsub.f32 %v8426, %v9453
        %v9537 = vsub.f32 %v8428, %v9453
        %v9538 = vsub.f32 %v9198, %v9453
        %v9539 = vsub.f32 %v9200, %v9453
        %v9540 = vsub.f32 %v8432, %v9454
        %v9541 = vsub.f32 %v8434, %v9454
        %v9542 = vsub.f32 %v9204, %v9454
        %v9543 = vsub.f32 %v9206, %v9454
        %v9544 = vsub.f32 %v8436, %v9455
        %v9545 = vsub.f32 %v8438, %v9455
        %v9546 = vsub.f32 %v9208, %v9455
        %v9547 = vsub.f32 %v9210, %v9455
        %v9548 = vsub.f32 %v8442, %v9456
        %v9549 = vsub.f32 %v8444, %v9456
        %v9550 = vsub.f32 %v9214, %v9456
        %v9551 = vsub.f32 %v9216, %v9456
        %v9552 = vsub.f32 %v8446, %v9457
        %v9553 = vsub.f32 %v8448, %v9457
        %v9554 = vsub.f32 %v9218, %v9457
        %v9555 = vsub.f32 %v9220, %v9457
        %v9556 = vsub.f32 %v8452, %v9458
        %v9557 = vsub.f32 %v8454, %v9458
        %v9558 = vsub.f32 %v9224, %v9458
        %v9559 = vsub.f32 %v9226, %v9458
        %v9560 = vsub.f32 %v8456, %v9459
        %v9561 = vsub.f32 %v8458, %v9459
        %v9562 = vsub.f32 %v9228, %v9459
        %v9563 = vsub.f32 %v9230, %v9459
        %v9564 = vsub.f32 %v8462, %v9460
        %v9565 = vsub.f32 %v8464, %v9460
        %v9566 = vsub.f32 %v9234, %v9460
        %v9567 = vsub.f32 %v9236, %v9460
        %v9568 = vsub.f32 %v8466, %v9461
        %v9569 = vsub.f32 %v8468, %v9461
        %v9570 = vsub.f32 %v9238, %v9461
        %v9571 = vsub.f32 %v9240, %v9461
        %v9572 = vsub.f32 %v8472, %v9462
        %v9573 = vsub.f32 %v8474, %v9462
        %v9574 = vsub.f32 %v9244, %v9462
        %v9575 = vsub.f32 %v9246, %v9462
        %v9576 = vsub.f32 %v8476, %v9463
        %v9577 = vsub.f32 %v8478, %v9463
        %v9578 = vsub.f32 %v9248, %v9463
        %v9579 = vsub.f32 %v9250, %v9463
        %v9580 = vsub.f32 %v8482, %v9464
        %v9581 = vsub.f32 %v8484, %v9464
        %v9582 = vsub.f32 %v9254, %v9464
        %v9583 = vsub.f32 %v9256, %v9464
        %v9584 = vsub.f32 %v8486, %v9465
        %v9585 = vsub.f32 %v8488, %v9465
        %v9586 = vsub.f32 %v9258, %v9465
        %v9587 = vsub.f32 %v9260, %v9465
        %v9588 = vsub.f32 %v8492, %v9466
        %v9589 = vsub.f32 %v8494, %v9466
        %v9590 = vsub.f32 %v9264, %v9466
        %v9591 = vsub.f32 %v9266, %v9466
        %v9592 = vsub.f32 %v8496, %v9467
        %v9593 = vsub.f32 %v8498, %v9467
        %v9594 = vsub.f32 %v9268, %v9467
        %v9595 = vsub.f32 %v9270, %v9467
        %v9596 = vmul.f32 %v9468, %v9468
        %v9597 = vmul.f32 %v9469, %v9469
        %v9598 = vmul.f32 %v9470, %v9470
        %v9599 = vmul.f32 %v9471, %v9471
        %v9600 = vmul.f32 %v9472, %v9472
        %v9601 = vmul.f32 %v9473, %v9473
        %v9602 = vmul.f32 %v9474, %v9474
        %v9603 = vmul.f32 %v9475, %v9475
        %v9604 = vmul.f32 %v9476, %v9476
        %v9605 = vmul.f32 %v9477, %v9477
        %v9606 = vmul.f32 %v9478, %v9478
        %v9607 = vmul.f32 %v9479, %v9479
        %v9608 = vmul.f32 %v9480, %v9480
        %v9609 = vmul.f32 %v9481, %v9481
        %v9610 = vmul.f32 %v9482, %v9482
        %v9611 = vmul.f32 %v9483, %v9483
        %v9612 = vmul.f32 %v9484, %v9484
        %v9613 = vmul.f32 %v9485, %v9485
        %v9614 = vmul.f32 %v9486, %v9486
        %v9615 = vmul.f32 %v9487, %v9487
        %v9616 = vmul.f32 %v9488, %v9488
        %v9617 = vmul.f32 %v9489, %v9489
        %v9618 = vmul.f32 %v9490, %v9490
        %v9619 = vmul.f32 %v9491, %v9491
        %v9620 = vmul.f32 %v9492, %v9492
        %v9621 = vmul.f32 %v9493, %v9493
        %v9622 = vmul.f32 %v9494, %v9494
        %v9623 = vmul.f32 %v9495, %v9495
        %v9624 = vmul.f32 %v9496, %v9496
        %v9625 = vmul.f32 %v9497, %v9497
        %v9626 = vmul.f32 %v9498, %v9498
        %v9627 = vmul.f32 %v9499, %v9499
        %v9628 = vmul.f32 %v9500, %v9500
        %v9629 = vmul.f32 %v9501, %v9501
        %v9630 = vmul.f32 %v9502, %v9502
        %v9631 = vmul.f32 %v9503, %v9503
        %v9632 = vmul.f32 %v9504, %v9504
        %v9633 = vmul.f32 %v9505, %v9505
        %v9634 = vmul.f32 %v9506, %v9506
        %v9635 = vmul.f32 %v9507, %v9507
        %v9636 = vmul.f32 %v9508, %v9508
        %v9637 = vmul.f32 %v9509, %v9509
        %v9638 = vmul.f32 %v9510, %v9510
        %v9639 = vmul.f32 %v9511, %v9511
        %v9640 = vmul.f32 %v9512, %v9512
        %v9641 = vmul.f32 %v9513, %v9513
        %v9642 = vmul.f32 %v9514, %v9514
        %v9643 = vmul.f32 %v9515, %v9515
        %v9644 = vmul.f32 %v9516, %v9516
        %v9645 = vmul.f32 %v9517, %v9517
        %v9646 = vmul.f32 %v9518, %v9518
        %v9647 = vmul.f32 %v9519, %v9519
        %v9648 = vmul.f32 %v9520, %v9520
        %v9649 = vmul.f32 %v9521, %v9521
        %v9650 = vmul.f32 %v9522, %v9522
        %v9651 = vmul.f32 %v9523, %v9523
        %v9652 = vmul.f32 %v9524, %v9524
        %v9653 = vmul.f32 %v9525, %v9525
        %v9654 = vmul.f32 %v9526, %v9526
        %v9655 = vmul.f32 %v9527, %v9527
        %v9656 = vmul.f32 %v9528, %v9528
        %v9657 = vmul.f32 %v9529, %v9529
        %v9658 = vmul.f32 %v9530, %v9530
        %v9659 = vmul.f32 %v9531, %v9531
        %v9660 = vmul.f32 %v9532, %v9532
        %v9661 = vmul.f32 %v9533, %v9533
        %v9662 = vmul.f32 %v9534, %v9534
        %v9663 = vmul.f32 %v9535, %v9535
        %v9664 = vmul.f32 %v9536, %v9536
        %v9665 = vmul.f32 %v9537, %v9537
        %v9666 = vmul.f32 %v9538, %v9538
        %v9667 = vmul.f32 %v9539, %v9539
        %v9668 = vmul.f32 %v9540, %v9540
        %v9669 = vmul.f32 %v9541, %v9541
        %v9670 = vmul.f32 %v9542, %v9542
        %v9671 = vmul.f32 %v9543, %v9543
        %v9672 = vmul.f32 %v9544, %v9544
        %v9673 = vmul.f32 %v9545, %v9545
        %v9674 = vmul.f32 %v9546, %v9546
        %v9675 = vmul.f32 %v9547, %v9547
        %v9676 = vmul.f32 %v9548, %v9548
        %v9677 = vmul.f32 %v9549, %v9549
        %v9678 = vmul.f32 %v9550, %v9550
        %v9679 = vmul.f32 %v9551, %v9551
        %v9680 = vmul.f32 %v9552, %v9552
        %v9681 = vmul.f32 %v9553, %v9553
        %v9682 = vmul.f32 %v9554, %v9554
        %v9683 = vmul.f32 %v9555, %v9555
        %v9684 = vmul.f32 %v9556, %v9556
        %v9685 = vmul.f32 %v9557, %v9557
        %v9686 = vmul.f32 %v9558, %v9558
        %v9687 = vmul.f32 %v9559, %v9559
        %v9688 = vmul.f32 %v9560, %v9560
        %v9689 = vmul.f32 %v9561, %v9561
        %v9690 = vmul.f32 %v9562, %v9562
        %v9691 = vmul.f32 %v9563, %v9563
        %v9692 = vmul.f32 %v9564, %v9564
        %v9693 = vmul.f32 %v9565, %v9565
        %v9694 = vmul.f32 %v9566, %v9566
        %v9695 = vmul.f32 %v9567, %v9567
        %v9696 = vmul.f32 %v9568, %v9568
        %v9697 = vmul.f32 %v9569, %v9569
        %v9698 = vmul.f32 %v9570, %v9570
        %v9699 = vmul.f32 %v9571, %v9571
        %v9700 = vmul.f32 %v9572, %v9572
        %v9701 = vmul.f32 %v9573, %v9573
        %v9702 = vmul.f32 %v9574, %v9574
        %v9703 = vmul.f32 %v9575, %v9575
        %v9704 = vmul.f32 %v9576, %v9576
        %v9705 = vmul.f32 %v9577, %v9577
        %v9706 = vmul.f32 %v9578, %v9578
        %v9707 = vmul.f32 %v9579, %v9579
        %v9708 = vmul.f32 %v9580, %v9580
        %v9709 = vmul.f32 %v9581, %v9581
        %v9710 = vmul.f32 %v9582, %v9582
        %v9711 = vmul.f32 %v9583, %v9583
        %v9712 = vmul.f32 %v9584, %v9584
        %v9713 = vmul.f32 %v9585, %v9585
        %v9714 = vmul.f32 %v9586, %v9586
        %v9715 = vmul.f32 %v9587, %v9587
        %v9716 = vmul.f32 %v9588, %v9588
        %v9717 = vmul.f32 %v9589, %v9589
        %v9718 = vmul.f32 %v9590, %v9590
        %v9719 = vmul.f32 %v9591, %v9591
        %v9720 = vmul.f32 %v9592, %v9592
        %v9721 = vmul.f32 %v9593, %v9593
        %v9722 = vmul.f32 %v9594, %v9594
        %v9723 = vmul.f32 %v9595, %v9595
        %v9724 = vadd.f32 %v9596, %v9597
        %v9725 = vadd.f32 %v9724, %v9598
        %v9726 = vadd.f32 %v9725, %v9599
        %9727 = vadd.xlane.f32.xlu0 %v9726
        %v9728 = vpop.xlane.xlu0 %9727
        %v9729 = vadd.f32 %v9600, %v9601
        %v9730 = vadd.f32 %v9729, %v9602
        %v9731 = vadd.f32 %v9730, %v9603
        %9732 = vadd.xlane.f32.xlu0 %v9731
        %v9733 = vpop.xlane.xlu0 %9732
        %v9734 = vadd.f32 %v9604, %v9605
        %v9735 = vadd.f32 %v9734, %v9606
        %v9736 = vadd.f32 %v9735, %v9607
        %9737 = vadd.xlane.f32.xlu0 %v9736
        %v9738 = vpop.xlane.xlu0 %9737
        %v9739 = vadd.f32 %v9608, %v9609
        %v9740 = vadd.f32 %v9739, %v9610
        %v9741 = vadd.f32 %v9740, %v9611
        %9742 = vadd.xlane.f32.xlu0 %v9741
        %v9743 = vpop.xlane.xlu0 %9742
        %v9744 = vadd.f32 %v9612, %v9613
        %v9745 = vadd.f32 %v9744, %v9614
        %v9746 = vadd.f32 %v9745, %v9615
        %9747 = vadd.xlane.f32.xlu0 %v9746
        %v9748 = vpop.xlane.xlu0 %9747
        %v9749 = vadd.f32 %v9616, %v9617
        %v9750 = vadd.f32 %v9749, %v9618
        %v9751 = vadd.f32 %v9750, %v9619
        %9752 = vadd.xlane.f32.xlu0 %v9751
        %v9753 = vpop.xlane.xlu0 %9752
        %v9754 = vadd.f32 %v9620, %v9621
        %v9755 = vadd.f32 %v9754, %v9622
        %v9756 = vadd.f32 %v9755, %v9623
        %9757 = vadd.xlane.f32.xlu0 %v9756
        %v9758 = vpop.xlane.xlu0 %9757
        %v9759 = vadd.f32 %v9624, %v9625
        %v9760 = vadd.f32 %v9759, %v9626
        %v9761 = vadd.f32 %v9760, %v9627
        %9762 = vadd.xlane.f32.xlu0 %v9761
        %v9763 = vpop.xlane.xlu0 %9762
        %v9764 = vadd.f32 %v9628, %v9629
        %v9765 = vadd.f32 %v9764, %v9630
        %v9766 = vadd.f32 %v9765, %v9631
        %9767 = vadd.xlane.f32.xlu0 %v9766
        %v9768 = vpop.xlane.xlu0 %9767
        %v9769 = vadd.f32 %v9632, %v9633
        %v9770 = vadd.f32 %v9769, %v9634
        %v9771 = vadd.f32 %v9770, %v9635
        %9772 = vadd.xlane.f32.xlu0 %v9771
        %v9773 = vpop.xlane.xlu0 %9772
        %v9774 = vadd.f32 %v9636, %v9637
        %v9775 = vadd.f32 %v9774, %v9638
        %v9776 = vadd.f32 %v9775, %v9639
        %9777 = vadd.xlane.f32.xlu0 %v9776
        %v9778 = vpop.xlane.xlu0 %9777
        %v9779 = vadd.f32 %v9640, %v9641
        %v9780 = vadd.f32 %v9779, %v9642
        %v9781 = vadd.f32 %v9780, %v9643
        %9782 = vadd.xlane.f32.xlu0 %v9781
        %v9783 = vpop.xlane.xlu0 %9782
        %v9784 = vadd.f32 %v9644, %v9645
        %v9785 = vadd.f32 %v9784, %v9646
        %v9786 = vadd.f32 %v9785, %v9647
        %9787 = vadd.xlane.f32.xlu0 %v9786
        %v9788 = vpop.xlane.xlu0 %9787
        %v9789 = vadd.f32 %v9648, %v9649
        %v9790 = vadd.f32 %v9789, %v9650
        %v9791 = vadd.f32 %v9790, %v9651
        %9792 = vadd.xlane.f32.xlu0 %v9791
        %v9793 = vpop.xlane.xlu0 %9792
        %v9794 = vadd.f32 %v9652, %v9653
        %v9795 = vadd.f32 %v9794, %v9654
        %v9796 = vadd.f32 %v9795, %v9655
        %9797 = vadd.xlane.f32.xlu0 %v9796
        %v9798 = vpop.xlane.xlu0 %9797
        %v9799 = vadd.f32 %v9656, %v9657
        %v9800 = vadd.f32 %v9799, %v9658
        %v9801 = vadd.f32 %v9800, %v9659
        %9802 = vadd.xlane.f32.xlu0 %v9801
        %v9803 = vpop.xlane.xlu0 %9802
        %v9804 = vadd.f32 %v9660, %v9661
        %v9805 = vadd.f32 %v9804, %v9662
        %v9806 = vadd.f32 %v9805, %v9663
        %9807 = vadd.xlane.f32.xlu0 %v9806
        %v9808 = vpop.xlane.xlu0 %9807
        %v9809 = vadd.f32 %v9664, %v9665
        %v9810 = vadd.f32 %v9809, %v9666
        %v9811 = vadd.f32 %v9810, %v9667
        %9812 = vadd.xlane.f32.xlu0 %v9811
        %v9813 = vpop.xlane.xlu0 %9812
        %v9814 = vadd.f32 %v9668, %v9669
        %v9815 = vadd.f32 %v9814, %v9670
        %v9816 = vadd.f32 %v9815, %v9671
        %9817 = vadd.xlane.f32.xlu0 %v9816
        %v9818 = vpop.xlane.xlu0 %9817
        %v9819 = vadd.f32 %v9672, %v9673
        %v9820 = vadd.f32 %v9819, %v9674
        %v9821 = vadd.f32 %v9820, %v9675
        %9822 = vadd.xlane.f32.xlu0 %v9821
        %v9823 = vpop.xlane.xlu0 %9822
        %v9824 = vadd.f32 %v9676, %v9677
        %v9825 = vadd.f32 %v9824, %v9678
        %v9826 = vadd.f32 %v9825, %v9679
        %9827 = vadd.xlane.f32.xlu0 %v9826
        %v9828 = vpop.xlane.xlu0 %9827
        %v9829 = vadd.f32 %v9680, %v9681
        %v9830 = vadd.f32 %v9829, %v9682
        %v9831 = vadd.f32 %v9830, %v9683
        %9832 = vadd.xlane.f32.xlu0 %v9831
        %v9833 = vpop.xlane.xlu0 %9832
        %v9834 = vadd.f32 %v9684, %v9685
        %v9835 = vadd.f32 %v9834, %v9686
        %v9836 = vadd.f32 %v9835, %v9687
        %9837 = vadd.xlane.f32.xlu0 %v9836
        %v9838 = vpop.xlane.xlu0 %9837
        %v9839 = vadd.f32 %v9688, %v9689
        %v9840 = vadd.f32 %v9839, %v9690
        %v9841 = vadd.f32 %v9840, %v9691
        %9842 = vadd.xlane.f32.xlu0 %v9841
        %v9843 = vpop.xlane.xlu0 %9842
        %v9844 = vadd.f32 %v9692, %v9693
        %v9845 = vadd.f32 %v9844, %v9694
        %v9846 = vadd.f32 %v9845, %v9695
        %9847 = vadd.xlane.f32.xlu0 %v9846
        %v9848 = vpop.xlane.xlu0 %9847
        %v9849 = vadd.f32 %v9696, %v9697
        %v9850 = vadd.f32 %v9849, %v9698
        %v9851 = vadd.f32 %v9850, %v9699
        %9852 = vadd.xlane.f32.xlu0 %v9851
        %v9853 = vpop.xlane.xlu0 %9852
        %v9854 = vadd.f32 %v9700, %v9701
        %v9855 = vadd.f32 %v9854, %v9702
        %v9856 = vadd.f32 %v9855, %v9703
        %9857 = vadd.xlane.f32.xlu0 %v9856
        %v9858 = vpop.xlane.xlu0 %9857
        %v9859 = vadd.f32 %v9704, %v9705
        %v9860 = vadd.f32 %v9859, %v9706
        %v9861 = vadd.f32 %v9860, %v9707
        %9862 = vadd.xlane.f32.xlu0 %v9861
        %v9863 = vpop.xlane.xlu0 %9862
        %v9864 = vadd.f32 %v9708, %v9709
        %v9865 = vadd.f32 %v9864, %v9710
        %v9866 = vadd.f32 %v9865, %v9711
        %9867 = vadd.xlane.f32.xlu0 %v9866
        %v9868 = vpop.xlane.xlu0 %9867
        %v9869 = vadd.f32 %v9712, %v9713
        %v9870 = vadd.f32 %v9869, %v9714
        %v9871 = vadd.f32 %v9870, %v9715
        %9872 = vadd.xlane.f32.xlu0 %v9871
        %v9873 = vpop.xlane.xlu0 %9872
        %v9874 = vadd.f32 %v9716, %v9717
        %v9875 = vadd.f32 %v9874, %v9718
        %v9876 = vadd.f32 %v9875, %v9719
        %9877 = vadd.xlane.f32.xlu0 %v9876
        %v9878 = vpop.xlane.xlu0 %9877
        %v9879 = vadd.f32 %v9720, %v9721
        %v9880 = vadd.f32 %v9879, %v9722
        %v9881 = vadd.f32 %v9880, %v9723
        %9882 = vadd.xlane.f32.xlu0 %v9881
        %v9883 = vpop.xlane.xlu0 %9882
        %v9884 = vmul.f32 %v9728, %v5198
        %v9885 = vmul.f32 %v9733, %v5198
        %v9886 = vmul.f32 %v9738, %v5198
        %v9887 = vmul.f32 %v9743, %v5198
        %v9888 = vmul.f32 %v9748, %v5198
        %v9889 = vmul.f32 %v9753, %v5198
        %v9890 = vmul.f32 %v9758, %v5198
        %v9891 = vmul.f32 %v9763, %v5198
        %v9892 = vmul.f32 %v9768, %v5198
        %v9893 = vmul.f32 %v9773, %v5198
        %v9894 = vmul.f32 %v9778, %v5198
        %v9895 = vmul.f32 %v9783, %v5198
        %v9896 = vmul.f32 %v9788, %v5198
        %v9897 = vmul.f32 %v9793, %v5198
        %v9898 = vmul.f32 %v9798, %v5198
        %v9899 = vmul.f32 %v9803, %v5198
        %v9900 = vmul.f32 %v9808, %v5198
        %v9901 = vmul.f32 %v9813, %v5198
        %v9902 = vmul.f32 %v9818, %v5198
        %v9903 = vmul.f32 %v9823, %v5198
        %v9904 = vmul.f32 %v9828, %v5198
        %v9905 = vmul.f32 %v9833, %v5198
        %v9906 = vmul.f32 %v9838, %v5198
        %v9907 = vmul.f32 %v9843, %v5198
        %v9908 = vmul.f32 %v9848, %v5198
        %v9909 = vmul.f32 %v9853, %v5198
        %v9910 = vmul.f32 %v9858, %v5198
        %v9911 = vmul.f32 %v9863, %v5198
        %v9912 = vmul.f32 %v9868, %v5198
        %v9913 = vmul.f32 %v9873, %v5198
        %v9914 = vmul.f32 %v9878, %v5198
        %v9915 = vmul.f32 %v9883, %v5198
        %v9916 = vadd.f32 %v9884, 1e-05
        %v9917 = vadd.f32 %v9885, 1e-05
        %v9918 = vadd.f32 %v9886, 1e-05
        %v9919 = vadd.f32 %v9887, 1e-05
        %v9920 = vadd.f32 %v9888, 1e-05
        %v9921 = vadd.f32 %v9889, 1e-05
        %v9922 = vadd.f32 %v9890, 1e-05
        %v9923 = vadd.f32 %v9891, 1e-05
        %v9924 = vadd.f32 %v9892, 1e-05
        %v9925 = vadd.f32 %v9893, 1e-05
        %v9926 = vadd.f32 %v9894, 1e-05
        %v9927 = vadd.f32 %v9895, 1e-05
        %v9928 = vadd.f32 %v9896, 1e-05
        %v9929 = vadd.f32 %v9897, 1e-05
        %v9930 = vadd.f32 %v9898, 1e-05
        %v9931 = vadd.f32 %v9899, 1e-05
        %v9932 = vadd.f32 %v9900, 1e-05
        %v9933 = vadd.f32 %v9901, 1e-05
        %v9934 = vadd.f32 %v9902, 1e-05
        %v9935 = vadd.f32 %v9903, 1e-05
        %v9936 = vadd.f32 %v9904, 1e-05
        %v9937 = vadd.f32 %v9905, 1e-05
        %v9938 = vadd.f32 %v9906, 1e-05
        %v9939 = vadd.f32 %v9907, 1e-05
        %v9940 = vadd.f32 %v9908, 1e-05
        %v9941 = vadd.f32 %v9909, 1e-05
        %v9942 = vadd.f32 %v9910, 1e-05
        %v9943 = vadd.f32 %v9911, 1e-05
        %v9944 = vadd.f32 %v9912, 1e-05
        %v9945 = vadd.f32 %v9913, 1e-05
        %v9946 = vadd.f32 %v9914, 1e-05
        %v9947 = vadd.f32 %v9915, 1e-05
        %v9948 = vrsqrt.pop %v9916
        %v9949 = vrsqrt.pop %v9917
        %v9950 = vrsqrt.pop %v9918
        %v9951 = vrsqrt.pop %v9919
        %v9952 = vrsqrt.pop %v9920
        %v9953 = vrsqrt.pop %v9921
        %v9954 = vrsqrt.pop %v9922
        %v9955 = vrsqrt.pop %v9923
        %v9956 = vrsqrt.pop %v9924
        %v9957 = vrsqrt.pop %v9925
        %v9958 = vrsqrt.pop %v9926
        %v9959 = vrsqrt.pop %v9927
        %v9960 = vrsqrt.pop %v9928
        %v9961 = vrsqrt.pop %v9929
        %v9962 = vrsqrt.pop %v9930
        %v9963 = vrsqrt.pop %v9931
        %v9964 = vrsqrt.pop %v9932
        %v9965 = vrsqrt.pop %v9933
        %v9966 = vrsqrt.pop %v9934
        %v9967 = vrsqrt.pop %v9935
        %v9968 = vrsqrt.pop %v9936
        %v9969 = vrsqrt.pop %v9937
        %v9970 = vrsqrt.pop %v9938
        %v9971 = vrsqrt.pop %v9939
        %v9972 = vrsqrt.pop %v9940
        %v9973 = vrsqrt.pop %v9941
        %v9974 = vrsqrt.pop %v9942
        %v9975 = vrsqrt.pop %v9943
        %v9976 = vrsqrt.pop %v9944
        %v9977 = vrsqrt.pop %v9945
        %v9978 = vrsqrt.pop %v9946
        %v9979 = vrsqrt.pop %v9947
        %v9981 = vlaneseq
        %v9982 = vshrl.u32 %v9981, 7
        %v9983 = vsub.s32 0, %v9982
        %v9984 = vrot.slane %v9273, %v9983
        %v9985 = vlaneseq
        %v9986 = vshrl.u32 %v9985, 7
        %v9987 = vsub.s32 1, %v9986
        %v9988 = vrot.slane %v9273, %v9987
        %v9989 = vlaneseq
        %v9990 = vshrl.u32 %v9989, 7
        %v9991 = vsub.s32 2, %v9990
        %v9992 = vrot.slane %v9273, %v9991
        %v9993 = vlaneseq
        %v9994 = vshrl.u32 %v9993, 7
        %v9995 = vsub.s32 3, %v9994
        %v9996 = vrot.slane %v9273, %v9995
        %v10001 = vmul.f32 %v9948, %v9984
        %v10002 = vmul.f32 %v9948, %v9988
        %v10003 = vmul.f32 %v9948, %v9992
        %v10004 = vmul.f32 %v9948, %v9996
        %v10005 = vmul.f32 %v9949, %v9984
        %v10006 = vmul.f32 %v9949, %v9988
        %v10007 = vmul.f32 %v9949, %v9992
        %v10008 = vmul.f32 %v9949, %v9996
        %v10009 = vmul.f32 %v9950, %v9984
        %v10010 = vmul.f32 %v9950, %v9988
        %v10011 = vmul.f32 %v9950, %v9992
        %v10012 = vmul.f32 %v9950, %v9996
        %v10013 = vmul.f32 %v9951, %v9984
        %v10014 = vmul.f32 %v9951, %v9988
        %v10015 = vmul.f32 %v9951, %v9992
        %v10016 = vmul.f32 %v9951, %v9996
        %v10017 = vmul.f32 %v9952, %v9984
        %v10018 = vmul.f32 %v9952, %v9988
        %v10019 = vmul.f32 %v9952, %v9992
        %v10020 = vmul.f32 %v9952, %v9996
        %v10021 = vmul.f32 %v9953, %v9984
        %v10022 = vmul.f32 %v9953, %v9988
        %v10023 = vmul.f32 %v9953, %v9992
        %v10024 = vmul.f32 %v9953, %v9996
        %v10025 = vmul.f32 %v9954, %v9984
        %v10026 = vmul.f32 %v9954, %v9988
        %v10027 = vmul.f32 %v9954, %v9992
        %v10028 = vmul.f32 %v9954, %v9996
        %v10029 = vmul.f32 %v9955, %v9984
        %v10030 = vmul.f32 %v9955, %v9988
        %v10031 = vmul.f32 %v9955, %v9992
        %v10032 = vmul.f32 %v9955, %v9996
        %v10033 = vmul.f32 %v9956, %v9984
        %v10034 = vmul.f32 %v9956, %v9988
        %v10035 = vmul.f32 %v9956, %v9992
        %v10036 = vmul.f32 %v9956, %v9996
        %v10037 = vmul.f32 %v9957, %v9984
        %v10038 = vmul.f32 %v9957, %v9988
        %v10039 = vmul.f32 %v9957, %v9992
        %v10040 = vmul.f32 %v9957, %v9996
        %v10041 = vmul.f32 %v9958, %v9984
        %v10042 = vmul.f32 %v9958, %v9988
        %v10043 = vmul.f32 %v9958, %v9992
        %v10044 = vmul.f32 %v9958, %v9996
        %v10045 = vmul.f32 %v9959, %v9984
        %v10046 = vmul.f32 %v9959, %v9988
        %v10047 = vmul.f32 %v9959, %v9992
        %v10048 = vmul.f32 %v9959, %v9996
        %v10049 = vmul.f32 %v9960, %v9984
        %v10050 = vmul.f32 %v9960, %v9988
        %v10051 = vmul.f32 %v9960, %v9992
        %v10052 = vmul.f32 %v9960, %v9996
        %v10053 = vmul.f32 %v9961, %v9984
        %v10054 = vmul.f32 %v9961, %v9988
        %v10055 = vmul.f32 %v9961, %v9992
        %v10056 = vmul.f32 %v9961, %v9996
        %v10057 = vmul.f32 %v9962, %v9984
        %v10058 = vmul.f32 %v9962, %v9988
        %v10059 = vmul.f32 %v9962, %v9992
        %v10060 = vmul.f32 %v9962, %v9996
        %v10061 = vmul.f32 %v9963, %v9984
        %v10062 = vmul.f32 %v9963, %v9988
        %v10063 = vmul.f32 %v9963, %v9992
        %v10064 = vmul.f32 %v9963, %v9996
        %v10065 = vmul.f32 %v9964, %v9984
        %v10066 = vmul.f32 %v9964, %v9988
        %v10067 = vmul.f32 %v9964, %v9992
        %v10068 = vmul.f32 %v9964, %v9996
        %v10069 = vmul.f32 %v9965, %v9984
        %v10070 = vmul.f32 %v9965, %v9988
        %v10071 = vmul.f32 %v9965, %v9992
        %v10072 = vmul.f32 %v9965, %v9996
        %v10073 = vmul.f32 %v9966, %v9984
        %v10074 = vmul.f32 %v9966, %v9988
        %v10075 = vmul.f32 %v9966, %v9992
        %v10076 = vmul.f32 %v9966, %v9996
        %v10077 = vmul.f32 %v9967, %v9984
        %v10078 = vmul.f32 %v9967, %v9988
        %v10079 = vmul.f32 %v9967, %v9992
        %v10080 = vmul.f32 %v9967, %v9996
        %v10081 = vmul.f32 %v9968, %v9984
        %v10082 = vmul.f32 %v9968, %v9988
        %v10083 = vmul.f32 %v9968, %v9992
        %v10084 = vmul.f32 %v9968, %v9996
        %v10085 = vmul.f32 %v9969, %v9984
        %v10086 = vmul.f32 %v9969, %v9988
        %v10087 = vmul.f32 %v9969, %v9992
        %v10088 = vmul.f32 %v9969, %v9996
        %v10089 = vmul.f32 %v9970, %v9984
        %v10090 = vmul.f32 %v9970, %v9988
        %v10091 = vmul.f32 %v9970, %v9992
        %v10092 = vmul.f32 %v9970, %v9996
        %v10093 = vmul.f32 %v9971, %v9984
        %v10094 = vmul.f32 %v9971, %v9988
        %v10095 = vmul.f32 %v9971, %v9992
        %v10096 = vmul.f32 %v9971, %v9996
        %v10097 = vmul.f32 %v9972, %v9984
        %v10098 = vmul.f32 %v9972, %v9988
        %v10099 = vmul.f32 %v9972, %v9992
        %v10100 = vmul.f32 %v9972, %v9996
        %v10101 = vmul.f32 %v9973, %v9984
        %v10102 = vmul.f32 %v9973, %v9988
        %v10103 = vmul.f32 %v9973, %v9992
        %v10104 = vmul.f32 %v9973, %v9996
        %v10105 = vmul.f32 %v9974, %v9984
        %v10106 = vmul.f32 %v9974, %v9988
        %v10107 = vmul.f32 %v9974, %v9992
        %v10108 = vmul.f32 %v9974, %v9996
        %v10109 = vmul.f32 %v9975, %v9984
        %v10110 = vmul.f32 %v9975, %v9988
        %v10111 = vmul.f32 %v9975, %v9992
        %v10112 = vmul.f32 %v9975, %v9996
        %v10113 = vmul.f32 %v9976, %v9984
        %v10114 = vmul.f32 %v9976, %v9988
        %v10115 = vmul.f32 %v9976, %v9992
        %v10116 = vmul.f32 %v9976, %v9996
        %v10117 = vmul.f32 %v9977, %v9984
        %v10118 = vmul.f32 %v9977, %v9988
        %v10119 = vmul.f32 %v9977, %v9992
        %v10120 = vmul.f32 %v9977, %v9996
        %v10121 = vmul.f32 %v9978, %v9984
        %v10122 = vmul.f32 %v9978, %v9988
        %v10123 = vmul.f32 %v9978, %v9992
        %v10124 = vmul.f32 %v9978, %v9996
        %v10125 = vmul.f32 %v9979, %v9984
        %v10126 = vmul.f32 %v9979, %v9988
        %v10127 = vmul.f32 %v9979, %v9992
        %v10128 = vmul.f32 %v9979, %v9996
        %v10129 = vmul.f32 %v9468, %v10001
        %v10130 = vmul.f32 %v9469, %v10002
        %v10131 = vmul.f32 %v9470, %v10003
        %v10132 = vmul.f32 %v9471, %v10004
        %v10133 = vmul.f32 %v9472, %v10005
        %v10134 = vmul.f32 %v9473, %v10006
        %v10135 = vmul.f32 %v9474, %v10007
        %v10136 = vmul.f32 %v9475, %v10008
        %v10137 = vmul.f32 %v9476, %v10009
        %v10138 = vmul.f32 %v9477, %v10010
        %v10139 = vmul.f32 %v9478, %v10011
        %v10140 = vmul.f32 %v9479, %v10012
        %v10141 = vmul.f32 %v9480, %v10013
        %v10142 = vmul.f32 %v9481, %v10014
        %v10143 = vmul.f32 %v9482, %v10015
        %v10144 = vmul.f32 %v9483, %v10016
        %v10145 = vmul.f32 %v9484, %v10017
        %v10146 = vmul.f32 %v9485, %v10018
        %v10147 = vmul.f32 %v9486, %v10019
        %v10148 = vmul.f32 %v9487, %v10020
        %v10149 = vmul.f32 %v9488, %v10021
        %v10150 = vmul.f32 %v9489, %v10022
        %v10151 = vmul.f32 %v9490, %v10023
        %v10152 = vmul.f32 %v9491, %v10024
        %v10153 = vmul.f32 %v9492, %v10025
        %v10154 = vmul.f32 %v9493, %v10026
        %v10155 = vmul.f32 %v9494, %v10027
        %v10156 = vmul.f32 %v9495, %v10028
        %v10157 = vmul.f32 %v9496, %v10029
        %v10158 = vmul.f32 %v9497, %v10030
        %v10159 = vmul.f32 %v9498, %v10031
        %v10160 = vmul.f32 %v9499, %v10032
        %v10161 = vmul.f32 %v9500, %v10033
        %v10162 = vmul.f32 %v9501, %v10034
        %v10163 = vmul.f32 %v9502, %v10035
        %v10164 = vmul.f32 %v9503, %v10036
        %v10165 = vmul.f32 %v9504, %v10037
        %v10166 = vmul.f32 %v9505, %v10038
        %v10167 = vmul.f32 %v9506, %v10039
        %v10168 = vmul.f32 %v9507, %v10040
        %v10169 = vmul.f32 %v9508, %v10041
        %v10170 = vmul.f32 %v9509, %v10042
        %v10171 = vmul.f32 %v9510, %v10043
        %v10172 = vmul.f32 %v9511, %v10044
        %v10173 = vmul.f32 %v9512, %v10045
        %v10174 = vmul.f32 %v9513, %v10046
        %v10175 = vmul.f32 %v9514, %v10047
        %v10176 = vmul.f32 %v9515, %v10048
        %v10177 = vmul.f32 %v9516, %v10049
        %v10178 = vmul.f32 %v9517, %v10050
        %v10179 = vmul.f32 %v9518, %v10051
        %v10180 = vmul.f32 %v9519, %v10052
        %v10181 = vmul.f32 %v9520, %v10053
        %v10182 = vmul.f32 %v9521, %v10054
        %v10183 = vmul.f32 %v9522, %v10055
        %v10184 = vmul.f32 %v9523, %v10056
        %v10185 = vmul.f32 %v9524, %v10057
        %v10186 = vmul.f32 %v9525, %v10058
        %v10187 = vmul.f32 %v9526, %v10059
        %v10188 = vmul.f32 %v9527, %v10060
        %v10189 = vmul.f32 %v9528, %v10061
        %v10190 = vmul.f32 %v9529, %v10062
        %v10191 = vmul.f32 %v9530, %v10063
        %v10192 = vmul.f32 %v9531, %v10064
        %v10193 = vmul.f32 %v9532, %v10065
        %v10194 = vmul.f32 %v9533, %v10066
        %v10195 = vmul.f32 %v9534, %v10067
        %v10196 = vmul.f32 %v9535, %v10068
        %v10197 = vmul.f32 %v9536, %v10069
        %v10198 = vmul.f32 %v9537, %v10070
        %v10199 = vmul.f32 %v9538, %v10071
        %v10200 = vmul.f32 %v9539, %v10072
        %v10201 = vmul.f32 %v9540, %v10073
        %v10202 = vmul.f32 %v9541, %v10074
        %v10203 = vmul.f32 %v9542, %v10075
        %v10204 = vmul.f32 %v9543, %v10076
        %v10205 = vmul.f32 %v9544, %v10077
        %v10206 = vmul.f32 %v9545, %v10078
        %v10207 = vmul.f32 %v9546, %v10079
        %v10208 = vmul.f32 %v9547, %v10080
        %v10209 = vmul.f32 %v9548, %v10081
        %v10210 = vmul.f32 %v9549, %v10082
        %v10211 = vmul.f32 %v9550, %v10083
        %v10212 = vmul.f32 %v9551, %v10084
        %v10213 = vmul.f32 %v9552, %v10085
        %v10214 = vmul.f32 %v9553, %v10086
        %v10215 = vmul.f32 %v9554, %v10087
        %v10216 = vmul.f32 %v9555, %v10088
        %v10217 = vmul.f32 %v9556, %v10089
        %v10218 = vmul.f32 %v9557, %v10090
        %v10219 = vmul.f32 %v9558, %v10091
        %v10220 = vmul.f32 %v9559, %v10092
        %v10221 = vmul.f32 %v9560, %v10093
        %v10222 = vmul.f32 %v9561, %v10094
        %v10223 = vmul.f32 %v9562, %v10095
        %v10224 = vmul.f32 %v9563, %v10096
        %v10225 = vmul.f32 %v9564, %v10097
        %v10226 = vmul.f32 %v9565, %v10098
        %v10227 = vmul.f32 %v9566, %v10099
        %v10228 = vmul.f32 %v9567, %v10100
        %v10229 = vmul.f32 %v9568, %v10101
        %v10230 = vmul.f32 %v9569, %v10102
        %v10231 = vmul.f32 %v9570, %v10103
        %v10232 = vmul.f32 %v9571, %v10104
        %v10233 = vmul.f32 %v9572, %v10105
        %v10234 = vmul.f32 %v9573, %v10106
        %v10235 = vmul.f32 %v9574, %v10107
        %v10236 = vmul.f32 %v9575, %v10108
        %v10237 = vmul.f32 %v9576, %v10109
        %v10238 = vmul.f32 %v9577, %v10110
        %v10239 = vmul.f32 %v9578, %v10111
        %v10240 = vmul.f32 %v9579, %v10112
        %v10241 = vmul.f32 %v9580, %v10113
        %v10242 = vmul.f32 %v9581, %v10114
        %v10243 = vmul.f32 %v9582, %v10115
        %v10244 = vmul.f32 %v9583, %v10116
        %v10245 = vmul.f32 %v9584, %v10117
        %v10246 = vmul.f32 %v9585, %v10118
        %v10247 = vmul.f32 %v9586, %v10119
        %v10248 = vmul.f32 %v9587, %v10120
        %v10249 = vmul.f32 %v9588, %v10121
        %v10250 = vmul.f32 %v9589, %v10122
        %v10251 = vmul.f32 %v9590, %v10123
        %v10252 = vmul.f32 %v9591, %v10124
        %v10253 = vmul.f32 %v9592, %v10125
        %v10254 = vmul.f32 %v9593, %v10126
        %v10255 = vmul.f32 %v9594, %v10127
        %v10256 = vmul.f32 %v9595, %v10128
        %v10258 = vlaneseq
        %v10259 = vshrl.u32 %v10258, 7
        %v10260 = vsub.s32 0, %v10259
        %v10261 = vrot.slane %v9275, %v10260
        %v10262 = vlaneseq
        %v10263 = vshrl.u32 %v10262, 7
        %v10264 = vsub.s32 1, %v10263
        %v10265 = vrot.slane %v9275, %v10264
        %v10266 = vlaneseq
        %v10267 = vshrl.u32 %v10266, 7
        %v10268 = vsub.s32 2, %v10267
        %v10269 = vrot.slane %v9275, %v10268
        %v10270 = vlaneseq
        %v10271 = vshrl.u32 %v10270, 7
        %v10272 = vsub.s32 3, %v10271
        %v10273 = vrot.slane %v9275, %v10272
        %v10278 = vadd.f32 %v10129, %v10261
        %v10279 = vadd.f32 %v10130, %v10265
        %v10280 = vadd.f32 %v10131, %v10269
        %v10281 = vadd.f32 %v10132, %v10273
        %v10282 = vadd.f32 %v10133, %v10261
        %v10283 = vadd.f32 %v10134, %v10265
        %v10284 = vadd.f32 %v10135, %v10269
        %v10285 = vadd.f32 %v10136, %v10273
        %v10286 = vadd.f32 %v10137, %v10261
        %v10287 = vadd.f32 %v10138, %v10265
        %v10288 = vadd.f32 %v10139, %v10269
        %v10289 = vadd.f32 %v10140, %v10273
        %v10290 = vadd.f32 %v10141, %v10261
        %v10291 = vadd.f32 %v10142, %v10265
        %v10292 = vadd.f32 %v10143, %v10269
        %v10293 = vadd.f32 %v10144, %v10273
        %v10294 = vadd.f32 %v10145, %v10261
        %v10295 = vadd.f32 %v10146, %v10265
        %v10296 = vadd.f32 %v10147, %v10269
        %v10297 = vadd.f32 %v10148, %v10273
        %v10298 = vadd.f32 %v10149, %v10261
        %v10299 = vadd.f32 %v10150, %v10265
        %v10300 = vadd.f32 %v10151, %v10269
        %v10301 = vadd.f32 %v10152, %v10273
        %v10302 = vadd.f32 %v10153, %v10261
        %v10303 = vadd.f32 %v10154, %v10265
        %v10304 = vadd.f32 %v10155, %v10269
        %v10305 = vadd.f32 %v10156, %v10273
        %v10306 = vadd.f32 %v10157, %v10261
        %v10307 = vadd.f32 %v10158, %v10265
        %v10308 = vadd.f32 %v10159, %v10269
        %v10309 = vadd.f32 %v10160, %v10273
        %v10310 = vadd.f32 %v10161, %v10261
        %v10311 = vadd.f32 %v10162, %v10265
        %v10312 = vadd.f32 %v10163, %v10269
        %v10313 = vadd.f32 %v10164, %v10273
        %v10314 = vadd.f32 %v10165, %v10261
        %v10315 = vadd.f32 %v10166, %v10265
        %v10316 = vadd.f32 %v10167, %v10269
        %v10317 = vadd.f32 %v10168, %v10273
        %v10318 = vadd.f32 %v10169, %v10261
        %v10319 = vadd.f32 %v10170, %v10265
        %v10320 = vadd.f32 %v10171, %v10269
        %v10321 = vadd.f32 %v10172, %v10273
        %v10322 = vadd.f32 %v10173, %v10261
        %v10323 = vadd.f32 %v10174, %v10265
        %v10324 = vadd.f32 %v10175, %v10269
        %v10325 = vadd.f32 %v10176, %v10273
        %v10326 = vadd.f32 %v10177, %v10261
        %v10327 = vadd.f32 %v10178, %v10265
        %v10328 = vadd.f32 %v10179, %v10269
        %v10329 = vadd.f32 %v10180, %v10273
        %v10330 = vadd.f32 %v10181, %v10261
        %v10331 = vadd.f32 %v10182, %v10265
        %v10332 = vadd.f32 %v10183, %v10269
        %v10333 = vadd.f32 %v10184, %v10273
        %v10334 = vadd.f32 %v10185, %v10261
        %v10335 = vadd.f32 %v10186, %v10265
        %v10336 = vadd.f32 %v10187, %v10269
        %v10337 = vadd.f32 %v10188, %v10273
        %v10338 = vadd.f32 %v10189, %v10261
        %v10339 = vadd.f32 %v10190, %v10265
        %v10340 = vadd.f32 %v10191, %v10269
        %v10341 = vadd.f32 %v10192, %v10273
        %v10342 = vadd.f32 %v10193, %v10261
        %v10343 = vadd.f32 %v10194, %v10265
        %v10344 = vadd.f32 %v10195, %v10269
        %v10345 = vadd.f32 %v10196, %v10273
        %v10346 = vadd.f32 %v10197, %v10261
        %v10347 = vadd.f32 %v10198, %v10265
        %v10348 = vadd.f32 %v10199, %v10269
        %v10349 = vadd.f32 %v10200, %v10273
        %v10350 = vadd.f32 %v10201, %v10261
        %v10351 = vadd.f32 %v10202, %v10265
        %v10352 = vadd.f32 %v10203, %v10269
        %v10353 = vadd.f32 %v10204, %v10273
        %v10354 = vadd.f32 %v10205, %v10261
        %v10355 = vadd.f32 %v10206, %v10265
        %v10356 = vadd.f32 %v10207, %v10269
        %v10357 = vadd.f32 %v10208, %v10273
        %v10358 = vadd.f32 %v10209, %v10261
        %v10359 = vadd.f32 %v10210, %v10265
        %v10360 = vadd.f32 %v10211, %v10269
        %v10361 = vadd.f32 %v10212, %v10273
        %v10362 = vadd.f32 %v10213, %v10261
        %v10363 = vadd.f32 %v10214, %v10265
        %v10364 = vadd.f32 %v10215, %v10269
        %v10365 = vadd.f32 %v10216, %v10273
        %v10366 = vadd.f32 %v10217, %v10261
        %v10367 = vadd.f32 %v10218, %v10265
        %v10368 = vadd.f32 %v10219, %v10269
        %v10369 = vadd.f32 %v10220, %v10273
        %v10370 = vadd.f32 %v10221, %v10261
        %v10371 = vadd.f32 %v10222, %v10265
        %v10372 = vadd.f32 %v10223, %v10269
        %v10373 = vadd.f32 %v10224, %v10273
        %v10374 = vadd.f32 %v10225, %v10261
        %v10375 = vadd.f32 %v10226, %v10265
        %v10376 = vadd.f32 %v10227, %v10269
        %v10377 = vadd.f32 %v10228, %v10273
        %v10378 = vadd.f32 %v10229, %v10261
        %v10379 = vadd.f32 %v10230, %v10265
        %v10380 = vadd.f32 %v10231, %v10269
        %v10381 = vadd.f32 %v10232, %v10273
        %v10382 = vadd.f32 %v10233, %v10261
        %v10383 = vadd.f32 %v10234, %v10265
        %v10384 = vadd.f32 %v10235, %v10269
        %v10385 = vadd.f32 %v10236, %v10273
        %v10386 = vadd.f32 %v10237, %v10261
        %v10387 = vadd.f32 %v10238, %v10265
        %v10388 = vadd.f32 %v10239, %v10269
        %v10389 = vadd.f32 %v10240, %v10273
        %v10390 = vadd.f32 %v10241, %v10261
        %v10391 = vadd.f32 %v10242, %v10265
        %v10392 = vadd.f32 %v10243, %v10269
        %v10393 = vadd.f32 %v10244, %v10273
        %v10394 = vadd.f32 %v10245, %v10261
        %v10395 = vadd.f32 %v10246, %v10265
        %v10396 = vadd.f32 %v10247, %v10269
        %v10397 = vadd.f32 %v10248, %v10273
        %v10398 = vadd.f32 %v10249, %v10261
        %v10399 = vadd.f32 %v10250, %v10265
        %v10400 = vadd.f32 %v10251, %v10269
        %v10401 = vadd.f32 %v10252, %v10273
        %v10402 = vadd.f32 %v10253, %v10261
        %v10403 = vadd.f32 %v10254, %v10265
        %v10404 = vadd.f32 %v10255, %v10269
        %v10405 = vadd.f32 %v10256, %v10273
        %v10406 = vadd.f32 %v6041, %v10278
        %v10407 = vadd.f32 %v6042, %v10279
        %v10408 = vadd.f32 %v6043, %v10280
        %v10409 = vadd.f32 %v6044, %v10281
        %v10410 = vadd.f32 %v6045, %v10282
        %v10411 = vadd.f32 %v6046, %v10283
        %v10412 = vadd.f32 %v6047, %v10284
        %v10413 = vadd.f32 %v6048, %v10285
        %v10414 = vadd.f32 %v6049, %v10286
        %v10415 = vadd.f32 %v6050, %v10287
        %v10416 = vadd.f32 %v6051, %v10288
        %v10417 = vadd.f32 %v6052, %v10289
        %v10418 = vadd.f32 %v6053, %v10290
        %v10419 = vadd.f32 %v6054, %v10291
        %v10420 = vadd.f32 %v6055, %v10292
        %v10421 = vadd.f32 %v6056, %v10293
        %v10422 = vadd.f32 %v6057, %v10294
        %v10423 = vadd.f32 %v6058, %v10295
        %v10424 = vadd.f32 %v6059, %v10296
        %v10425 = vadd.f32 %v6060, %v10297
        %v10426 = vadd.f32 %v6061, %v10298
        %v10427 = vadd.f32 %v6062, %v10299
        %v10428 = vadd.f32 %v6063, %v10300
        %v10429 = vadd.f32 %v6064, %v10301
        %v10430 = vadd.f32 %v6065, %v10302
        %v10431 = vadd.f32 %v6066, %v10303
        %v10432 = vadd.f32 %v6067, %v10304
        %v10433 = vadd.f32 %v6068, %v10305
        %v10434 = vadd.f32 %v6069, %v10306
        %v10435 = vadd.f32 %v6070, %v10307
        %v10436 = vadd.f32 %v6071, %v10308
        %v10437 = vadd.f32 %v6072, %v10309
        %v10438 = vadd.f32 %v6073, %v10310
        %v10439 = vadd.f32 %v6074, %v10311
        %v10440 = vadd.f32 %v6075, %v10312
        %v10441 = vadd.f32 %v6076, %v10313
        %v10442 = vadd.f32 %v6077, %v10314
        %v10443 = vadd.f32 %v6078, %v10315
        %v10444 = vadd.f32 %v6079, %v10316
        %v10445 = vadd.f32 %v6080, %v10317
        %v10446 = vadd.f32 %v6081, %v10318
        %v10447 = vadd.f32 %v6082, %v10319
        %v10448 = vadd.f32 %v6083, %v10320
        %v10449 = vadd.f32 %v6084, %v10321
        %v10450 = vadd.f32 %v6085, %v10322
        %v10451 = vadd.f32 %v6086, %v10323
        %v10452 = vadd.f32 %v6087, %v10324
        %v10453 = vadd.f32 %v6088, %v10325
        %v10454 = vadd.f32 %v6089, %v10326
        %v10455 = vadd.f32 %v6090, %v10327
        %v10456 = vadd.f32 %v6091, %v10328
        %v10457 = vadd.f32 %v6092, %v10329
        %v10458 = vadd.f32 %v6093, %v10330
        %v10459 = vadd.f32 %v6094, %v10331
        %v10460 = vadd.f32 %v6095, %v10332
        %v10461 = vadd.f32 %v6096, %v10333
        %v10462 = vadd.f32 %v6097, %v10334
        %v10463 = vadd.f32 %v6098, %v10335
        %v10464 = vadd.f32 %v6099, %v10336
        %v10465 = vadd.f32 %v6100, %v10337
        %v10466 = vadd.f32 %v6101, %v10338
        %v10467 = vadd.f32 %v6102, %v10339
        %v10468 = vadd.f32 %v6103, %v10340
        %v10469 = vadd.f32 %v6104, %v10341
        %v10470 = vadd.f32 %v6105, %v10342
        %v10471 = vadd.f32 %v6106, %v10343
        %v10472 = vadd.f32 %v6107, %v10344
        %v10473 = vadd.f32 %v6108, %v10345
        %v10474 = vadd.f32 %v6109, %v10346
        %v10475 = vadd.f32 %v6110, %v10347
        %v10476 = vadd.f32 %v6111, %v10348
        %v10477 = vadd.f32 %v6112, %v10349
        %v10478 = vadd.f32 %v6113, %v10350
        %v10479 = vadd.f32 %v6114, %v10351
        %v10480 = vadd.f32 %v6115, %v10352
        %v10481 = vadd.f32 %v6116, %v10353
        %v10482 = vadd.f32 %v6117, %v10354
        %v10483 = vadd.f32 %v6118, %v10355
        %v10484 = vadd.f32 %v6119, %v10356
        %v10485 = vadd.f32 %v6120, %v10357
        %v10486 = vadd.f32 %v6121, %v10358
        %v10487 = vadd.f32 %v6122, %v10359
        %v10488 = vadd.f32 %v6123, %v10360
        %v10489 = vadd.f32 %v6124, %v10361
        %v10490 = vadd.f32 %v6125, %v10362
        %v10491 = vadd.f32 %v6126, %v10363
        %v10492 = vadd.f32 %v6127, %v10364
        %v10493 = vadd.f32 %v6128, %v10365
        %v10494 = vadd.f32 %v6129, %v10366
        %v10495 = vadd.f32 %v6130, %v10367
        %v10496 = vadd.f32 %v6131, %v10368
        %v10497 = vadd.f32 %v6132, %v10369
        %v10498 = vadd.f32 %v6133, %v10370
        %v10499 = vadd.f32 %v6134, %v10371
        %v10500 = vadd.f32 %v6135, %v10372
        %v10501 = vadd.f32 %v6136, %v10373
        %v10502 = vadd.f32 %v6137, %v10374
        %v10503 = vadd.f32 %v6138, %v10375
        %v10504 = vadd.f32 %v6139, %v10376
        %v10505 = vadd.f32 %v6140, %v10377
        %v10506 = vadd.f32 %v6141, %v10378
        %v10507 = vadd.f32 %v6142, %v10379
        %v10508 = vadd.f32 %v6143, %v10380
        %v10509 = vadd.f32 %v6144, %v10381
        %v10510 = vadd.f32 %v6145, %v10382
        %v10511 = vadd.f32 %v6146, %v10383
        %v10512 = vadd.f32 %v6147, %v10384
        %v10513 = vadd.f32 %v6148, %v10385
        %v10514 = vadd.f32 %v6149, %v10386
        %v10515 = vadd.f32 %v6150, %v10387
        %v10516 = vadd.f32 %v6151, %v10388
        %v10517 = vadd.f32 %v6152, %v10389
        %v10518 = vadd.f32 %v6153, %v10390
        %v10519 = vadd.f32 %v6154, %v10391
        %v10520 = vadd.f32 %v6155, %v10392
        %v10521 = vadd.f32 %v6156, %v10393
        %v10522 = vadd.f32 %v6157, %v10394
        %v10523 = vadd.f32 %v6158, %v10395
        %v10524 = vadd.f32 %v6159, %v10396
        %v10525 = vadd.f32 %v6160, %v10397
        %v10526 = vadd.f32 %v6161, %v10398
        %v10527 = vadd.f32 %v6162, %v10399
        %v10528 = vadd.f32 %v6163, %v10400
        %v10529 = vadd.f32 %v6164, %v10401
        %v10530 = vadd.f32 %v6165, %v10402
        %v10531 = vadd.f32 %v6166, %v10403
        %v10532 = vadd.f32 %v6167, %v10404
        %v10533 = vadd.f32 %v6168, %v10405
        %v10534 = vmax.f32 %v10406, 0.0
        %v10535 = vmax.f32 %v10407, 0.0
        %v10536 = vmax.f32 %v10408, 0.0
        %v10537 = vmax.f32 %v10409, 0.0
        %v10538 = vmax.f32 %v10410, 0.0
        %v10539 = vmax.f32 %v10411, 0.0
        %v10540 = vmax.f32 %v10412, 0.0
        %v10541 = vmax.f32 %v10413, 0.0
        %v10542 = vmax.f32 %v10414, 0.0
        %v10543 = vmax.f32 %v10415, 0.0
        %v10544 = vmax.f32 %v10416, 0.0
        %v10545 = vmax.f32 %v10417, 0.0
        %v10546 = vmax.f32 %v10418, 0.0
        %v10547 = vmax.f32 %v10419, 0.0
        %v10548 = vmax.f32 %v10420, 0.0
        %v10549 = vmax.f32 %v10421, 0.0
        %v10550 = vmax.f32 %v10422, 0.0
        %v10551 = vmax.f32 %v10423, 0.0
        %v10552 = vmax.f32 %v10424, 0.0
        %v10553 = vmax.f32 %v10425, 0.0
        %v10554 = vmax.f32 %v10426, 0.0
        %v10555 = vmax.f32 %v10427, 0.0
        %v10556 = vmax.f32 %v10428, 0.0
        %v10557 = vmax.f32 %v10429, 0.0
        %v10558 = vmax.f32 %v10430, 0.0
        %v10559 = vmax.f32 %v10431, 0.0
        %v10560 = vmax.f32 %v10432, 0.0
        %v10561 = vmax.f32 %v10433, 0.0
        %v10562 = vmax.f32 %v10434, 0.0
        %v10563 = vmax.f32 %v10435, 0.0
        %v10564 = vmax.f32 %v10436, 0.0
        %v10565 = vmax.f32 %v10437, 0.0
        %v10566 = vmax.f32 %v10438, 0.0
        %v10567 = vmax.f32 %v10439, 0.0
        %v10568 = vmax.f32 %v10440, 0.0
        %v10569 = vmax.f32 %v10441, 0.0
        %v10570 = vmax.f32 %v10442, 0.0
        %v10571 = vmax.f32 %v10443, 0.0
        %v10572 = vmax.f32 %v10444, 0.0
        %v10573 = vmax.f32 %v10445, 0.0
        %v10574 = vmax.f32 %v10446, 0.0
        %v10575 = vmax.f32 %v10447, 0.0
        %v10576 = vmax.f32 %v10448, 0.0
        %v10577 = vmax.f32 %v10449, 0.0
        %v10578 = vmax.f32 %v10450, 0.0
        %v10579 = vmax.f32 %v10451, 0.0
        %v10580 = vmax.f32 %v10452, 0.0
        %v10581 = vmax.f32 %v10453, 0.0
        %v10582 = vmax.f32 %v10454, 0.0
        %v10583 = vmax.f32 %v10455, 0.0
        %v10584 = vmax.f32 %v10456, 0.0
        %v10585 = vmax.f32 %v10457, 0.0
        %v10586 = vmax.f32 %v10458, 0.0
        %v10587 = vmax.f32 %v10459, 0.0
        %v10588 = vmax.f32 %v10460, 0.0
        %v10589 = vmax.f32 %v10461, 0.0
        %v10590 = vmax.f32 %v10462, 0.0
        %v10591 = vmax.f32 %v10463, 0.0
        %v10592 = vmax.f32 %v10464, 0.0
        %v10593 = vmax.f32 %v10465, 0.0
        %v10594 = vmax.f32 %v10466, 0.0
        %v10595 = vmax.f32 %v10467, 0.0
        %v10596 = vmax.f32 %v10468, 0.0
        %v10597 = vmax.f32 %v10469, 0.0
        %v10598 = vmax.f32 %v10470, 0.0
        %v10599 = vmax.f32 %v10471, 0.0
        %v10600 = vmax.f32 %v10472, 0.0
        %v10601 = vmax.f32 %v10473, 0.0
        %v10602 = vmax.f32 %v10474, 0.0
        %v10603 = vmax.f32 %v10475, 0.0
        %v10604 = vmax.f32 %v10476, 0.0
        %v10605 = vmax.f32 %v10477, 0.0
        %v10606 = vmax.f32 %v10478, 0.0
        %v10607 = vmax.f32 %v10479, 0.0
        %v10608 = vmax.f32 %v10480, 0.0
        %v10609 = vmax.f32 %v10481, 0.0
        %v10610 = vmax.f32 %v10482, 0.0
        %v10611 = vmax.f32 %v10483, 0.0
        %v10612 = vmax.f32 %v10484, 0.0
        %v10613 = vmax.f32 %v10485, 0.0
        %v10614 = vmax.f32 %v10486, 0.0
        %v10615 = vmax.f32 %v10487, 0.0
        %v10616 = vmax.f32 %v10488, 0.0
        %v10617 = vmax.f32 %v10489, 0.0
        %v10618 = vmax.f32 %v10490, 0.0
        %v10619 = vmax.f32 %v10491, 0.0
        %v10620 = vmax.f32 %v10492, 0.0
        %v10621 = vmax.f32 %v10493, 0.0
        %v10622 = vmax.f32 %v10494, 0.0
        %v10623 = vmax.f32 %v10495, 0.0
        %v10624 = vmax.f32 %v10496, 0.0
        %v10625 = vmax.f32 %v10497, 0.0
        %v10626 = vmax.f32 %v10498, 0.0
        %v10627 = vmax.f32 %v10499, 0.0
        %v10628 = vmax.f32 %v10500, 0.0
        %v10629 = vmax.f32 %v10501, 0.0
        %v10630 = vmax.f32 %v10502, 0.0
        %v10631 = vmax.f32 %v10503, 0.0
        %v10632 = vmax.f32 %v10504, 0.0
        %v10633 = vmax.f32 %v10505, 0.0
        %v10634 = vmax.f32 %v10506, 0.0
        %v10635 = vmax.f32 %v10507, 0.0
        %v10636 = vmax.f32 %v10508, 0.0
        %v10637 = vmax.f32 %v10509, 0.0
        %v10638 = vmax.f32 %v10510, 0.0
        %v10639 = vmax.f32 %v10511, 0.0
        %v10640 = vmax.f32 %v10512, 0.0
        %v10641 = vmax.f32 %v10513, 0.0
        %v10642 = vmax.f32 %v10514, 0.0
        %v10643 = vmax.f32 %v10515, 0.0
        %v10644 = vmax.f32 %v10516, 0.0
        %v10645 = vmax.f32 %v10517, 0.0
        %v10646 = vmax.f32 %v10518, 0.0
        %v10647 = vmax.f32 %v10519, 0.0
        %v10648 = vmax.f32 %v10520, 0.0
        %v10649 = vmax.f32 %v10521, 0.0
        %v10650 = vmax.f32 %v10522, 0.0
        %v10651 = vmax.f32 %v10523, 0.0
        %v10652 = vmax.f32 %v10524, 0.0
        %v10653 = vmax.f32 %v10525, 0.0
        %v10654 = vmax.f32 %v10526, 0.0
        %v10655 = vmax.f32 %v10527, 0.0
        %v10656 = vmax.f32 %v10528, 0.0
        %v10657 = vmax.f32 %v10529, 0.0
        %v10658 = vmax.f32 %v10530, 0.0
        %v10659 = vmax.f32 %v10531, 0.0
        %v10660 = vmax.f32 %v10532, 0.0
        %v10661 = vmax.f32 %v10533, 0.0
        %v10662 = vpack.c.bf16 %v10538, %v10534
        %v10663 = vpack.c.bf16 %v10539, %v10535
        %v10664 = vpack.c.bf16 %v10540, %v10536
        %v10665 = vpack.c.bf16 %v10541, %v10537
        %v10666 = vpack.c.bf16 %v10546, %v10542
        %v10667 = vpack.c.bf16 %v10547, %v10543
        %v10668 = vpack.c.bf16 %v10548, %v10544
        %v10669 = vpack.c.bf16 %v10549, %v10545
        %v10670 = vpack.c.bf16 %v10554, %v10550
        %v10671 = vpack.c.bf16 %v10555, %v10551
        %v10672 = vpack.c.bf16 %v10556, %v10552
        %v10673 = vpack.c.bf16 %v10557, %v10553
        %v10674 = vpack.c.bf16 %v10562, %v10558
        %v10675 = vpack.c.bf16 %v10563, %v10559
        %v10676 = vpack.c.bf16 %v10564, %v10560
        %v10677 = vpack.c.bf16 %v10565, %v10561
        %v10678 = vpack.c.bf16 %v10570, %v10566
        %v10679 = vpack.c.bf16 %v10571, %v10567
        %v10680 = vpack.c.bf16 %v10572, %v10568
        %v10681 = vpack.c.bf16 %v10573, %v10569
        %v10682 = vpack.c.bf16 %v10578, %v10574
        %v10683 = vpack.c.bf16 %v10579, %v10575
        %v10684 = vpack.c.bf16 %v10580, %v10576
        %v10685 = vpack.c.bf16 %v10581, %v10577
        %v10686 = vpack.c.bf16 %v10586, %v10582
        %v10687 = vpack.c.bf16 %v10587, %v10583
        %v10688 = vpack.c.bf16 %v10588, %v10584
        %v10689 = vpack.c.bf16 %v10589, %v10585
        %v10690 = vpack.c.bf16 %v10594, %v10590
        %v10691 = vpack.c.bf16 %v10595, %v10591
        %v10692 = vpack.c.bf16 %v10596, %v10592
        %v10693 = vpack.c.bf16 %v10597, %v10593
        %v10694 = vpack.c.bf16 %v10602, %v10598
        %v10695 = vpack.c.bf16 %v10603, %v10599
        %v10696 = vpack.c.bf16 %v10604, %v10600
        %v10697 = vpack.c.bf16 %v10605, %v10601
        %v10698 = vpack.c.bf16 %v10610, %v10606
        %v10699 = vpack.c.bf16 %v10611, %v10607
        %v10700 = vpack.c.bf16 %v10612, %v10608
        %v10701 = vpack.c.bf16 %v10613, %v10609
        %v10702 = vpack.c.bf16 %v10618, %v10614
        %v10703 = vpack.c.bf16 %v10619, %v10615
        %v10704 = vpack.c.bf16 %v10620, %v10616
        %v10705 = vpack.c.bf16 %v10621, %v10617
        %v10706 = vpack.c.bf16 %v10626, %v10622
        %v10707 = vpack.c.bf16 %v10627, %v10623
        %v10708 = vpack.c.bf16 %v10628, %v10624
        %v10709 = vpack.c.bf16 %v10629, %v10625
        %v10710 = vpack.c.bf16 %v10634, %v10630
        %v10711 = vpack.c.bf16 %v10635, %v10631
        %v10712 = vpack.c.bf16 %v10636, %v10632
        %v10713 = vpack.c.bf16 %v10637, %v10633
        %v10714 = vpack.c.bf16 %v10642, %v10638
        %v10715 = vpack.c.bf16 %v10643, %v10639
        %v10716 = vpack.c.bf16 %v10644, %v10640
        %v10717 = vpack.c.bf16 %v10645, %v10641
        %v10718 = vpack.c.bf16 %v10650, %v10646
        %v10719 = vpack.c.bf16 %v10651, %v10647
        %v10720 = vpack.c.bf16 %v10652, %v10648
        %v10721 = vpack.c.bf16 %v10653, %v10649
        %v10722 = vpack.c.bf16 %v10658, %v10654
        %v10723 = vpack.c.bf16 %v10659, %v10655
        %v10724 = vpack.c.bf16 %v10660, %v10656
        %v10725 = vpack.c.bf16 %v10661, %v10657
        %v10790 = vunpack.c.l.b16 %v10662
        %v10791 = vunpack.c.l.b16 %v10663
        %v10792 = vunpack.c.l.b16 %v10664
        %v10793 = vunpack.c.l.b16 %v10665
        %v10794 = vunpack.c.h.b16 %v10662
        %v10795 = vunpack.c.h.b16 %v10663
        %v10796 = vunpack.c.h.b16 %v10664
        %v10797 = vunpack.c.h.b16 %v10665
        %v10798 = vunpack.c.l.b16 %v10666
        %v10799 = vunpack.c.l.b16 %v10667
        %v10800 = vunpack.c.l.b16 %v10668
        %v10801 = vunpack.c.l.b16 %v10669
        %v10802 = vunpack.c.h.b16 %v10666
        %v10803 = vunpack.c.h.b16 %v10667
        %v10804 = vunpack.c.h.b16 %v10668
        %v10805 = vunpack.c.h.b16 %v10669
        %v10806 = vunpack.c.l.b16 %v10670
        %v10807 = vunpack.c.l.b16 %v10671
        %v10808 = vunpack.c.l.b16 %v10672
        %v10809 = vunpack.c.l.b16 %v10673
        %v10810 = vunpack.c.h.b16 %v10670
        %v10811 = vunpack.c.h.b16 %v10671
        %v10812 = vunpack.c.h.b16 %v10672
        %v10813 = vunpack.c.h.b16 %v10673
        %v10814 = vunpack.c.l.b16 %v10674
        %v10815 = vunpack.c.l.b16 %v10675
        %v10816 = vunpack.c.l.b16 %v10676
        %v10817 = vunpack.c.l.b16 %v10677
        %v10818 = vunpack.c.h.b16 %v10674
        %v10819 = vunpack.c.h.b16 %v10675
        %v10820 = vunpack.c.h.b16 %v10676
        %v10821 = vunpack.c.h.b16 %v10677
        %v10822 = vunpack.c.l.b16 %v10678
        %v10823 = vunpack.c.l.b16 %v10679
        %v10824 = vunpack.c.l.b16 %v10680
        %v10825 = vunpack.c.l.b16 %v10681
        %v10826 = vunpack.c.h.b16 %v10678
        %v10827 = vunpack.c.h.b16 %v10679
        %v10828 = vunpack.c.h.b16 %v10680
        %v10829 = vunpack.c.h.b16 %v10681
        %v10830 = vunpack.c.l.b16 %v10682
        %v10831 = vunpack.c.l.b16 %v10683
        %v10832 = vunpack.c.l.b16 %v10684
        %v10833 = vunpack.c.l.b16 %v10685
        %v10834 = vunpack.c.h.b16 %v10682
        %v10835 = vunpack.c.h.b16 %v10683
        %v10836 = vunpack.c.h.b16 %v10684
        %v10837 = vunpack.c.h.b16 %v10685
        %v10838 = vunpack.c.l.b16 %v10686
        %v10839 = vunpack.c.l.b16 %v10687
        %v10840 = vunpack.c.l.b16 %v10688
        %v10841 = vunpack.c.l.b16 %v10689
        %v10842 = vunpack.c.h.b16 %v10686
        %v10843 = vunpack.c.h.b16 %v10687
        %v10844 = vunpack.c.h.b16 %v10688
        %v10845 = vunpack.c.h.b16 %v10689
        %v10846 = vunpack.c.l.b16 %v10690
        %v10847 = vunpack.c.l.b16 %v10691
        %v10848 = vunpack.c.l.b16 %v10692
        %v10849 = vunpack.c.l.b16 %v10693
        %v10850 = vunpack.c.h.b16 %v10690
        %v10851 = vunpack.c.h.b16 %v10691
        %v10852 = vunpack.c.h.b16 %v10692
        %v10853 = vunpack.c.h.b16 %v10693
        %v10854 = vunpack.c.l.b16 %v10694
        %v10855 = vunpack.c.l.b16 %v10695
        %v10856 = vunpack.c.l.b16 %v10696
        %v10857 = vunpack.c.l.b16 %v10697
        %v10858 = vunpack.c.h.b16 %v10694
        %v10859 = vunpack.c.h.b16 %v10695
        %v10860 = vunpack.c.h.b16 %v10696
        %v10861 = vunpack.c.h.b16 %v10697
        %v10862 = vunpack.c.l.b16 %v10698
        %v10863 = vunpack.c.l.b16 %v10699
        %v10864 = vunpack.c.l.b16 %v10700
        %v10865 = vunpack.c.l.b16 %v10701
        %v10866 = vunpack.c.h.b16 %v10698
        %v10867 = vunpack.c.h.b16 %v10699
        %v10868 = vunpack.c.h.b16 %v10700
        %v10869 = vunpack.c.h.b16 %v10701
        %v10870 = vunpack.c.l.b16 %v10702
        %v10871 = vunpack.c.l.b16 %v10703
        %v10872 = vunpack.c.l.b16 %v10704
        %v10873 = vunpack.c.l.b16 %v10705
        %v10874 = vunpack.c.h.b16 %v10702
        %v10875 = vunpack.c.h.b16 %v10703
        %v10876 = vunpack.c.h.b16 %v10704
        %v10877 = vunpack.c.h.b16 %v10705
        %v10878 = vunpack.c.l.b16 %v10706
        %v10879 = vunpack.c.l.b16 %v10707
        %v10880 = vunpack.c.l.b16 %v10708
        %v10881 = vunpack.c.l.b16 %v10709
        %v10882 = vunpack.c.h.b16 %v10706
        %v10883 = vunpack.c.h.b16 %v10707
        %v10884 = vunpack.c.h.b16 %v10708
        %v10885 = vunpack.c.h.b16 %v10709
        %v10886 = vunpack.c.l.b16 %v10710
        %v10887 = vunpack.c.l.b16 %v10711
        %v10888 = vunpack.c.l.b16 %v10712
        %v10889 = vunpack.c.l.b16 %v10713
        %v10890 = vunpack.c.h.b16 %v10710
        %v10891 = vunpack.c.h.b16 %v10711
        %v10892 = vunpack.c.h.b16 %v10712
        %v10893 = vunpack.c.h.b16 %v10713
        %v10894 = vunpack.c.l.b16 %v10714
        %v10895 = vunpack.c.l.b16 %v10715
        %v10896 = vunpack.c.l.b16 %v10716
        %v10897 = vunpack.c.l.b16 %v10717
        %v10898 = vunpack.c.h.b16 %v10714
        %v10899 = vunpack.c.h.b16 %v10715
        %v10900 = vunpack.c.h.b16 %v10716
        %v10901 = vunpack.c.h.b16 %v10717
        %v10902 = vunpack.c.l.b16 %v10718
        %v10903 = vunpack.c.l.b16 %v10719
        %v10904 = vunpack.c.l.b16 %v10720
        %v10905 = vunpack.c.l.b16 %v10721
        %v10906 = vunpack.c.h.b16 %v10718
        %v10907 = vunpack.c.h.b16 %v10719
        %v10908 = vunpack.c.h.b16 %v10720
        %v10909 = vunpack.c.h.b16 %v10721
        %v10910 = vunpack.c.l.b16 %v10722
        %v10911 = vunpack.c.l.b16 %v10723
        %v10912 = vunpack.c.l.b16 %v10724
        %v10913 = vunpack.c.l.b16 %v10725
        %v10914 = vunpack.c.h.b16 %v10722
        %v10915 = vunpack.c.h.b16 %v10723
        %v10916 = vunpack.c.h.b16 %v10724
        %v10917 = vunpack.c.h.b16 %v10725
        %v10918 = vpack.c.b16 %v10791, %v10790
        %v10919 = vpack.c.b16 %v10793, %v10792
        %v10920 = vpack.c.b16 %v10795, %v10794
        %v10921 = vpack.c.b16 %v10797, %v10796
        %v10922 = vpack.c.b16 %v10799, %v10798
        %v10923 = vpack.c.b16 %v10801, %v10800
        %v10924 = vpack.c.b16 %v10803, %v10802
        %v10925 = vpack.c.b16 %v10805, %v10804
        %v10926 = vpack.c.b16 %v10807, %v10806
        %v10927 = vpack.c.b16 %v10809, %v10808
        %v10928 = vpack.c.b16 %v10811, %v10810
        %v10929 = vpack.c.b16 %v10813, %v10812
        %v10930 = vpack.c.b16 %v10815, %v10814
        %v10931 = vpack.c.b16 %v10817, %v10816
        %v10932 = vpack.c.b16 %v10819, %v10818
        %v10933 = vpack.c.b16 %v10821, %v10820
        %v10934 = vpack.c.b16 %v10823, %v10822
        %v10935 = vpack.c.b16 %v10825, %v10824
        %v10936 = vpack.c.b16 %v10827, %v10826
        %v10937 = vpack.c.b16 %v10829, %v10828
        %v10938 = vpack.c.b16 %v10831, %v10830
        %v10939 = vpack.c.b16 %v10833, %v10832
        %v10940 = vpack.c.b16 %v10835, %v10834
        %v10941 = vpack.c.b16 %v10837, %v10836
        %v10942 = vpack.c.b16 %v10839, %v10838
        %v10943 = vpack.c.b16 %v10841, %v10840
        %v10944 = vpack.c.b16 %v10843, %v10842
        %v10945 = vpack.c.b16 %v10845, %v10844
        %v10946 = vpack.c.b16 %v10847, %v10846
        %v10947 = vpack.c.b16 %v10849, %v10848
        %v10948 = vpack.c.b16 %v10851, %v10850
        %v10949 = vpack.c.b16 %v10853, %v10852
        %v10950 = vpack.c.b16 %v10855, %v10854
        %v10951 = vpack.c.b16 %v10857, %v10856
        %v10952 = vpack.c.b16 %v10859, %v10858
        %v10953 = vpack.c.b16 %v10861, %v10860
        %v10954 = vpack.c.b16 %v10863, %v10862
        %v10955 = vpack.c.b16 %v10865, %v10864
        %v10956 = vpack.c.b16 %v10867, %v10866
        %v10957 = vpack.c.b16 %v10869, %v10868
        %v10958 = vpack.c.b16 %v10871, %v10870
        %v10959 = vpack.c.b16 %v10873, %v10872
        %v10960 = vpack.c.b16 %v10875, %v10874
        %v10961 = vpack.c.b16 %v10877, %v10876
        %v10962 = vpack.c.b16 %v10879, %v10878
        %v10963 = vpack.c.b16 %v10881, %v10880
        %v10964 = vpack.c.b16 %v10883, %v10882
        %v10965 = vpack.c.b16 %v10885, %v10884
        %v10966 = vpack.c.b16 %v10887, %v10886
        %v10967 = vpack.c.b16 %v10889, %v10888
        %v10968 = vpack.c.b16 %v10891, %v10890
        %v10969 = vpack.c.b16 %v10893, %v10892
        %v10970 = vpack.c.b16 %v10895, %v10894
        %v10971 = vpack.c.b16 %v10897, %v10896
        %v10972 = vpack.c.b16 %v10899, %v10898
        %v10973 = vpack.c.b16 %v10901, %v10900
        %v10974 = vpack.c.b16 %v10903, %v10902
        %v10975 = vpack.c.b16 %v10905, %v10904
        %v10976 = vpack.c.b16 %v10907, %v10906
        %v10977 = vpack.c.b16 %v10909, %v10908
        %v10978 = vpack.c.b16 %v10911, %v10910
        %v10979 = vpack.c.b16 %v10913, %v10912
        %v10980 = vpack.c.b16 %v10915, %v10914
        %v10981 = vpack.c.b16 %v10917, %v10916
        %11046 = vst [vmem:[%s380] sm:$0xff] %v10918
        %11047 = vst [vmem:[%s380 + $0x8] sm:$0xff] %v10919
        %11048 = vst [vmem:[%s380 + $0x10] sm:$0xff] %v10920
        %11049 = vst [vmem:[%s380 + $0x18] sm:$0xff] %v10921
        %11050 = vst [vmem:[%s380 + $0x20] sm:$0xff] %v10922
        %11051 = vst [vmem:[%s380 + $0x28] sm:$0xff] %v10923
        %11052 = vst [vmem:[%s380 + $0x30] sm:$0xff] %v10924
        %11053 = vst [vmem:[%s380 + $0x38] sm:$0xff] %v10925
        %11054 = vst [vmem:[%s380 + $0x40] sm:$0xff] %v10926
        %11055 = vst [vmem:[%s380 + $0x48] sm:$0xff] %v10927
        %11056 = vst [vmem:[%s380 + $0x50] sm:$0xff] %v10928
        %11057 = vst [vmem:[%s380 + $0x58] sm:$0xff] %v10929
        %11058 = vst [vmem:[%s380 + $0x60] sm:$0xff] %v10930
        %11059 = vst [vmem:[%s380 + $0x68] sm:$0xff] %v10931
        %11060 = vst [vmem:[%s380 + $0x70] sm:$0xff] %v10932
        %11061 = vst [vmem:[%s380 + $0x78] sm:$0xff] %v10933
        %11062 = vst [vmem:[%s380 + $0x80] sm:$0xff] %v10934
        %11063 = vst [vmem:[%s380 + $0x88] sm:$0xff] %v10935
        %11064 = vst [vmem:[%s380 + $0x90] sm:$0xff] %v10936
        %11065 = vst [vmem:[%s380 + $0x98] sm:$0xff] %v10937
        %11066 = vst [vmem:[%s380 + $0xa0] sm:$0xff] %v10938
        %11067 = vst [vmem:[%s380 + $0xa8] sm:$0xff] %v10939
        %11068 = vst [vmem:[%s380 + $0xb0] sm:$0xff] %v10940
        %11069 = vst [vmem:[%s380 + $0xb8] sm:$0xff] %v10941
        %11070 = vst [vmem:[%s380 + $0xc0] sm:$0xff] %v10942
        %11071 = vst [vmem:[%s380 + $0xc8] sm:$0xff] %v10943
        %11072 = vst [vmem:[%s380 + $0xd0] sm:$0xff] %v10944
        %11073 = vst [vmem:[%s380 + $0xd8] sm:$0xff] %v10945
        %11074 = vst [vmem:[%s380 + $0xe0] sm:$0xff] %v10946
        %11075 = vst [vmem:[%s380 + $0xe8] sm:$0xff] %v10947
        %11076 = vst [vmem:[%s380 + $0xf0] sm:$0xff] %v10948
        %11077 = vst [vmem:[%s380 + $0xf8] sm:$0xff] %v10949
        %11078 = vst [vmem:[%s380 + $0x100] sm:$0xff] %v10950
        %11079 = vst [vmem:[%s380 + $0x108] sm:$0xff] %v10951
        %11080 = vst [vmem:[%s380 + $0x110] sm:$0xff] %v10952
        %11081 = vst [vmem:[%s380 + $0x118] sm:$0xff] %v10953
        %11082 = vst [vmem:[%s380 + $0x120] sm:$0xff] %v10954
        %11083 = vst [vmem:[%s380 + $0x128] sm:$0xff] %v10955
        %11084 = vst [vmem:[%s380 + $0x130] sm:$0xff] %v10956
        %11085 = vst [vmem:[%s380 + $0x138] sm:$0xff] %v10957
        %11086 = vst [vmem:[%s380 + $0x140] sm:$0xff] %v10958
        %11087 = vst [vmem:[%s380 + $0x148] sm:$0xff] %v10959
        %11088 = vst [vmem:[%s380 + $0x150] sm:$0xff] %v10960
        %11089 = vst [vmem:[%s380 + $0x158] sm:$0xff] %v10961
        %11090 = vst [vmem:[%s380 + $0x160] sm:$0xff] %v10962
        %11091 = vst [vmem:[%s380 + $0x168] sm:$0xff] %v10963
        %11092 = vst [vmem:[%s380 + $0x170] sm:$0xff] %v10964
        %11093 = vst [vmem:[%s380 + $0x178] sm:$0xff] %v10965
        %11094 = vst [vmem:[%s380 + $0x180] sm:$0xff] %v10966
        %11095 = vst [vmem:[%s380 + $0x188] sm:$0xff] %v10967
        %11096 = vst [vmem:[%s380 + $0x190] sm:$0xff] %v10968
        %11097 = vst [vmem:[%s380 + $0x198] sm:$0xff] %v10969
        %11098 = vst [vmem:[%s380 + $0x1a0] sm:$0xff] %v10970
        %11099 = vst [vmem:[%s380 + $0x1a8] sm:$0xff] %v10971
        %11100 = vst [vmem:[%s380 + $0x1b0] sm:$0xff] %v10972
        %11101 = vst [vmem:[%s380 + $0x1b8] sm:$0xff] %v10973
        %11102 = vst [vmem:[%s380 + $0x1c0] sm:$0xff] %v10974
        %11103 = vst [vmem:[%s380 + $0x1c8] sm:$0xff] %v10975
        %11104 = vst [vmem:[%s380 + $0x1d0] sm:$0xff] %v10976
        %11105 = vst [vmem:[%s380 + $0x1d8] sm:$0xff] %v10977
        %11106 = vst [vmem:[%s380 + $0x1e0] sm:$0xff] %v10978
        %11107 = vst [vmem:[%s380 + $0x1e8] sm:$0xff] %v10979
        %11108 = vst [vmem:[%s380 + $0x1f0] sm:$0xff] %v10980
        %11109 = vst [vmem:[%s380 + $0x1f8] sm:$0xff] %v10981
        %s11110 = sand.u32 %s187, 1
        %s11111 = scalar_lea.sflag [#allocation4], %s11110
        %s11112 = sand.u32 %s187, 1
        %s11113 = smul.addr %s11112, 512
        %s11114 = scalar_lea.vmem [#allocation14], %s11113
        // Predicated region
        $region77: #{tpu_custom_call.1} parent=47 // pred_check
          %p11115 = pneg %p197
        $region78: #{tpu_custom_call.1} parent=47 // pred_check_branch
          %11117 = sbr.rel (%p11115) target = $region80
        $region79: #{tpu_custom_call.1} parent=47 // pred_region
          %s11118 = smul.u32 32, %s27
          %s11120 = ssub.s32 8192, 8192
          %11121 = vsyncadd %s11111, %s11120
          %s11122 = smul.addr %s11118, 4
          %s11123 = smul.addr %s11122, 64
          %s11124 = scalar_lea.hbm %s7, %s11123
          %s11125 = sshll.u32 %s11114, 4
          %s11126 = int_to_ptr.vmem [resolvable:$true] %s11125
          %11131 = dma.vmem_to_hbm [thread:$0]  %s11126, 8192, %s11124, %s11111, 256, 256, 16
        $region80: #{tpu_custom_call.1} parent=47 // pred_fallthru
          _
      $region48: #{tpu_custom_call.1} parent=5 // pred_fallthru
        _
      %p11132 = scmp.le.s32.totalorder 2, %s22
      // Predicated region
      $region81: #{tpu_custom_call.1} parent=5 // pred_check
        %p11133 = pneg %p11132
      $region82: #{tpu_custom_call.1} parent=5 // pred_check_branch
        %11135 = sbr.rel (%p11133) target = $region84
      $region83: #{tpu_custom_call.1} parent=5 // pred_region
        %s11136 = ssub.s32 %s22, 2
        // Predicated region
        $region85: #{tpu_custom_call.1} parent=83 // pred_check
          %p11137 = pneg %p203
        $region86: #{tpu_custom_call.1} parent=83 // pred_check_branch
          %11139 = sbr.rel (%p11137) target = $region88
        $region87: #{tpu_custom_call.1} parent=83 // pred_region
          %s11140 = sand.u32 %s188, 1
          %s11141 = scalar_lea.sflag [#allocation4], %s11140
          %s11142 = sand.u32 %s188, 1
          %s11143 = smul.addr %s11142, 512
          %s11144 = scalar_lea.vmem [#allocation14], %s11143
          %11145 = dma.done %s11141, 8192
        $region88: #{tpu_custom_call.1} parent=83 // pred_fallthru
          _
      $region84: #{tpu_custom_call.1} parent=5 // pred_fallthru
        _
    $region6: #{tpu_custom_call.1} parent=1 // loop_footer
      %s26 = sadd.s32 1, %s22
    $region7: #{tpu_custom_call.1} parent=1 // loop_footer_branch
      %21 = sbr.rel target = $region3
    $region8: #{tpu_custom_call.1} parent=1 // loop_exit
      _
    %11146 = vsyncpa [#allocation3], 1
    %s11147 = scalar_lea.sflag [#allocation3], 1
    %11148 = vsyncpa %s11147, 1
    %11149 = vsyncpa [#allocation6], 1
    %11150 = vsyncpa [#allocation9], 1
    %11151 = vsyncpa [#allocation12], 1
    %11152 = vsyncpa [#allocation4], 1
    %s11153 = scalar_lea.sflag [#allocation4], 1
    %11154 = vsyncpa %s11153, 1

</llo_original>
